<compile_context>
chip_gen: v5e
topology: v5e:2x2
jax: 0.10.0
libtpu: 0.0.40
codegen_flags: <defaults>
</compile_context>

<pallas_src>
import functools
import math

import jax
import jax.numpy as jnp
import numpy as np
from jax.experimental import pallas as pl
from jax.experimental.pallas import tpu as pltpu


# ----------------------------------------------------------------------------
# Pallas kernel: both MGRU_RBF directions fused & interleaved, grid=().
# ----------------------------------------------------------------------------
def _bimgru_kernel(v_ref, m_ref,
                   gh_ref, beta_ref, rcat_ref, gi_ref,
                   wout_ref, wcata_ref, wz_ref, wih_ref, whh_ref, bias_ref,
                   chat_ref, imp_ref, loss_ref,
                   *, seq_len, batch, input_size, hidden_size):
    f32 = jnp.float32
    T, D, H = seq_len, input_size, hidden_size

    # Tiny packed bias slab [2, 1, 2D+3H] = [b_out | b_z | b_hh]; hoisting it
    # costs ~1 vreg per direction, so it is loaded & sliced once.
    bias = bias_ref[...]
    bout = (bias[0, :, :D], bias[1, :, :D])
    bz = (bias[0, :, D:2 * D], bias[1, :, D:2 * D])
    bhh = (bias[0, :, 2 * D:], bias[1, :, 2 * D:])

    def dir_step(d, t, hid, loss):
        """One timestep of direction d reading/writing original-time index t.

        Weight matrices are re-read from their VMEM refs inside the loop
        (vld slots are idle here) to keep vreg live ranges small.
        """
        v = v_ref[t]                                   # [B, D]
        m = m_ref[t]                                   # [B, D]

        # History regression x_hat = output_layer(hid)
        x_hat = jnp.dot(hid, wout_ref[d], preferred_element_type=f32) + bout[d]
        x_c = m * v + (1.0 - m) * x_hat

        # concat_lyaer(cat([x_c, r])): rbf-half + bias precomputed (rcat).
        concat_hat = (jnp.dot(x_c, wcata_ref[d], preferred_element_type=f32)
                      + rcat_ref[d, t])
        a_c = m * v + (1.0 - m) * concat_hat

        # z_layer: FeatureRegression (zero-diagonal applied in the wrapper).
        z_hat = jnp.dot(a_c, wz_ref[d], preferred_element_type=f32) + bz[d]

        # beta = sigmoid(beta_layer(cat([gamma_x, m]))) is input-only.
        beta = beta_ref[d, t]
        c_hat = beta * z_hat + (1.0 - beta) * x_hat
        c_c = m * v + (1.0 - m) * c_hat

        # Fused masked-L1 loss: one reduction + one divide per step.
        err = (jnp.abs(v - x_hat) + jnp.abs(v - concat_hat)
               + jnp.abs(v - z_hat) + jnp.abs(v - c_hat)) * m
        msum = jnp.sum(m, keepdims=True) + 1e-5        # (1, 1)
        loss = loss + jnp.sum(err, keepdims=True) / msum

        # GRU cell on decayed hidden state; input = cat([c_c, m]).
        # Two fused gate-wide [., 3H] dots; m-half (+ b_ih) precomputed (gi).
        hid_d = hid * gh_ref[d, t]
        gi = jnp.dot(c_c, wih_ref[d], preferred_element_type=f32) + gi_ref[d, t]
        gh = jnp.dot(hid_d, whh_ref[d], preferred_element_type=f32) + bhh[d]
        g_rz = jax.nn.sigmoid(gi[:, :2 * H] + gh[:, :2 * H])
        r_g = g_rz[:, :H]
        z_g = g_rz[:, H:]
        n_g = jnp.tanh(gi[:, 2 * H:] + r_g * gh[:, 2 * H:])
        hid = (1.0 - z_g) * n_g + z_g * hid_d
        return hid, loss, c_hat, c_c

    hid_f = jnp.zeros((batch, H), f32)
    hid_b = jnp.zeros((batch, H), f32)
    loss_f = jnp.zeros((1, 1), f32)
    loss_b = jnp.zeros((1, 1), f32)

    # Fully-unrolled, fully-static time loop; the forward and backward chains
    # are independent, so the scheduler interleaves them and each fills the
    # other's MXU push/pop latency.
    # TODO(synk): switch to a partially-unrolled, time-chunked pipeline for
    # large T (VMEM / code-size bound).
    for i in range(T):
        j = T - 1 - i
        hid_f, loss_f, chat_f, cc_f = dir_step(0, i, hid_f, loss_f)
        hid_b, loss_b, chat_b, cc_b = dir_step(1, j, hid_b, loss_b)
        chat_ref[0, i] = chat_f
        imp_ref[0, i] = cc_f
        # Backward outputs written at original-time index j -> already
        # "backdirect_imputation"-aligned.
        chat_ref[1, j] = chat_b
        imp_ref[1, j] = cc_b

    # MGRU_RBF returns x_loss * 5.
    loss_ref[0] = loss_f * 5.0
    loss_ref[1] = loss_b * 5.0


# ----------------------------------------------------------------------------
# Parameter init (deterministic, mirrors the PyTorch __init__ shapes).
# ----------------------------------------------------------------------------
def init_mgru_params(key, input_size, hidden_size):
    D, H = input_size, hidden_size
    ks = jax.random.split(key, 16)

    def unif(k, shape, fan):
        s = 1.0 / math.sqrt(fan)
        return jax.random.uniform(k, shape, jnp.float32, -s, s)

    p = {}
    p['W_dx'] = unif(ks[0], (D, D), D)            # TemporalDecay(D, D)
    p['b_dx'] = unif(ks[1], (D,), D)
    p['W_dh'] = unif(ks[2], (H, D), H)            # TemporalDecay(D, H)
    p['b_dh'] = unif(ks[3], (H,), H)
    p['W_out'] = unif(ks[4], (D, H), H)           # Linear(H, D)
    p['b_out'] = unif(ks[5], (D,), H)
    p['W_z'] = unif(ks[6], (D, D), D)             # FeatureRegression(D)
    p['b_z'] = unif(ks[7], (D,), D)
    p['W_beta'] = unif(ks[8], (D, 2 * D), 2 * D)  # Linear(2D, D)
    p['b_beta'] = unif(ks[9], (D,), 2 * D)
    p['W_cat'] = unif(ks[10], (D, 2 * D), 2 * D)  # Linear(2D, D)
    p['b_cat'] = unif(ks[11], (D,), 2 * D)
    p['W_ih'] = unif(ks[12], (3 * H, 2 * D), H)   # GRUCell(2D, H)
    p['b_ih'] = unif(ks[13], (3 * H,), H)
    p['W_hh'] = unif(ks[14], (3 * H, H), H)
    p['b_hh'] = unif(ks[15], (3 * H,), H)
    return p


# ----------------------------------------------------------------------------
# Hoisted, input-only precompute (batched over the whole sequence) and
# kernel-layout weight prep (transposed, gate-fused, diag-masked, packed).
# ----------------------------------------------------------------------------
def _precompute_direction(p, delta_tm, masks_tm, rbfs_tm, D, H):
    T, B, _ = delta_tm.shape
    dflat = delta_tm.reshape(T * B, D)
    mflat = masks_tm.reshape(T * B, D)
    rflat = rbfs_tm.reshape(T * B, D)

    gamma_x = jnp.exp(-jax.nn.relu(dflat @ p['W_dx'].T + p['b_dx']))
    gamma_h = jnp.exp(-jax.nn.relu(dflat @ p['W_dh'].T + p['b_dh']))
    beta = jax.nn.sigmoid(gamma_x @ p['W_beta'][:, :D].T
                          + mflat @ p['W_beta'][:, D:].T + p['b_beta'])
    rcat = rflat @ p['W_cat'][:, D:].T + p['b_cat']      # rbf-half + bias
    gi_pre = mflat @ p['W_ih'][:, D:].T + p['b_ih']      # m-half + b_ih [TB,3H]

    seq = dict(
        gh=gamma_h.reshape(T, B, H),
        beta=beta.reshape(T, B, D),
        rcat=rcat.reshape(T, B, D),
        gi=gi_pre.reshape(T, B, 3 * H),
    )

    maskz = 1.0 - jnp.eye(D, dtype=jnp.float32)          # FeatureRegression
    w = dict(
        wout=p['W_out'].T,                               # [H, D]
        wcata=p['W_cat'][:, :D].T,                       # [D, D]
        wz=(p['W_z'] * maskz).T,                         # [D, D]
        wih=p['W_ih'][:, :D].T,                          # [D, 3H] (r|z|n)
        whh=p['W_hh'].T,                                 # [H, 3H] (r|z|n)
        bias=jnp.concatenate([p['b_out'], p['b_z'], p['b_hh']]
                             ).reshape(1, 2 * D + 3 * H),
    )
    return seq, w


_SEQ_NAMES = ['gh', 'beta', 'rcat', 'gi']
_W_NAMES = ['wout', 'wcata', 'wz', 'wih', 'whh', 'bias']


def _vmem_budget_bytes(arrays, out_shapes):
    """(8,128)-padded resident bytes + headroom, clamped for all chips."""
    def padded(shape):
        s = list(shape) if shape else [1]
        s[-1] = -(-s[-1] // 128) * 128
        if len(s) >= 2:
            s[-2] = -(-s[-2] // 8) * 8
        n = 1
        for x in s:
            n *= x
        return 4 * n

    total = sum(padded(a.shape) for a in arrays)
    total += sum(padded(o.shape) for o in out_shapes)
    # 2x safety for compiler scratch / internal copies + fixed headroom.
    # Clamp: >= 32 MiB (above every default scoped limit), <= 96 MiB.
    return int(min(max(2 * total + (16 << 20), 32 << 20), 96 << 20))


# ----------------------------------------------------------------------------
# BiMGRU_RBF forward.
# ----------------------------------------------------------------------------
def _bimgru_rbf_forward_impl(dataset, params_f, params_b, hidden_size):
    B, _, T, D = dataset.shape
    H = hidden_size

    # One transpose of the stacked tensor to time-major [4, T, B, D].
    data_tm = jnp.transpose(dataset.astype(jnp.float32), (1, 2, 0, 3))
    values_tm, delta_tm, masks_tm, rbfs_tm = (data_tm[0], data_tm[1],
                                              data_tm[2], data_tm[3])

    seq_f, w_f = _precompute_direction(params_f, delta_tm, masks_tm, rbfs_tm, D, H)
    seq_b, w_b = _precompute_direction(params_b, delta_tm, masks_tm, rbfs_tm, D, H)

    dir_seq = [jnp.stack([seq_f[n], seq_b[n]], axis=0) for n in _SEQ_NAMES]
    dir_w = [jnp.stack([w_f[n], w_b[n]], axis=0) for n in _W_NAMES]
    inputs = (values_tm, masks_tm, *dir_seq, *dir_w)     # 12 operands

    out_shape = (
        jax.ShapeDtypeStruct((2, T, B, D), jnp.float32),   # c_hat
        jax.ShapeDtypeStruct((2, T, B, D), jnp.float32),   # imputations
        jax.ShapeDtypeStruct((2, 1, 1), jnp.float32),      # x_loss per dir
    )

    vmem_spec = pl.BlockSpec(memory_space=pltpu.MemorySpace.VMEM)
    kernel = functools.partial(_bimgru_kernel, seq_len=T, batch=B,
                               input_size=D, hidden_size=H)

    chat, imp, loss = pl.pallas_call(
        kernel,
        in_specs=[vmem_spec] * len(inputs),
        out_specs=[vmem_spec] * len(out_shape),
        out_shape=out_shape,
        compiler_params=pltpu.CompilerParams(
            vmem_limit_bytes=_vmem_budget_bytes(inputs, out_shape)),
    )(*inputs)

    xl_f = loss[0, 0, 0]
    xl_b = loss[1, 0, 0]

    # Backward-direction outputs are already written at original-time indices
    # (== backdirect_imputation of the raw backward outputs).
    c_hat_f = jnp.transpose(chat[0], (1, 0, 2))       # [B, T, D]
    c_hat_b = jnp.transpose(chat[1], (1, 0, 2))
    imp_f = jnp.transpose(imp[0], (1, 0, 2))
    imp_b = jnp.transpose(imp[1], (1, 0, 2))

    loss_c = jnp.mean((c_hat_f - c_hat_b) ** 2)
    total_loss = xl_f + xl_b + loss_c
    bi_c_hat = (c_hat_f + c_hat_b) * 0.5
    bi_imputation = (imp_f + imp_b) * 0.5
    return total_loss, xl_f, xl_b, loss_c, bi_c_hat, bi_imputation


bimgru_rbf_forward = jax.jit(_bimgru_rbf_forward_impl, static_argnums=3)


# ----------------------------------------------------------------------------
# Pure-JAX reference (mirrors the PyTorch code 1:1) for verification.
# ----------------------------------------------------------------------------
def _mgru_ref(dataset, p, hidden_size):
    B, _, T, D = dataset.shape
    H = hidden_size
    values, delta, masks, rbfs = (dataset[:, 0], dataset[:, 1],
                                  dataset[:, 2], dataset[:, 3])
    maskz = 1.0 - jnp.eye(D, dtype=jnp.float32)
    hid = jnp.zeros((B, H), jnp.float32)
    x_loss = 0.0
    chats, imps = [], []
    for i in range(T):
        v, d, m, r = values[:, i], delta[:, i], masks[:, i], rbfs[:, i]
        gamma_x = jnp.exp(-jax.nn.relu(d @ p['W_dx'].T + p['b_dx']))
        gamma_h = jnp.exp(-jax.nn.relu(d @ p['W_dh'].T + p['b_dh']))
        x_hat = hid @ p['W_out'].T + p['b_out']
        msum = jnp.sum(m) + 1e-5
        x_loss += jnp.sum(jnp.abs(v - x_hat) * m) / msum
        x_c = m * v + (1 - m) * x_hat
        RG = jnp.concatenate([x_c, r], axis=1)
        concat_hat = RG @ p['W_cat'].T + p['b_cat']
        x_loss += jnp.sum(jnp.abs(v - concat_hat) * m) / msum
        a_c = m * v + (1 - m) * concat_hat
        z_hat = a_c @ (p['W_z'] * maskz).T + p['b_z']
        x_loss += jnp.sum(jnp.abs(v - z_hat) * m) / msum
        bw = jnp.concatenate([gamma_x, m], axis=1)
        beta = jax.nn.sigmoid(bw @ p['W_beta'].T + p['b_beta'])
        c_hat = beta * z_hat + (1 - beta) * x_hat
        x_loss += jnp.sum(jnp.abs(v - c_hat) * m) / msum
        c_c = m * v + (1 - m) * c_hat
        gru_in = jnp.concatenate([c_c, m], axis=1)
        chats.append(c_hat)
        imps.append(c_c)
        hid = hid * gamma_h
        gi = gru_in @ p['W_ih'].T + p['b_ih']
        gh = hid @ p['W_hh'].T + p['b_hh']
        i_r, i_z, i_n = gi[:, :H], gi[:, H:2 * H], gi[:, 2 * H:]
        h_r, h_z, h_n = gh[:, :H], gh[:, H:2 * H], gh[:, 2 * H:]
        rg = jax.nn.sigmoid(i_r + h_r)
        zg = jax.nn.sigmoid(i_z + h_z)
        ng = jnp.tanh(i_n + rg * h_n)
        hid = (1 - zg) * ng + zg * hid
    return jnp.stack(chats, axis=1), jnp.stack(imps, axis=1), x_loss * 5.0


def _bimgru_ref(dataset, params_f, params_b, hidden_size):
    back_dataset = dataset[:, :, ::-1, :]
    c_f, i_f, xl_f = _mgru_ref(dataset, params_f, hidden_size)
    c_b, i_b, xl_b = _mgru_ref(back_dataset, params_b, hidden_size)
    c_b = c_b[:, ::-1, :]
    i_b = i_b[:, ::-1, :]
    loss_c = jnp.mean((c_f - c_b) ** 2)
    return (xl_f + xl_b + loss_c, xl_f, xl_b, loss_c,
            (c_f + c_b) / 2.0, (i_f + i_b) / 2.0)


# ----------------------------------------------------------------------------
if __name__ == "__main__":
    B, D, H, T = 8, 16, 32, 8   # batch, input_size, hidden_size, seq_len

    key = jax.random.PRNGKey(0)
    k_v, k_d, k_m, k_r, k_pf, k_pb = jax.random.split(key, 6)

    vals = jax.random.normal(k_v, (B, T, D), jnp.float32)
    delta = jax.random.uniform(k_d, (B, T, D), jnp.float32, 0.0, 2.0)
    masks = (jax.random.uniform(k_m, (B, T, D)) > 0.3).astype(jnp.float32)
    rbfs = jax.random.normal(k_r, (B, T, D), jnp.float32)
    dataset = jnp.stack([vals, delta, masks, rbfs], axis=1)   # [B, 4, T, D]

    params_f = init_mgru_params(k_pf, D, H)
    params_b = init_mgru_params(k_pb, D, H)

    outs = bimgru_rbf_forward(dataset, params_f, params_b, H)
    outs = jax.block_until_ready(outs)
    loss, xl_f, xl_b, loss_c, bi_c_hat, bi_imp = outs

    # Verify against a pure-JAX mirror of the PyTorch forward.
    ref = _bimgru_ref(dataset, params_f, params_b, H)
    np.testing.assert_allclose(np.asarray(loss), np.asarray(ref[0]),
                               rtol=2e-3, atol=2e-3)
    np.testing.assert_allclose(np.asarray(bi_c_hat), np.asarray(ref[4]),
                               rtol=2e-3, atol=2e-3)
    np.testing.assert_allclose(np.asarray(bi_imp), np.asarray(ref[5]),
                               rtol=2e-3, atol=2e-3)

    print("KERNEL_OK")
</pallas_src>

<mosaic_0001>
module attributes {stable_mosaic.version = 11 : i64} {
  func.func @_bimgru_kernel(%arg0: memref<8x8x16xf32, #tpu.memory_space<vmem>>, %arg1: memref<8x8x16xf32, #tpu.memory_space<vmem>>, %arg2: memref<2x8x8x32xf32, #tpu.memory_space<vmem>>, %arg3: memref<2x8x8x16xf32, #tpu.memory_space<vmem>>, %arg4: memref<2x8x8x16xf32, #tpu.memory_space<vmem>>, %arg5: memref<2x8x8x96xf32, #tpu.memory_space<vmem>>, %arg6: memref<2x32x16xf32, #tpu.memory_space<vmem>>, %arg7: memref<2x16x16xf32, #tpu.memory_space<vmem>>, %arg8: memref<2x16x16xf32, #tpu.memory_space<vmem>>, %arg9: memref<2x16x96xf32, #tpu.memory_space<vmem>>, %arg10: memref<2x32x96xf32, #tpu.memory_space<vmem>>, %arg11: memref<2x1x128xf32, #tpu.memory_space<vmem>>, %arg12: memref<2x8x8x16xf32, #tpu.memory_space<vmem>>, %arg13: memref<2x8x8x16xf32, #tpu.memory_space<vmem>>, %arg14: memref<2x1x1xf32, #tpu.memory_space<vmem>>) attributes {dimension_semantics = [], scalar_prefetch = 0 : i64, scratch_operands = 0 : i64, tpu.core_type = #tpu.core_type<tc>} {
    %c0 = arith.constant 0 : index
    %c0_0 = arith.constant 0 : index
    %c0_1 = arith.constant 0 : index
    %0 = vector.load %arg11[%c0, %c0_0, %c0_1] : memref<2x1x128xf32, #tpu.memory_space<vmem>>, vector<2x1x128xf32>
    %1 = vector.extract_strided_slice %0 {offsets = [0, 0, 0], sizes = [1, 1, 16], strides = [1, 1, 1]} : vector<2x1x128xf32> to vector<1x1x16xf32>
    %2 = vector.shape_cast %1 : vector<1x1x16xf32> to vector<1x16xf32>
    %3 = vector.extract_strided_slice %0 {offsets = [1, 0, 0], sizes = [1, 1, 16], strides = [1, 1, 1]} : vector<2x1x128xf32> to vector<1x1x16xf32>
    %4 = vector.shape_cast %3 : vector<1x1x16xf32> to vector<1x16xf32>
    %5 = vector.extract_strided_slice %0 {offsets = [0, 0, 16], sizes = [1, 1, 16], strides = [1, 1, 1]} : vector<2x1x128xf32> to vector<1x1x16xf32>
    %6 = vector.shape_cast %5 : vector<1x1x16xf32> to vector<1x16xf32>
    %7 = vector.extract_strided_slice %0 {offsets = [1, 0, 16], sizes = [1, 1, 16], strides = [1, 1, 1]} : vector<2x1x128xf32> to vector<1x1x16xf32>
    %8 = vector.shape_cast %7 : vector<1x1x16xf32> to vector<1x16xf32>
    %9 = vector.extract_strided_slice %0 {offsets = [0, 0, 32], sizes = [1, 1, 96], strides = [1, 1, 1]} : vector<2x1x128xf32> to vector<1x1x96xf32>
    %10 = vector.shape_cast %9 : vector<1x1x96xf32> to vector<1x96xf32>
    %11 = vector.extract_strided_slice %0 {offsets = [1, 0, 32], sizes = [1, 1, 96], strides = [1, 1, 1]} : vector<2x1x128xf32> to vector<1x1x96xf32>
    %12 = vector.shape_cast %11 : vector<1x1x96xf32> to vector<1x96xf32>
    %cst = arith.constant 0.000000e+00 : f32
    %13 = vector.broadcast %cst : f32 to vector<8x32xf32>
    %cst_2 = arith.constant 0.000000e+00 : f32
    %14 = vector.broadcast %cst_2 : f32 to vector<8x32xf32>
    %cst_3 = arith.constant 0.000000e+00 : f32
    %15 = vector.broadcast %cst_3 : f32 to vector<1x1xf32>
    %cst_4 = arith.constant 0.000000e+00 : f32
    %16 = vector.broadcast %cst_4 : f32 to vector<1x1xf32>
    %c0_5 = arith.constant 0 : index
    %c0_6 = arith.constant 0 : index
    %c0_7 = arith.constant 0 : index
    %17 = vector.load %arg0[%c0_5, %c0_6, %c0_7] : memref<8x8x16xf32, #tpu.memory_space<vmem>>, vector<1x8x16xf32>
    %18 = vector.shape_cast %17 : vector<1x8x16xf32> to vector<8x16xf32>
    %c0_8 = arith.constant 0 : index
    %c0_9 = arith.constant 0 : index
    %c0_10 = arith.constant 0 : index
    %19 = vector.load %arg1[%c0_8, %c0_9, %c0_10] : memref<8x8x16xf32, #tpu.memory_space<vmem>>, vector<1x8x16xf32>
    %20 = vector.shape_cast %19 : vector<1x8x16xf32> to vector<8x16xf32>
    %c0_11 = arith.constant 0 : index
    %c0_12 = arith.constant 0 : index
    %c0_13 = arith.constant 0 : index
    %21 = vector.load %arg6[%c0_11, %c0_12, %c0_13] : memref<2x32x16xf32, #tpu.memory_space<vmem>>, vector<1x32x16xf32>
    %22 = vector.shape_cast %21 : vector<1x32x16xf32> to vector<32x16xf32>
    %cst_14 = arith.constant dense<0.000000e+00> : vector<8x16xf32>
    %23 = tpu.matmul %13, %22, %cst_14 {dimension_numbers = #tpu.dot_dimension_numbers<[1], [0], [0], [1], [0, 0, 1, 1], [], []>} : vector<8x32xf32>, vector<32x16xf32>, vector<8x16xf32> -> vector<8x16xf32>
    %24 = vector.broadcast %2 : vector<1x16xf32> to vector<8x16xf32>
    %25 = arith.addf %23, %24 : vector<8x16xf32>
    %26 = arith.mulf %20, %18 : vector<8x16xf32>
    %cst_15 = arith.constant 1.000000e+00 : f32
    %27 = vector.broadcast %cst_15 : f32 to vector<8x16xf32>
    %28 = arith.subf %27, %20 : vector<8x16xf32>
    %29 = arith.mulf %28, %25 : vector<8x16xf32>
    %30 = arith.addf %26, %29 : vector<8x16xf32>
    %c0_16 = arith.constant 0 : index
    %c0_17 = arith.constant 0 : index
    %c0_18 = arith.constant 0 : index
    %31 = vector.load %arg7[%c0_16, %c0_17, %c0_18] : memref<2x16x16xf32, #tpu.memory_space<vmem>>, vector<1x16x16xf32>
    %32 = vector.shape_cast %31 : vector<1x16x16xf32> to vector<16x16xf32>
    %cst_19 = arith.constant dense<0.000000e+00> : vector<8x16xf32>
    %33 = tpu.matmul %30, %32, %cst_19 {dimension_numbers = #tpu.dot_dimension_numbers<[1], [0], [0], [1], [0, 0, 1, 1], [], []>} : vector<8x16xf32>, vector<16x16xf32>, vector<8x16xf32> -> vector<8x16xf32>
    %c0_20 = arith.constant 0 : index
    %c0_21 = arith.constant 0 : index
    %c0_22 = arith.constant 0 : index
    %c0_23 = arith.constant 0 : index
    %34 = vector.load %arg4[%c0_20, %c0_21, %c0_22, %c0_23] : memref<2x8x8x16xf32, #tpu.memory_space<vmem>>, vector<1x1x8x16xf32>
    %35 = vector.shape_cast %34 : vector<1x1x8x16xf32> to vector<8x16xf32>
    %36 = arith.addf %33, %35 : vector<8x16xf32>
    %37 = arith.mulf %20, %18 : vector<8x16xf32>
    %cst_24 = arith.constant 1.000000e+00 : f32
    %38 = vector.broadcast %cst_24 : f32 to vector<8x16xf32>
    %39 = arith.subf %38, %20 : vector<8x16xf32>
    %40 = arith.mulf %39, %36 : vector<8x16xf32>
    %41 = arith.addf %37, %40 : vector<8x16xf32>
    %c0_25 = arith.constant 0 : index
    %c0_26 = arith.constant 0 : index
    %c0_27 = arith.constant 0 : index
    %42 = vector.load %arg8[%c0_25, %c0_26, %c0_27] : memref<2x16x16xf32, #tpu.memory_space<vmem>>, vector<1x16x16xf32>
    %43 = vector.shape_cast %42 : vector<1x16x16xf32> to vector<16x16xf32>
    %cst_28 = arith.constant dense<0.000000e+00> : vector<8x16xf32>
    %44 = tpu.matmul %41, %43, %cst_28 {dimension_numbers = #tpu.dot_dimension_numbers<[1], [0], [0], [1], [0, 0, 1, 1], [], []>} : vector<8x16xf32>, vector<16x16xf32>, vector<8x16xf32> -> vector<8x16xf32>
    %45 = vector.broadcast %6 : vector<1x16xf32> to vector<8x16xf32>
    %46 = arith.addf %44, %45 : vector<8x16xf32>
    %c0_29 = arith.constant 0 : index
    %c0_30 = arith.constant 0 : index
    %c0_31 = arith.constant 0 : index
    %c0_32 = arith.constant 0 : index
    %47 = vector.load %arg3[%c0_29, %c0_30, %c0_31, %c0_32] : memref<2x8x8x16xf32, #tpu.memory_space<vmem>>, vector<1x1x8x16xf32>
    %48 = vector.shape_cast %47 : vector<1x1x8x16xf32> to vector<8x16xf32>
    %49 = arith.mulf %48, %46 : vector<8x16xf32>
    %cst_33 = arith.constant 1.000000e+00 : f32
    %50 = vector.broadcast %cst_33 : f32 to vector<8x16xf32>
    %51 = arith.subf %50, %48 : vector<8x16xf32>
    %52 = arith.mulf %51, %25 : vector<8x16xf32>
    %53 = arith.addf %49, %52 : vector<8x16xf32>
    %54 = arith.mulf %20, %18 : vector<8x16xf32>
    %cst_34 = arith.constant 1.000000e+00 : f32
    %55 = vector.broadcast %cst_34 : f32 to vector<8x16xf32>
    %56 = arith.subf %55, %20 : vector<8x16xf32>
    %57 = arith.mulf %56, %53 : vector<8x16xf32>
    %58 = arith.addf %54, %57 : vector<8x16xf32>
    %59 = arith.subf %18, %25 : vector<8x16xf32>
    %60 = math.absf %59 : vector<8x16xf32>
    %61 = arith.subf %18, %36 : vector<8x16xf32>
    %62 = math.absf %61 : vector<8x16xf32>
    %63 = arith.addf %60, %62 : vector<8x16xf32>
    %64 = arith.subf %18, %46 : vector<8x16xf32>
    %65 = math.absf %64 : vector<8x16xf32>
    %66 = arith.addf %63, %65 : vector<8x16xf32>
    %67 = arith.subf %18, %53 : vector<8x16xf32>
    %68 = math.absf %67 : vector<8x16xf32>
    %69 = arith.addf %66, %68 : vector<8x16xf32>
    %70 = arith.mulf %69, %20 : vector<8x16xf32>
    %71 = vector.shape_cast %20 : vector<8x16xf32> to vector<1x8x16xf32>
    %cst_35 = arith.constant dense<0.000000e+00> : vector<1xf32>
    %72 = vector.multi_reduction <add>, %71, %cst_35 [1, 2] : vector<1x8x16xf32> to vector<1xf32>
    %73 = vector.shape_cast %72 : vector<1xf32> to vector<1x1x1xf32>
    %74 = vector.extract %73[0, 0, 0] : f32 from vector<1x1x1xf32>
    %75 = vector.broadcast %74 : f32 to vector<1x1xf32>
    %cst_36 = arith.constant 9.99999974E-6 : f32
    %76 = vector.broadcast %cst_36 : f32 to vector<1x1xf32>
    %77 = arith.addf %75, %76 : vector<1x1xf32>
    %78 = vector.shape_cast %70 : vector<8x16xf32> to vector<1x8x16xf32>
    %cst_37 = arith.constant dense<0.000000e+00> : vector<1xf32>
    %79 = vector.multi_reduction <add>, %78, %cst_37 [1, 2] : vector<1x8x16xf32> to vector<1xf32>
    %80 = vector.shape_cast %79 : vector<1xf32> to vector<1x1x1xf32>
    %81 = vector.extract %80[0, 0, 0] : f32 from vector<1x1x1xf32>
    %82 = vector.broadcast %81 : f32 to vector<1x1xf32>
    %83 = arith.divf %82, %77 : vector<1x1xf32>
    %84 = arith.addf %15, %83 : vector<1x1xf32>
    %c0_38 = arith.constant 0 : index
    %c0_39 = arith.constant 0 : index
    %c0_40 = arith.constant 0 : index
    %c0_41 = arith.constant 0 : index
    %85 = vector.load %arg2[%c0_38, %c0_39, %c0_40, %c0_41] : memref<2x8x8x32xf32, #tpu.memory_space<vmem>>, vector<1x1x8x32xf32>
    %86 = vector.shape_cast %85 : vector<1x1x8x32xf32> to vector<8x32xf32>
    %87 = arith.mulf %13, %86 : vector<8x32xf32>
    %c0_42 = arith.constant 0 : index
    %c0_43 = arith.constant 0 : index
    %c0_44 = arith.constant 0 : index
    %88 = vector.load %arg9[%c0_42, %c0_43, %c0_44] : memref<2x16x96xf32, #tpu.memory_space<vmem>>, vector<1x16x96xf32>
    %89 = vector.shape_cast %88 : vector<1x16x96xf32> to vector<16x96xf32>
    %cst_45 = arith.constant dense<0.000000e+00> : vector<8x96xf32>
    %90 = tpu.matmul %58, %89, %cst_45 {dimension_numbers = #tpu.dot_dimension_numbers<[1], [0], [0], [1], [0, 0, 1, 1], [], []>} : vector<8x16xf32>, vector<16x96xf32>, vector<8x96xf32> -> vector<8x96xf32>
    %c0_46 = arith.constant 0 : index
    %c0_47 = arith.constant 0 : index
    %c0_48 = arith.constant 0 : index
    %c0_49 = arith.constant 0 : index
    %91 = vector.load %arg5[%c0_46, %c0_47, %c0_48, %c0_49] : memref<2x8x8x96xf32, #tpu.memory_space<vmem>>, vector<1x1x8x96xf32>
    %92 = vector.shape_cast %91 : vector<1x1x8x96xf32> to vector<8x96xf32>
    %93 = arith.addf %90, %92 : vector<8x96xf32>
    %c0_50 = arith.constant 0 : index
    %c0_51 = arith.constant 0 : index
    %c0_52 = arith.constant 0 : index
    %94 = vector.load %arg10[%c0_50, %c0_51, %c0_52] : memref<2x32x96xf32, #tpu.memory_space<vmem>>, vector<1x32x96xf32>
    %95 = vector.shape_cast %94 : vector<1x32x96xf32> to vector<32x96xf32>
    %cst_53 = arith.constant dense<0.000000e+00> : vector<8x96xf32>
    %96 = tpu.matmul %87, %95, %cst_53 {dimension_numbers = #tpu.dot_dimension_numbers<[1], [0], [0], [1], [0, 0, 1, 1], [], []>} : vector<8x32xf32>, vector<32x96xf32>, vector<8x96xf32> -> vector<8x96xf32>
    %97 = vector.broadcast %10 : vector<1x96xf32> to vector<8x96xf32>
    %98 = arith.addf %96, %97 : vector<8x96xf32>
    %99 = vector.extract_strided_slice %93 {offsets = [0, 0], sizes = [8, 64], strides = [1, 1]} : vector<8x96xf32> to vector<8x64xf32>
    %100 = vector.extract_strided_slice %98 {offsets = [0, 0], sizes = [8, 64], strides = [1, 1]} : vector<8x96xf32> to vector<8x64xf32>
    %101 = arith.addf %99, %100 : vector<8x64xf32>
    %102 = arith.negf %101 : vector<8x64xf32>
    %103 = math.exp %102 : vector<8x64xf32>
    %cst_54 = arith.constant 1.000000e+00 : f32
    %104 = vector.broadcast %cst_54 : f32 to vector<8x64xf32>
    %105 = arith.addf %104, %103 : vector<8x64xf32>
    %106 = arith.divf %104, %105 : vector<8x64xf32>
    %107 = vector.extract_strided_slice %106 {offsets = [0, 0], sizes = [8, 32], strides = [1, 1]} : vector<8x64xf32> to vector<8x32xf32>
    %108 = vector.extract_strided_slice %106 {offsets = [0, 32], sizes = [8, 32], strides = [1, 1]} : vector<8x64xf32> to vector<8x32xf32>
    %109 = vector.extract_strided_slice %93 {offsets = [0, 64], sizes = [8, 32], strides = [1, 1]} : vector<8x96xf32> to vector<8x32xf32>
    %110 = vector.extract_strided_slice %98 {offsets = [0, 64], sizes = [8, 32], strides = [1, 1]} : vector<8x96xf32> to vector<8x32xf32>
    %111 = arith.mulf %107, %110 : vector<8x32xf32>
    %112 = arith.addf %109, %111 : vector<8x32xf32>
    %113 = math.tanh %112 : vector<8x32xf32>
    %cst_55 = arith.constant 1.000000e+00 : f32
    %114 = vector.broadcast %cst_55 : f32 to vector<8x32xf32>
    %115 = arith.subf %114, %108 : vector<8x32xf32>
    %116 = arith.mulf %115, %113 : vector<8x32xf32>
    %117 = arith.mulf %108, %87 : vector<8x32xf32>
    %118 = arith.addf %116, %117 : vector<8x32xf32>
    %c7 = arith.constant 7 : index
    %c0_56 = arith.constant 0 : index
    %c0_57 = arith.constant 0 : index
    %119 = vector.load %arg0[%c7, %c0_56, %c0_57] : memref<8x8x16xf32, #tpu.memory_space<vmem>>, vector<1x8x16xf32>
    %120 = vector.shape_cast %119 : vector<1x8x16xf32> to vector<8x16xf32>
    %c7_58 = arith.constant 7 : index
    %c0_59 = arith.constant 0 : index
    %c0_60 = arith.constant 0 : index
    %121 = vector.load %arg1[%c7_58, %c0_59, %c0_60] : memref<8x8x16xf32, #tpu.memory_space<vmem>>, vector<1x8x16xf32>
    %122 = vector.shape_cast %121 : vector<1x8x16xf32> to vector<8x16xf32>
    %c1 = arith.constant 1 : index
    %c0_61 = arith.constant 0 : index
    %c0_62 = arith.constant 0 : index
    %123 = vector.load %arg6[%c1, %c0_61, %c0_62] : memref<2x32x16xf32, #tpu.memory_space<vmem>>, vector<1x32x16xf32>
    %124 = vector.shape_cast %123 : vector<1x32x16xf32> to vector<32x16xf32>
    %cst_63 = arith.constant dense<0.000000e+00> : vector<8x16xf32>
    %125 = tpu.matmul %14, %124, %cst_63 {dimension_numbers = #tpu.dot_dimension_numbers<[1], [0], [0], [1], [0, 0, 1, 1], [], []>} : vector<8x32xf32>, vector<32x16xf32>, vector<8x16xf32> -> vector<8x16xf32>
    %126 = vector.broadcast %4 : vector<1x16xf32> to vector<8x16xf32>
    %127 = arith.addf %125, %126 : vector<8x16xf32>
    %128 = arith.mulf %122, %120 : vector<8x16xf32>
    %cst_64 = arith.constant 1.000000e+00 : f32
    %129 = vector.broadcast %cst_64 : f32 to vector<8x16xf32>
    %130 = arith.subf %129, %122 : vector<8x16xf32>
    %131 = arith.mulf %130, %127 : vector<8x16xf32>
    %132 = arith.addf %128, %131 : vector<8x16xf32>
    %c1_65 = arith.constant 1 : index
    %c0_66 = arith.constant 0 : index
    %c0_67 = arith.constant 0 : index
    %133 = vector.load %arg7[%c1_65, %c0_66, %c0_67] : memref<2x16x16xf32, #tpu.memory_space<vmem>>, vector<1x16x16xf32>
    %134 = vector.shape_cast %133 : vector<1x16x16xf32> to vector<16x16xf32>
    %cst_68 = arith.constant dense<0.000000e+00> : vector<8x16xf32>
    %135 = tpu.matmul %132, %134, %cst_68 {dimension_numbers = #tpu.dot_dimension_numbers<[1], [0], [0], [1], [0, 0, 1, 1], [], []>} : vector<8x16xf32>, vector<16x16xf32>, vector<8x16xf32> -> vector<8x16xf32>
    %c1_69 = arith.constant 1 : index
    %c7_70 = arith.constant 7 : index
    %c0_71 = arith.constant 0 : index
    %c0_72 = arith.constant 0 : index
    %136 = vector.load %arg4[%c1_69, %c7_70, %c0_71, %c0_72] : memref<2x8x8x16xf32, #tpu.memory_space<vmem>>, vector<1x1x8x16xf32>
    %137 = vector.shape_cast %136 : vector<1x1x8x16xf32> to vector<8x16xf32>
    %138 = arith.addf %135, %137 : vector<8x16xf32>
    %139 = arith.mulf %122, %120 : vector<8x16xf32>
    %cst_73 = arith.constant 1.000000e+00 : f32
    %140 = vector.broadcast %cst_73 : f32 to vector<8x16xf32>
    %141 = arith.subf %140, %122 : vector<8x16xf32>
    %142 = arith.mulf %141, %138 : vector<8x16xf32>
    %143 = arith.addf %139, %142 : vector<8x16xf32>
    %c1_74 = arith.constant 1 : index
    %c0_75 = arith.constant 0 : index
    %c0_76 = arith.constant 0 : index
    %144 = vector.load %arg8[%c1_74, %c0_75, %c0_76] : memref<2x16x16xf32, #tpu.memory_space<vmem>>, vector<1x16x16xf32>
    %145 = vector.shape_cast %144 : vector<1x16x16xf32> to vector<16x16xf32>
    %cst_77 = arith.constant dense<0.000000e+00> : vector<8x16xf32>
    %146 = tpu.matmul %143, %145, %cst_77 {dimension_numbers = #tpu.dot_dimension_numbers<[1], [0], [0], [1], [0, 0, 1, 1], [], []>} : vector<8x16xf32>, vector<16x16xf32>, vector<8x16xf32> -> vector<8x16xf32>
    %147 = vector.broadcast %8 : vector<1x16xf32> to vector<8x16xf32>
    %148 = arith.addf %146, %147 : vector<8x16xf32>
    %c1_78 = arith.constant 1 : index
    %c7_79 = arith.constant 7 : index
    %c0_80 = arith.constant 0 : index
    %c0_81 = arith.constant 0 : index
    %149 = vector.load %arg3[%c1_78, %c7_79, %c0_80, %c0_81] : memref<2x8x8x16xf32, #tpu.memory_space<vmem>>, vector<1x1x8x16xf32>
    %150 = vector.shape_cast %149 : vector<1x1x8x16xf32> to vector<8x16xf32>
    %151 = arith.mulf %150, %148 : vector<8x16xf32>
    %cst_82 = arith.constant 1.000000e+00 : f32
    %152 = vector.broadcast %cst_82 : f32 to vector<8x16xf32>
    %153 = arith.subf %152, %150 : vector<8x16xf32>
    %154 = arith.mulf %153, %127 : vector<8x16xf32>
    %155 = arith.addf %151, %154 : vector<8x16xf32>
    %156 = arith.mulf %122, %120 : vector<8x16xf32>
    %cst_83 = arith.constant 1.000000e+00 : f32
    %157 = vector.broadcast %cst_83 : f32 to vector<8x16xf32>
    %158 = arith.subf %157, %122 : vector<8x16xf32>
    %159 = arith.mulf %158, %155 : vector<8x16xf32>
    %160 = arith.addf %156, %159 : vector<8x16xf32>
    %161 = arith.subf %120, %127 : vector<8x16xf32>
    %162 = math.absf %161 : vector<8x16xf32>
    %163 = arith.subf %120, %138 : vector<8x16xf32>
    %164 = math.absf %163 : vector<8x16xf32>
    %165 = arith.addf %162, %164 : vector<8x16xf32>
    %166 = arith.subf %120, %148 : vector<8x16xf32>
    %167 = math.absf %166 : vector<8x16xf32>
    %168 = arith.addf %165, %167 : vector<8x16xf32>
    %169 = arith.subf %120, %155 : vector<8x16xf32>
    %170 = math.absf %169 : vector<8x16xf32>
    %171 = arith.addf %168, %170 : vector<8x16xf32>
    %172 = arith.mulf %171, %122 : vector<8x16xf32>
    %173 = vector.shape_cast %122 : vector<8x16xf32> to vector<1x8x16xf32>
    %cst_84 = arith.constant dense<0.000000e+00> : vector<1xf32>
    %174 = vector.multi_reduction <add>, %173, %cst_84 [1, 2] : vector<1x8x16xf32> to vector<1xf32>
    %175 = vector.shape_cast %174 : vector<1xf32> to vector<1x1x1xf32>
    %176 = vector.extract %175[0, 0, 0] : f32 from vector<1x1x1xf32>
    %177 = vector.broadcast %176 : f32 to vector<1x1xf32>
    %cst_85 = arith.constant 9.99999974E-6 : f32
    %178 = vector.broadcast %cst_85 : f32 to vector<1x1xf32>
    %179 = arith.addf %177, %178 : vector<1x1xf32>
    %180 = vector.shape_cast %172 : vector<8x16xf32> to vector<1x8x16xf32>
    %cst_86 = arith.constant dense<0.000000e+00> : vector<1xf32>
    %181 = vector.multi_reduction <add>, %180, %cst_86 [1, 2] : vector<1x8x16xf32> to vector<1xf32>
    %182 = vector.shape_cast %181 : vector<1xf32> to vector<1x1x1xf32>
    %183 = vector.extract %182[0, 0, 0] : f32 from vector<1x1x1xf32>
    %184 = vector.broadcast %183 : f32 to vector<1x1xf32>
    %185 = arith.divf %184, %179 : vector<1x1xf32>
    %186 = arith.addf %16, %185 : vector<1x1xf32>
    %c1_87 = arith.constant 1 : index
    %c7_88 = arith.constant 7 : index
    %c0_89 = arith.constant 0 : index
    %c0_90 = arith.constant 0 : index
    %187 = vector.load %arg2[%c1_87, %c7_88, %c0_89, %c0_90] : memref<2x8x8x32xf32, #tpu.memory_space<vmem>>, vector<1x1x8x32xf32>
    %188 = vector.shape_cast %187 : vector<1x1x8x32xf32> to vector<8x32xf32>
    %189 = arith.mulf %14, %188 : vector<8x32xf32>
    %c1_91 = arith.constant 1 : index
    %c0_92 = arith.constant 0 : index
    %c0_93 = arith.constant 0 : index
    %190 = vector.load %arg9[%c1_91, %c0_92, %c0_93] : memref<2x16x96xf32, #tpu.memory_space<vmem>>, vector<1x16x96xf32>
    %191 = vector.shape_cast %190 : vector<1x16x96xf32> to vector<16x96xf32>
    %cst_94 = arith.constant dense<0.000000e+00> : vector<8x96xf32>
    %192 = tpu.matmul %160, %191, %cst_94 {dimension_numbers = #tpu.dot_dimension_numbers<[1], [0], [0], [1], [0, 0, 1, 1], [], []>} : vector<8x16xf32>, vector<16x96xf32>, vector<8x96xf32> -> vector<8x96xf32>
    %c1_95 = arith.constant 1 : index
    %c7_96 = arith.constant 7 : index
    %c0_97 = arith.constant 0 : index
    %c0_98 = arith.constant 0 : index
    %193 = vector.load %arg5[%c1_95, %c7_96, %c0_97, %c0_98] : memref<2x8x8x96xf32, #tpu.memory_space<vmem>>, vector<1x1x8x96xf32>
    %194 = vector.shape_cast %193 : vector<1x1x8x96xf32> to vector<8x96xf32>
    %195 = arith.addf %192, %194 : vector<8x96xf32>
    %c1_99 = arith.constant 1 : index
    %c0_100 = arith.constant 0 : index
    %c0_101 = arith.constant 0 : index
    %196 = vector.load %arg10[%c1_99, %c0_100, %c0_101] : memref<2x32x96xf32, #tpu.memory_space<vmem>>, vector<1x32x96xf32>
    %197 = vector.shape_cast %196 : vector<1x32x96xf32> to vector<32x96xf32>
    %cst_102 = arith.constant dense<0.000000e+00> : vector<8x96xf32>
    %198 = tpu.matmul %189, %197, %cst_102 {dimension_numbers = #tpu.dot_dimension_numbers<[1], [0], [0], [1], [0, 0, 1, 1], [], []>} : vector<8x32xf32>, vector<32x96xf32>, vector<8x96xf32> -> vector<8x96xf32>
    %199 = vector.broadcast %12 : vector<1x96xf32> to vector<8x96xf32>
    %200 = arith.addf %198, %199 : vector<8x96xf32>
    %201 = vector.extract_strided_slice %195 {offsets = [0, 0], sizes = [8, 64], strides = [1, 1]} : vector<8x96xf32> to vector<8x64xf32>
    %202 = vector.extract_strided_slice %200 {offsets = [0, 0], sizes = [8, 64], strides = [1, 1]} : vector<8x96xf32> to vector<8x64xf32>
    %203 = arith.addf %201, %202 : vector<8x64xf32>
    %204 = arith.negf %203 : vector<8x64xf32>
    %205 = math.exp %204 : vector<8x64xf32>
    %cst_103 = arith.constant 1.000000e+00 : f32
    %206 = vector.broadcast %cst_103 : f32 to vector<8x64xf32>
    %207 = arith.addf %206, %205 : vector<8x64xf32>
    %208 = arith.divf %206, %207 : vector<8x64xf32>
    %209 = vector.extract_strided_slice %208 {offsets = [0, 0], sizes = [8, 32], strides = [1, 1]} : vector<8x64xf32> to vector<8x32xf32>
    %210 = vector.extract_strided_slice %208 {offsets = [0, 32], sizes = [8, 32], strides = [1, 1]} : vector<8x64xf32> to vector<8x32xf32>
    %211 = vector.extract_strided_slice %195 {offsets = [0, 64], sizes = [8, 32], strides = [1, 1]} : vector<8x96xf32> to vector<8x32xf32>
    %212 = vector.extract_strided_slice %200 {offsets = [0, 64], sizes = [8, 32], strides = [1, 1]} : vector<8x96xf32> to vector<8x32xf32>
    %213 = arith.mulf %209, %212 : vector<8x32xf32>
    %214 = arith.addf %211, %213 : vector<8x32xf32>
    %215 = math.tanh %214 : vector<8x32xf32>
    %cst_104 = arith.constant 1.000000e+00 : f32
    %216 = vector.broadcast %cst_104 : f32 to vector<8x32xf32>
    %217 = arith.subf %216, %210 : vector<8x32xf32>
    %218 = arith.mulf %217, %215 : vector<8x32xf32>
    %219 = arith.mulf %210, %189 : vector<8x32xf32>
    %220 = arith.addf %218, %219 : vector<8x32xf32>
    %c0_105 = arith.constant 0 : index
    %c0_106 = arith.constant 0 : index
    %c0_107 = arith.constant 0 : index
    %c0_108 = arith.constant 0 : index
    %221 = vector.load %arg12[%c0_105, %c0_106, %c0_107, %c0_108] : memref<2x8x8x16xf32, #tpu.memory_space<vmem>>, vector<1x1x8x16xf32>
    %222 = vector.shape_cast %221 : vector<1x1x8x16xf32> to vector<8x16xf32>
    %223 = vector.shape_cast %53 : vector<8x16xf32> to vector<1x1x8x16xf32>
    tpu.vector_store %arg12[%c0_105, %c0_106, %c0_107, %c0_108], %223 {strides = array<i32>} : memref<2x8x8x16xf32, #tpu.memory_space<vmem>>, vector<1x1x8x16xf32>,
    %c0_109 = arith.constant 0 : index
    %c0_110 = arith.constant 0 : index
    %c0_111 = arith.constant 0 : index
    %c0_112 = arith.constant 0 : index
    %224 = vector.load %arg13[%c0_109, %c0_110, %c0_111, %c0_112] : memref<2x8x8x16xf32, #tpu.memory_space<vmem>>, vector<1x1x8x16xf32>
    %225 = vector.shape_cast %224 : vector<1x1x8x16xf32> to vector<8x16xf32>
    %226 = vector.shape_cast %58 : vector<8x16xf32> to vector<1x1x8x16xf32>
    tpu.vector_store %arg13[%c0_109, %c0_110, %c0_111, %c0_112], %226 {strides = array<i32>} : memref<2x8x8x16xf32, #tpu.memory_space<vmem>>, vector<1x1x8x16xf32>,
    %c1_113 = arith.constant 1 : index
    %c7_114 = arith.constant 7 : index
    %c0_115 = arith.constant 0 : index
    %c0_116 = arith.constant 0 : index
    %227 = vector.load %arg12[%c1_113, %c7_114, %c0_115, %c0_116] : memref<2x8x8x16xf32, #tpu.memory_space<vmem>>, vector<1x1x8x16xf32>
    %228 = vector.shape_cast %227 : vector<1x1x8x16xf32> to vector<8x16xf32>
    %229 = vector.shape_cast %155 : vector<8x16xf32> to vector<1x1x8x16xf32>
    tpu.vector_store %arg12[%c1_113, %c7_114, %c0_115, %c0_116], %229 {strides = array<i32>} : memref<2x8x8x16xf32, #tpu.memory_space<vmem>>, vector<1x1x8x16xf32>,
    %c1_117 = arith.constant 1 : index
    %c7_118 = arith.constant 7 : index
    %c0_119 = arith.constant 0 : index
    %c0_120 = arith.constant 0 : index
    %230 = vector.load %arg13[%c1_117, %c7_118, %c0_119, %c0_120] : memref<2x8x8x16xf32, #tpu.memory_space<vmem>>, vector<1x1x8x16xf32>
    %231 = vector.shape_cast %230 : vector<1x1x8x16xf32> to vector<8x16xf32>
    %232 = vector.shape_cast %160 : vector<8x16xf32> to vector<1x1x8x16xf32>
    tpu.vector_store %arg13[%c1_117, %c7_118, %c0_119, %c0_120], %232 {strides = array<i32>} : memref<2x8x8x16xf32, #tpu.memory_space<vmem>>, vector<1x1x8x16xf32>,
    %c1_121 = arith.constant 1 : index
    %c0_122 = arith.constant 0 : index
    %c0_123 = arith.constant 0 : index
    %233 = vector.load %arg0[%c1_121, %c0_122, %c0_123] : memref<8x8x16xf32, #tpu.memory_space<vmem>>, vector<1x8x16xf32>
    %234 = vector.shape_cast %233 : vector<1x8x16xf32> to vector<8x16xf32>
    %c1_124 = arith.constant 1 : index
    %c0_125 = arith.constant 0 : index
    %c0_126 = arith.constant 0 : index
    %235 = vector.load %arg1[%c1_124, %c0_125, %c0_126] : memref<8x8x16xf32, #tpu.memory_space<vmem>>, vector<1x8x16xf32>
    %236 = vector.shape_cast %235 : vector<1x8x16xf32> to vector<8x16xf32>
    %c0_127 = arith.constant 0 : index
    %c0_128 = arith.constant 0 : index
    %c0_129 = arith.constant 0 : index
    %237 = vector.load %arg6[%c0_127, %c0_128, %c0_129] : memref<2x32x16xf32, #tpu.memory_space<vmem>>, vector<1x32x16xf32>
    %238 = vector.shape_cast %237 : vector<1x32x16xf32> to vector<32x16xf32>
    %cst_130 = arith.constant dense<0.000000e+00> : vector<8x16xf32>
    %239 = tpu.matmul %118, %238, %cst_130 {dimension_numbers = #tpu.dot_dimension_numbers<[1], [0], [0], [1], [0, 0, 1, 1], [], []>} : vector<8x32xf32>, vector<32x16xf32>, vector<8x16xf32> -> vector<8x16xf32>
    %240 = vector.broadcast %2 : vector<1x16xf32> to vector<8x16xf32>
    %241 = arith.addf %239, %240 : vector<8x16xf32>
    %242 = arith.mulf %236, %234 : vector<8x16xf32>
    %cst_131 = arith.constant 1.000000e+00 : f32
    %243 = vector.broadcast %cst_131 : f32 to vector<8x16xf32>
    %244 = arith.subf %243, %236 : vector<8x16xf32>
    %245 = arith.mulf %244, %241 : vector<8x16xf32>
    %246 = arith.addf %242, %245 : vector<8x16xf32>
    %c0_132 = arith.constant 0 : index
    %c0_133 = arith.constant 0 : index
    %c0_134 = arith.constant 0 : index
    %247 = vector.load %arg7[%c0_132, %c0_133, %c0_134] : memref<2x16x16xf32, #tpu.memory_space<vmem>>, vector<1x16x16xf32>
    %248 = vector.shape_cast %247 : vector<1x16x16xf32> to vector<16x16xf32>
    %cst_135 = arith.constant dense<0.000000e+00> : vector<8x16xf32>
    %249 = tpu.matmul %246, %248, %cst_135 {dimension_numbers = #tpu.dot_dimension_numbers<[1], [0], [0], [1], [0, 0, 1, 1], [], []>} : vector<8x16xf32>, vector<16x16xf32>, vector<8x16xf32> -> vector<8x16xf32>
    %c0_136 = arith.constant 0 : index
    %c1_137 = arith.constant 1 : index
    %c0_138 = arith.constant 0 : index
    %c0_139 = arith.constant 0 : index
    %250 = vector.load %arg4[%c0_136, %c1_137, %c0_138, %c0_139] : memref<2x8x8x16xf32, #tpu.memory_space<vmem>>, vector<1x1x8x16xf32>
    %251 = vector.shape_cast %250 : vector<1x1x8x16xf32> to vector<8x16xf32>
    %252 = arith.addf %249, %251 : vector<8x16xf32>
    %253 = arith.mulf %236, %234 : vector<8x16xf32>
    %cst_140 = arith.constant 1.000000e+00 : f32
    %254 = vector.broadcast %cst_140 : f32 to vector<8x16xf32>
    %255 = arith.subf %254, %236 : vector<8x16xf32>
    %256 = arith.mulf %255, %252 : vector<8x16xf32>
    %257 = arith.addf %253, %256 : vector<8x16xf32>
    %c0_141 = arith.constant 0 : index
    %c0_142 = arith.constant 0 : index
    %c0_143 = arith.constant 0 : index
    %258 = vector.load %arg8[%c0_141, %c0_142, %c0_143] : memref<2x16x16xf32, #tpu.memory_space<vmem>>, vector<1x16x16xf32>
    %259 = vector.shape_cast %258 : vector<1x16x16xf32> to vector<16x16xf32>
    %cst_144 = arith.constant dense<0.000000e+00> : vector<8x16xf32>
    %260 = tpu.matmul %257, %259, %cst_144 {dimension_numbers = #tpu.dot_dimension_numbers<[1], [0], [0], [1], [0, 0, 1, 1], [], []>} : vector<8x16xf32>, vector<16x16xf32>, vector<8x16xf32> -> vector<8x16xf32>
    %261 = vector.broadcast %6 : vector<1x16xf32> to vector<8x16xf32>
    %262 = arith.addf %260, %261 : vector<8x16xf32>
    %c0_145 = arith.constant 0 : index
    %c1_146 = arith.constant 1 : index
    %c0_147 = arith.constant 0 : index
    %c0_148 = arith.constant 0 : index
    %263 = vector.load %arg3[%c0_145, %c1_146, %c0_147, %c0_148] : memref<2x8x8x16xf32, #tpu.memory_space<vmem>>, vector<1x1x8x16xf32>
    %264 = vector.shape_cast %263 : vector<1x1x8x16xf32> to vector<8x16xf32>
    %265 = arith.mulf %264, %262 : vector<8x16xf32>
    %cst_149 = arith.constant 1.000000e+00 : f32
    %266 = vector.broadcast %cst_149 : f32 to vector<8x16xf32>
    %267 = arith.subf %266, %264 : vector<8x16xf32>
    %268 = arith.mulf %267, %241 : vector<8x16xf32>
    %269 = arith.addf %265, %268 : vector<8x16xf32>
    %270 = arith.mulf %236, %234 : vector<8x16xf32>
    %cst_150 = arith.constant 1.000000e+00 : f32
    %271 = vector.broadcast %cst_150 : f32 to vector<8x16xf32>
    %272 = arith.subf %271, %236 : vector<8x16xf32>
    %273 = arith.mulf %272, %269 : vector<8x16xf32>
    %274 = arith.addf %270, %273 : vector<8x16xf32>
    %275 = arith.subf %234, %241 : vector<8x16xf32>
    %276 = math.absf %275 : vector<8x16xf32>
    %277 = arith.subf %234, %252 : vector<8x16xf32>
    %278 = math.absf %277 : vector<8x16xf32>
    %279 = arith.addf %276, %278 : vector<8x16xf32>
    %280 = arith.subf %234, %262 : vector<8x16xf32>
    %281 = math.absf %280 : vector<8x16xf32>
    %282 = arith.addf %279, %281 : vector<8x16xf32>
    %283 = arith.subf %234, %269 : vector<8x16xf32>
    %284 = math.absf %283 : vector<8x16xf32>
    %285 = arith.addf %282, %284 : vector<8x16xf32>
    %286 = arith.mulf %285, %236 : vector<8x16xf32>
    %287 = vector.shape_cast %236 : vector<8x16xf32> to vector<1x8x16xf32>
    %cst_151 = arith.constant dense<0.000000e+00> : vector<1xf32>
    %288 = vector.multi_reduction <add>, %287, %cst_151 [1, 2] : vector<1x8x16xf32> to vector<1xf32>
    %289 = vector.shape_cast %288 : vector<1xf32> to vector<1x1x1xf32>
    %290 = vector.extract %289[0, 0, 0] : f32 from vector<1x1x1xf32>
    %291 = vector.broadcast %290 : f32 to vector<1x1xf32>
    %cst_152 = arith.constant 9.99999974E-6 : f32
    %292 = vector.broadcast %cst_152 : f32 to vector<1x1xf32>
    %293 = arith.addf %291, %292 : vector<1x1xf32>
    %294 = vector.shape_cast %286 : vector<8x16xf32> to vector<1x8x16xf32>
    %cst_153 = arith.constant dense<0.000000e+00> : vector<1xf32>
    %295 = vector.multi_reduction <add>, %294, %cst_153 [1, 2] : vector<1x8x16xf32> to vector<1xf32>
    %296 = vector.shape_cast %295 : vector<1xf32> to vector<1x1x1xf32>
    %297 = vector.extract %296[0, 0, 0] : f32 from vector<1x1x1xf32>
    %298 = vector.broadcast %297 : f32 to vector<1x1xf32>
    %299 = arith.divf %298, %293 : vector<1x1xf32>
    %300 = arith.addf %84, %299 : vector<1x1xf32>
    %c0_154 = arith.constant 0 : index
    %c1_155 = arith.constant 1 : index
    %c0_156 = arith.constant 0 : index
    %c0_157 = arith.constant 0 : index
    %301 = vector.load %arg2[%c0_154, %c1_155, %c0_156, %c0_157] : memref<2x8x8x32xf32, #tpu.memory_space<vmem>>, vector<1x1x8x32xf32>
    %302 = vector.shape_cast %301 : vector<1x1x8x32xf32> to vector<8x32xf32>
    %303 = arith.mulf %118, %302 : vector<8x32xf32>
    %c0_158 = arith.constant 0 : index
    %c0_159 = arith.constant 0 : index
    %c0_160 = arith.constant 0 : index
    %304 = vector.load %arg9[%c0_158, %c0_159, %c0_160] : memref<2x16x96xf32, #tpu.memory_space<vmem>>, vector<1x16x96xf32>
    %305 = vector.shape_cast %304 : vector<1x16x96xf32> to vector<16x96xf32>
    %cst_161 = arith.constant dense<0.000000e+00> : vector<8x96xf32>
    %306 = tpu.matmul %274, %305, %cst_161 {dimension_numbers = #tpu.dot_dimension_numbers<[1], [0], [0], [1], [0, 0, 1, 1], [], []>} : vector<8x16xf32>, vector<16x96xf32>, vector<8x96xf32> -> vector<8x96xf32>
    %c0_162 = arith.constant 0 : index
    %c1_163 = arith.constant 1 : index
    %c0_164 = arith.constant 0 : index
    %c0_165 = arith.constant 0 : index
    %307 = vector.load %arg5[%c0_162, %c1_163, %c0_164, %c0_165] : memref<2x8x8x96xf32, #tpu.memory_space<vmem>>, vector<1x1x8x96xf32>
    %308 = vector.shape_cast %307 : vector<1x1x8x96xf32> to vector<8x96xf32>
    %309 = arith.addf %306, %308 : vector<8x96xf32>
    %c0_166 = arith.constant 0 : index
    %c0_167 = arith.constant 0 : index
    %c0_168 = arith.constant 0 : index
    %310 = vector.load %arg10[%c0_166, %c0_167, %c0_168] : memref<2x32x96xf32, #tpu.memory_space<vmem>>, vector<1x32x96xf32>
    %311 = vector.shape_cast %310 : vector<1x32x96xf32> to vector<32x96xf32>
    %cst_169 = arith.constant dense<0.000000e+00> : vector<8x96xf32>
    %312 = tpu.matmul %303, %311, %cst_169 {dimension_numbers = #tpu.dot_dimension_numbers<[1], [0], [0], [1], [0, 0, 1, 1], [], []>} : vector<8x32xf32>, vector<32x96xf32>, vector<8x96xf32> -> vector<8x96xf32>
    %313 = vector.broadcast %10 : vector<1x96xf32> to vector<8x96xf32>
    %314 = arith.addf %312, %313 : vector<8x96xf32>
    %315 = vector.extract_strided_slice %309 {offsets = [0, 0], sizes = [8, 64], strides = [1, 1]} : vector<8x96xf32> to vector<8x64xf32>
    %316 = vector.extract_strided_slice %314 {offsets = [0, 0], sizes = [8, 64], strides = [1, 1]} : vector<8x96xf32> to vector<8x64xf32>
    %317 = arith.addf %315, %316 : vector<8x64xf32>
    %318 = arith.negf %317 : vector<8x64xf32>
    %319 = math.exp %318 : vector<8x64xf32>
    %cst_170 = arith.constant 1.000000e+00 : f32
    %320 = vector.broadcast %cst_170 : f32 to vector<8x64xf32>
    %321 = arith.addf %320, %319 : vector<8x64xf32>
    %322 = arith.divf %320, %321 : vector<8x64xf32>
    %323 = vector.extract_strided_slice %322 {offsets = [0, 0], sizes = [8, 32], strides = [1, 1]} : vector<8x64xf32> to vector<8x32xf32>
    %324 = vector.extract_strided_slice %322 {offsets = [0, 32], sizes = [8, 32], strides = [1, 1]} : vector<8x64xf32> to vector<8x32xf32>
    %325 = vector.extract_strided_slice %309 {offsets = [0, 64], sizes = [8, 32], strides = [1, 1]} : vector<8x96xf32> to vector<8x32xf32>
    %326 = vector.extract_strided_slice %314 {offsets = [0, 64], sizes = [8, 32], strides = [1, 1]} : vector<8x96xf32> to vector<8x32xf32>
    %327 = arith.mulf %323, %326 : vector<8x32xf32>
    %328 = arith.addf %325, %327 : vector<8x32xf32>
    %329 = math.tanh %328 : vector<8x32xf32>
    %cst_171 = arith.constant 1.000000e+00 : f32
    %330 = vector.broadcast %cst_171 : f32 to vector<8x32xf32>
    %331 = arith.subf %330, %324 : vector<8x32xf32>
    %332 = arith.mulf %331, %329 : vector<8x32xf32>
    %333 = arith.mulf %324, %303 : vector<8x32xf32>
    %334 = arith.addf %332, %333 : vector<8x32xf32>
    %c6 = arith.constant 6 : index
    %c0_172 = arith.constant 0 : index
    %c0_173 = arith.constant 0 : index
    %335 = vector.load %arg0[%c6, %c0_172, %c0_173] : memref<8x8x16xf32, #tpu.memory_space<vmem>>, vector<1x8x16xf32>
    %336 = vector.shape_cast %335 : vector<1x8x16xf32> to vector<8x16xf32>
    %c6_174 = arith.constant 6 : index
    %c0_175 = arith.constant 0 : index
    %c0_176 = arith.constant 0 : index
    %337 = vector.load %arg1[%c6_174, %c0_175, %c0_176] : memref<8x8x16xf32, #tpu.memory_space<vmem>>, vector<1x8x16xf32>
    %338 = vector.shape_cast %337 : vector<1x8x16xf32> to vector<8x16xf32>
    %c1_177 = arith.constant 1 : index
    %c0_178 = arith.constant 0 : index
    %c0_179 = arith.constant 0 : index
    %339 = vector.load %arg6[%c1_177, %c0_178, %c0_179] : memref<2x32x16xf32, #tpu.memory_space<vmem>>, vector<1x32x16xf32>
    %340 = vector.shape_cast %339 : vector<1x32x16xf32> to vector<32x16xf32>
    %cst_180 = arith.constant dense<0.000000e+00> : vector<8x16xf32>
    %341 = tpu.matmul %220, %340, %cst_180 {dimension_numbers = #tpu.dot_dimension_numbers<[1], [0], [0], [1], [0, 0, 1, 1], [], []>} : vector<8x32xf32>, vector<32x16xf32>, vector<8x16xf32> -> vector<8x16xf32>
    %342 = vector.broadcast %4 : vector<1x16xf32> to vector<8x16xf32>
    %343 = arith.addf %341, %342 : vector<8x16xf32>
    %344 = arith.mulf %338, %336 : vector<8x16xf32>
    %cst_181 = arith.constant 1.000000e+00 : f32
    %345 = vector.broadcast %cst_181 : f32 to vector<8x16xf32>
    %346 = arith.subf %345, %338 : vector<8x16xf32>
    %347 = arith.mulf %346, %343 : vector<8x16xf32>
    %348 = arith.addf %344, %347 : vector<8x16xf32>
    %c1_182 = arith.constant 1 : index
    %c0_183 = arith.constant 0 : index
    %c0_184 = arith.constant 0 : index
    %349 = vector.load %arg7[%c1_182, %c0_183, %c0_184] : memref<2x16x16xf32, #tpu.memory_space<vmem>>, vector<1x16x16xf32>
    %350 = vector.shape_cast %349 : vector<1x16x16xf32> to vector<16x16xf32>
    %cst_185 = arith.constant dense<0.000000e+00> : vector<8x16xf32>
    %351 = tpu.matmul %348, %350, %cst_185 {dimension_numbers = #tpu.dot_dimension_numbers<[1], [0], [0], [1], [0, 0, 1, 1], [], []>} : vector<8x16xf32>, vector<16x16xf32>, vector<8x16xf32> -> vector<8x16xf32>
    %c1_186 = arith.constant 1 : index
    %c6_187 = arith.constant 6 : index
    %c0_188 = arith.constant 0 : index
    %c0_189 = arith.constant 0 : index
    %352 = vector.load %arg4[%c1_186, %c6_187, %c0_188, %c0_189] : memref<2x8x8x16xf32, #tpu.memory_space<vmem>>, vector<1x1x8x16xf32>
    %353 = vector.shape_cast %352 : vector<1x1x8x16xf32> to vector<8x16xf32>
    %354 = arith.addf %351, %353 : vector<8x16xf32>
    %355 = arith.mulf %338, %336 : vector<8x16xf32>
    %cst_190 = arith.constant 1.000000e+00 : f32
    %356 = vector.broadcast %cst_190 : f32 to vector<8x16xf32>
    %357 = arith.subf %356, %338 : vector<8x16xf32>
    %358 = arith.mulf %357, %354 : vector<8x16xf32>
    %359 = arith.addf %355, %358 : vector<8x16xf32>
    %c1_191 = arith.constant 1 : index
    %c0_192 = arith.constant 0 : index
    %c0_193 = arith.constant 0 : index
    %360 = vector.load %arg8[%c1_191, %c0_192, %c0_193] : memref<2x16x16xf32, #tpu.memory_space<vmem>>, vector<1x16x16xf32>
    %361 = vector.shape_cast %360 : vector<1x16x16xf32> to vector<16x16xf32>
    %cst_194 = arith.constant dense<0.000000e+00> : vector<8x16xf32>
    %362 = tpu.matmul %359, %361, %cst_194 {dimension_numbers = #tpu.dot_dimension_numbers<[1], [0], [0], [1], [0, 0, 1, 1], [], []>} : vector<8x16xf32>, vector<16x16xf32>, vector<8x16xf32> -> vector<8x16xf32>
    %363 = vector.broadcast %8 : vector<1x16xf32> to vector<8x16xf32>
    %364 = arith.addf %362, %363 : vector<8x16xf32>
    %c1_195 = arith.constant 1 : index
    %c6_196 = arith.constant 6 : index
    %c0_197 = arith.constant 0 : index
    %c0_198 = arith.constant 0 : index
    %365 = vector.load %arg3[%c1_195, %c6_196, %c0_197, %c0_198] : memref<2x8x8x16xf32, #tpu.memory_space<vmem>>, vector<1x1x8x16xf32>
    %366 = vector.shape_cast %365 : vector<1x1x8x16xf32> to vector<8x16xf32>
    %367 = arith.mulf %366, %364 : vector<8x16xf32>
    %cst_199 = arith.constant 1.000000e+00 : f32
    %368 = vector.broadcast %cst_199 : f32 to vector<8x16xf32>
    %369 = arith.subf %368, %366 : vector<8x16xf32>
    %370 = arith.mulf %369, %343 : vector<8x16xf32>
    %371 = arith.addf %367, %370 : vector<8x16xf32>
    %372 = arith.mulf %338, %336 : vector<8x16xf32>
    %cst_200 = arith.constant 1.000000e+00 : f32
    %373 = vector.broadcast %cst_200 : f32 to vector<8x16xf32>
    %374 = arith.subf %373, %338 : vector<8x16xf32>
    %375 = arith.mulf %374, %371 : vector<8x16xf32>
    %376 = arith.addf %372, %375 : vector<8x16xf32>
    %377 = arith.subf %336, %343 : vector<8x16xf32>
    %378 = math.absf %377 : vector<8x16xf32>
    %379 = arith.subf %336, %354 : vector<8x16xf32>
    %380 = math.absf %379 : vector<8x16xf32>
    %381 = arith.addf %378, %380 : vector<8x16xf32>
    %382 = arith.subf %336, %364 : vector<8x16xf32>
    %383 = math.absf %382 : vector<8x16xf32>
    %384 = arith.addf %381, %383 : vector<8x16xf32>
    %385 = arith.subf %336, %371 : vector<8x16xf32>
    %386 = math.absf %385 : vector<8x16xf32>
    %387 = arith.addf %384, %386 : vector<8x16xf32>
    %388 = arith.mulf %387, %338 : vector<8x16xf32>
    %389 = vector.shape_cast %338 : vector<8x16xf32> to vector<1x8x16xf32>
    %cst_201 = arith.constant dense<0.000000e+00> : vector<1xf32>
    %390 = vector.multi_reduction <add>, %389, %cst_201 [1, 2] : vector<1x8x16xf32> to vector<1xf32>
    %391 = vector.shape_cast %390 : vector<1xf32> to vector<1x1x1xf32>
    %392 = vector.extract %391[0, 0, 0] : f32 from vector<1x1x1xf32>
    %393 = vector.broadcast %392 : f32 to vector<1x1xf32>
    %cst_202 = arith.constant 9.99999974E-6 : f32
    %394 = vector.broadcast %cst_202 : f32 to vector<1x1xf32>
    %395 = arith.addf %393, %394 : vector<1x1xf32>
    %396 = vector.shape_cast %388 : vector<8x16xf32> to vector<1x8x16xf32>
    %cst_203 = arith.constant dense<0.000000e+00> : vector<1xf32>
    %397 = vector.multi_reduction <add>, %396, %cst_203 [1, 2] : vector<1x8x16xf32> to vector<1xf32>
    %398 = vector.shape_cast %397 : vector<1xf32> to vector<1x1x1xf32>
    %399 = vector.extract %398[0, 0, 0] : f32 from vector<1x1x1xf32>
    %400 = vector.broadcast %399 : f32 to vector<1x1xf32>
    %401 = arith.divf %400, %395 : vector<1x1xf32>
    %402 = arith.addf %186, %401 : vector<1x1xf32>
    %c1_204 = arith.constant 1 : index
    %c6_205 = arith.constant 6 : index
    %c0_206 = arith.constant 0 : index
    %c0_207 = arith.constant 0 : index
    %403 = vector.load %arg2[%c1_204, %c6_205, %c0_206, %c0_207] : memref<2x8x8x32xf32, #tpu.memory_space<vmem>>, vector<1x1x8x32xf32>
    %404 = vector.shape_cast %403 : vector<1x1x8x32xf32> to vector<8x32xf32>
    %405 = arith.mulf %220, %404 : vector<8x32xf32>
    %c1_208 = arith.constant 1 : index
    %c0_209 = arith.constant 0 : index
    %c0_210 = arith.constant 0 : index
    %406 = vector.load %arg9[%c1_208, %c0_209, %c0_210] : memref<2x16x96xf32, #tpu.memory_space<vmem>>, vector<1x16x96xf32>
    %407 = vector.shape_cast %406 : vector<1x16x96xf32> to vector<16x96xf32>
    %cst_211 = arith.constant dense<0.000000e+00> : vector<8x96xf32>
    %408 = tpu.matmul %376, %407, %cst_211 {dimension_numbers = #tpu.dot_dimension_numbers<[1], [0], [0], [1], [0, 0, 1, 1], [], []>} : vector<8x16xf32>, vector<16x96xf32>, vector<8x96xf32> -> vector<8x96xf32>
    %c1_212 = arith.constant 1 : index
    %c6_213 = arith.constant 6 : index
    %c0_214 = arith.constant 0 : index
    %c0_215 = arith.constant 0 : index
    %409 = vector.load %arg5[%c1_212, %c6_213, %c0_214, %c0_215] : memref<2x8x8x96xf32, #tpu.memory_space<vmem>>, vector<1x1x8x96xf32>
    %410 = vector.shape_cast %409 : vector<1x1x8x96xf32> to vector<8x96xf32>
    %411 = arith.addf %408, %410 : vector<8x96xf32>
    %c1_216 = arith.constant 1 : index
    %c0_217 = arith.constant 0 : index
    %c0_218 = arith.constant 0 : index
    %412 = vector.load %arg10[%c1_216, %c0_217, %c0_218] : memref<2x32x96xf32, #tpu.memory_space<vmem>>, vector<1x32x96xf32>
    %413 = vector.shape_cast %412 : vector<1x32x96xf32> to vector<32x96xf32>
    %cst_219 = arith.constant dense<0.000000e+00> : vector<8x96xf32>
    %414 = tpu.matmul %405, %413, %cst_219 {dimension_numbers = #tpu.dot_dimension_numbers<[1], [0], [0], [1], [0, 0, 1, 1], [], []>} : vector<8x32xf32>, vector<32x96xf32>, vector<8x96xf32> -> vector<8x96xf32>
    %415 = vector.broadcast %12 : vector<1x96xf32> to vector<8x96xf32>
    %416 = arith.addf %414, %415 : vector<8x96xf32>
    %417 = vector.extract_strided_slice %411 {offsets = [0, 0], sizes = [8, 64], strides = [1, 1]} : vector<8x96xf32> to vector<8x64xf32>
    %418 = vector.extract_strided_slice %416 {offsets = [0, 0], sizes = [8, 64], strides = [1, 1]} : vector<8x96xf32> to vector<8x64xf32>
    %419 = arith.addf %417, %418 : vector<8x64xf32>
    %420 = arith.negf %419 : vector<8x64xf32>
    %421 = math.exp %420 : vector<8x64xf32>
    %cst_220 = arith.constant 1.000000e+00 : f32
    %422 = vector.broadcast %cst_220 : f32 to vector<8x64xf32>
    %423 = arith.addf %422, %421 : vector<8x64xf32>
    %424 = arith.divf %422, %423 : vector<8x64xf32>
    %425 = vector.extract_strided_slice %424 {offsets = [0, 0], sizes = [8, 32], strides = [1, 1]} : vector<8x64xf32> to vector<8x32xf32>
    %426 = vector.extract_strided_slice %424 {offsets = [0, 32], sizes = [8, 32], strides = [1, 1]} : vector<8x64xf32> to vector<8x32xf32>
    %427 = vector.extract_strided_slice %411 {offsets = [0, 64], sizes = [8, 32], strides = [1, 1]} : vector<8x96xf32> to vector<8x32xf32>
    %428 = vector.extract_strided_slice %416 {offsets = [0, 64], sizes = [8, 32], strides = [1, 1]} : vector<8x96xf32> to vector<8x32xf32>
    %429 = arith.mulf %425, %428 : vector<8x32xf32>
    %430 = arith.addf %427, %429 : vector<8x32xf32>
    %431 = math.tanh %430 : vector<8x32xf32>
    %cst_221 = arith.constant 1.000000e+00 : f32
    %432 = vector.broadcast %cst_221 : f32 to vector<8x32xf32>
    %433 = arith.subf %432, %426 : vector<8x32xf32>
    %434 = arith.mulf %433, %431 : vector<8x32xf32>
    %435 = arith.mulf %426, %405 : vector<8x32xf32>
    %436 = arith.addf %434, %435 : vector<8x32xf32>
    %c0_222 = arith.constant 0 : index
    %c1_223 = arith.constant 1 : index
    %c0_224 = arith.constant 0 : index
    %c0_225 = arith.constant 0 : index
    %437 = vector.load %arg12[%c0_222, %c1_223, %c0_224, %c0_225] : memref<2x8x8x16xf32, #tpu.memory_space<vmem>>, vector<1x1x8x16xf32>
    %438 = vector.shape_cast %437 : vector<1x1x8x16xf32> to vector<8x16xf32>
    %439 = vector.shape_cast %269 : vector<8x16xf32> to vector<1x1x8x16xf32>
    tpu.vector_store %arg12[%c0_222, %c1_223, %c0_224, %c0_225], %439 {strides = array<i32>} : memref<2x8x8x16xf32, #tpu.memory_space<vmem>>, vector<1x1x8x16xf32>,
    %c0_226 = arith.constant 0 : index
    %c1_227 = arith.constant 1 : index
    %c0_228 = arith.constant 0 : index
    %c0_229 = arith.constant 0 : index
    %440 = vector.load %arg13[%c0_226, %c1_227, %c0_228, %c0_229] : memref<2x8x8x16xf32, #tpu.memory_space<vmem>>, vector<1x1x8x16xf32>
    %441 = vector.shape_cast %440 : vector<1x1x8x16xf32> to vector<8x16xf32>
    %442 = vector.shape_cast %274 : vector<8x16xf32> to vector<1x1x8x16xf32>
    tpu.vector_store %arg13[%c0_226, %c1_227, %c0_228, %c0_229], %442 {strides = array<i32>} : memref<2x8x8x16xf32, #tpu.memory_space<vmem>>, vector<1x1x8x16xf32>,
    %c1_230 = arith.constant 1 : index
    %c6_231 = arith.constant 6 : index
    %c0_232 = arith.constant 0 : index
    %c0_233 = arith.constant 0 : index
    %443 = vector.load %arg12[%c1_230, %c6_231, %c0_232, %c0_233] : memref<2x8x8x16xf32, #tpu.memory_space<vmem>>, vector<1x1x8x16xf32>
    %444 = vector.shape_cast %443 : vector<1x1x8x16xf32> to vector<8x16xf32>
    %445 = vector.shape_cast %371 : vector<8x16xf32> to vector<1x1x8x16xf32>
    tpu.vector_store %arg12[%c1_230, %c6_231, %c0_232, %c0_233], %445 {strides = array<i32>} : memref<2x8x8x16xf32, #tpu.memory_space<vmem>>, vector<1x1x8x16xf32>,
    %c1_234 = arith.constant 1 : index
    %c6_235 = arith.constant 6 : index
    %c0_236 = arith.constant 0 : index
    %c0_237 = arith.constant 0 : index
    %446 = vector.load %arg13[%c1_234, %c6_235, %c0_236, %c0_237] : memref<2x8x8x16xf32, #tpu.memory_space<vmem>>, vector<1x1x8x16xf32>
    %447 = vector.shape_cast %446 : vector<1x1x8x16xf32> to vector<8x16xf32>
    %448 = vector.shape_cast %376 : vector<8x16xf32> to vector<1x1x8x16xf32>
    tpu.vector_store %arg13[%c1_234, %c6_235, %c0_236, %c0_237], %448 {strides = array<i32>} : memref<2x8x8x16xf32, #tpu.memory_space<vmem>>, vector<1x1x8x16xf32>,
    %c2 = arith.constant 2 : index
    %c0_238 = arith.constant 0 : index
    %c0_239 = arith.constant 0 : index
    %449 = vector.load %arg0[%c2, %c0_238, %c0_239] : memref<8x8x16xf32, #tpu.memory_space<vmem>>, vector<1x8x16xf32>
    %450 = vector.shape_cast %449 : vector<1x8x16xf32> to vector<8x16xf32>
    %c2_240 = arith.constant 2 : index
    %c0_241 = arith.constant 0 : index
    %c0_242 = arith.constant 0 : index
    %451 = vector.load %arg1[%c2_240, %c0_241, %c0_242] : memref<8x8x16xf32, #tpu.memory_space<vmem>>, vector<1x8x16xf32>
    %452 = vector.shape_cast %451 : vector<1x8x16xf32> to vector<8x16xf32>
    %c0_243 = arith.constant 0 : index
    %c0_244 = arith.constant 0 : index
    %c0_245 = arith.constant 0 : index
    %453 = vector.load %arg6[%c0_243, %c0_244, %c0_245] : memref<2x32x16xf32, #tpu.memory_space<vmem>>, vector<1x32x16xf32>
    %454 = vector.shape_cast %453 : vector<1x32x16xf32> to vector<32x16xf32>
    %cst_246 = arith.constant dense<0.000000e+00> : vector<8x16xf32>
    %455 = tpu.matmul %334, %454, %cst_246 {dimension_numbers = #tpu.dot_dimension_numbers<[1], [0], [0], [1], [0, 0, 1, 1], [], []>} : vector<8x32xf32>, vector<32x16xf32>, vector<8x16xf32> -> vector<8x16xf32>
    %456 = vector.broadcast %2 : vector<1x16xf32> to vector<8x16xf32>
    %457 = arith.addf %455, %456 : vector<8x16xf32>
    %458 = arith.mulf %452, %450 : vector<8x16xf32>
    %cst_247 = arith.constant 1.000000e+00 : f32
    %459 = vector.broadcast %cst_247 : f32 to vector<8x16xf32>
    %460 = arith.subf %459, %452 : vector<8x16xf32>
    %461 = arith.mulf %460, %457 : vector<8x16xf32>
    %462 = arith.addf %458, %461 : vector<8x16xf32>
    %c0_248 = arith.constant 0 : index
    %c0_249 = arith.constant 0 : index
    %c0_250 = arith.constant 0 : index
    %463 = vector.load %arg7[%c0_248, %c0_249, %c0_250] : memref<2x16x16xf32, #tpu.memory_space<vmem>>, vector<1x16x16xf32>
    %464 = vector.shape_cast %463 : vector<1x16x16xf32> to vector<16x16xf32>
    %cst_251 = arith.constant dense<0.000000e+00> : vector<8x16xf32>
    %465 = tpu.matmul %462, %464, %cst_251 {dimension_numbers = #tpu.dot_dimension_numbers<[1], [0], [0], [1], [0, 0, 1, 1], [], []>} : vector<8x16xf32>, vector<16x16xf32>, vector<8x16xf32> -> vector<8x16xf32>
    %c0_252 = arith.constant 0 : index
    %c2_253 = arith.constant 2 : index
    %c0_254 = arith.constant 0 : index
    %c0_255 = arith.constant 0 : index
    %466 = vector.load %arg4[%c0_252, %c2_253, %c0_254, %c0_255] : memref<2x8x8x16xf32, #tpu.memory_space<vmem>>, vector<1x1x8x16xf32>
    %467 = vector.shape_cast %466 : vector<1x1x8x16xf32> to vector<8x16xf32>
    %468 = arith.addf %465, %467 : vector<8x16xf32>
    %469 = arith.mulf %452, %450 : vector<8x16xf32>
    %cst_256 = arith.constant 1.000000e+00 : f32
    %470 = vector.broadcast %cst_256 : f32 to vector<8x16xf32>
    %471 = arith.subf %470, %452 : vector<8x16xf32>
    %472 = arith.mulf %471, %468 : vector<8x16xf32>
    %473 = arith.addf %469, %472 : vector<8x16xf32>
    %c0_257 = arith.constant 0 : index
    %c0_258 = arith.constant 0 : index
    %c0_259 = arith.constant 0 : index
    %474 = vector.load %arg8[%c0_257, %c0_258, %c0_259] : memref<2x16x16xf32, #tpu.memory_space<vmem>>, vector<1x16x16xf32>
    %475 = vector.shape_cast %474 : vector<1x16x16xf32> to vector<16x16xf32>
    %cst_260 = arith.constant dense<0.000000e+00> : vector<8x16xf32>
    %476 = tpu.matmul %473, %475, %cst_260 {dimension_numbers = #tpu.dot_dimension_numbers<[1], [0], [0], [1], [0, 0, 1, 1], [], []>} : vector<8x16xf32>, vector<16x16xf32>, vector<8x16xf32> -> vector<8x16xf32>
    %477 = vector.broadcast %6 : vector<1x16xf32> to vector<8x16xf32>
    %478 = arith.addf %476, %477 : vector<8x16xf32>
    %c0_261 = arith.constant 0 : index
    %c2_262 = arith.constant 2 : index
    %c0_263 = arith.constant 0 : index
    %c0_264 = arith.constant 0 : index
    %479 = vector.load %arg3[%c0_261, %c2_262, %c0_263, %c0_264] : memref<2x8x8x16xf32, #tpu.memory_space<vmem>>, vector<1x1x8x16xf32>
    %480 = vector.shape_cast %479 : vector<1x1x8x16xf32> to vector<8x16xf32>
    %481 = arith.mulf %480, %478 : vector<8x16xf32>
    %cst_265 = arith.constant 1.000000e+00 : f32
    %482 = vector.broadcast %cst_265 : f32 to vector<8x16xf32>
    %483 = arith.subf %482, %480 : vector<8x16xf32>
    %484 = arith.mulf %483, %457 : vector<8x16xf32>
    %485 = arith.addf %481, %484 : vector<8x16xf32>
    %486 = arith.mulf %452, %450 : vector<8x16xf32>
    %cst_266 = arith.constant 1.000000e+00 : f32
    %487 = vector.broadcast %cst_266 : f32 to vector<8x16xf32>
    %488 = arith.subf %487, %452 : vector<8x16xf32>
    %489 = arith.mulf %488, %485 : vector<8x16xf32>
    %490 = arith.addf %486, %489 : vector<8x16xf32>
    %491 = arith.subf %450, %457 : vector<8x16xf32>
    %492 = math.absf %491 : vector<8x16xf32>
    %493 = arith.subf %450, %468 : vector<8x16xf32>
    %494 = math.absf %493 : vector<8x16xf32>
    %495 = arith.addf %492, %494 : vector<8x16xf32>
    %496 = arith.subf %450, %478 : vector<8x16xf32>
    %497 = math.absf %496 : vector<8x16xf32>
    %498 = arith.addf %495, %497 : vector<8x16xf32>
    %499 = arith.subf %450, %485 : vector<8x16xf32>
    %500 = math.absf %499 : vector<8x16xf32>
    %501 = arith.addf %498, %500 : vector<8x16xf32>
    %502 = arith.mulf %501, %452 : vector<8x16xf32>
    %503 = vector.shape_cast %452 : vector<8x16xf32> to vector<1x8x16xf32>
    %cst_267 = arith.constant dense<0.000000e+00> : vector<1xf32>
    %504 = vector.multi_reduction <add>, %503, %cst_267 [1, 2] : vector<1x8x16xf32> to vector<1xf32>
    %505 = vector.shape_cast %504 : vector<1xf32> to vector<1x1x1xf32>
    %506 = vector.extract %505[0, 0, 0] : f32 from vector<1x1x1xf32>
    %507 = vector.broadcast %506 : f32 to vector<1x1xf32>
    %cst_268 = arith.constant 9.99999974E-6 : f32
    %508 = vector.broadcast %cst_268 : f32 to vector<1x1xf32>
    %509 = arith.addf %507, %508 : vector<1x1xf32>
    %510 = vector.shape_cast %502 : vector<8x16xf32> to vector<1x8x16xf32>
    %cst_269 = arith.constant dense<0.000000e+00> : vector<1xf32>
    %511 = vector.multi_reduction <add>, %510, %cst_269 [1, 2] : vector<1x8x16xf32> to vector<1xf32>
    %512 = vector.shape_cast %511 : vector<1xf32> to vector<1x1x1xf32>
    %513 = vector.extract %512[0, 0, 0] : f32 from vector<1x1x1xf32>
    %514 = vector.broadcast %513 : f32 to vector<1x1xf32>
    %515 = arith.divf %514, %509 : vector<1x1xf32>
    %516 = arith.addf %300, %515 : vector<1x1xf32>
    %c0_270 = arith.constant 0 : index
    %c2_271 = arith.constant 2 : index
    %c0_272 = arith.constant 0 : index
    %c0_273 = arith.constant 0 : index
    %517 = vector.load %arg2[%c0_270, %c2_271, %c0_272, %c0_273] : memref<2x8x8x32xf32, #tpu.memory_space<vmem>>, vector<1x1x8x32xf32>
    %518 = vector.shape_cast %517 : vector<1x1x8x32xf32> to vector<8x32xf32>
    %519 = arith.mulf %334, %518 : vector<8x32xf32>
    %c0_274 = arith.constant 0 : index
    %c0_275 = arith.constant 0 : index
    %c0_276 = arith.constant 0 : index
    %520 = vector.load %arg9[%c0_274, %c0_275, %c0_276] : memref<2x16x96xf32, #tpu.memory_space<vmem>>, vector<1x16x96xf32>
    %521 = vector.shape_cast %520 : vector<1x16x96xf32> to vector<16x96xf32>
    %cst_277 = arith.constant dense<0.000000e+00> : vector<8x96xf32>
    %522 = tpu.matmul %490, %521, %cst_277 {dimension_numbers = #tpu.dot_dimension_numbers<[1], [0], [0], [1], [0, 0, 1, 1], [], []>} : vector<8x16xf32>, vector<16x96xf32>, vector<8x96xf32> -> vector<8x96xf32>
    %c0_278 = arith.constant 0 : index
    %c2_279 = arith.constant 2 : index
    %c0_280 = arith.constant 0 : index
    %c0_281 = arith.constant 0 : index
    %523 = vector.load %arg5[%c0_278, %c2_279, %c0_280, %c0_281] : memref<2x8x8x96xf32, #tpu.memory_space<vmem>>, vector<1x1x8x96xf32>
    %524 = vector.shape_cast %523 : vector<1x1x8x96xf32> to vector<8x96xf32>
    %525 = arith.addf %522, %524 : vector<8x96xf32>
    %c0_282 = arith.constant 0 : index
    %c0_283 = arith.constant 0 : index
    %c0_284 = arith.constant 0 : index
    %526 = vector.load %arg10[%c0_282, %c0_283, %c0_284] : memref<2x32x96xf32, #tpu.memory_space<vmem>>, vector<1x32x96xf32>
    %527 = vector.shape_cast %526 : vector<1x32x96xf32> to vector<32x96xf32>
    %cst_285 = arith.constant dense<0.000000e+00> : vector<8x96xf32>
    %528 = tpu.matmul %519, %527, %cst_285 {dimension_numbers = #tpu.dot_dimension_numbers<[1], [0], [0], [1], [0, 0, 1, 1], [], []>} : vector<8x32xf32>, vector<32x96xf32>, vector<8x96xf32> -> vector<8x96xf32>
    %529 = vector.broadcast %10 : vector<1x96xf32> to vector<8x96xf32>
    %530 = arith.addf %528, %529 : vector<8x96xf32>
    %531 = vector.extract_strided_slice %525 {offsets = [0, 0], sizes = [8, 64], strides = [1, 1]} : vector<8x96xf32> to vector<8x64xf32>
    %532 = vector.extract_strided_slice %530 {offsets = [0, 0], sizes = [8, 64], strides = [1, 1]} : vector<8x96xf32> to vector<8x64xf32>
    %533 = arith.addf %531, %532 : vector<8x64xf32>
    %534 = arith.negf %533 : vector<8x64xf32>
    %535 = math.exp %534 : vector<8x64xf32>
    %cst_286 = arith.constant 1.000000e+00 : f32
    %536 = vector.broadcast %cst_286 : f32 to vector<8x64xf32>
    %537 = arith.addf %536, %535 : vector<8x64xf32>
    %538 = arith.divf %536, %537 : vector<8x64xf32>
    %539 = vector.extract_strided_slice %538 {offsets = [0, 0], sizes = [8, 32], strides = [1, 1]} : vector<8x64xf32> to vector<8x32xf32>
    %540 = vector.extract_strided_slice %538 {offsets = [0, 32], sizes = [8, 32], strides = [1, 1]} : vector<8x64xf32> to vector<8x32xf32>
    %541 = vector.extract_strided_slice %525 {offsets = [0, 64], sizes = [8, 32], strides = [1, 1]} : vector<8x96xf32> to vector<8x32xf32>
    %542 = vector.extract_strided_slice %530 {offsets = [0, 64], sizes = [8, 32], strides = [1, 1]} : vector<8x96xf32> to vector<8x32xf32>
    %543 = arith.mulf %539, %542 : vector<8x32xf32>
    %544 = arith.addf %541, %543 : vector<8x32xf32>
    %545 = math.tanh %544 : vector<8x32xf32>
    %cst_287 = arith.constant 1.000000e+00 : f32
    %546 = vector.broadcast %cst_287 : f32 to vector<8x32xf32>
    %547 = arith.subf %546, %540 : vector<8x32xf32>
    %548 = arith.mulf %547, %545 : vector<8x32xf32>
    %549 = arith.mulf %540, %519 : vector<8x32xf32>
    %550 = arith.addf %548, %549 : vector<8x32xf32>
    %c5 = arith.constant 5 : index
    %c0_288 = arith.constant 0 : index
    %c0_289 = arith.constant 0 : index
    %551 = vector.load %arg0[%c5, %c0_288, %c0_289] : memref<8x8x16xf32, #tpu.memory_space<vmem>>, vector<1x8x16xf32>
    %552 = vector.shape_cast %551 : vector<1x8x16xf32> to vector<8x16xf32>
    %c5_290 = arith.constant 5 : index
    %c0_291 = arith.constant 0 : index
    %c0_292 = arith.constant 0 : index
    %553 = vector.load %arg1[%c5_290, %c0_291, %c0_292] : memref<8x8x16xf32, #tpu.memory_space<vmem>>, vector<1x8x16xf32>
    %554 = vector.shape_cast %553 : vector<1x8x16xf32> to vector<8x16xf32>
    %c1_293 = arith.constant 1 : index
    %c0_294 = arith.constant 0 : index
    %c0_295 = arith.constant 0 : index
    %555 = vector.load %arg6[%c1_293, %c0_294, %c0_295] : memref<2x32x16xf32, #tpu.memory_space<vmem>>, vector<1x32x16xf32>
    %556 = vector.shape_cast %555 : vector<1x32x16xf32> to vector<32x16xf32>
    %cst_296 = arith.constant dense<0.000000e+00> : vector<8x16xf32>
    %557 = tpu.matmul %436, %556, %cst_296 {dimension_numbers = #tpu.dot_dimension_numbers<[1], [0], [0], [1], [0, 0, 1, 1], [], []>} : vector<8x32xf32>, vector<32x16xf32>, vector<8x16xf32> -> vector<8x16xf32>
    %558 = vector.broadcast %4 : vector<1x16xf32> to vector<8x16xf32>
    %559 = arith.addf %557, %558 : vector<8x16xf32>
    %560 = arith.mulf %554, %552 : vector<8x16xf32>
    %cst_297 = arith.constant 1.000000e+00 : f32
    %561 = vector.broadcast %cst_297 : f32 to vector<8x16xf32>
    %562 = arith.subf %561, %554 : vector<8x16xf32>
    %563 = arith.mulf %562, %559 : vector<8x16xf32>
    %564 = arith.addf %560, %563 : vector<8x16xf32>
    %c1_298 = arith.constant 1 : index
    %c0_299 = arith.constant 0 : index
    %c0_300 = arith.constant 0 : index
    %565 = vector.load %arg7[%c1_298, %c0_299, %c0_300] : memref<2x16x16xf32, #tpu.memory_space<vmem>>, vector<1x16x16xf32>
    %566 = vector.shape_cast %565 : vector<1x16x16xf32> to vector<16x16xf32>
    %cst_301 = arith.constant dense<0.000000e+00> : vector<8x16xf32>
    %567 = tpu.matmul %564, %566, %cst_301 {dimension_numbers = #tpu.dot_dimension_numbers<[1], [0], [0], [1], [0, 0, 1, 1], [], []>} : vector<8x16xf32>, vector<16x16xf32>, vector<8x16xf32> -> vector<8x16xf32>
    %c1_302 = arith.constant 1 : index
    %c5_303 = arith.constant 5 : index
    %c0_304 = arith.constant 0 : index
    %c0_305 = arith.constant 0 : index
    %568 = vector.load %arg4[%c1_302, %c5_303, %c0_304, %c0_305] : memref<2x8x8x16xf32, #tpu.memory_space<vmem>>, vector<1x1x8x16xf32>
    %569 = vector.shape_cast %568 : vector<1x1x8x16xf32> to vector<8x16xf32>
    %570 = arith.addf %567, %569 : vector<8x16xf32>
    %571 = arith.mulf %554, %552 : vector<8x16xf32>
    %cst_306 = arith.constant 1.000000e+00 : f32
    %572 = vector.broadcast %cst_306 : f32 to vector<8x16xf32>
    %573 = arith.subf %572, %554 : vector<8x16xf32>
    %574 = arith.mulf %573, %570 : vector<8x16xf32>
    %575 = arith.addf %571, %574 : vector<8x16xf32>
    %c1_307 = arith.constant 1 : index
    %c0_308 = arith.constant 0 : index
    %c0_309 = arith.constant 0 : index
    %576 = vector.load %arg8[%c1_307, %c0_308, %c0_309] : memref<2x16x16xf32, #tpu.memory_space<vmem>>, vector<1x16x16xf32>
    %577 = vector.shape_cast %576 : vector<1x16x16xf32> to vector<16x16xf32>
    %cst_310 = arith.constant dense<0.000000e+00> : vector<8x16xf32>
    %578 = tpu.matmul %575, %577, %cst_310 {dimension_numbers = #tpu.dot_dimension_numbers<[1], [0], [0], [1], [0, 0, 1, 1], [], []>} : vector<8x16xf32>, vector<16x16xf32>, vector<8x16xf32> -> vector<8x16xf32>
    %579 = vector.broadcast %8 : vector<1x16xf32> to vector<8x16xf32>
    %580 = arith.addf %578, %579 : vector<8x16xf32>
    %c1_311 = arith.constant 1 : index
    %c5_312 = arith.constant 5 : index
    %c0_313 = arith.constant 0 : index
    %c0_314 = arith.constant 0 : index
    %581 = vector.load %arg3[%c1_311, %c5_312, %c0_313, %c0_314] : memref<2x8x8x16xf32, #tpu.memory_space<vmem>>, vector<1x1x8x16xf32>
    %582 = vector.shape_cast %581 : vector<1x1x8x16xf32> to vector<8x16xf32>
    %583 = arith.mulf %582, %580 : vector<8x16xf32>
    %cst_315 = arith.constant 1.000000e+00 : f32
    %584 = vector.broadcast %cst_315 : f32 to vector<8x16xf32>
    %585 = arith.subf %584, %582 : vector<8x16xf32>
    %586 = arith.mulf %585, %559 : vector<8x16xf32>
    %587 = arith.addf %583, %586 : vector<8x16xf32>
    %588 = arith.mulf %554, %552 : vector<8x16xf32>
    %cst_316 = arith.constant 1.000000e+00 : f32
    %589 = vector.broadcast %cst_316 : f32 to vector<8x16xf32>
    %590 = arith.subf %589, %554 : vector<8x16xf32>
    %591 = arith.mulf %590, %587 : vector<8x16xf32>
    %592 = arith.addf %588, %591 : vector<8x16xf32>
    %593 = arith.subf %552, %559 : vector<8x16xf32>
    %594 = math.absf %593 : vector<8x16xf32>
    %595 = arith.subf %552, %570 : vector<8x16xf32>
    %596 = math.absf %595 : vector<8x16xf32>
    %597 = arith.addf %594, %596 : vector<8x16xf32>
    %598 = arith.subf %552, %580 : vector<8x16xf32>
    %599 = math.absf %598 : vector<8x16xf32>
    %600 = arith.addf %597, %599 : vector<8x16xf32>
    %601 = arith.subf %552, %587 : vector<8x16xf32>
    %602 = math.absf %601 : vector<8x16xf32>
    %603 = arith.addf %600, %602 : vector<8x16xf32>
    %604 = arith.mulf %603, %554 : vector<8x16xf32>
    %605 = vector.shape_cast %554 : vector<8x16xf32> to vector<1x8x16xf32>
    %cst_317 = arith.constant dense<0.000000e+00> : vector<1xf32>
    %606 = vector.multi_reduction <add>, %605, %cst_317 [1, 2] : vector<1x8x16xf32> to vector<1xf32>
    %607 = vector.shape_cast %606 : vector<1xf32> to vector<1x1x1xf32>
    %608 = vector.extract %607[0, 0, 0] : f32 from vector<1x1x1xf32>
    %609 = vector.broadcast %608 : f32 to vector<1x1xf32>
    %cst_318 = arith.constant 9.99999974E-6 : f32
    %610 = vector.broadcast %cst_318 : f32 to vector<1x1xf32>
    %611 = arith.addf %609, %610 : vector<1x1xf32>
    %612 = vector.shape_cast %604 : vector<8x16xf32> to vector<1x8x16xf32>
    %cst_319 = arith.constant dense<0.000000e+00> : vector<1xf32>
    %613 = vector.multi_reduction <add>, %612, %cst_319 [1, 2] : vector<1x8x16xf32> to vector<1xf32>
    %614 = vector.shape_cast %613 : vector<1xf32> to vector<1x1x1xf32>
    %615 = vector.extract %614[0, 0, 0] : f32 from vector<1x1x1xf32>
    %616 = vector.broadcast %615 : f32 to vector<1x1xf32>
    %617 = arith.divf %616, %611 : vector<1x1xf32>
    %618 = arith.addf %402, %617 : vector<1x1xf32>
    %c1_320 = arith.constant 1 : index
    %c5_321 = arith.constant 5 : index
    %c0_322 = arith.constant 0 : index
    %c0_323 = arith.constant 0 : index
    %619 = vector.load %arg2[%c1_320, %c5_321, %c0_322, %c0_323] : memref<2x8x8x32xf32, #tpu.memory_space<vmem>>, vector<1x1x8x32xf32>
    %620 = vector.shape_cast %619 : vector<1x1x8x32xf32> to vector<8x32xf32>
    %621 = arith.mulf %436, %620 : vector<8x32xf32>
    %c1_324 = arith.constant 1 : index
    %c0_325 = arith.constant 0 : index
    %c0_326 = arith.constant 0 : index
    %622 = vector.load %arg9[%c1_324, %c0_325, %c0_326] : memref<2x16x96xf32, #tpu.memory_space<vmem>>, vector<1x16x96xf32>
    %623 = vector.shape_cast %622 : vector<1x16x96xf32> to vector<16x96xf32>
    %cst_327 = arith.constant dense<0.000000e+00> : vector<8x96xf32>
    %624 = tpu.matmul %592, %623, %cst_327 {dimension_numbers = #tpu.dot_dimension_numbers<[1], [0], [0], [1], [0, 0, 1, 1], [], []>} : vector<8x16xf32>, vector<16x96xf32>, vector<8x96xf32> -> vector<8x96xf32>
    %c1_328 = arith.constant 1 : index
    %c5_329 = arith.constant 5 : index
    %c0_330 = arith.constant 0 : index
    %c0_331 = arith.constant 0 : index
    %625 = vector.load %arg5[%c1_328, %c5_329, %c0_330, %c0_331] : memref<2x8x8x96xf32, #tpu.memory_space<vmem>>, vector<1x1x8x96xf32>
    %626 = vector.shape_cast %625 : vector<1x1x8x96xf32> to vector<8x96xf32>
    %627 = arith.addf %624, %626 : vector<8x96xf32>
    %c1_332 = arith.constant 1 : index
    %c0_333 = arith.constant 0 : index
    %c0_334 = arith.constant 0 : index
    %628 = vector.load %arg10[%c1_332, %c0_333, %c0_334] : memref<2x32x96xf32, #tpu.memory_space<vmem>>, vector<1x32x96xf32>
    %629 = vector.shape_cast %628 : vector<1x32x96xf32> to vector<32x96xf32>
    %cst_335 = arith.constant dense<0.000000e+00> : vector<8x96xf32>
    %630 = tpu.matmul %621, %629, %cst_335 {dimension_numbers = #tpu.dot_dimension_numbers<[1], [0], [0], [1], [0, 0, 1, 1], [], []>} : vector<8x32xf32>, vector<32x96xf32>, vector<8x96xf32> -> vector<8x96xf32>
    %631 = vector.broadcast %12 : vector<1x96xf32> to vector<8x96xf32>
    %632 = arith.addf %630, %631 : vector<8x96xf32>
    %633 = vector.extract_strided_slice %627 {offsets = [0, 0], sizes = [8, 64], strides = [1, 1]} : vector<8x96xf32> to vector<8x64xf32>
    %634 = vector.extract_strided_slice %632 {offsets = [0, 0], sizes = [8, 64], strides = [1, 1]} : vector<8x96xf32> to vector<8x64xf32>
    %635 = arith.addf %633, %634 : vector<8x64xf32>
    %636 = arith.negf %635 : vector<8x64xf32>
    %637 = math.exp %636 : vector<8x64xf32>
    %cst_336 = arith.constant 1.000000e+00 : f32
    %638 = vector.broadcast %cst_336 : f32 to vector<8x64xf32>
    %639 = arith.addf %638, %637 : vector<8x64xf32>
    %640 = arith.divf %638, %639 : vector<8x64xf32>
    %641 = vector.extract_strided_slice %640 {offsets = [0, 0], sizes = [8, 32], strides = [1, 1]} : vector<8x64xf32> to vector<8x32xf32>
    %642 = vector.extract_strided_slice %640 {offsets = [0, 32], sizes = [8, 32], strides = [1, 1]} : vector<8x64xf32> to vector<8x32xf32>
    %643 = vector.extract_strided_slice %627 {offsets = [0, 64], sizes = [8, 32], strides = [1, 1]} : vector<8x96xf32> to vector<8x32xf32>
    %644 = vector.extract_strided_slice %632 {offsets = [0, 64], sizes = [8, 32], strides = [1, 1]} : vector<8x96xf32> to vector<8x32xf32>
    %645 = arith.mulf %641, %644 : vector<8x32xf32>
    %646 = arith.addf %643, %645 : vector<8x32xf32>
    %647 = math.tanh %646 : vector<8x32xf32>
    %cst_337 = arith.constant 1.000000e+00 : f32
    %648 = vector.broadcast %cst_337 : f32 to vector<8x32xf32>
    %649 = arith.subf %648, %642 : vector<8x32xf32>
    %650 = arith.mulf %649, %647 : vector<8x32xf32>
    %651 = arith.mulf %642, %621 : vector<8x32xf32>
    %652 = arith.addf %650, %651 : vector<8x32xf32>
    %c0_338 = arith.constant 0 : index
    %c2_339 = arith.constant 2 : index
    %c0_340 = arith.constant 0 : index
    %c0_341 = arith.constant 0 : index
    %653 = vector.load %arg12[%c0_338, %c2_339, %c0_340, %c0_341] : memref<2x8x8x16xf32, #tpu.memory_space<vmem>>, vector<1x1x8x16xf32>
    %654 = vector.shape_cast %653 : vector<1x1x8x16xf32> to vector<8x16xf32>
    %655 = vector.shape_cast %485 : vector<8x16xf32> to vector<1x1x8x16xf32>
    tpu.vector_store %arg12[%c0_338, %c2_339, %c0_340, %c0_341], %655 {strides = array<i32>} : memref<2x8x8x16xf32, #tpu.memory_space<vmem>>, vector<1x1x8x16xf32>,
    %c0_342 = arith.constant 0 : index
    %c2_343 = arith.constant 2 : index
    %c0_344 = arith.constant 0 : index
    %c0_345 = arith.constant 0 : index
    %656 = vector.load %arg13[%c0_342, %c2_343, %c0_344, %c0_345] : memref<2x8x8x16xf32, #tpu.memory_space<vmem>>, vector<1x1x8x16xf32>
    %657 = vector.shape_cast %656 : vector<1x1x8x16xf32> to vector<8x16xf32>
    %658 = vector.shape_cast %490 : vector<8x16xf32> to vector<1x1x8x16xf32>
    tpu.vector_store %arg13[%c0_342, %c2_343, %c0_344, %c0_345], %658 {strides = array<i32>} : memref<2x8x8x16xf32, #tpu.memory_space<vmem>>, vector<1x1x8x16xf32>,
    %c1_346 = arith.constant 1 : index
    %c5_347 = arith.constant 5 : index
    %c0_348 = arith.constant 0 : index
    %c0_349 = arith.constant 0 : index
    %659 = vector.load %arg12[%c1_346, %c5_347, %c0_348, %c0_349] : memref<2x8x8x16xf32, #tpu.memory_space<vmem>>, vector<1x1x8x16xf32>
    %660 = vector.shape_cast %659 : vector<1x1x8x16xf32> to vector<8x16xf32>
    %661 = vector.shape_cast %587 : vector<8x16xf32> to vector<1x1x8x16xf32>
    tpu.vector_store %arg12[%c1_346, %c5_347, %c0_348, %c0_349], %661 {strides = array<i32>} : memref<2x8x8x16xf32, #tpu.memory_space<vmem>>, vector<1x1x8x16xf32>,
    %c1_350 = arith.constant 1 : index
    %c5_351 = arith.constant 5 : index
    %c0_352 = arith.constant 0 : index
    %c0_353 = arith.constant 0 : index
    %662 = vector.load %arg13[%c1_350, %c5_351, %c0_352, %c0_353] : memref<2x8x8x16xf32, #tpu.memory_space<vmem>>, vector<1x1x8x16xf32>
    %663 = vector.shape_cast %662 : vector<1x1x8x16xf32> to vector<8x16xf32>
    %664 = vector.shape_cast %592 : vector<8x16xf32> to vector<1x1x8x16xf32>
    tpu.vector_store %arg13[%c1_350, %c5_351, %c0_352, %c0_353], %664 {strides = array<i32>} : memref<2x8x8x16xf32, #tpu.memory_space<vmem>>, vector<1x1x8x16xf32>,
    %c3 = arith.constant 3 : index
    %c0_354 = arith.constant 0 : index
    %c0_355 = arith.constant 0 : index
    %665 = vector.load %arg0[%c3, %c0_354, %c0_355] : memref<8x8x16xf32, #tpu.memory_space<vmem>>, vector<1x8x16xf32>
    %666 = vector.shape_cast %665 : vector<1x8x16xf32> to vector<8x16xf32>
    %c3_356 = arith.constant 3 : index
    %c0_357 = arith.constant 0 : index
    %c0_358 = arith.constant 0 : index
    %667 = vector.load %arg1[%c3_356, %c0_357, %c0_358] : memref<8x8x16xf32, #tpu.memory_space<vmem>>, vector<1x8x16xf32>
    %668 = vector.shape_cast %667 : vector<1x8x16xf32> to vector<8x16xf32>
    %c0_359 = arith.constant 0 : index
    %c0_360 = arith.constant 0 : index
    %c0_361 = arith.constant 0 : index
    %669 = vector.load %arg6[%c0_359, %c0_360, %c0_361] : memref<2x32x16xf32, #tpu.memory_space<vmem>>, vector<1x32x16xf32>
    %670 = vector.shape_cast %669 : vector<1x32x16xf32> to vector<32x16xf32>
    %cst_362 = arith.constant dense<0.000000e+00> : vector<8x16xf32>
    %671 = tpu.matmul %550, %670, %cst_362 {dimension_numbers = #tpu.dot_dimension_numbers<[1], [0], [0], [1], [0, 0, 1, 1], [], []>} : vector<8x32xf32>, vector<32x16xf32>, vector<8x16xf32> -> vector<8x16xf32>
    %672 = vector.broadcast %2 : vector<1x16xf32> to vector<8x16xf32>
    %673 = arith.addf %671, %672 : vector<8x16xf32>
    %674 = arith.mulf %668, %666 : vector<8x16xf32>
    %cst_363 = arith.constant 1.000000e+00 : f32
    %675 = vector.broadcast %cst_363 : f32 to vector<8x16xf32>
    %676 = arith.subf %675, %668 : vector<8x16xf32>
    %677 = arith.mulf %676, %673 : vector<8x16xf32>
    %678 = arith.addf %674, %677 : vector<8x16xf32>
    %c0_364 = arith.constant 0 : index
    %c0_365 = arith.constant 0 : index
    %c0_366 = arith.constant 0 : index
    %679 = vector.load %arg7[%c0_364, %c0_365, %c0_366] : memref<2x16x16xf32, #tpu.memory_space<vmem>>, vector<1x16x16xf32>
    %680 = vector.shape_cast %679 : vector<1x16x16xf32> to vector<16x16xf32>
    %cst_367 = arith.constant dense<0.000000e+00> : vector<8x16xf32>
    %681 = tpu.matmul %678, %680, %cst_367 {dimension_numbers = #tpu.dot_dimension_numbers<[1], [0], [0], [1], [0, 0, 1, 1], [], []>} : vector<8x16xf32>, vector<16x16xf32>, vector<8x16xf32> -> vector<8x16xf32>
    %c0_368 = arith.constant 0 : index
    %c3_369 = arith.constant 3 : index
    %c0_370 = arith.constant 0 : index
    %c0_371 = arith.constant 0 : index
    %682 = vector.load %arg4[%c0_368, %c3_369, %c0_370, %c0_371] : memref<2x8x8x16xf32, #tpu.memory_space<vmem>>, vector<1x1x8x16xf32>
    %683 = vector.shape_cast %682 : vector<1x1x8x16xf32> to vector<8x16xf32>
    %684 = arith.addf %681, %683 : vector<8x16xf32>
    %685 = arith.mulf %668, %666 : vector<8x16xf32>
    %cst_372 = arith.constant 1.000000e+00 : f32
    %686 = vector.broadcast %cst_372 : f32 to vector<8x16xf32>
    %687 = arith.subf %686, %668 : vector<8x16xf32>
    %688 = arith.mulf %687, %684 : vector<8x16xf32>
    %689 = arith.addf %685, %688 : vector<8x16xf32>
    %c0_373 = arith.constant 0 : index
    %c0_374 = arith.constant 0 : index
    %c0_375 = arith.constant 0 : index
    %690 = vector.load %arg8[%c0_373, %c0_374, %c0_375] : memref<2x16x16xf32, #tpu.memory_space<vmem>>, vector<1x16x16xf32>
    %691 = vector.shape_cast %690 : vector<1x16x16xf32> to vector<16x16xf32>
    %cst_376 = arith.constant dense<0.000000e+00> : vector<8x16xf32>
    %692 = tpu.matmul %689, %691, %cst_376 {dimension_numbers = #tpu.dot_dimension_numbers<[1], [0], [0], [1], [0, 0, 1, 1], [], []>} : vector<8x16xf32>, vector<16x16xf32>, vector<8x16xf32> -> vector<8x16xf32>
    %693 = vector.broadcast %6 : vector<1x16xf32> to vector<8x16xf32>
    %694 = arith.addf %692, %693 : vector<8x16xf32>
    %c0_377 = arith.constant 0 : index
    %c3_378 = arith.constant 3 : index
    %c0_379 = arith.constant 0 : index
    %c0_380 = arith.constant 0 : index
    %695 = vector.load %arg3[%c0_377, %c3_378, %c0_379, %c0_380] : memref<2x8x8x16xf32, #tpu.memory_space<vmem>>, vector<1x1x8x16xf32>
    %696 = vector.shape_cast %695 : vector<1x1x8x16xf32> to vector<8x16xf32>
    %697 = arith.mulf %696, %694 : vector<8x16xf32>
    %cst_381 = arith.constant 1.000000e+00 : f32
    %698 = vector.broadcast %cst_381 : f32 to vector<8x16xf32>
    %699 = arith.subf %698, %696 : vector<8x16xf32>
    %700 = arith.mulf %699, %673 : vector<8x16xf32>
    %701 = arith.addf %697, %700 : vector<8x16xf32>
    %702 = arith.mulf %668, %666 : vector<8x16xf32>
    %cst_382 = arith.constant 1.000000e+00 : f32
    %703 = vector.broadcast %cst_382 : f32 to vector<8x16xf32>
    %704 = arith.subf %703, %668 : vector<8x16xf32>
    %705 = arith.mulf %704, %701 : vector<8x16xf32>
    %706 = arith.addf %702, %705 : vector<8x16xf32>
    %707 = arith.subf %666, %673 : vector<8x16xf32>
    %708 = math.absf %707 : vector<8x16xf32>
    %709 = arith.subf %666, %684 : vector<8x16xf32>
    %710 = math.absf %709 : vector<8x16xf32>
    %711 = arith.addf %708, %710 : vector<8x16xf32>
    %712 = arith.subf %666, %694 : vector<8x16xf32>
    %713 = math.absf %712 : vector<8x16xf32>
    %714 = arith.addf %711, %713 : vector<8x16xf32>
    %715 = arith.subf %666, %701 : vector<8x16xf32>
    %716 = math.absf %715 : vector<8x16xf32>
    %717 = arith.addf %714, %716 : vector<8x16xf32>
    %718 = arith.mulf %717, %668 : vector<8x16xf32>
    %719 = vector.shape_cast %668 : vector<8x16xf32> to vector<1x8x16xf32>
    %cst_383 = arith.constant dense<0.000000e+00> : vector<1xf32>
    %720 = vector.multi_reduction <add>, %719, %cst_383 [1, 2] : vector<1x8x16xf32> to vector<1xf32>
    %721 = vector.shape_cast %720 : vector<1xf32> to vector<1x1x1xf32>
    %722 = vector.extract %721[0, 0, 0] : f32 from vector<1x1x1xf32>
    %723 = vector.broadcast %722 : f32 to vector<1x1xf32>
    %cst_384 = arith.constant 9.99999974E-6 : f32
    %724 = vector.broadcast %cst_384 : f32 to vector<1x1xf32>
    %725 = arith.addf %723, %724 : vector<1x1xf32>
    %726 = vector.shape_cast %718 : vector<8x16xf32> to vector<1x8x16xf32>
    %cst_385 = arith.constant dense<0.000000e+00> : vector<1xf32>
    %727 = vector.multi_reduction <add>, %726, %cst_385 [1, 2] : vector<1x8x16xf32> to vector<1xf32>
    %728 = vector.shape_cast %727 : vector<1xf32> to vector<1x1x1xf32>
    %729 = vector.extract %728[0, 0, 0] : f32 from vector<1x1x1xf32>
    %730 = vector.broadcast %729 : f32 to vector<1x1xf32>
    %731 = arith.divf %730, %725 : vector<1x1xf32>
    %732 = arith.addf %516, %731 : vector<1x1xf32>
    %c0_386 = arith.constant 0 : index
    %c3_387 = arith.constant 3 : index
    %c0_388 = arith.constant 0 : index
    %c0_389 = arith.constant 0 : index
    %733 = vector.load %arg2[%c0_386, %c3_387, %c0_388, %c0_389] : memref<2x8x8x32xf32, #tpu.memory_space<vmem>>, vector<1x1x8x32xf32>
    %734 = vector.shape_cast %733 : vector<1x1x8x32xf32> to vector<8x32xf32>
    %735 = arith.mulf %550, %734 : vector<8x32xf32>
    %c0_390 = arith.constant 0 : index
    %c0_391 = arith.constant 0 : index
    %c0_392 = arith.constant 0 : index
    %736 = vector.load %arg9[%c0_390, %c0_391, %c0_392] : memref<2x16x96xf32, #tpu.memory_space<vmem>>, vector<1x16x96xf32>
    %737 = vector.shape_cast %736 : vector<1x16x96xf32> to vector<16x96xf32>
    %cst_393 = arith.constant dense<0.000000e+00> : vector<8x96xf32>
    %738 = tpu.matmul %706, %737, %cst_393 {dimension_numbers = #tpu.dot_dimension_numbers<[1], [0], [0], [1], [0, 0, 1, 1], [], []>} : vector<8x16xf32>, vector<16x96xf32>, vector<8x96xf32> -> vector<8x96xf32>
    %c0_394 = arith.constant 0 : index
    %c3_395 = arith.constant 3 : index
    %c0_396 = arith.constant 0 : index
    %c0_397 = arith.constant 0 : index
    %739 = vector.load %arg5[%c0_394, %c3_395, %c0_396, %c0_397] : memref<2x8x8x96xf32, #tpu.memory_space<vmem>>, vector<1x1x8x96xf32>
    %740 = vector.shape_cast %739 : vector<1x1x8x96xf32> to vector<8x96xf32>
    %741 = arith.addf %738, %740 : vector<8x96xf32>
    %c0_398 = arith.constant 0 : index
    %c0_399 = arith.constant 0 : index
    %c0_400 = arith.constant 0 : index
    %742 = vector.load %arg10[%c0_398, %c0_399, %c0_400] : memref<2x32x96xf32, #tpu.memory_space<vmem>>, vector<1x32x96xf32>
    %743 = vector.shape_cast %742 : vector<1x32x96xf32> to vector<32x96xf32>
    %cst_401 = arith.constant dense<0.000000e+00> : vector<8x96xf32>
    %744 = tpu.matmul %735, %743, %cst_401 {dimension_numbers = #tpu.dot_dimension_numbers<[1], [0], [0], [1], [0, 0, 1, 1], [], []>} : vector<8x32xf32>, vector<32x96xf32>, vector<8x96xf32> -> vector<8x96xf32>
    %745 = vector.broadcast %10 : vector<1x96xf32> to vector<8x96xf32>
    %746 = arith.addf %744, %745 : vector<8x96xf32>
    %747 = vector.extract_strided_slice %741 {offsets = [0, 0], sizes = [8, 64], strides = [1, 1]} : vector<8x96xf32> to vector<8x64xf32>
    %748 = vector.extract_strided_slice %746 {offsets = [0, 0], sizes = [8, 64], strides = [1, 1]} : vector<8x96xf32> to vector<8x64xf32>
    %749 = arith.addf %747, %748 : vector<8x64xf32>
    %750 = arith.negf %749 : vector<8x64xf32>
    %751 = math.exp %750 : vector<8x64xf32>
    %cst_402 = arith.constant 1.000000e+00 : f32
    %752 = vector.broadcast %cst_402 : f32 to vector<8x64xf32>
    %753 = arith.addf %752, %751 : vector<8x64xf32>
    %754 = arith.divf %752, %753 : vector<8x64xf32>
    %755 = vector.extract_strided_slice %754 {offsets = [0, 0], sizes = [8, 32], strides = [1, 1]} : vector<8x64xf32> to vector<8x32xf32>
    %756 = vector.extract_strided_slice %754 {offsets = [0, 32], sizes = [8, 32], strides = [1, 1]} : vector<8x64xf32> to vector<8x32xf32>
    %757 = vector.extract_strided_slice %741 {offsets = [0, 64], sizes = [8, 32], strides = [1, 1]} : vector<8x96xf32> to vector<8x32xf32>
    %758 = vector.extract_strided_slice %746 {offsets = [0, 64], sizes = [8, 32], strides = [1, 1]} : vector<8x96xf32> to vector<8x32xf32>
    %759 = arith.mulf %755, %758 : vector<8x32xf32>
    %760 = arith.addf %757, %759 : vector<8x32xf32>
    %761 = math.tanh %760 : vector<8x32xf32>
    %cst_403 = arith.constant 1.000000e+00 : f32
    %762 = vector.broadcast %cst_403 : f32 to vector<8x32xf32>
    %763 = arith.subf %762, %756 : vector<8x32xf32>
    %764 = arith.mulf %763, %761 : vector<8x32xf32>
    %765 = arith.mulf %756, %735 : vector<8x32xf32>
    %766 = arith.addf %764, %765 : vector<8x32xf32>
    %c4 = arith.constant 4 : index
    %c0_404 = arith.constant 0 : index
    %c0_405 = arith.constant 0 : index
    %767 = vector.load %arg0[%c4, %c0_404, %c0_405] : memref<8x8x16xf32, #tpu.memory_space<vmem>>, vector<1x8x16xf32>
    %768 = vector.shape_cast %767 : vector<1x8x16xf32> to vector<8x16xf32>
    %c4_406 = arith.constant 4 : index
    %c0_407 = arith.constant 0 : index
    %c0_408 = arith.constant 0 : index
    %769 = vector.load %arg1[%c4_406, %c0_407, %c0_408] : memref<8x8x16xf32, #tpu.memory_space<vmem>>, vector<1x8x16xf32>
    %770 = vector.shape_cast %769 : vector<1x8x16xf32> to vector<8x16xf32>
    %c1_409 = arith.constant 1 : index
    %c0_410 = arith.constant 0 : index
    %c0_411 = arith.constant 0 : index
    %771 = vector.load %arg6[%c1_409, %c0_410, %c0_411] : memref<2x32x16xf32, #tpu.memory_space<vmem>>, vector<1x32x16xf32>
    %772 = vector.shape_cast %771 : vector<1x32x16xf32> to vector<32x16xf32>
    %cst_412 = arith.constant dense<0.000000e+00> : vector<8x16xf32>
    %773 = tpu.matmul %652, %772, %cst_412 {dimension_numbers = #tpu.dot_dimension_numbers<[1], [0], [0], [1], [0, 0, 1, 1], [], []>} : vector<8x32xf32>, vector<32x16xf32>, vector<8x16xf32> -> vector<8x16xf32>
    %774 = vector.broadcast %4 : vector<1x16xf32> to vector<8x16xf32>
    %775 = arith.addf %773, %774 : vector<8x16xf32>
    %776 = arith.mulf %770, %768 : vector<8x16xf32>
    %cst_413 = arith.constant 1.000000e+00 : f32
    %777 = vector.broadcast %cst_413 : f32 to vector<8x16xf32>
    %778 = arith.subf %777, %770 : vector<8x16xf32>
    %779 = arith.mulf %778, %775 : vector<8x16xf32>
    %780 = arith.addf %776, %779 : vector<8x16xf32>
    %c1_414 = arith.constant 1 : index
    %c0_415 = arith.constant 0 : index
    %c0_416 = arith.constant 0 : index
    %781 = vector.load %arg7[%c1_414, %c0_415, %c0_416] : memref<2x16x16xf32, #tpu.memory_space<vmem>>, vector<1x16x16xf32>
    %782 = vector.shape_cast %781 : vector<1x16x16xf32> to vector<16x16xf32>
    %cst_417 = arith.constant dense<0.000000e+00> : vector<8x16xf32>
    %783 = tpu.matmul %780, %782, %cst_417 {dimension_numbers = #tpu.dot_dimension_numbers<[1], [0], [0], [1], [0, 0, 1, 1], [], []>} : vector<8x16xf32>, vector<16x16xf32>, vector<8x16xf32> -> vector<8x16xf32>
    %c1_418 = arith.constant 1 : index
    %c4_419 = arith.constant 4 : index
    %c0_420 = arith.constant 0 : index
    %c0_421 = arith.constant 0 : index
    %784 = vector.load %arg4[%c1_418, %c4_419, %c0_420, %c0_421] : memref<2x8x8x16xf32, #tpu.memory_space<vmem>>, vector<1x1x8x16xf32>
    %785 = vector.shape_cast %784 : vector<1x1x8x16xf32> to vector<8x16xf32>
    %786 = arith.addf %783, %785 : vector<8x16xf32>
    %787 = arith.mulf %770, %768 : vector<8x16xf32>
    %cst_422 = arith.constant 1.000000e+00 : f32
    %788 = vector.broadcast %cst_422 : f32 to vector<8x16xf32>
    %789 = arith.subf %788, %770 : vector<8x16xf32>
    %790 = arith.mulf %789, %786 : vector<8x16xf32>
    %791 = arith.addf %787, %790 : vector<8x16xf32>
    %c1_423 = arith.constant 1 : index
    %c0_424 = arith.constant 0 : index
    %c0_425 = arith.constant 0 : index
    %792 = vector.load %arg8[%c1_423, %c0_424, %c0_425] : memref<2x16x16xf32, #tpu.memory_space<vmem>>, vector<1x16x16xf32>
    %793 = vector.shape_cast %792 : vector<1x16x16xf32> to vector<16x16xf32>
    %cst_426 = arith.constant dense<0.000000e+00> : vector<8x16xf32>
    %794 = tpu.matmul %791, %793, %cst_426 {dimension_numbers = #tpu.dot_dimension_numbers<[1], [0], [0], [1], [0, 0, 1, 1], [], []>} : vector<8x16xf32>, vector<16x16xf32>, vector<8x16xf32> -> vector<8x16xf32>
    %795 = vector.broadcast %8 : vector<1x16xf32> to vector<8x16xf32>
    %796 = arith.addf %794, %795 : vector<8x16xf32>
    %c1_427 = arith.constant 1 : index
    %c4_428 = arith.constant 4 : index
    %c0_429 = arith.constant 0 : index
    %c0_430 = arith.constant 0 : index
    %797 = vector.load %arg3[%c1_427, %c4_428, %c0_429, %c0_430] : memref<2x8x8x16xf32, #tpu.memory_space<vmem>>, vector<1x1x8x16xf32>
    %798 = vector.shape_cast %797 : vector<1x1x8x16xf32> to vector<8x16xf32>
    %799 = arith.mulf %798, %796 : vector<8x16xf32>
    %cst_431 = arith.constant 1.000000e+00 : f32
    %800 = vector.broadcast %cst_431 : f32 to vector<8x16xf32>
    %801 = arith.subf %800, %798 : vector<8x16xf32>
    %802 = arith.mulf %801, %775 : vector<8x16xf32>
    %803 = arith.addf %799, %802 : vector<8x16xf32>
    %804 = arith.mulf %770, %768 : vector<8x16xf32>
    %cst_432 = arith.constant 1.000000e+00 : f32
    %805 = vector.broadcast %cst_432 : f32 to vector<8x16xf32>
    %806 = arith.subf %805, %770 : vector<8x16xf32>
    %807 = arith.mulf %806, %803 : vector<8x16xf32>
    %808 = arith.addf %804, %807 : vector<8x16xf32>
    %809 = arith.subf %768, %775 : vector<8x16xf32>
    %810 = math.absf %809 : vector<8x16xf32>
    %811 = arith.subf %768, %786 : vector<8x16xf32>
    %812 = math.absf %811 : vector<8x16xf32>
    %813 = arith.addf %810, %812 : vector<8x16xf32>
    %814 = arith.subf %768, %796 : vector<8x16xf32>
    %815 = math.absf %814 : vector<8x16xf32>
    %816 = arith.addf %813, %815 : vector<8x16xf32>
    %817 = arith.subf %768, %803 : vector<8x16xf32>
    %818 = math.absf %817 : vector<8x16xf32>
    %819 = arith.addf %816, %818 : vector<8x16xf32>
    %820 = arith.mulf %819, %770 : vector<8x16xf32>
    %821 = vector.shape_cast %770 : vector<8x16xf32> to vector<1x8x16xf32>
    %cst_433 = arith.constant dense<0.000000e+00> : vector<1xf32>
    %822 = vector.multi_reduction <add>, %821, %cst_433 [1, 2] : vector<1x8x16xf32> to vector<1xf32>
    %823 = vector.shape_cast %822 : vector<1xf32> to vector<1x1x1xf32>
    %824 = vector.extract %823[0, 0, 0] : f32 from vector<1x1x1xf32>
    %825 = vector.broadcast %824 : f32 to vector<1x1xf32>
    %cst_434 = arith.constant 9.99999974E-6 : f32
    %826 = vector.broadcast %cst_434 : f32 to vector<1x1xf32>
    %827 = arith.addf %825, %826 : vector<1x1xf32>
    %828 = vector.shape_cast %820 : vector<8x16xf32> to vector<1x8x16xf32>
    %cst_435 = arith.constant dense<0.000000e+00> : vector<1xf32>
    %829 = vector.multi_reduction <add>, %828, %cst_435 [1, 2] : vector<1x8x16xf32> to vector<1xf32>
    %830 = vector.shape_cast %829 : vector<1xf32> to vector<1x1x1xf32>
    %831 = vector.extract %830[0, 0, 0] : f32 from vector<1x1x1xf32>
    %832 = vector.broadcast %831 : f32 to vector<1x1xf32>
    %833 = arith.divf %832, %827 : vector<1x1xf32>
    %834 = arith.addf %618, %833 : vector<1x1xf32>
    %c1_436 = arith.constant 1 : index
    %c4_437 = arith.constant 4 : index
    %c0_438 = arith.constant 0 : index
    %c0_439 = arith.constant 0 : index
    %835 = vector.load %arg2[%c1_436, %c4_437, %c0_438, %c0_439] : memref<2x8x8x32xf32, #tpu.memory_space<vmem>>, vector<1x1x8x32xf32>
    %836 = vector.shape_cast %835 : vector<1x1x8x32xf32> to vector<8x32xf32>
    %837 = arith.mulf %652, %836 : vector<8x32xf32>
    %c1_440 = arith.constant 1 : index
    %c0_441 = arith.constant 0 : index
    %c0_442 = arith.constant 0 : index
    %838 = vector.load %arg9[%c1_440, %c0_441, %c0_442] : memref<2x16x96xf32, #tpu.memory_space<vmem>>, vector<1x16x96xf32>
    %839 = vector.shape_cast %838 : vector<1x16x96xf32> to vector<16x96xf32>
    %cst_443 = arith.constant dense<0.000000e+00> : vector<8x96xf32>
    %840 = tpu.matmul %808, %839, %cst_443 {dimension_numbers = #tpu.dot_dimension_numbers<[1], [0], [0], [1], [0, 0, 1, 1], [], []>} : vector<8x16xf32>, vector<16x96xf32>, vector<8x96xf32> -> vector<8x96xf32>
    %c1_444 = arith.constant 1 : index
    %c4_445 = arith.constant 4 : index
    %c0_446 = arith.constant 0 : index
    %c0_447 = arith.constant 0 : index
    %841 = vector.load %arg5[%c1_444, %c4_445, %c0_446, %c0_447] : memref<2x8x8x96xf32, #tpu.memory_space<vmem>>, vector<1x1x8x96xf32>
    %842 = vector.shape_cast %841 : vector<1x1x8x96xf32> to vector<8x96xf32>
    %843 = arith.addf %840, %842 : vector<8x96xf32>
    %c1_448 = arith.constant 1 : index
    %c0_449 = arith.constant 0 : index
    %c0_450 = arith.constant 0 : index
    %844 = vector.load %arg10[%c1_448, %c0_449, %c0_450] : memref<2x32x96xf32, #tpu.memory_space<vmem>>, vector<1x32x96xf32>
    %845 = vector.shape_cast %844 : vector<1x32x96xf32> to vector<32x96xf32>
    %cst_451 = arith.constant dense<0.000000e+00> : vector<8x96xf32>
    %846 = tpu.matmul %837, %845, %cst_451 {dimension_numbers = #tpu.dot_dimension_numbers<[1], [0], [0], [1], [0, 0, 1, 1], [], []>} : vector<8x32xf32>, vector<32x96xf32>, vector<8x96xf32> -> vector<8x96xf32>
    %847 = vector.broadcast %12 : vector<1x96xf32> to vector<8x96xf32>
    %848 = arith.addf %846, %847 : vector<8x96xf32>
    %849 = vector.extract_strided_slice %843 {offsets = [0, 0], sizes = [8, 64], strides = [1, 1]} : vector<8x96xf32> to vector<8x64xf32>
    %850 = vector.extract_strided_slice %848 {offsets = [0, 0], sizes = [8, 64], strides = [1, 1]} : vector<8x96xf32> to vector<8x64xf32>
    %851 = arith.addf %849, %850 : vector<8x64xf32>
    %852 = arith.negf %851 : vector<8x64xf32>
    %853 = math.exp %852 : vector<8x64xf32>
    %cst_452 = arith.constant 1.000000e+00 : f32
    %854 = vector.broadcast %cst_452 : f32 to vector<8x64xf32>
    %855 = arith.addf %854, %853 : vector<8x64xf32>
    %856 = arith.divf %854, %855 : vector<8x64xf32>
    %857 = vector.extract_strided_slice %856 {offsets = [0, 0], sizes = [8, 32], strides = [1, 1]} : vector<8x64xf32> to vector<8x32xf32>
    %858 = vector.extract_strided_slice %856 {offsets = [0, 32], sizes = [8, 32], strides = [1, 1]} : vector<8x64xf32> to vector<8x32xf32>
    %859 = vector.extract_strided_slice %843 {offsets = [0, 64], sizes = [8, 32], strides = [1, 1]} : vector<8x96xf32> to vector<8x32xf32>
    %860 = vector.extract_strided_slice %848 {offsets = [0, 64], sizes = [8, 32], strides = [1, 1]} : vector<8x96xf32> to vector<8x32xf32>
    %861 = arith.mulf %857, %860 : vector<8x32xf32>
    %862 = arith.addf %859, %861 : vector<8x32xf32>
    %863 = math.tanh %862 : vector<8x32xf32>
    %cst_453 = arith.constant 1.000000e+00 : f32
    %864 = vector.broadcast %cst_453 : f32 to vector<8x32xf32>
    %865 = arith.subf %864, %858 : vector<8x32xf32>
    %866 = arith.mulf %865, %863 : vector<8x32xf32>
    %867 = arith.mulf %858, %837 : vector<8x32xf32>
    %868 = arith.addf %866, %867 : vector<8x32xf32>
    %c0_454 = arith.constant 0 : index
    %c3_455 = arith.constant 3 : index
    %c0_456 = arith.constant 0 : index
    %c0_457 = arith.constant 0 : index
    %869 = vector.load %arg12[%c0_454, %c3_455, %c0_456, %c0_457] : memref<2x8x8x16xf32, #tpu.memory_space<vmem>>, vector<1x1x8x16xf32>
    %870 = vector.shape_cast %869 : vector<1x1x8x16xf32> to vector<8x16xf32>
    %871 = vector.shape_cast %701 : vector<8x16xf32> to vector<1x1x8x16xf32>
    tpu.vector_store %arg12[%c0_454, %c3_455, %c0_456, %c0_457], %871 {strides = array<i32>} : memref<2x8x8x16xf32, #tpu.memory_space<vmem>>, vector<1x1x8x16xf32>,
    %c0_458 = arith.constant 0 : index
    %c3_459 = arith.constant 3 : index
    %c0_460 = arith.constant 0 : index
    %c0_461 = arith.constant 0 : index
    %872 = vector.load %arg13[%c0_458, %c3_459, %c0_460, %c0_461] : memref<2x8x8x16xf32, #tpu.memory_space<vmem>>, vector<1x1x8x16xf32>
    %873 = vector.shape_cast %872 : vector<1x1x8x16xf32> to vector<8x16xf32>
    %874 = vector.shape_cast %706 : vector<8x16xf32> to vector<1x1x8x16xf32>
    tpu.vector_store %arg13[%c0_458, %c3_459, %c0_460, %c0_461], %874 {strides = array<i32>} : memref<2x8x8x16xf32, #tpu.memory_space<vmem>>, vector<1x1x8x16xf32>,
    %c1_462 = arith.constant 1 : index
    %c4_463 = arith.constant 4 : index
    %c0_464 = arith.constant 0 : index
    %c0_465 = arith.constant 0 : index
    %875 = vector.load %arg12[%c1_462, %c4_463, %c0_464, %c0_465] : memref<2x8x8x16xf32, #tpu.memory_space<vmem>>, vector<1x1x8x16xf32>
    %876 = vector.shape_cast %875 : vector<1x1x8x16xf32> to vector<8x16xf32>
    %877 = vector.shape_cast %803 : vector<8x16xf32> to vector<1x1x8x16xf32>
    tpu.vector_store %arg12[%c1_462, %c4_463, %c0_464, %c0_465], %877 {strides = array<i32>} : memref<2x8x8x16xf32, #tpu.memory_space<vmem>>, vector<1x1x8x16xf32>,
    %c1_466 = arith.constant 1 : index
    %c4_467 = arith.constant 4 : index
    %c0_468 = arith.constant 0 : index
    %c0_469 = arith.constant 0 : index
    %878 = vector.load %arg13[%c1_466, %c4_467, %c0_468, %c0_469] : memref<2x8x8x16xf32, #tpu.memory_space<vmem>>, vector<1x1x8x16xf32>
    %879 = vector.shape_cast %878 : vector<1x1x8x16xf32> to vector<8x16xf32>
    %880 = vector.shape_cast %808 : vector<8x16xf32> to vector<1x1x8x16xf32>
    tpu.vector_store %arg13[%c1_466, %c4_467, %c0_468, %c0_469], %880 {strides = array<i32>} : memref<2x8x8x16xf32, #tpu.memory_space<vmem>>, vector<1x1x8x16xf32>,
    %c4_470 = arith.constant 4 : index
    %c0_471 = arith.constant 0 : index
    %c0_472 = arith.constant 0 : index
    %881 = vector.load %arg0[%c4_470, %c0_471, %c0_472] : memref<8x8x16xf32, #tpu.memory_space<vmem>>, vector<1x8x16xf32>
    %882 = vector.shape_cast %881 : vector<1x8x16xf32> to vector<8x16xf32>
    %c4_473 = arith.constant 4 : index
    %c0_474 = arith.constant 0 : index
    %c0_475 = arith.constant 0 : index
    %883 = vector.load %arg1[%c4_473, %c0_474, %c0_475] : memref<8x8x16xf32, #tpu.memory_space<vmem>>, vector<1x8x16xf32>
    %884 = vector.shape_cast %883 : vector<1x8x16xf32> to vector<8x16xf32>
    %c0_476 = arith.constant 0 : index
    %c0_477 = arith.constant 0 : index
    %c0_478 = arith.constant 0 : index
    %885 = vector.load %arg6[%c0_476, %c0_477, %c0_478] : memref<2x32x16xf32, #tpu.memory_space<vmem>>, vector<1x32x16xf32>
    %886 = vector.shape_cast %885 : vector<1x32x16xf32> to vector<32x16xf32>
    %cst_479 = arith.constant dense<0.000000e+00> : vector<8x16xf32>
    %887 = tpu.matmul %766, %886, %cst_479 {dimension_numbers = #tpu.dot_dimension_numbers<[1], [0], [0], [1], [0, 0, 1, 1], [], []>} : vector<8x32xf32>, vector<32x16xf32>, vector<8x16xf32> -> vector<8x16xf32>
    %888 = vector.broadcast %2 : vector<1x16xf32> to vector<8x16xf32>
    %889 = arith.addf %887, %888 : vector<8x16xf32>
    %890 = arith.mulf %884, %882 : vector<8x16xf32>
    %cst_480 = arith.constant 1.000000e+00 : f32
    %891 = vector.broadcast %cst_480 : f32 to vector<8x16xf32>
    %892 = arith.subf %891, %884 : vector<8x16xf32>
    %893 = arith.mulf %892, %889 : vector<8x16xf32>
    %894 = arith.addf %890, %893 : vector<8x16xf32>
    %c0_481 = arith.constant 0 : index
    %c0_482 = arith.constant 0 : index
    %c0_483 = arith.constant 0 : index
    %895 = vector.load %arg7[%c0_481, %c0_482, %c0_483] : memref<2x16x16xf32, #tpu.memory_space<vmem>>, vector<1x16x16xf32>
    %896 = vector.shape_cast %895 : vector<1x16x16xf32> to vector<16x16xf32>
    %cst_484 = arith.constant dense<0.000000e+00> : vector<8x16xf32>
    %897 = tpu.matmul %894, %896, %cst_484 {dimension_numbers = #tpu.dot_dimension_numbers<[1], [0], [0], [1], [0, 0, 1, 1], [], []>} : vector<8x16xf32>, vector<16x16xf32>, vector<8x16xf32> -> vector<8x16xf32>
    %c0_485 = arith.constant 0 : index
    %c4_486 = arith.constant 4 : index
    %c0_487 = arith.constant 0 : index
    %c0_488 = arith.constant 0 : index
    %898 = vector.load %arg4[%c0_485, %c4_486, %c0_487, %c0_488] : memref<2x8x8x16xf32, #tpu.memory_space<vmem>>, vector<1x1x8x16xf32>
    %899 = vector.shape_cast %898 : vector<1x1x8x16xf32> to vector<8x16xf32>
    %900 = arith.addf %897, %899 : vector<8x16xf32>
    %901 = arith.mulf %884, %882 : vector<8x16xf32>
    %cst_489 = arith.constant 1.000000e+00 : f32
    %902 = vector.broadcast %cst_489 : f32 to vector<8x16xf32>
    %903 = arith.subf %902, %884 : vector<8x16xf32>
    %904 = arith.mulf %903, %900 : vector<8x16xf32>
    %905 = arith.addf %901, %904 : vector<8x16xf32>
    %c0_490 = arith.constant 0 : index
    %c0_491 = arith.constant 0 : index
    %c0_492 = arith.constant 0 : index
    %906 = vector.load %arg8[%c0_490, %c0_491, %c0_492] : memref<2x16x16xf32, #tpu.memory_space<vmem>>, vector<1x16x16xf32>
    %907 = vector.shape_cast %906 : vector<1x16x16xf32> to vector<16x16xf32>
    %cst_493 = arith.constant dense<0.000000e+00> : vector<8x16xf32>
    %908 = tpu.matmul %905, %907, %cst_493 {dimension_numbers = #tpu.dot_dimension_numbers<[1], [0], [0], [1], [0, 0, 1, 1], [], []>} : vector<8x16xf32>, vector<16x16xf32>, vector<8x16xf32> -> vector<8x16xf32>
    %909 = vector.broadcast %6 : vector<1x16xf32> to vector<8x16xf32>
    %910 = arith.addf %908, %909 : vector<8x16xf32>
    %c0_494 = arith.constant 0 : index
    %c4_495 = arith.constant 4 : index
    %c0_496 = arith.constant 0 : index
    %c0_497 = arith.constant 0 : index
    %911 = vector.load %arg3[%c0_494, %c4_495, %c0_496, %c0_497] : memref<2x8x8x16xf32, #tpu.memory_space<vmem>>, vector<1x1x8x16xf32>
    %912 = vector.shape_cast %911 : vector<1x1x8x16xf32> to vector<8x16xf32>
    %913 = arith.mulf %912, %910 : vector<8x16xf32>
    %cst_498 = arith.constant 1.000000e+00 : f32
    %914 = vector.broadcast %cst_498 : f32 to vector<8x16xf32>
    %915 = arith.subf %914, %912 : vector<8x16xf32>
    %916 = arith.mulf %915, %889 : vector<8x16xf32>
    %917 = arith.addf %913, %916 : vector<8x16xf32>
    %918 = arith.mulf %884, %882 : vector<8x16xf32>
    %cst_499 = arith.constant 1.000000e+00 : f32
    %919 = vector.broadcast %cst_499 : f32 to vector<8x16xf32>
    %920 = arith.subf %919, %884 : vector<8x16xf32>
    %921 = arith.mulf %920, %917 : vector<8x16xf32>
    %922 = arith.addf %918, %921 : vector<8x16xf32>
    %923 = arith.subf %882, %889 : vector<8x16xf32>
    %924 = math.absf %923 : vector<8x16xf32>
    %925 = arith.subf %882, %900 : vector<8x16xf32>
    %926 = math.absf %925 : vector<8x16xf32>
    %927 = arith.addf %924, %926 : vector<8x16xf32>
    %928 = arith.subf %882, %910 : vector<8x16xf32>
    %929 = math.absf %928 : vector<8x16xf32>
    %930 = arith.addf %927, %929 : vector<8x16xf32>
    %931 = arith.subf %882, %917 : vector<8x16xf32>
    %932 = math.absf %931 : vector<8x16xf32>
    %933 = arith.addf %930, %932 : vector<8x16xf32>
    %934 = arith.mulf %933, %884 : vector<8x16xf32>
    %935 = vector.shape_cast %884 : vector<8x16xf32> to vector<1x8x16xf32>
    %cst_500 = arith.constant dense<0.000000e+00> : vector<1xf32>
    %936 = vector.multi_reduction <add>, %935, %cst_500 [1, 2] : vector<1x8x16xf32> to vector<1xf32>
    %937 = vector.shape_cast %936 : vector<1xf32> to vector<1x1x1xf32>
    %938 = vector.extract %937[0, 0, 0] : f32 from vector<1x1x1xf32>
    %939 = vector.broadcast %938 : f32 to vector<1x1xf32>
    %cst_501 = arith.constant 9.99999974E-6 : f32
    %940 = vector.broadcast %cst_501 : f32 to vector<1x1xf32>
    %941 = arith.addf %939, %940 : vector<1x1xf32>
    %942 = vector.shape_cast %934 : vector<8x16xf32> to vector<1x8x16xf32>
    %cst_502 = arith.constant dense<0.000000e+00> : vector<1xf32>
    %943 = vector.multi_reduction <add>, %942, %cst_502 [1, 2] : vector<1x8x16xf32> to vector<1xf32>
    %944 = vector.shape_cast %943 : vector<1xf32> to vector<1x1x1xf32>
    %945 = vector.extract %944[0, 0, 0] : f32 from vector<1x1x1xf32>
    %946 = vector.broadcast %945 : f32 to vector<1x1xf32>
    %947 = arith.divf %946, %941 : vector<1x1xf32>
    %948 = arith.addf %732, %947 : vector<1x1xf32>
    %c0_503 = arith.constant 0 : index
    %c4_504 = arith.constant 4 : index
    %c0_505 = arith.constant 0 : index
    %c0_506 = arith.constant 0 : index
    %949 = vector.load %arg2[%c0_503, %c4_504, %c0_505, %c0_506] : memref<2x8x8x32xf32, #tpu.memory_space<vmem>>, vector<1x1x8x32xf32>
    %950 = vector.shape_cast %949 : vector<1x1x8x32xf32> to vector<8x32xf32>
    %951 = arith.mulf %766, %950 : vector<8x32xf32>
    %c0_507 = arith.constant 0 : index
    %c0_508 = arith.constant 0 : index
    %c0_509 = arith.constant 0 : index
    %952 = vector.load %arg9[%c0_507, %c0_508, %c0_509] : memref<2x16x96xf32, #tpu.memory_space<vmem>>, vector<1x16x96xf32>
    %953 = vector.shape_cast %952 : vector<1x16x96xf32> to vector<16x96xf32>
    %cst_510 = arith.constant dense<0.000000e+00> : vector<8x96xf32>
    %954 = tpu.matmul %922, %953, %cst_510 {dimension_numbers = #tpu.dot_dimension_numbers<[1], [0], [0], [1], [0, 0, 1, 1], [], []>} : vector<8x16xf32>, vector<16x96xf32>, vector<8x96xf32> -> vector<8x96xf32>
    %c0_511 = arith.constant 0 : index
    %c4_512 = arith.constant 4 : index
    %c0_513 = arith.constant 0 : index
    %c0_514 = arith.constant 0 : index
    %955 = vector.load %arg5[%c0_511, %c4_512, %c0_513, %c0_514] : memref<2x8x8x96xf32, #tpu.memory_space<vmem>>, vector<1x1x8x96xf32>
    %956 = vector.shape_cast %955 : vector<1x1x8x96xf32> to vector<8x96xf32>
    %957 = arith.addf %954, %956 : vector<8x96xf32>
    %c0_515 = arith.constant 0 : index
    %c0_516 = arith.constant 0 : index
    %c0_517 = arith.constant 0 : index
    %958 = vector.load %arg10[%c0_515, %c0_516, %c0_517] : memref<2x32x96xf32, #tpu.memory_space<vmem>>, vector<1x32x96xf32>
    %959 = vector.shape_cast %958 : vector<1x32x96xf32> to vector<32x96xf32>
    %cst_518 = arith.constant dense<0.000000e+00> : vector<8x96xf32>
    %960 = tpu.matmul %951, %959, %cst_518 {dimension_numbers = #tpu.dot_dimension_numbers<[1], [0], [0], [1], [0, 0, 1, 1], [], []>} : vector<8x32xf32>, vector<32x96xf32>, vector<8x96xf32> -> vector<8x96xf32>
    %961 = vector.broadcast %10 : vector<1x96xf32> to vector<8x96xf32>
    %962 = arith.addf %960, %961 : vector<8x96xf32>
    %963 = vector.extract_strided_slice %957 {offsets = [0, 0], sizes = [8, 64], strides = [1, 1]} : vector<8x96xf32> to vector<8x64xf32>
    %964 = vector.extract_strided_slice %962 {offsets = [0, 0], sizes = [8, 64], strides = [1, 1]} : vector<8x96xf32> to vector<8x64xf32>
    %965 = arith.addf %963, %964 : vector<8x64xf32>
    %966 = arith.negf %965 : vector<8x64xf32>
    %967 = math.exp %966 : vector<8x64xf32>
    %cst_519 = arith.constant 1.000000e+00 : f32
    %968 = vector.broadcast %cst_519 : f32 to vector<8x64xf32>
    %969 = arith.addf %968, %967 : vector<8x64xf32>
    %970 = arith.divf %968, %969 : vector<8x64xf32>
    %971 = vector.extract_strided_slice %970 {offsets = [0, 0], sizes = [8, 32], strides = [1, 1]} : vector<8x64xf32> to vector<8x32xf32>
    %972 = vector.extract_strided_slice %970 {offsets = [0, 32], sizes = [8, 32], strides = [1, 1]} : vector<8x64xf32> to vector<8x32xf32>
    %973 = vector.extract_strided_slice %957 {offsets = [0, 64], sizes = [8, 32], strides = [1, 1]} : vector<8x96xf32> to vector<8x32xf32>
    %974 = vector.extract_strided_slice %962 {offsets = [0, 64], sizes = [8, 32], strides = [1, 1]} : vector<8x96xf32> to vector<8x32xf32>
    %975 = arith.mulf %971, %974 : vector<8x32xf32>
    %976 = arith.addf %973, %975 : vector<8x32xf32>
    %977 = math.tanh %976 : vector<8x32xf32>
    %cst_520 = arith.constant 1.000000e+00 : f32
    %978 = vector.broadcast %cst_520 : f32 to vector<8x32xf32>
    %979 = arith.subf %978, %972 : vector<8x32xf32>
    %980 = arith.mulf %979, %977 : vector<8x32xf32>
    %981 = arith.mulf %972, %951 : vector<8x32xf32>
    %982 = arith.addf %980, %981 : vector<8x32xf32>
    %c3_521 = arith.constant 3 : index
    %c0_522 = arith.constant 0 : index
    %c0_523 = arith.constant 0 : index
    %983 = vector.load %arg0[%c3_521, %c0_522, %c0_523] : memref<8x8x16xf32, #tpu.memory_space<vmem>>, vector<1x8x16xf32>
    %984 = vector.shape_cast %983 : vector<1x8x16xf32> to vector<8x16xf32>
    %c3_524 = arith.constant 3 : index
    %c0_525 = arith.constant 0 : index
    %c0_526 = arith.constant 0 : index
    %985 = vector.load %arg1[%c3_524, %c0_525, %c0_526] : memref<8x8x16xf32, #tpu.memory_space<vmem>>, vector<1x8x16xf32>
    %986 = vector.shape_cast %985 : vector<1x8x16xf32> to vector<8x16xf32>
    %c1_527 = arith.constant 1 : index
    %c0_528 = arith.constant 0 : index
    %c0_529 = arith.constant 0 : index
    %987 = vector.load %arg6[%c1_527, %c0_528, %c0_529] : memref<2x32x16xf32, #tpu.memory_space<vmem>>, vector<1x32x16xf32>
    %988 = vector.shape_cast %987 : vector<1x32x16xf32> to vector<32x16xf32>
    %cst_530 = arith.constant dense<0.000000e+00> : vector<8x16xf32>
    %989 = tpu.matmul %868, %988, %cst_530 {dimension_numbers = #tpu.dot_dimension_numbers<[1], [0], [0], [1], [0, 0, 1, 1], [], []>} : vector<8x32xf32>, vector<32x16xf32>, vector<8x16xf32> -> vector<8x16xf32>
    %990 = vector.broadcast %4 : vector<1x16xf32> to vector<8x16xf32>
    %991 = arith.addf %989, %990 : vector<8x16xf32>
    %992 = arith.mulf %986, %984 : vector<8x16xf32>
    %cst_531 = arith.constant 1.000000e+00 : f32
    %993 = vector.broadcast %cst_531 : f32 to vector<8x16xf32>
    %994 = arith.subf %993, %986 : vector<8x16xf32>
    %995 = arith.mulf %994, %991 : vector<8x16xf32>
    %996 = arith.addf %992, %995 : vector<8x16xf32>
    %c1_532 = arith.constant 1 : index
    %c0_533 = arith.constant 0 : index
    %c0_534 = arith.constant 0 : index
    %997 = vector.load %arg7[%c1_532, %c0_533, %c0_534] : memref<2x16x16xf32, #tpu.memory_space<vmem>>, vector<1x16x16xf32>
    %998 = vector.shape_cast %997 : vector<1x16x16xf32> to vector<16x16xf32>
    %cst_535 = arith.constant dense<0.000000e+00> : vector<8x16xf32>
    %999 = tpu.matmul %996, %998, %cst_535 {dimension_numbers = #tpu.dot_dimension_numbers<[1], [0], [0], [1], [0, 0, 1, 1], [], []>} : vector<8x16xf32>, vector<16x16xf32>, vector<8x16xf32> -> vector<8x16xf32>
    %c1_536 = arith.constant 1 : index
    %c3_537 = arith.constant 3 : index
    %c0_538 = arith.constant 0 : index
    %c0_539 = arith.constant 0 : index
    %1000 = vector.load %arg4[%c1_536, %c3_537, %c0_538, %c0_539] : memref<2x8x8x16xf32, #tpu.memory_space<vmem>>, vector<1x1x8x16xf32>
    %1001 = vector.shape_cast %1000 : vector<1x1x8x16xf32> to vector<8x16xf32>
    %1002 = arith.addf %999, %1001 : vector<8x16xf32>
    %1003 = arith.mulf %986, %984 : vector<8x16xf32>
    %cst_540 = arith.constant 1.000000e+00 : f32
    %1004 = vector.broadcast %cst_540 : f32 to vector<8x16xf32>
    %1005 = arith.subf %1004, %986 : vector<8x16xf32>
    %1006 = arith.mulf %1005, %1002 : vector<8x16xf32>
    %1007 = arith.addf %1003, %1006 : vector<8x16xf32>
    %c1_541 = arith.constant 1 : index
    %c0_542 = arith.constant 0 : index
    %c0_543 = arith.constant 0 : index
    %1008 = vector.load %arg8[%c1_541, %c0_542, %c0_543] : memref<2x16x16xf32, #tpu.memory_space<vmem>>, vector<1x16x16xf32>
    %1009 = vector.shape_cast %1008 : vector<1x16x16xf32> to vector<16x16xf32>
    %cst_544 = arith.constant dense<0.000000e+00> : vector<8x16xf32>
    %1010 = tpu.matmul %1007, %1009, %cst_544 {dimension_numbers = #tpu.dot_dimension_numbers<[1], [0], [0], [1], [0, 0, 1, 1], [], []>} : vector<8x16xf32>, vector<16x16xf32>, vector<8x16xf32> -> vector<8x16xf32>
    %1011 = vector.broadcast %8 : vector<1x16xf32> to vector<8x16xf32>
    %1012 = arith.addf %1010, %1011 : vector<8x16xf32>
    %c1_545 = arith.constant 1 : index
    %c3_546 = arith.constant 3 : index
    %c0_547 = arith.constant 0 : index
    %c0_548 = arith.constant 0 : index
    %1013 = vector.load %arg3[%c1_545, %c3_546, %c0_547, %c0_548] : memref<2x8x8x16xf32, #tpu.memory_space<vmem>>, vector<1x1x8x16xf32>
    %1014 = vector.shape_cast %1013 : vector<1x1x8x16xf32> to vector<8x16xf32>
    %1015 = arith.mulf %1014, %1012 : vector<8x16xf32>
    %cst_549 = arith.constant 1.000000e+00 : f32
    %1016 = vector.broadcast %cst_549 : f32 to vector<8x16xf32>
    %1017 = arith.subf %1016, %1014 : vector<8x16xf32>
    %1018 = arith.mulf %1017, %991 : vector<8x16xf32>
    %1019 = arith.addf %1015, %1018 : vector<8x16xf32>
    %1020 = arith.mulf %986, %984 : vector<8x16xf32>
    %cst_550 = arith.constant 1.000000e+00 : f32
    %1021 = vector.broadcast %cst_550 : f32 to vector<8x16xf32>
    %1022 = arith.subf %1021, %986 : vector<8x16xf32>
    %1023 = arith.mulf %1022, %1019 : vector<8x16xf32>
    %1024 = arith.addf %1020, %1023 : vector<8x16xf32>
    %1025 = arith.subf %984, %991 : vector<8x16xf32>
    %1026 = math.absf %1025 : vector<8x16xf32>
    %1027 = arith.subf %984, %1002 : vector<8x16xf32>
    %1028 = math.absf %1027 : vector<8x16xf32>
    %1029 = arith.addf %1026, %1028 : vector<8x16xf32>
    %1030 = arith.subf %984, %1012 : vector<8x16xf32>
    %1031 = math.absf %1030 : vector<8x16xf32>
    %1032 = arith.addf %1029, %1031 : vector<8x16xf32>
    %1033 = arith.subf %984, %1019 : vector<8x16xf32>
    %1034 = math.absf %1033 : vector<8x16xf32>
    %1035 = arith.addf %1032, %1034 : vector<8x16xf32>
    %1036 = arith.mulf %1035, %986 : vector<8x16xf32>
    %1037 = vector.shape_cast %986 : vector<8x16xf32> to vector<1x8x16xf32>
    %cst_551 = arith.constant dense<0.000000e+00> : vector<1xf32>
    %1038 = vector.multi_reduction <add>, %1037, %cst_551 [1, 2] : vector<1x8x16xf32> to vector<1xf32>
    %1039 = vector.shape_cast %1038 : vector<1xf32> to vector<1x1x1xf32>
    %1040 = vector.extract %1039[0, 0, 0] : f32 from vector<1x1x1xf32>
    %1041 = vector.broadcast %1040 : f32 to vector<1x1xf32>
    %cst_552 = arith.constant 9.99999974E-6 : f32
    %1042 = vector.broadcast %cst_552 : f32 to vector<1x1xf32>
    %1043 = arith.addf %1041, %1042 : vector<1x1xf32>
    %1044 = vector.shape_cast %1036 : vector<8x16xf32> to vector<1x8x16xf32>
    %cst_553 = arith.constant dense<0.000000e+00> : vector<1xf32>
    %1045 = vector.multi_reduction <add>, %1044, %cst_553 [1, 2] : vector<1x8x16xf32> to vector<1xf32>
    %1046 = vector.shape_cast %1045 : vector<1xf32> to vector<1x1x1xf32>
    %1047 = vector.extract %1046[0, 0, 0] : f32 from vector<1x1x1xf32>
    %1048 = vector.broadcast %1047 : f32 to vector<1x1xf32>
    %1049 = arith.divf %1048, %1043 : vector<1x1xf32>
    %1050 = arith.addf %834, %1049 : vector<1x1xf32>
    %c1_554 = arith.constant 1 : index
    %c3_555 = arith.constant 3 : index
    %c0_556 = arith.constant 0 : index
    %c0_557 = arith.constant 0 : index
    %1051 = vector.load %arg2[%c1_554, %c3_555, %c0_556, %c0_557] : memref<2x8x8x32xf32, #tpu.memory_space<vmem>>, vector<1x1x8x32xf32>
    %1052 = vector.shape_cast %1051 : vector<1x1x8x32xf32> to vector<8x32xf32>
    %1053 = arith.mulf %868, %1052 : vector<8x32xf32>
    %c1_558 = arith.constant 1 : index
    %c0_559 = arith.constant 0 : index
    %c0_560 = arith.constant 0 : index
    %1054 = vector.load %arg9[%c1_558, %c0_559, %c0_560] : memref<2x16x96xf32, #tpu.memory_space<vmem>>, vector<1x16x96xf32>
    %1055 = vector.shape_cast %1054 : vector<1x16x96xf32> to vector<16x96xf32>
    %cst_561 = arith.constant dense<0.000000e+00> : vector<8x96xf32>
    %1056 = tpu.matmul %1024, %1055, %cst_561 {dimension_numbers = #tpu.dot_dimension_numbers<[1], [0], [0], [1], [0, 0, 1, 1], [], []>} : vector<8x16xf32>, vector<16x96xf32>, vector<8x96xf32> -> vector<8x96xf32>
    %c1_562 = arith.constant 1 : index
    %c3_563 = arith.constant 3 : index
    %c0_564 = arith.constant 0 : index
    %c0_565 = arith.constant 0 : index
    %1057 = vector.load %arg5[%c1_562, %c3_563, %c0_564, %c0_565] : memref<2x8x8x96xf32, #tpu.memory_space<vmem>>, vector<1x1x8x96xf32>
    %1058 = vector.shape_cast %1057 : vector<1x1x8x96xf32> to vector<8x96xf32>
    %1059 = arith.addf %1056, %1058 : vector<8x96xf32>
    %c1_566 = arith.constant 1 : index
    %c0_567 = arith.constant 0 : index
    %c0_568 = arith.constant 0 : index
    %1060 = vector.load %arg10[%c1_566, %c0_567, %c0_568] : memref<2x32x96xf32, #tpu.memory_space<vmem>>, vector<1x32x96xf32>
    %1061 = vector.shape_cast %1060 : vector<1x32x96xf32> to vector<32x96xf32>
    %cst_569 = arith.constant dense<0.000000e+00> : vector<8x96xf32>
    %1062 = tpu.matmul %1053, %1061, %cst_569 {dimension_numbers = #tpu.dot_dimension_numbers<[1], [0], [0], [1], [0, 0, 1, 1], [], []>} : vector<8x32xf32>, vector<32x96xf32>, vector<8x96xf32> -> vector<8x96xf32>
    %1063 = vector.broadcast %12 : vector<1x96xf32> to vector<8x96xf32>
    %1064 = arith.addf %1062, %1063 : vector<8x96xf32>
    %1065 = vector.extract_strided_slice %1059 {offsets = [0, 0], sizes = [8, 64], strides = [1, 1]} : vector<8x96xf32> to vector<8x64xf32>
    %1066 = vector.extract_strided_slice %1064 {offsets = [0, 0], sizes = [8, 64], strides = [1, 1]} : vector<8x96xf32> to vector<8x64xf32>
    %1067 = arith.addf %1065, %1066 : vector<8x64xf32>
    %1068 = arith.negf %1067 : vector<8x64xf32>
    %1069 = math.exp %1068 : vector<8x64xf32>
    %cst_570 = arith.constant 1.000000e+00 : f32
    %1070 = vector.broadcast %cst_570 : f32 to vector<8x64xf32>
    %1071 = arith.addf %1070, %1069 : vector<8x64xf32>
    %1072 = arith.divf %1070, %1071 : vector<8x64xf32>
    %1073 = vector.extract_strided_slice %1072 {offsets = [0, 0], sizes = [8, 32], strides = [1, 1]} : vector<8x64xf32> to vector<8x32xf32>
    %1074 = vector.extract_strided_slice %1072 {offsets = [0, 32], sizes = [8, 32], strides = [1, 1]} : vector<8x64xf32> to vector<8x32xf32>
    %1075 = vector.extract_strided_slice %1059 {offsets = [0, 64], sizes = [8, 32], strides = [1, 1]} : vector<8x96xf32> to vector<8x32xf32>
    %1076 = vector.extract_strided_slice %1064 {offsets = [0, 64], sizes = [8, 32], strides = [1, 1]} : vector<8x96xf32> to vector<8x32xf32>
    %1077 = arith.mulf %1073, %1076 : vector<8x32xf32>
    %1078 = arith.addf %1075, %1077 : vector<8x32xf32>
    %1079 = math.tanh %1078 : vector<8x32xf32>
    %cst_571 = arith.constant 1.000000e+00 : f32
    %1080 = vector.broadcast %cst_571 : f32 to vector<8x32xf32>
    %1081 = arith.subf %1080, %1074 : vector<8x32xf32>
    %1082 = arith.mulf %1081, %1079 : vector<8x32xf32>
    %1083 = arith.mulf %1074, %1053 : vector<8x32xf32>
    %1084 = arith.addf %1082, %1083 : vector<8x32xf32>
    %c0_572 = arith.constant 0 : index
    %c4_573 = arith.constant 4 : index
    %c0_574 = arith.constant 0 : index
    %c0_575 = arith.constant 0 : index
    %1085 = vector.load %arg12[%c0_572, %c4_573, %c0_574, %c0_575] : memref<2x8x8x16xf32, #tpu.memory_space<vmem>>, vector<1x1x8x16xf32>
    %1086 = vector.shape_cast %1085 : vector<1x1x8x16xf32> to vector<8x16xf32>
    %1087 = vector.shape_cast %917 : vector<8x16xf32> to vector<1x1x8x16xf32>
    tpu.vector_store %arg12[%c0_572, %c4_573, %c0_574, %c0_575], %1087 {strides = array<i32>} : memref<2x8x8x16xf32, #tpu.memory_space<vmem>>, vector<1x1x8x16xf32>,
    %c0_576 = arith.constant 0 : index
    %c4_577 = arith.constant 4 : index
    %c0_578 = arith.constant 0 : index
    %c0_579 = arith.constant 0 : index
    %1088 = vector.load %arg13[%c0_576, %c4_577, %c0_578, %c0_579] : memref<2x8x8x16xf32, #tpu.memory_space<vmem>>, vector<1x1x8x16xf32>
    %1089 = vector.shape_cast %1088 : vector<1x1x8x16xf32> to vector<8x16xf32>
    %1090 = vector.shape_cast %922 : vector<8x16xf32> to vector<1x1x8x16xf32>
    tpu.vector_store %arg13[%c0_576, %c4_577, %c0_578, %c0_579], %1090 {strides = array<i32>} : memref<2x8x8x16xf32, #tpu.memory_space<vmem>>, vector<1x1x8x16xf32>,
    %c1_580 = arith.constant 1 : index
    %c3_581 = arith.constant 3 : index
    %c0_582 = arith.constant 0 : index
    %c0_583 = arith.constant 0 : index
    %1091 = vector.load %arg12[%c1_580, %c3_581, %c0_582, %c0_583] : memref<2x8x8x16xf32, #tpu.memory_space<vmem>>, vector<1x1x8x16xf32>
    %1092 = vector.shape_cast %1091 : vector<1x1x8x16xf32> to vector<8x16xf32>
    %1093 = vector.shape_cast %1019 : vector<8x16xf32> to vector<1x1x8x16xf32>
    tpu.vector_store %arg12[%c1_580, %c3_581, %c0_582, %c0_583], %1093 {strides = array<i32>} : memref<2x8x8x16xf32, #tpu.memory_space<vmem>>, vector<1x1x8x16xf32>,
    %c1_584 = arith.constant 1 : index
    %c3_585 = arith.constant 3 : index
    %c0_586 = arith.constant 0 : index
    %c0_587 = arith.constant 0 : index
    %1094 = vector.load %arg13[%c1_584, %c3_585, %c0_586, %c0_587] : memref<2x8x8x16xf32, #tpu.memory_space<vmem>>, vector<1x1x8x16xf32>
    %1095 = vector.shape_cast %1094 : vector<1x1x8x16xf32> to vector<8x16xf32>
    %1096 = vector.shape_cast %1024 : vector<8x16xf32> to vector<1x1x8x16xf32>
    tpu.vector_store %arg13[%c1_584, %c3_585, %c0_586, %c0_587], %1096 {strides = array<i32>} : memref<2x8x8x16xf32, #tpu.memory_space<vmem>>, vector<1x1x8x16xf32>,
    %c5_588 = arith.constant 5 : index
    %c0_589 = arith.constant 0 : index
    %c0_590 = arith.constant 0 : index
    %1097 = vector.load %arg0[%c5_588, %c0_589, %c0_590] : memref<8x8x16xf32, #tpu.memory_space<vmem>>, vector<1x8x16xf32>
    %1098 = vector.shape_cast %1097 : vector<1x8x16xf32> to vector<8x16xf32>
    %c5_591 = arith.constant 5 : index
    %c0_592 = arith.constant 0 : index
    %c0_593 = arith.constant 0 : index
    %1099 = vector.load %arg1[%c5_591, %c0_592, %c0_593] : memref<8x8x16xf32, #tpu.memory_space<vmem>>, vector<1x8x16xf32>
    %1100 = vector.shape_cast %1099 : vector<1x8x16xf32> to vector<8x16xf32>
    %c0_594 = arith.constant 0 : index
    %c0_595 = arith.constant 0 : index
    %c0_596 = arith.constant 0 : index
    %1101 = vector.load %arg6[%c0_594, %c0_595, %c0_596] : memref<2x32x16xf32, #tpu.memory_space<vmem>>, vector<1x32x16xf32>
    %1102 = vector.shape_cast %1101 : vector<1x32x16xf32> to vector<32x16xf32>
    %cst_597 = arith.constant dense<0.000000e+00> : vector<8x16xf32>
    %1103 = tpu.matmul %982, %1102, %cst_597 {dimension_numbers = #tpu.dot_dimension_numbers<[1], [0], [0], [1], [0, 0, 1, 1], [], []>} : vector<8x32xf32>, vector<32x16xf32>, vector<8x16xf32> -> vector<8x16xf32>
    %1104 = vector.broadcast %2 : vector<1x16xf32> to vector<8x16xf32>
    %1105 = arith.addf %1103, %1104 : vector<8x16xf32>
    %1106 = arith.mulf %1100, %1098 : vector<8x16xf32>
    %cst_598 = arith.constant 1.000000e+00 : f32
    %1107 = vector.broadcast %cst_598 : f32 to vector<8x16xf32>
    %1108 = arith.subf %1107, %1100 : vector<8x16xf32>
    %1109 = arith.mulf %1108, %1105 : vector<8x16xf32>
    %1110 = arith.addf %1106, %1109 : vector<8x16xf32>
    %c0_599 = arith.constant 0 : index
    %c0_600 = arith.constant 0 : index
    %c0_601 = arith.constant 0 : index
    %1111 = vector.load %arg7[%c0_599, %c0_600, %c0_601] : memref<2x16x16xf32, #tpu.memory_space<vmem>>, vector<1x16x16xf32>
    %1112 = vector.shape_cast %1111 : vector<1x16x16xf32> to vector<16x16xf32>
    %cst_602 = arith.constant dense<0.000000e+00> : vector<8x16xf32>
    %1113 = tpu.matmul %1110, %1112, %cst_602 {dimension_numbers = #tpu.dot_dimension_numbers<[1], [0], [0], [1], [0, 0, 1, 1], [], []>} : vector<8x16xf32>, vector<16x16xf32>, vector<8x16xf32> -> vector<8x16xf32>
    %c0_603 = arith.constant 0 : index
    %c5_604 = arith.constant 5 : index
    %c0_605 = arith.constant 0 : index
    %c0_606 = arith.constant 0 : index
    %1114 = vector.load %arg4[%c0_603, %c5_604, %c0_605, %c0_606] : memref<2x8x8x16xf32, #tpu.memory_space<vmem>>, vector<1x1x8x16xf32>
    %1115 = vector.shape_cast %1114 : vector<1x1x8x16xf32> to vector<8x16xf32>
    %1116 = arith.addf %1113, %1115 : vector<8x16xf32>
    %1117 = arith.mulf %1100, %1098 : vector<8x16xf32>
    %cst_607 = arith.constant 1.000000e+00 : f32
    %1118 = vector.broadcast %cst_607 : f32 to vector<8x16xf32>
    %1119 = arith.subf %1118, %1100 : vector<8x16xf32>
    %1120 = arith.mulf %1119, %1116 : vector<8x16xf32>
    %1121 = arith.addf %1117, %1120 : vector<8x16xf32>
    %c0_608 = arith.constant 0 : index
    %c0_609 = arith.constant 0 : index
    %c0_610 = arith.constant 0 : index
    %1122 = vector.load %arg8[%c0_608, %c0_609, %c0_610] : memref<2x16x16xf32, #tpu.memory_space<vmem>>, vector<1x16x16xf32>
    %1123 = vector.shape_cast %1122 : vector<1x16x16xf32> to vector<16x16xf32>
    %cst_611 = arith.constant dense<0.000000e+00> : vector<8x16xf32>
    %1124 = tpu.matmul %1121, %1123, %cst_611 {dimension_numbers = #tpu.dot_dimension_numbers<[1], [0], [0], [1], [0, 0, 1, 1], [], []>} : vector<8x16xf32>, vector<16x16xf32>, vector<8x16xf32> -> vector<8x16xf32>
    %1125 = vector.broadcast %6 : vector<1x16xf32> to vector<8x16xf32>
    %1126 = arith.addf %1124, %1125 : vector<8x16xf32>
    %c0_612 = arith.constant 0 : index
    %c5_613 = arith.constant 5 : index
    %c0_614 = arith.constant 0 : index
    %c0_615 = arith.constant 0 : index
    %1127 = vector.load %arg3[%c0_612, %c5_613, %c0_614, %c0_615] : memref<2x8x8x16xf32, #tpu.memory_space<vmem>>, vector<1x1x8x16xf32>
    %1128 = vector.shape_cast %1127 : vector<1x1x8x16xf32> to vector<8x16xf32>
    %1129 = arith.mulf %1128, %1126 : vector<8x16xf32>
    %cst_616 = arith.constant 1.000000e+00 : f32
    %1130 = vector.broadcast %cst_616 : f32 to vector<8x16xf32>
    %1131 = arith.subf %1130, %1128 : vector<8x16xf32>
    %1132 = arith.mulf %1131, %1105 : vector<8x16xf32>
    %1133 = arith.addf %1129, %1132 : vector<8x16xf32>
    %1134 = arith.mulf %1100, %1098 : vector<8x16xf32>
    %cst_617 = arith.constant 1.000000e+00 : f32
    %1135 = vector.broadcast %cst_617 : f32 to vector<8x16xf32>
    %1136 = arith.subf %1135, %1100 : vector<8x16xf32>
    %1137 = arith.mulf %1136, %1133 : vector<8x16xf32>
    %1138 = arith.addf %1134, %1137 : vector<8x16xf32>
    %1139 = arith.subf %1098, %1105 : vector<8x16xf32>
    %1140 = math.absf %1139 : vector<8x16xf32>
    %1141 = arith.subf %1098, %1116 : vector<8x16xf32>
    %1142 = math.absf %1141 : vector<8x16xf32>
    %1143 = arith.addf %1140, %1142 : vector<8x16xf32>
    %1144 = arith.subf %1098, %1126 : vector<8x16xf32>
    %1145 = math.absf %1144 : vector<8x16xf32>
    %1146 = arith.addf %1143, %1145 : vector<8x16xf32>
    %1147 = arith.subf %1098, %1133 : vector<8x16xf32>
    %1148 = math.absf %1147 : vector<8x16xf32>
    %1149 = arith.addf %1146, %1148 : vector<8x16xf32>
    %1150 = arith.mulf %1149, %1100 : vector<8x16xf32>
    %1151 = vector.shape_cast %1100 : vector<8x16xf32> to vector<1x8x16xf32>
    %cst_618 = arith.constant dense<0.000000e+00> : vector<1xf32>
    %1152 = vector.multi_reduction <add>, %1151, %cst_618 [1, 2] : vector<1x8x16xf32> to vector<1xf32>
    %1153 = vector.shape_cast %1152 : vector<1xf32> to vector<1x1x1xf32>
    %1154 = vector.extract %1153[0, 0, 0] : f32 from vector<1x1x1xf32>
    %1155 = vector.broadcast %1154 : f32 to vector<1x1xf32>
    %cst_619 = arith.constant 9.99999974E-6 : f32
    %1156 = vector.broadcast %cst_619 : f32 to vector<1x1xf32>
    %1157 = arith.addf %1155, %1156 : vector<1x1xf32>
    %1158 = vector.shape_cast %1150 : vector<8x16xf32> to vector<1x8x16xf32>
    %cst_620 = arith.constant dense<0.000000e+00> : vector<1xf32>
    %1159 = vector.multi_reduction <add>, %1158, %cst_620 [1, 2] : vector<1x8x16xf32> to vector<1xf32>
    %1160 = vector.shape_cast %1159 : vector<1xf32> to vector<1x1x1xf32>
    %1161 = vector.extract %1160[0, 0, 0] : f32 from vector<1x1x1xf32>
    %1162 = vector.broadcast %1161 : f32 to vector<1x1xf32>
    %1163 = arith.divf %1162, %1157 : vector<1x1xf32>
    %1164 = arith.addf %948, %1163 : vector<1x1xf32>
    %c0_621 = arith.constant 0 : index
    %c5_622 = arith.constant 5 : index
    %c0_623 = arith.constant 0 : index
    %c0_624 = arith.constant 0 : index
    %1165 = vector.load %arg2[%c0_621, %c5_622, %c0_623, %c0_624] : memref<2x8x8x32xf32, #tpu.memory_space<vmem>>, vector<1x1x8x32xf32>
    %1166 = vector.shape_cast %1165 : vector<1x1x8x32xf32> to vector<8x32xf32>
    %1167 = arith.mulf %982, %1166 : vector<8x32xf32>
    %c0_625 = arith.constant 0 : index
    %c0_626 = arith.constant 0 : index
    %c0_627 = arith.constant 0 : index
    %1168 = vector.load %arg9[%c0_625, %c0_626, %c0_627] : memref<2x16x96xf32, #tpu.memory_space<vmem>>, vector<1x16x96xf32>
    %1169 = vector.shape_cast %1168 : vector<1x16x96xf32> to vector<16x96xf32>
    %cst_628 = arith.constant dense<0.000000e+00> : vector<8x96xf32>
    %1170 = tpu.matmul %1138, %1169, %cst_628 {dimension_numbers = #tpu.dot_dimension_numbers<[1], [0], [0], [1], [0, 0, 1, 1], [], []>} : vector<8x16xf32>, vector<16x96xf32>, vector<8x96xf32> -> vector<8x96xf32>
    %c0_629 = arith.constant 0 : index
    %c5_630 = arith.constant 5 : index
    %c0_631 = arith.constant 0 : index
    %c0_632 = arith.constant 0 : index
    %1171 = vector.load %arg5[%c0_629, %c5_630, %c0_631, %c0_632] : memref<2x8x8x96xf32, #tpu.memory_space<vmem>>, vector<1x1x8x96xf32>
    %1172 = vector.shape_cast %1171 : vector<1x1x8x96xf32> to vector<8x96xf32>
    %1173 = arith.addf %1170, %1172 : vector<8x96xf32>
    %c0_633 = arith.constant 0 : index
    %c0_634 = arith.constant 0 : index
    %c0_635 = arith.constant 0 : index
    %1174 = vector.load %arg10[%c0_633, %c0_634, %c0_635] : memref<2x32x96xf32, #tpu.memory_space<vmem>>, vector<1x32x96xf32>
    %1175 = vector.shape_cast %1174 : vector<1x32x96xf32> to vector<32x96xf32>
    %cst_636 = arith.constant dense<0.000000e+00> : vector<8x96xf32>
    %1176 = tpu.matmul %1167, %1175, %cst_636 {dimension_numbers = #tpu.dot_dimension_numbers<[1], [0], [0], [1], [0, 0, 1, 1], [], []>} : vector<8x32xf32>, vector<32x96xf32>, vector<8x96xf32> -> vector<8x96xf32>
    %1177 = vector.broadcast %10 : vector<1x96xf32> to vector<8x96xf32>
    %1178 = arith.addf %1176, %1177 : vector<8x96xf32>
    %1179 = vector.extract_strided_slice %1173 {offsets = [0, 0], sizes = [8, 64], strides = [1, 1]} : vector<8x96xf32> to vector<8x64xf32>
    %1180 = vector.extract_strided_slice %1178 {offsets = [0, 0], sizes = [8, 64], strides = [1, 1]} : vector<8x96xf32> to vector<8x64xf32>
    %1181 = arith.addf %1179, %1180 : vector<8x64xf32>
    %1182 = arith.negf %1181 : vector<8x64xf32>
    %1183 = math.exp %1182 : vector<8x64xf32>
    %cst_637 = arith.constant 1.000000e+00 : f32
    %1184 = vector.broadcast %cst_637 : f32 to vector<8x64xf32>
    %1185 = arith.addf %1184, %1183 : vector<8x64xf32>
    %1186 = arith.divf %1184, %1185 : vector<8x64xf32>
    %1187 = vector.extract_strided_slice %1186 {offsets = [0, 0], sizes = [8, 32], strides = [1, 1]} : vector<8x64xf32> to vector<8x32xf32>
    %1188 = vector.extract_strided_slice %1186 {offsets = [0, 32], sizes = [8, 32], strides = [1, 1]} : vector<8x64xf32> to vector<8x32xf32>
    %1189 = vector.extract_strided_slice %1173 {offsets = [0, 64], sizes = [8, 32], strides = [1, 1]} : vector<8x96xf32> to vector<8x32xf32>
    %1190 = vector.extract_strided_slice %1178 {offsets = [0, 64], sizes = [8, 32], strides = [1, 1]} : vector<8x96xf32> to vector<8x32xf32>
    %1191 = arith.mulf %1187, %1190 : vector<8x32xf32>
    %1192 = arith.addf %1189, %1191 : vector<8x32xf32>
    %1193 = math.tanh %1192 : vector<8x32xf32>
    %cst_638 = arith.constant 1.000000e+00 : f32
    %1194 = vector.broadcast %cst_638 : f32 to vector<8x32xf32>
    %1195 = arith.subf %1194, %1188 : vector<8x32xf32>
    %1196 = arith.mulf %1195, %1193 : vector<8x32xf32>
    %1197 = arith.mulf %1188, %1167 : vector<8x32xf32>
    %1198 = arith.addf %1196, %1197 : vector<8x32xf32>
    %c2_639 = arith.constant 2 : index
    %c0_640 = arith.constant 0 : index
    %c0_641 = arith.constant 0 : index
    %1199 = vector.load %arg0[%c2_639, %c0_640, %c0_641] : memref<8x8x16xf32, #tpu.memory_space<vmem>>, vector<1x8x16xf32>
    %1200 = vector.shape_cast %1199 : vector<1x8x16xf32> to vector<8x16xf32>
    %c2_642 = arith.constant 2 : index
    %c0_643 = arith.constant 0 : index
    %c0_644 = arith.constant 0 : index
    %1201 = vector.load %arg1[%c2_642, %c0_643, %c0_644] : memref<8x8x16xf32, #tpu.memory_space<vmem>>, vector<1x8x16xf32>
    %1202 = vector.shape_cast %1201 : vector<1x8x16xf32> to vector<8x16xf32>
    %c1_645 = arith.constant 1 : index
    %c0_646 = arith.constant 0 : index
    %c0_647 = arith.constant 0 : index
    %1203 = vector.load %arg6[%c1_645, %c0_646, %c0_647] : memref<2x32x16xf32, #tpu.memory_space<vmem>>, vector<1x32x16xf32>
    %1204 = vector.shape_cast %1203 : vector<1x32x16xf32> to vector<32x16xf32>
    %cst_648 = arith.constant dense<0.000000e+00> : vector<8x16xf32>
    %1205 = tpu.matmul %1084, %1204, %cst_648 {dimension_numbers = #tpu.dot_dimension_numbers<[1], [0], [0], [1], [0, 0, 1, 1], [], []>} : vector<8x32xf32>, vector<32x16xf32>, vector<8x16xf32> -> vector<8x16xf32>
    %1206 = vector.broadcast %4 : vector<1x16xf32> to vector<8x16xf32>
    %1207 = arith.addf %1205, %1206 : vector<8x16xf32>
    %1208 = arith.mulf %1202, %1200 : vector<8x16xf32>
    %cst_649 = arith.constant 1.000000e+00 : f32
    %1209 = vector.broadcast %cst_649 : f32 to vector<8x16xf32>
    %1210 = arith.subf %1209, %1202 : vector<8x16xf32>
    %1211 = arith.mulf %1210, %1207 : vector<8x16xf32>
    %1212 = arith.addf %1208, %1211 : vector<8x16xf32>
    %c1_650 = arith.constant 1 : index
    %c0_651 = arith.constant 0 : index
    %c0_652 = arith.constant 0 : index
    %1213 = vector.load %arg7[%c1_650, %c0_651, %c0_652] : memref<2x16x16xf32, #tpu.memory_space<vmem>>, vector<1x16x16xf32>
    %1214 = vector.shape_cast %1213 : vector<1x16x16xf32> to vector<16x16xf32>
    %cst_653 = arith.constant dense<0.000000e+00> : vector<8x16xf32>
    %1215 = tpu.matmul %1212, %1214, %cst_653 {dimension_numbers = #tpu.dot_dimension_numbers<[1], [0], [0], [1], [0, 0, 1, 1], [], []>} : vector<8x16xf32>, vector<16x16xf32>, vector<8x16xf32> -> vector<8x16xf32>
    %c1_654 = arith.constant 1 : index
    %c2_655 = arith.constant 2 : index
    %c0_656 = arith.constant 0 : index
    %c0_657 = arith.constant 0 : index
    %1216 = vector.load %arg4[%c1_654, %c2_655, %c0_656, %c0_657] : memref<2x8x8x16xf32, #tpu.memory_space<vmem>>, vector<1x1x8x16xf32>
    %1217 = vector.shape_cast %1216 : vector<1x1x8x16xf32> to vector<8x16xf32>
    %1218 = arith.addf %1215, %1217 : vector<8x16xf32>
    %1219 = arith.mulf %1202, %1200 : vector<8x16xf32>
    %cst_658 = arith.constant 1.000000e+00 : f32
    %1220 = vector.broadcast %cst_658 : f32 to vector<8x16xf32>
    %1221 = arith.subf %1220, %1202 : vector<8x16xf32>
    %1222 = arith.mulf %1221, %1218 : vector<8x16xf32>
    %1223 = arith.addf %1219, %1222 : vector<8x16xf32>
    %c1_659 = arith.constant 1 : index
    %c0_660 = arith.constant 0 : index
    %c0_661 = arith.constant 0 : index
    %1224 = vector.load %arg8[%c1_659, %c0_660, %c0_661] : memref<2x16x16xf32, #tpu.memory_space<vmem>>, vector<1x16x16xf32>
    %1225 = vector.shape_cast %1224 : vector<1x16x16xf32> to vector<16x16xf32>
    %cst_662 = arith.constant dense<0.000000e+00> : vector<8x16xf32>
    %1226 = tpu.matmul %1223, %1225, %cst_662 {dimension_numbers = #tpu.dot_dimension_numbers<[1], [0], [0], [1], [0, 0, 1, 1], [], []>} : vector<8x16xf32>, vector<16x16xf32>, vector<8x16xf32> -> vector<8x16xf32>
    %1227 = vector.broadcast %8 : vector<1x16xf32> to vector<8x16xf32>
    %1228 = arith.addf %1226, %1227 : vector<8x16xf32>
    %c1_663 = arith.constant 1 : index
    %c2_664 = arith.constant 2 : index
    %c0_665 = arith.constant 0 : index
    %c0_666 = arith.constant 0 : index
    %1229 = vector.load %arg3[%c1_663, %c2_664, %c0_665, %c0_666] : memref<2x8x8x16xf32, #tpu.memory_space<vmem>>, vector<1x1x8x16xf32>
    %1230 = vector.shape_cast %1229 : vector<1x1x8x16xf32> to vector<8x16xf32>
    %1231 = arith.mulf %1230, %1228 : vector<8x16xf32>
    %cst_667 = arith.constant 1.000000e+00 : f32
    %1232 = vector.broadcast %cst_667 : f32 to vector<8x16xf32>
    %1233 = arith.subf %1232, %1230 : vector<8x16xf32>
    %1234 = arith.mulf %1233, %1207 : vector<8x16xf32>
    %1235 = arith.addf %1231, %1234 : vector<8x16xf32>
    %1236 = arith.mulf %1202, %1200 : vector<8x16xf32>
    %cst_668 = arith.constant 1.000000e+00 : f32
    %1237 = vector.broadcast %cst_668 : f32 to vector<8x16xf32>
    %1238 = arith.subf %1237, %1202 : vector<8x16xf32>
    %1239 = arith.mulf %1238, %1235 : vector<8x16xf32>
    %1240 = arith.addf %1236, %1239 : vector<8x16xf32>
    %1241 = arith.subf %1200, %1207 : vector<8x16xf32>
    %1242 = math.absf %1241 : vector<8x16xf32>
    %1243 = arith.subf %1200, %1218 : vector<8x16xf32>
    %1244 = math.absf %1243 : vector<8x16xf32>
    %1245 = arith.addf %1242, %1244 : vector<8x16xf32>
    %1246 = arith.subf %1200, %1228 : vector<8x16xf32>
    %1247 = math.absf %1246 : vector<8x16xf32>
    %1248 = arith.addf %1245, %1247 : vector<8x16xf32>
    %1249 = arith.subf %1200, %1235 : vector<8x16xf32>
    %1250 = math.absf %1249 : vector<8x16xf32>
    %1251 = arith.addf %1248, %1250 : vector<8x16xf32>
    %1252 = arith.mulf %1251, %1202 : vector<8x16xf32>
    %1253 = vector.shape_cast %1202 : vector<8x16xf32> to vector<1x8x16xf32>
    %cst_669 = arith.constant dense<0.000000e+00> : vector<1xf32>
    %1254 = vector.multi_reduction <add>, %1253, %cst_669 [1, 2] : vector<1x8x16xf32> to vector<1xf32>
    %1255 = vector.shape_cast %1254 : vector<1xf32> to vector<1x1x1xf32>
    %1256 = vector.extract %1255[0, 0, 0] : f32 from vector<1x1x1xf32>
    %1257 = vector.broadcast %1256 : f32 to vector<1x1xf32>
    %cst_670 = arith.constant 9.99999974E-6 : f32
    %1258 = vector.broadcast %cst_670 : f32 to vector<1x1xf32>
    %1259 = arith.addf %1257, %1258 : vector<1x1xf32>
    %1260 = vector.shape_cast %1252 : vector<8x16xf32> to vector<1x8x16xf32>
    %cst_671 = arith.constant dense<0.000000e+00> : vector<1xf32>
    %1261 = vector.multi_reduction <add>, %1260, %cst_671 [1, 2] : vector<1x8x16xf32> to vector<1xf32>
    %1262 = vector.shape_cast %1261 : vector<1xf32> to vector<1x1x1xf32>
    %1263 = vector.extract %1262[0, 0, 0] : f32 from vector<1x1x1xf32>
    %1264 = vector.broadcast %1263 : f32 to vector<1x1xf32>
    %1265 = arith.divf %1264, %1259 : vector<1x1xf32>
    %1266 = arith.addf %1050, %1265 : vector<1x1xf32>
    %c1_672 = arith.constant 1 : index
    %c2_673 = arith.constant 2 : index
    %c0_674 = arith.constant 0 : index
    %c0_675 = arith.constant 0 : index
    %1267 = vector.load %arg2[%c1_672, %c2_673, %c0_674, %c0_675] : memref<2x8x8x32xf32, #tpu.memory_space<vmem>>, vector<1x1x8x32xf32>
    %1268 = vector.shape_cast %1267 : vector<1x1x8x32xf32> to vector<8x32xf32>
    %1269 = arith.mulf %1084, %1268 : vector<8x32xf32>
    %c1_676 = arith.constant 1 : index
    %c0_677 = arith.constant 0 : index
    %c0_678 = arith.constant 0 : index
    %1270 = vector.load %arg9[%c1_676, %c0_677, %c0_678] : memref<2x16x96xf32, #tpu.memory_space<vmem>>, vector<1x16x96xf32>
    %1271 = vector.shape_cast %1270 : vector<1x16x96xf32> to vector<16x96xf32>
    %cst_679 = arith.constant dense<0.000000e+00> : vector<8x96xf32>
    %1272 = tpu.matmul %1240, %1271, %cst_679 {dimension_numbers = #tpu.dot_dimension_numbers<[1], [0], [0], [1], [0, 0, 1, 1], [], []>} : vector<8x16xf32>, vector<16x96xf32>, vector<8x96xf32> -> vector<8x96xf32>
    %c1_680 = arith.constant 1 : index
    %c2_681 = arith.constant 2 : index
    %c0_682 = arith.constant 0 : index
    %c0_683 = arith.constant 0 : index
    %1273 = vector.load %arg5[%c1_680, %c2_681, %c0_682, %c0_683] : memref<2x8x8x96xf32, #tpu.memory_space<vmem>>, vector<1x1x8x96xf32>
    %1274 = vector.shape_cast %1273 : vector<1x1x8x96xf32> to vector<8x96xf32>
    %1275 = arith.addf %1272, %1274 : vector<8x96xf32>
    %c1_684 = arith.constant 1 : index
    %c0_685 = arith.constant 0 : index
    %c0_686 = arith.constant 0 : index
    %1276 = vector.load %arg10[%c1_684, %c0_685, %c0_686] : memref<2x32x96xf32, #tpu.memory_space<vmem>>, vector<1x32x96xf32>
    %1277 = vector.shape_cast %1276 : vector<1x32x96xf32> to vector<32x96xf32>
    %cst_687 = arith.constant dense<0.000000e+00> : vector<8x96xf32>
    %1278 = tpu.matmul %1269, %1277, %cst_687 {dimension_numbers = #tpu.dot_dimension_numbers<[1], [0], [0], [1], [0, 0, 1, 1], [], []>} : vector<8x32xf32>, vector<32x96xf32>, vector<8x96xf32> -> vector<8x96xf32>
    %1279 = vector.broadcast %12 : vector<1x96xf32> to vector<8x96xf32>
    %1280 = arith.addf %1278, %1279 : vector<8x96xf32>
    %1281 = vector.extract_strided_slice %1275 {offsets = [0, 0], sizes = [8, 64], strides = [1, 1]} : vector<8x96xf32> to vector<8x64xf32>
    %1282 = vector.extract_strided_slice %1280 {offsets = [0, 0], sizes = [8, 64], strides = [1, 1]} : vector<8x96xf32> to vector<8x64xf32>
    %1283 = arith.addf %1281, %1282 : vector<8x64xf32>
    %1284 = arith.negf %1283 : vector<8x64xf32>
    %1285 = math.exp %1284 : vector<8x64xf32>
    %cst_688 = arith.constant 1.000000e+00 : f32
    %1286 = vector.broadcast %cst_688 : f32 to vector<8x64xf32>
    %1287 = arith.addf %1286, %1285 : vector<8x64xf32>
    %1288 = arith.divf %1286, %1287 : vector<8x64xf32>
    %1289 = vector.extract_strided_slice %1288 {offsets = [0, 0], sizes = [8, 32], strides = [1, 1]} : vector<8x64xf32> to vector<8x32xf32>
    %1290 = vector.extract_strided_slice %1288 {offsets = [0, 32], sizes = [8, 32], strides = [1, 1]} : vector<8x64xf32> to vector<8x32xf32>
    %1291 = vector.extract_strided_slice %1275 {offsets = [0, 64], sizes = [8, 32], strides = [1, 1]} : vector<8x96xf32> to vector<8x32xf32>
    %1292 = vector.extract_strided_slice %1280 {offsets = [0, 64], sizes = [8, 32], strides = [1, 1]} : vector<8x96xf32> to vector<8x32xf32>
    %1293 = arith.mulf %1289, %1292 : vector<8x32xf32>
    %1294 = arith.addf %1291, %1293 : vector<8x32xf32>
    %1295 = math.tanh %1294 : vector<8x32xf32>
    %cst_689 = arith.constant 1.000000e+00 : f32
    %1296 = vector.broadcast %cst_689 : f32 to vector<8x32xf32>
    %1297 = arith.subf %1296, %1290 : vector<8x32xf32>
    %1298 = arith.mulf %1297, %1295 : vector<8x32xf32>
    %1299 = arith.mulf %1290, %1269 : vector<8x32xf32>
    %1300 = arith.addf %1298, %1299 : vector<8x32xf32>
    %c0_690 = arith.constant 0 : index
    %c5_691 = arith.constant 5 : index
    %c0_692 = arith.constant 0 : index
    %c0_693 = arith.constant 0 : index
    %1301 = vector.load %arg12[%c0_690, %c5_691, %c0_692, %c0_693] : memref<2x8x8x16xf32, #tpu.memory_space<vmem>>, vector<1x1x8x16xf32>
    %1302 = vector.shape_cast %1301 : vector<1x1x8x16xf32> to vector<8x16xf32>
    %1303 = vector.shape_cast %1133 : vector<8x16xf32> to vector<1x1x8x16xf32>
    tpu.vector_store %arg12[%c0_690, %c5_691, %c0_692, %c0_693], %1303 {strides = array<i32>} : memref<2x8x8x16xf32, #tpu.memory_space<vmem>>, vector<1x1x8x16xf32>,
    %c0_694 = arith.constant 0 : index
    %c5_695 = arith.constant 5 : index
    %c0_696 = arith.constant 0 : index
    %c0_697 = arith.constant 0 : index
    %1304 = vector.load %arg13[%c0_694, %c5_695, %c0_696, %c0_697] : memref<2x8x8x16xf32, #tpu.memory_space<vmem>>, vector<1x1x8x16xf32>
    %1305 = vector.shape_cast %1304 : vector<1x1x8x16xf32> to vector<8x16xf32>
    %1306 = vector.shape_cast %1138 : vector<8x16xf32> to vector<1x1x8x16xf32>
    tpu.vector_store %arg13[%c0_694, %c5_695, %c0_696, %c0_697], %1306 {strides = array<i32>} : memref<2x8x8x16xf32, #tpu.memory_space<vmem>>, vector<1x1x8x16xf32>,
    %c1_698 = arith.constant 1 : index
    %c2_699 = arith.constant 2 : index
    %c0_700 = arith.constant 0 : index
    %c0_701 = arith.constant 0 : index
    %1307 = vector.load %arg12[%c1_698, %c2_699, %c0_700, %c0_701] : memref<2x8x8x16xf32, #tpu.memory_space<vmem>>, vector<1x1x8x16xf32>
    %1308 = vector.shape_cast %1307 : vector<1x1x8x16xf32> to vector<8x16xf32>
    %1309 = vector.shape_cast %1235 : vector<8x16xf32> to vector<1x1x8x16xf32>
    tpu.vector_store %arg12[%c1_698, %c2_699, %c0_700, %c0_701], %1309 {strides = array<i32>} : memref<2x8x8x16xf32, #tpu.memory_space<vmem>>, vector<1x1x8x16xf32>,
    %c1_702 = arith.constant 1 : index
    %c2_703 = arith.constant 2 : index
    %c0_704 = arith.constant 0 : index
    %c0_705 = arith.constant 0 : index
    %1310 = vector.load %arg13[%c1_702, %c2_703, %c0_704, %c0_705] : memref<2x8x8x16xf32, #tpu.memory_space<vmem>>, vector<1x1x8x16xf32>
    %1311 = vector.shape_cast %1310 : vector<1x1x8x16xf32> to vector<8x16xf32>
    %1312 = vector.shape_cast %1240 : vector<8x16xf32> to vector<1x1x8x16xf32>
    tpu.vector_store %arg13[%c1_702, %c2_703, %c0_704, %c0_705], %1312 {strides = array<i32>} : memref<2x8x8x16xf32, #tpu.memory_space<vmem>>, vector<1x1x8x16xf32>,
    %c6_706 = arith.constant 6 : index
    %c0_707 = arith.constant 0 : index
    %c0_708 = arith.constant 0 : index
    %1313 = vector.load %arg0[%c6_706, %c0_707, %c0_708] : memref<8x8x16xf32, #tpu.memory_space<vmem>>, vector<1x8x16xf32>
    %1314 = vector.shape_cast %1313 : vector<1x8x16xf32> to vector<8x16xf32>
    %c6_709 = arith.constant 6 : index
    %c0_710 = arith.constant 0 : index
    %c0_711 = arith.constant 0 : index
    %1315 = vector.load %arg1[%c6_709, %c0_710, %c0_711] : memref<8x8x16xf32, #tpu.memory_space<vmem>>, vector<1x8x16xf32>
    %1316 = vector.shape_cast %1315 : vector<1x8x16xf32> to vector<8x16xf32>
    %c0_712 = arith.constant 0 : index
    %c0_713 = arith.constant 0 : index
    %c0_714 = arith.constant 0 : index
    %1317 = vector.load %arg6[%c0_712, %c0_713, %c0_714] : memref<2x32x16xf32, #tpu.memory_space<vmem>>, vector<1x32x16xf32>
    %1318 = vector.shape_cast %1317 : vector<1x32x16xf32> to vector<32x16xf32>
    %cst_715 = arith.constant dense<0.000000e+00> : vector<8x16xf32>
    %1319 = tpu.matmul %1198, %1318, %cst_715 {dimension_numbers = #tpu.dot_dimension_numbers<[1], [0], [0], [1], [0, 0, 1, 1], [], []>} : vector<8x32xf32>, vector<32x16xf32>, vector<8x16xf32> -> vector<8x16xf32>
    %1320 = vector.broadcast %2 : vector<1x16xf32> to vector<8x16xf32>
    %1321 = arith.addf %1319, %1320 : vector<8x16xf32>
    %1322 = arith.mulf %1316, %1314 : vector<8x16xf32>
    %cst_716 = arith.constant 1.000000e+00 : f32
    %1323 = vector.broadcast %cst_716 : f32 to vector<8x16xf32>
    %1324 = arith.subf %1323, %1316 : vector<8x16xf32>
    %1325 = arith.mulf %1324, %1321 : vector<8x16xf32>
    %1326 = arith.addf %1322, %1325 : vector<8x16xf32>
    %c0_717 = arith.constant 0 : index
    %c0_718 = arith.constant 0 : index
    %c0_719 = arith.constant 0 : index
    %1327 = vector.load %arg7[%c0_717, %c0_718, %c0_719] : memref<2x16x16xf32, #tpu.memory_space<vmem>>, vector<1x16x16xf32>
    %1328 = vector.shape_cast %1327 : vector<1x16x16xf32> to vector<16x16xf32>
    %cst_720 = arith.constant dense<0.000000e+00> : vector<8x16xf32>
    %1329 = tpu.matmul %1326, %1328, %cst_720 {dimension_numbers = #tpu.dot_dimension_numbers<[1], [0], [0], [1], [0, 0, 1, 1], [], []>} : vector<8x16xf32>, vector<16x16xf32>, vector<8x16xf32> -> vector<8x16xf32>
    %c0_721 = arith.constant 0 : index
    %c6_722 = arith.constant 6 : index
    %c0_723 = arith.constant 0 : index
    %c0_724 = arith.constant 0 : index
    %1330 = vector.load %arg4[%c0_721, %c6_722, %c0_723, %c0_724] : memref<2x8x8x16xf32, #tpu.memory_space<vmem>>, vector<1x1x8x16xf32>
    %1331 = vector.shape_cast %1330 : vector<1x1x8x16xf32> to vector<8x16xf32>
    %1332 = arith.addf %1329, %1331 : vector<8x16xf32>
    %1333 = arith.mulf %1316, %1314 : vector<8x16xf32>
    %cst_725 = arith.constant 1.000000e+00 : f32
    %1334 = vector.broadcast %cst_725 : f32 to vector<8x16xf32>
    %1335 = arith.subf %1334, %1316 : vector<8x16xf32>
    %1336 = arith.mulf %1335, %1332 : vector<8x16xf32>
    %1337 = arith.addf %1333, %1336 : vector<8x16xf32>
    %c0_726 = arith.constant 0 : index
    %c0_727 = arith.constant 0 : index
    %c0_728 = arith.constant 0 : index
    %1338 = vector.load %arg8[%c0_726, %c0_727, %c0_728] : memref<2x16x16xf32, #tpu.memory_space<vmem>>, vector<1x16x16xf32>
    %1339 = vector.shape_cast %1338 : vector<1x16x16xf32> to vector<16x16xf32>
    %cst_729 = arith.constant dense<0.000000e+00> : vector<8x16xf32>
    %1340 = tpu.matmul %1337, %1339, %cst_729 {dimension_numbers = #tpu.dot_dimension_numbers<[1], [0], [0], [1], [0, 0, 1, 1], [], []>} : vector<8x16xf32>, vector<16x16xf32>, vector<8x16xf32> -> vector<8x16xf32>
    %1341 = vector.broadcast %6 : vector<1x16xf32> to vector<8x16xf32>
    %1342 = arith.addf %1340, %1341 : vector<8x16xf32>
    %c0_730 = arith.constant 0 : index
    %c6_731 = arith.constant 6 : index
    %c0_732 = arith.constant 0 : index
    %c0_733 = arith.constant 0 : index
    %1343 = vector.load %arg3[%c0_730, %c6_731, %c0_732, %c0_733] : memref<2x8x8x16xf32, #tpu.memory_space<vmem>>, vector<1x1x8x16xf32>
    %1344 = vector.shape_cast %1343 : vector<1x1x8x16xf32> to vector<8x16xf32>
    %1345 = arith.mulf %1344, %1342 : vector<8x16xf32>
    %cst_734 = arith.constant 1.000000e+00 : f32
    %1346 = vector.broadcast %cst_734 : f32 to vector<8x16xf32>
    %1347 = arith.subf %1346, %1344 : vector<8x16xf32>
    %1348 = arith.mulf %1347, %1321 : vector<8x16xf32>
    %1349 = arith.addf %1345, %1348 : vector<8x16xf32>
    %1350 = arith.mulf %1316, %1314 : vector<8x16xf32>
    %cst_735 = arith.constant 1.000000e+00 : f32
    %1351 = vector.broadcast %cst_735 : f32 to vector<8x16xf32>
    %1352 = arith.subf %1351, %1316 : vector<8x16xf32>
    %1353 = arith.mulf %1352, %1349 : vector<8x16xf32>
    %1354 = arith.addf %1350, %1353 : vector<8x16xf32>
    %1355 = arith.subf %1314, %1321 : vector<8x16xf32>
    %1356 = math.absf %1355 : vector<8x16xf32>
    %1357 = arith.subf %1314, %1332 : vector<8x16xf32>
    %1358 = math.absf %1357 : vector<8x16xf32>
    %1359 = arith.addf %1356, %1358 : vector<8x16xf32>
    %1360 = arith.subf %1314, %1342 : vector<8x16xf32>
    %1361 = math.absf %1360 : vector<8x16xf32>
    %1362 = arith.addf %1359, %1361 : vector<8x16xf32>
    %1363 = arith.subf %1314, %1349 : vector<8x16xf32>
    %1364 = math.absf %1363 : vector<8x16xf32>
    %1365 = arith.addf %1362, %1364 : vector<8x16xf32>
    %1366 = arith.mulf %1365, %1316 : vector<8x16xf32>
    %1367 = vector.shape_cast %1316 : vector<8x16xf32> to vector<1x8x16xf32>
    %cst_736 = arith.constant dense<0.000000e+00> : vector<1xf32>
    %1368 = vector.multi_reduction <add>, %1367, %cst_736 [1, 2] : vector<1x8x16xf32> to vector<1xf32>
    %1369 = vector.shape_cast %1368 : vector<1xf32> to vector<1x1x1xf32>
    %1370 = vector.extract %1369[0, 0, 0] : f32 from vector<1x1x1xf32>
    %1371 = vector.broadcast %1370 : f32 to vector<1x1xf32>
    %cst_737 = arith.constant 9.99999974E-6 : f32
    %1372 = vector.broadcast %cst_737 : f32 to vector<1x1xf32>
    %1373 = arith.addf %1371, %1372 : vector<1x1xf32>
    %1374 = vector.shape_cast %1366 : vector<8x16xf32> to vector<1x8x16xf32>
    %cst_738 = arith.constant dense<0.000000e+00> : vector<1xf32>
    %1375 = vector.multi_reduction <add>, %1374, %cst_738 [1, 2] : vector<1x8x16xf32> to vector<1xf32>
    %1376 = vector.shape_cast %1375 : vector<1xf32> to vector<1x1x1xf32>
    %1377 = vector.extract %1376[0, 0, 0] : f32 from vector<1x1x1xf32>
    %1378 = vector.broadcast %1377 : f32 to vector<1x1xf32>
    %1379 = arith.divf %1378, %1373 : vector<1x1xf32>
    %1380 = arith.addf %1164, %1379 : vector<1x1xf32>
    %c0_739 = arith.constant 0 : index
    %c6_740 = arith.constant 6 : index
    %c0_741 = arith.constant 0 : index
    %c0_742 = arith.constant 0 : index
    %1381 = vector.load %arg2[%c0_739, %c6_740, %c0_741, %c0_742] : memref<2x8x8x32xf32, #tpu.memory_space<vmem>>, vector<1x1x8x32xf32>
    %1382 = vector.shape_cast %1381 : vector<1x1x8x32xf32> to vector<8x32xf32>
    %1383 = arith.mulf %1198, %1382 : vector<8x32xf32>
    %c0_743 = arith.constant 0 : index
    %c0_744 = arith.constant 0 : index
    %c0_745 = arith.constant 0 : index
    %1384 = vector.load %arg9[%c0_743, %c0_744, %c0_745] : memref<2x16x96xf32, #tpu.memory_space<vmem>>, vector<1x16x96xf32>
    %1385 = vector.shape_cast %1384 : vector<1x16x96xf32> to vector<16x96xf32>
    %cst_746 = arith.constant dense<0.000000e+00> : vector<8x96xf32>
    %1386 = tpu.matmul %1354, %1385, %cst_746 {dimension_numbers = #tpu.dot_dimension_numbers<[1], [0], [0], [1], [0, 0, 1, 1], [], []>} : vector<8x16xf32>, vector<16x96xf32>, vector<8x96xf32> -> vector<8x96xf32>
    %c0_747 = arith.constant 0 : index
    %c6_748 = arith.constant 6 : index
    %c0_749 = arith.constant 0 : index
    %c0_750 = arith.constant 0 : index
    %1387 = vector.load %arg5[%c0_747, %c6_748, %c0_749, %c0_750] : memref<2x8x8x96xf32, #tpu.memory_space<vmem>>, vector<1x1x8x96xf32>
    %1388 = vector.shape_cast %1387 : vector<1x1x8x96xf32> to vector<8x96xf32>
    %1389 = arith.addf %1386, %1388 : vector<8x96xf32>
    %c0_751 = arith.constant 0 : index
    %c0_752 = arith.constant 0 : index
    %c0_753 = arith.constant 0 : index
    %1390 = vector.load %arg10[%c0_751, %c0_752, %c0_753] : memref<2x32x96xf32, #tpu.memory_space<vmem>>, vector<1x32x96xf32>
    %1391 = vector.shape_cast %1390 : vector<1x32x96xf32> to vector<32x96xf32>
    %cst_754 = arith.constant dense<0.000000e+00> : vector<8x96xf32>
    %1392 = tpu.matmul %1383, %1391, %cst_754 {dimension_numbers = #tpu.dot_dimension_numbers<[1], [0], [0], [1], [0, 0, 1, 1], [], []>} : vector<8x32xf32>, vector<32x96xf32>, vector<8x96xf32> -> vector<8x96xf32>
    %1393 = vector.broadcast %10 : vector<1x96xf32> to vector<8x96xf32>
    %1394 = arith.addf %1392, %1393 : vector<8x96xf32>
    %1395 = vector.extract_strided_slice %1389 {offsets = [0, 0], sizes = [8, 64], strides = [1, 1]} : vector<8x96xf32> to vector<8x64xf32>
    %1396 = vector.extract_strided_slice %1394 {offsets = [0, 0], sizes = [8, 64], strides = [1, 1]} : vector<8x96xf32> to vector<8x64xf32>
    %1397 = arith.addf %1395, %1396 : vector<8x64xf32>
    %1398 = arith.negf %1397 : vector<8x64xf32>
    %1399 = math.exp %1398 : vector<8x64xf32>
    %cst_755 = arith.constant 1.000000e+00 : f32
    %1400 = vector.broadcast %cst_755 : f32 to vector<8x64xf32>
    %1401 = arith.addf %1400, %1399 : vector<8x64xf32>
    %1402 = arith.divf %1400, %1401 : vector<8x64xf32>
    %1403 = vector.extract_strided_slice %1402 {offsets = [0, 0], sizes = [8, 32], strides = [1, 1]} : vector<8x64xf32> to vector<8x32xf32>
    %1404 = vector.extract_strided_slice %1402 {offsets = [0, 32], sizes = [8, 32], strides = [1, 1]} : vector<8x64xf32> to vector<8x32xf32>
    %1405 = vector.extract_strided_slice %1389 {offsets = [0, 64], sizes = [8, 32], strides = [1, 1]} : vector<8x96xf32> to vector<8x32xf32>
    %1406 = vector.extract_strided_slice %1394 {offsets = [0, 64], sizes = [8, 32], strides = [1, 1]} : vector<8x96xf32> to vector<8x32xf32>
    %1407 = arith.mulf %1403, %1406 : vector<8x32xf32>
    %1408 = arith.addf %1405, %1407 : vector<8x32xf32>
    %1409 = math.tanh %1408 : vector<8x32xf32>
    %cst_756 = arith.constant 1.000000e+00 : f32
    %1410 = vector.broadcast %cst_756 : f32 to vector<8x32xf32>
    %1411 = arith.subf %1410, %1404 : vector<8x32xf32>
    %1412 = arith.mulf %1411, %1409 : vector<8x32xf32>
    %1413 = arith.mulf %1404, %1383 : vector<8x32xf32>
    %1414 = arith.addf %1412, %1413 : vector<8x32xf32>
    %c1_757 = arith.constant 1 : index
    %c0_758 = arith.constant 0 : index
    %c0_759 = arith.constant 0 : index
    %1415 = vector.load %arg0[%c1_757, %c0_758, %c0_759] : memref<8x8x16xf32, #tpu.memory_space<vmem>>, vector<1x8x16xf32>
    %1416 = vector.shape_cast %1415 : vector<1x8x16xf32> to vector<8x16xf32>
    %c1_760 = arith.constant 1 : index
    %c0_761 = arith.constant 0 : index
    %c0_762 = arith.constant 0 : index
    %1417 = vector.load %arg1[%c1_760, %c0_761, %c0_762] : memref<8x8x16xf32, #tpu.memory_space<vmem>>, vector<1x8x16xf32>
    %1418 = vector.shape_cast %1417 : vector<1x8x16xf32> to vector<8x16xf32>
    %c1_763 = arith.constant 1 : index
    %c0_764 = arith.constant 0 : index
    %c0_765 = arith.constant 0 : index
    %1419 = vector.load %arg6[%c1_763, %c0_764, %c0_765] : memref<2x32x16xf32, #tpu.memory_space<vmem>>, vector<1x32x16xf32>
    %1420 = vector.shape_cast %1419 : vector<1x32x16xf32> to vector<32x16xf32>
    %cst_766 = arith.constant dense<0.000000e+00> : vector<8x16xf32>
    %1421 = tpu.matmul %1300, %1420, %cst_766 {dimension_numbers = #tpu.dot_dimension_numbers<[1], [0], [0], [1], [0, 0, 1, 1], [], []>} : vector<8x32xf32>, vector<32x16xf32>, vector<8x16xf32> -> vector<8x16xf32>
    %1422 = vector.broadcast %4 : vector<1x16xf32> to vector<8x16xf32>
    %1423 = arith.addf %1421, %1422 : vector<8x16xf32>
    %1424 = arith.mulf %1418, %1416 : vector<8x16xf32>
    %cst_767 = arith.constant 1.000000e+00 : f32
    %1425 = vector.broadcast %cst_767 : f32 to vector<8x16xf32>
    %1426 = arith.subf %1425, %1418 : vector<8x16xf32>
    %1427 = arith.mulf %1426, %1423 : vector<8x16xf32>
    %1428 = arith.addf %1424, %1427 : vector<8x16xf32>
    %c1_768 = arith.constant 1 : index
    %c0_769 = arith.constant 0 : index
    %c0_770 = arith.constant 0 : index
    %1429 = vector.load %arg7[%c1_768, %c0_769, %c0_770] : memref<2x16x16xf32, #tpu.memory_space<vmem>>, vector<1x16x16xf32>
    %1430 = vector.shape_cast %1429 : vector<1x16x16xf32> to vector<16x16xf32>
    %cst_771 = arith.constant dense<0.000000e+00> : vector<8x16xf32>
    %1431 = tpu.matmul %1428, %1430, %cst_771 {dimension_numbers = #tpu.dot_dimension_numbers<[1], [0], [0], [1], [0, 0, 1, 1], [], []>} : vector<8x16xf32>, vector<16x16xf32>, vector<8x16xf32> -> vector<8x16xf32>
    %c1_772 = arith.constant 1 : index
    %c1_773 = arith.constant 1 : index
    %c0_774 = arith.constant 0 : index
    %c0_775 = arith.constant 0 : index
    %1432 = vector.load %arg4[%c1_772, %c1_773, %c0_774, %c0_775] : memref<2x8x8x16xf32, #tpu.memory_space<vmem>>, vector<1x1x8x16xf32>
    %1433 = vector.shape_cast %1432 : vector<1x1x8x16xf32> to vector<8x16xf32>
    %1434 = arith.addf %1431, %1433 : vector<8x16xf32>
    %1435 = arith.mulf %1418, %1416 : vector<8x16xf32>
    %cst_776 = arith.constant 1.000000e+00 : f32
    %1436 = vector.broadcast %cst_776 : f32 to vector<8x16xf32>
    %1437 = arith.subf %1436, %1418 : vector<8x16xf32>
    %1438 = arith.mulf %1437, %1434 : vector<8x16xf32>
    %1439 = arith.addf %1435, %1438 : vector<8x16xf32>
    %c1_777 = arith.constant 1 : index
    %c0_778 = arith.constant 0 : index
    %c0_779 = arith.constant 0 : index
    %1440 = vector.load %arg8[%c1_777, %c0_778, %c0_779] : memref<2x16x16xf32, #tpu.memory_space<vmem>>, vector<1x16x16xf32>
    %1441 = vector.shape_cast %1440 : vector<1x16x16xf32> to vector<16x16xf32>
    %cst_780 = arith.constant dense<0.000000e+00> : vector<8x16xf32>
    %1442 = tpu.matmul %1439, %1441, %cst_780 {dimension_numbers = #tpu.dot_dimension_numbers<[1], [0], [0], [1], [0, 0, 1, 1], [], []>} : vector<8x16xf32>, vector<16x16xf32>, vector<8x16xf32> -> vector<8x16xf32>
    %1443 = vector.broadcast %8 : vector<1x16xf32> to vector<8x16xf32>
    %1444 = arith.addf %1442, %1443 : vector<8x16xf32>
    %c1_781 = arith.constant 1 : index
    %c1_782 = arith.constant 1 : index
    %c0_783 = arith.constant 0 : index
    %c0_784 = arith.constant 0 : index
    %1445 = vector.load %arg3[%c1_781, %c1_782, %c0_783, %c0_784] : memref<2x8x8x16xf32, #tpu.memory_space<vmem>>, vector<1x1x8x16xf32>
    %1446 = vector.shape_cast %1445 : vector<1x1x8x16xf32> to vector<8x16xf32>
    %1447 = arith.mulf %1446, %1444 : vector<8x16xf32>
    %cst_785 = arith.constant 1.000000e+00 : f32
    %1448 = vector.broadcast %cst_785 : f32 to vector<8x16xf32>
    %1449 = arith.subf %1448, %1446 : vector<8x16xf32>
    %1450 = arith.mulf %1449, %1423 : vector<8x16xf32>
    %1451 = arith.addf %1447, %1450 : vector<8x16xf32>
    %1452 = arith.mulf %1418, %1416 : vector<8x16xf32>
    %cst_786 = arith.constant 1.000000e+00 : f32
    %1453 = vector.broadcast %cst_786 : f32 to vector<8x16xf32>
    %1454 = arith.subf %1453, %1418 : vector<8x16xf32>
    %1455 = arith.mulf %1454, %1451 : vector<8x16xf32>
    %1456 = arith.addf %1452, %1455 : vector<8x16xf32>
    %1457 = arith.subf %1416, %1423 : vector<8x16xf32>
    %1458 = math.absf %1457 : vector<8x16xf32>
    %1459 = arith.subf %1416, %1434 : vector<8x16xf32>
    %1460 = math.absf %1459 : vector<8x16xf32>
    %1461 = arith.addf %1458, %1460 : vector<8x16xf32>
    %1462 = arith.subf %1416, %1444 : vector<8x16xf32>
    %1463 = math.absf %1462 : vector<8x16xf32>
    %1464 = arith.addf %1461, %1463 : vector<8x16xf32>
    %1465 = arith.subf %1416, %1451 : vector<8x16xf32>
    %1466 = math.absf %1465 : vector<8x16xf32>
    %1467 = arith.addf %1464, %1466 : vector<8x16xf32>
    %1468 = arith.mulf %1467, %1418 : vector<8x16xf32>
    %1469 = vector.shape_cast %1418 : vector<8x16xf32> to vector<1x8x16xf32>
    %cst_787 = arith.constant dense<0.000000e+00> : vector<1xf32>
    %1470 = vector.multi_reduction <add>, %1469, %cst_787 [1, 2] : vector<1x8x16xf32> to vector<1xf32>
    %1471 = vector.shape_cast %1470 : vector<1xf32> to vector<1x1x1xf32>
    %1472 = vector.extract %1471[0, 0, 0] : f32 from vector<1x1x1xf32>
    %1473 = vector.broadcast %1472 : f32 to vector<1x1xf32>
    %cst_788 = arith.constant 9.99999974E-6 : f32
    %1474 = vector.broadcast %cst_788 : f32 to vector<1x1xf32>
    %1475 = arith.addf %1473, %1474 : vector<1x1xf32>
    %1476 = vector.shape_cast %1468 : vector<8x16xf32> to vector<1x8x16xf32>
    %cst_789 = arith.constant dense<0.000000e+00> : vector<1xf32>
    %1477 = vector.multi_reduction <add>, %1476, %cst_789 [1, 2] : vector<1x8x16xf32> to vector<1xf32>
    %1478 = vector.shape_cast %1477 : vector<1xf32> to vector<1x1x1xf32>
    %1479 = vector.extract %1478[0, 0, 0] : f32 from vector<1x1x1xf32>
    %1480 = vector.broadcast %1479 : f32 to vector<1x1xf32>
    %1481 = arith.divf %1480, %1475 : vector<1x1xf32>
    %1482 = arith.addf %1266, %1481 : vector<1x1xf32>
    %c1_790 = arith.constant 1 : index
    %c1_791 = arith.constant 1 : index
    %c0_792 = arith.constant 0 : index
    %c0_793 = arith.constant 0 : index
    %1483 = vector.load %arg2[%c1_790, %c1_791, %c0_792, %c0_793] : memref<2x8x8x32xf32, #tpu.memory_space<vmem>>, vector<1x1x8x32xf32>
    %1484 = vector.shape_cast %1483 : vector<1x1x8x32xf32> to vector<8x32xf32>
    %1485 = arith.mulf %1300, %1484 : vector<8x32xf32>
    %c1_794 = arith.constant 1 : index
    %c0_795 = arith.constant 0 : index
    %c0_796 = arith.constant 0 : index
    %1486 = vector.load %arg9[%c1_794, %c0_795, %c0_796] : memref<2x16x96xf32, #tpu.memory_space<vmem>>, vector<1x16x96xf32>
    %1487 = vector.shape_cast %1486 : vector<1x16x96xf32> to vector<16x96xf32>
    %cst_797 = arith.constant dense<0.000000e+00> : vector<8x96xf32>
    %1488 = tpu.matmul %1456, %1487, %cst_797 {dimension_numbers = #tpu.dot_dimension_numbers<[1], [0], [0], [1], [0, 0, 1, 1], [], []>} : vector<8x16xf32>, vector<16x96xf32>, vector<8x96xf32> -> vector<8x96xf32>
    %c1_798 = arith.constant 1 : index
    %c1_799 = arith.constant 1 : index
    %c0_800 = arith.constant 0 : index
    %c0_801 = arith.constant 0 : index
    %1489 = vector.load %arg5[%c1_798, %c1_799, %c0_800, %c0_801] : memref<2x8x8x96xf32, #tpu.memory_space<vmem>>, vector<1x1x8x96xf32>
    %1490 = vector.shape_cast %1489 : vector<1x1x8x96xf32> to vector<8x96xf32>
    %1491 = arith.addf %1488, %1490 : vector<8x96xf32>
    %c1_802 = arith.constant 1 : index
    %c0_803 = arith.constant 0 : index
    %c0_804 = arith.constant 0 : index
    %1492 = vector.load %arg10[%c1_802, %c0_803, %c0_804] : memref<2x32x96xf32, #tpu.memory_space<vmem>>, vector<1x32x96xf32>
    %1493 = vector.shape_cast %1492 : vector<1x32x96xf32> to vector<32x96xf32>
    %cst_805 = arith.constant dense<0.000000e+00> : vector<8x96xf32>
    %1494 = tpu.matmul %1485, %1493, %cst_805 {dimension_numbers = #tpu.dot_dimension_numbers<[1], [0], [0], [1], [0, 0, 1, 1], [], []>} : vector<8x32xf32>, vector<32x96xf32>, vector<8x96xf32> -> vector<8x96xf32>
    %1495 = vector.broadcast %12 : vector<1x96xf32> to vector<8x96xf32>
    %1496 = arith.addf %1494, %1495 : vector<8x96xf32>
    %1497 = vector.extract_strided_slice %1491 {offsets = [0, 0], sizes = [8, 64], strides = [1, 1]} : vector<8x96xf32> to vector<8x64xf32>
    %1498 = vector.extract_strided_slice %1496 {offsets = [0, 0], sizes = [8, 64], strides = [1, 1]} : vector<8x96xf32> to vector<8x64xf32>
    %1499 = arith.addf %1497, %1498 : vector<8x64xf32>
    %1500 = arith.negf %1499 : vector<8x64xf32>
    %1501 = math.exp %1500 : vector<8x64xf32>
    %cst_806 = arith.constant 1.000000e+00 : f32
    %1502 = vector.broadcast %cst_806 : f32 to vector<8x64xf32>
    %1503 = arith.addf %1502, %1501 : vector<8x64xf32>
    %1504 = arith.divf %1502, %1503 : vector<8x64xf32>
    %1505 = vector.extract_strided_slice %1504 {offsets = [0, 0], sizes = [8, 32], strides = [1, 1]} : vector<8x64xf32> to vector<8x32xf32>
    %1506 = vector.extract_strided_slice %1504 {offsets = [0, 32], sizes = [8, 32], strides = [1, 1]} : vector<8x64xf32> to vector<8x32xf32>
    %1507 = vector.extract_strided_slice %1491 {offsets = [0, 64], sizes = [8, 32], strides = [1, 1]} : vector<8x96xf32> to vector<8x32xf32>
    %1508 = vector.extract_strided_slice %1496 {offsets = [0, 64], sizes = [8, 32], strides = [1, 1]} : vector<8x96xf32> to vector<8x32xf32>
    %1509 = arith.mulf %1505, %1508 : vector<8x32xf32>
    %1510 = arith.addf %1507, %1509 : vector<8x32xf32>
    %1511 = math.tanh %1510 : vector<8x32xf32>
    %cst_807 = arith.constant 1.000000e+00 : f32
    %1512 = vector.broadcast %cst_807 : f32 to vector<8x32xf32>
    %1513 = arith.subf %1512, %1506 : vector<8x32xf32>
    %1514 = arith.mulf %1513, %1511 : vector<8x32xf32>
    %1515 = arith.mulf %1506, %1485 : vector<8x32xf32>
    %1516 = arith.addf %1514, %1515 : vector<8x32xf32>
    %c0_808 = arith.constant 0 : index
    %c6_809 = arith.constant 6 : index
    %c0_810 = arith.constant 0 : index
    %c0_811 = arith.constant 0 : index
    %1517 = vector.load %arg12[%c0_808, %c6_809, %c0_810, %c0_811] : memref<2x8x8x16xf32, #tpu.memory_space<vmem>>, vector<1x1x8x16xf32>
    %1518 = vector.shape_cast %1517 : vector<1x1x8x16xf32> to vector<8x16xf32>
    %1519 = vector.shape_cast %1349 : vector<8x16xf32> to vector<1x1x8x16xf32>
    tpu.vector_store %arg12[%c0_808, %c6_809, %c0_810, %c0_811], %1519 {strides = array<i32>} : memref<2x8x8x16xf32, #tpu.memory_space<vmem>>, vector<1x1x8x16xf32>,
    %c0_812 = arith.constant 0 : index
    %c6_813 = arith.constant 6 : index
    %c0_814 = arith.constant 0 : index
    %c0_815 = arith.constant 0 : index
    %1520 = vector.load %arg13[%c0_812, %c6_813, %c0_814, %c0_815] : memref<2x8x8x16xf32, #tpu.memory_space<vmem>>, vector<1x1x8x16xf32>
    %1521 = vector.shape_cast %1520 : vector<1x1x8x16xf32> to vector<8x16xf32>
    %1522 = vector.shape_cast %1354 : vector<8x16xf32> to vector<1x1x8x16xf32>
    tpu.vector_store %arg13[%c0_812, %c6_813, %c0_814, %c0_815], %1522 {strides = array<i32>} : memref<2x8x8x16xf32, #tpu.memory_space<vmem>>, vector<1x1x8x16xf32>,
    %c1_816 = arith.constant 1 : index
    %c1_817 = arith.constant 1 : index
    %c0_818 = arith.constant 0 : index
    %c0_819 = arith.constant 0 : index
    %1523 = vector.load %arg12[%c1_816, %c1_817, %c0_818, %c0_819] : memref<2x8x8x16xf32, #tpu.memory_space<vmem>>, vector<1x1x8x16xf32>
    %1524 = vector.shape_cast %1523 : vector<1x1x8x16xf32> to vector<8x16xf32>
    %1525 = vector.shape_cast %1451 : vector<8x16xf32> to vector<1x1x8x16xf32>
    tpu.vector_store %arg12[%c1_816, %c1_817, %c0_818, %c0_819], %1525 {strides = array<i32>} : memref<2x8x8x16xf32, #tpu.memory_space<vmem>>, vector<1x1x8x16xf32>,
    %c1_820 = arith.constant 1 : index
    %c1_821 = arith.constant 1 : index
    %c0_822 = arith.constant 0 : index
    %c0_823 = arith.constant 0 : index
    %1526 = vector.load %arg13[%c1_820, %c1_821, %c0_822, %c0_823] : memref<2x8x8x16xf32, #tpu.memory_space<vmem>>, vector<1x1x8x16xf32>
    %1527 = vector.shape_cast %1526 : vector<1x1x8x16xf32> to vector<8x16xf32>
    %1528 = vector.shape_cast %1456 : vector<8x16xf32> to vector<1x1x8x16xf32>
    tpu.vector_store %arg13[%c1_820, %c1_821, %c0_822, %c0_823], %1528 {strides = array<i32>} : memref<2x8x8x16xf32, #tpu.memory_space<vmem>>, vector<1x1x8x16xf32>,
    %c7_824 = arith.constant 7 : index
    %c0_825 = arith.constant 0 : index
    %c0_826 = arith.constant 0 : index
    %1529 = vector.load %arg0[%c7_824, %c0_825, %c0_826] : memref<8x8x16xf32, #tpu.memory_space<vmem>>, vector<1x8x16xf32>
    %1530 = vector.shape_cast %1529 : vector<1x8x16xf32> to vector<8x16xf32>
    %c7_827 = arith.constant 7 : index
    %c0_828 = arith.constant 0 : index
    %c0_829 = arith.constant 0 : index
    %1531 = vector.load %arg1[%c7_827, %c0_828, %c0_829] : memref<8x8x16xf32, #tpu.memory_space<vmem>>, vector<1x8x16xf32>
    %1532 = vector.shape_cast %1531 : vector<1x8x16xf32> to vector<8x16xf32>
    %c0_830 = arith.constant 0 : index
    %c0_831 = arith.constant 0 : index
    %c0_832 = arith.constant 0 : index
    %1533 = vector.load %arg6[%c0_830, %c0_831, %c0_832] : memref<2x32x16xf32, #tpu.memory_space<vmem>>, vector<1x32x16xf32>
    %1534 = vector.shape_cast %1533 : vector<1x32x16xf32> to vector<32x16xf32>
    %cst_833 = arith.constant dense<0.000000e+00> : vector<8x16xf32>
    %1535 = tpu.matmul %1414, %1534, %cst_833 {dimension_numbers = #tpu.dot_dimension_numbers<[1], [0], [0], [1], [0, 0, 1, 1], [], []>} : vector<8x32xf32>, vector<32x16xf32>, vector<8x16xf32> -> vector<8x16xf32>
    %1536 = vector.broadcast %2 : vector<1x16xf32> to vector<8x16xf32>
    %1537 = arith.addf %1535, %1536 : vector<8x16xf32>
    %1538 = arith.mulf %1532, %1530 : vector<8x16xf32>
    %cst_834 = arith.constant 1.000000e+00 : f32
    %1539 = vector.broadcast %cst_834 : f32 to vector<8x16xf32>
    %1540 = arith.subf %1539, %1532 : vector<8x16xf32>
    %1541 = arith.mulf %1540, %1537 : vector<8x16xf32>
    %1542 = arith.addf %1538, %1541 : vector<8x16xf32>
    %c0_835 = arith.constant 0 : index
    %c0_836 = arith.constant 0 : index
    %c0_837 = arith.constant 0 : index
    %1543 = vector.load %arg7[%c0_835, %c0_836, %c0_837] : memref<2x16x16xf32, #tpu.memory_space<vmem>>, vector<1x16x16xf32>
    %1544 = vector.shape_cast %1543 : vector<1x16x16xf32> to vector<16x16xf32>
    %cst_838 = arith.constant dense<0.000000e+00> : vector<8x16xf32>
    %1545 = tpu.matmul %1542, %1544, %cst_838 {dimension_numbers = #tpu.dot_dimension_numbers<[1], [0], [0], [1], [0, 0, 1, 1], [], []>} : vector<8x16xf32>, vector<16x16xf32>, vector<8x16xf32> -> vector<8x16xf32>
    %c0_839 = arith.constant 0 : index
    %c7_840 = arith.constant 7 : index
    %c0_841 = arith.constant 0 : index
    %c0_842 = arith.constant 0 : index
    %1546 = vector.load %arg4[%c0_839, %c7_840, %c0_841, %c0_842] : memref<2x8x8x16xf32, #tpu.memory_space<vmem>>, vector<1x1x8x16xf32>
    %1547 = vector.shape_cast %1546 : vector<1x1x8x16xf32> to vector<8x16xf32>
    %1548 = arith.addf %1545, %1547 : vector<8x16xf32>
    %1549 = arith.mulf %1532, %1530 : vector<8x16xf32>
    %cst_843 = arith.constant 1.000000e+00 : f32
    %1550 = vector.broadcast %cst_843 : f32 to vector<8x16xf32>
    %1551 = arith.subf %1550, %1532 : vector<8x16xf32>
    %1552 = arith.mulf %1551, %1548 : vector<8x16xf32>
    %1553 = arith.addf %1549, %1552 : vector<8x16xf32>
    %c0_844 = arith.constant 0 : index
    %c0_845 = arith.constant 0 : index
    %c0_846 = arith.constant 0 : index
    %1554 = vector.load %arg8[%c0_844, %c0_845, %c0_846] : memref<2x16x16xf32, #tpu.memory_space<vmem>>, vector<1x16x16xf32>
    %1555 = vector.shape_cast %1554 : vector<1x16x16xf32> to vector<16x16xf32>
    %cst_847 = arith.constant dense<0.000000e+00> : vector<8x16xf32>
    %1556 = tpu.matmul %1553, %1555, %cst_847 {dimension_numbers = #tpu.dot_dimension_numbers<[1], [0], [0], [1], [0, 0, 1, 1], [], []>} : vector<8x16xf32>, vector<16x16xf32>, vector<8x16xf32> -> vector<8x16xf32>
    %1557 = vector.broadcast %6 : vector<1x16xf32> to vector<8x16xf32>
    %1558 = arith.addf %1556, %1557 : vector<8x16xf32>
    %c0_848 = arith.constant 0 : index
    %c7_849 = arith.constant 7 : index
    %c0_850 = arith.constant 0 : index
    %c0_851 = arith.constant 0 : index
    %1559 = vector.load %arg3[%c0_848, %c7_849, %c0_850, %c0_851] : memref<2x8x8x16xf32, #tpu.memory_space<vmem>>, vector<1x1x8x16xf32>
    %1560 = vector.shape_cast %1559 : vector<1x1x8x16xf32> to vector<8x16xf32>
    %1561 = arith.mulf %1560, %1558 : vector<8x16xf32>
    %cst_852 = arith.constant 1.000000e+00 : f32
    %1562 = vector.broadcast %cst_852 : f32 to vector<8x16xf32>
    %1563 = arith.subf %1562, %1560 : vector<8x16xf32>
    %1564 = arith.mulf %1563, %1537 : vector<8x16xf32>
    %1565 = arith.addf %1561, %1564 : vector<8x16xf32>
    %1566 = arith.mulf %1532, %1530 : vector<8x16xf32>
    %cst_853 = arith.constant 1.000000e+00 : f32
    %1567 = vector.broadcast %cst_853 : f32 to vector<8x16xf32>
    %1568 = arith.subf %1567, %1532 : vector<8x16xf32>
    %1569 = arith.mulf %1568, %1565 : vector<8x16xf32>
    %1570 = arith.addf %1566, %1569 : vector<8x16xf32>
    %1571 = arith.subf %1530, %1537 : vector<8x16xf32>
    %1572 = math.absf %1571 : vector<8x16xf32>
    %1573 = arith.subf %1530, %1548 : vector<8x16xf32>
    %1574 = math.absf %1573 : vector<8x16xf32>
    %1575 = arith.addf %1572, %1574 : vector<8x16xf32>
    %1576 = arith.subf %1530, %1558 : vector<8x16xf32>
    %1577 = math.absf %1576 : vector<8x16xf32>
    %1578 = arith.addf %1575, %1577 : vector<8x16xf32>
    %1579 = arith.subf %1530, %1565 : vector<8x16xf32>
    %1580 = math.absf %1579 : vector<8x16xf32>
    %1581 = arith.addf %1578, %1580 : vector<8x16xf32>
    %1582 = arith.mulf %1581, %1532 : vector<8x16xf32>
    %1583 = vector.shape_cast %1532 : vector<8x16xf32> to vector<1x8x16xf32>
    %cst_854 = arith.constant dense<0.000000e+00> : vector<1xf32>
    %1584 = vector.multi_reduction <add>, %1583, %cst_854 [1, 2] : vector<1x8x16xf32> to vector<1xf32>
    %1585 = vector.shape_cast %1584 : vector<1xf32> to vector<1x1x1xf32>
    %1586 = vector.extract %1585[0, 0, 0] : f32 from vector<1x1x1xf32>
    %1587 = vector.broadcast %1586 : f32 to vector<1x1xf32>
    %cst_855 = arith.constant 9.99999974E-6 : f32
    %1588 = vector.broadcast %cst_855 : f32 to vector<1x1xf32>
    %1589 = arith.addf %1587, %1588 : vector<1x1xf32>
    %1590 = vector.shape_cast %1582 : vector<8x16xf32> to vector<1x8x16xf32>
    %cst_856 = arith.constant dense<0.000000e+00> : vector<1xf32>
    %1591 = vector.multi_reduction <add>, %1590, %cst_856 [1, 2] : vector<1x8x16xf32> to vector<1xf32>
    %1592 = vector.shape_cast %1591 : vector<1xf32> to vector<1x1x1xf32>
    %1593 = vector.extract %1592[0, 0, 0] : f32 from vector<1x1x1xf32>
    %1594 = vector.broadcast %1593 : f32 to vector<1x1xf32>
    %1595 = arith.divf %1594, %1589 : vector<1x1xf32>
    %1596 = arith.addf %1380, %1595 : vector<1x1xf32>
    %c0_857 = arith.constant 0 : index
    %c0_858 = arith.constant 0 : index
    %c0_859 = arith.constant 0 : index
    %1597 = vector.load %arg0[%c0_857, %c0_858, %c0_859] : memref<8x8x16xf32, #tpu.memory_space<vmem>>, vector<1x8x16xf32>
    %1598 = vector.shape_cast %1597 : vector<1x8x16xf32> to vector<8x16xf32>
    %c0_860 = arith.constant 0 : index
    %c0_861 = arith.constant 0 : index
    %c0_862 = arith.constant 0 : index
    %1599 = vector.load %arg1[%c0_860, %c0_861, %c0_862] : memref<8x8x16xf32, #tpu.memory_space<vmem>>, vector<1x8x16xf32>
    %1600 = vector.shape_cast %1599 : vector<1x8x16xf32> to vector<8x16xf32>
    %c1_863 = arith.constant 1 : index
    %c0_864 = arith.constant 0 : index
    %c0_865 = arith.constant 0 : index
    %1601 = vector.load %arg6[%c1_863, %c0_864, %c0_865] : memref<2x32x16xf32, #tpu.memory_space<vmem>>, vector<1x32x16xf32>
    %1602 = vector.shape_cast %1601 : vector<1x32x16xf32> to vector<32x16xf32>
    %cst_866 = arith.constant dense<0.000000e+00> : vector<8x16xf32>
    %1603 = tpu.matmul %1516, %1602, %cst_866 {dimension_numbers = #tpu.dot_dimension_numbers<[1], [0], [0], [1], [0, 0, 1, 1], [], []>} : vector<8x32xf32>, vector<32x16xf32>, vector<8x16xf32> -> vector<8x16xf32>
    %1604 = vector.broadcast %4 : vector<1x16xf32> to vector<8x16xf32>
    %1605 = arith.addf %1603, %1604 : vector<8x16xf32>
    %1606 = arith.mulf %1600, %1598 : vector<8x16xf32>
    %cst_867 = arith.constant 1.000000e+00 : f32
    %1607 = vector.broadcast %cst_867 : f32 to vector<8x16xf32>
    %1608 = arith.subf %1607, %1600 : vector<8x16xf32>
    %1609 = arith.mulf %1608, %1605 : vector<8x16xf32>
    %1610 = arith.addf %1606, %1609 : vector<8x16xf32>
    %c1_868 = arith.constant 1 : index
    %c0_869 = arith.constant 0 : index
    %c0_870 = arith.constant 0 : index
    %1611 = vector.load %arg7[%c1_868, %c0_869, %c0_870] : memref<2x16x16xf32, #tpu.memory_space<vmem>>, vector<1x16x16xf32>
    %1612 = vector.shape_cast %1611 : vector<1x16x16xf32> to vector<16x16xf32>
    %cst_871 = arith.constant dense<0.000000e+00> : vector<8x16xf32>
    %1613 = tpu.matmul %1610, %1612, %cst_871 {dimension_numbers = #tpu.dot_dimension_numbers<[1], [0], [0], [1], [0, 0, 1, 1], [], []>} : vector<8x16xf32>, vector<16x16xf32>, vector<8x16xf32> -> vector<8x16xf32>
    %c1_872 = arith.constant 1 : index
    %c0_873 = arith.constant 0 : index
    %c0_874 = arith.constant 0 : index
    %c0_875 = arith.constant 0 : index
    %1614 = vector.load %arg4[%c1_872, %c0_873, %c0_874, %c0_875] : memref<2x8x8x16xf32, #tpu.memory_space<vmem>>, vector<1x1x8x16xf32>
    %1615 = vector.shape_cast %1614 : vector<1x1x8x16xf32> to vector<8x16xf32>
    %1616 = arith.addf %1613, %1615 : vector<8x16xf32>
    %1617 = arith.mulf %1600, %1598 : vector<8x16xf32>
    %cst_876 = arith.constant 1.000000e+00 : f32
    %1618 = vector.broadcast %cst_876 : f32 to vector<8x16xf32>
    %1619 = arith.subf %1618, %1600 : vector<8x16xf32>
    %1620 = arith.mulf %1619, %1616 : vector<8x16xf32>
    %1621 = arith.addf %1617, %1620 : vector<8x16xf32>
    %c1_877 = arith.constant 1 : index
    %c0_878 = arith.constant 0 : index
    %c0_879 = arith.constant 0 : index
    %1622 = vector.load %arg8[%c1_877, %c0_878, %c0_879] : memref<2x16x16xf32, #tpu.memory_space<vmem>>, vector<1x16x16xf32>
    %1623 = vector.shape_cast %1622 : vector<1x16x16xf32> to vector<16x16xf32>
    %cst_880 = arith.constant dense<0.000000e+00> : vector<8x16xf32>
    %1624 = tpu.matmul %1621, %1623, %cst_880 {dimension_numbers = #tpu.dot_dimension_numbers<[1], [0], [0], [1], [0, 0, 1, 1], [], []>} : vector<8x16xf32>, vector<16x16xf32>, vector<8x16xf32> -> vector<8x16xf32>
    %1625 = vector.broadcast %8 : vector<1x16xf32> to vector<8x16xf32>
    %1626 = arith.addf %1624, %1625 : vector<8x16xf32>
    %c1_881 = arith.constant 1 : index
    %c0_882 = arith.constant 0 : index
    %c0_883 = arith.constant 0 : index
    %c0_884 = arith.constant 0 : index
    %1627 = vector.load %arg3[%c1_881, %c0_882, %c0_883, %c0_884] : memref<2x8x8x16xf32, #tpu.memory_space<vmem>>, vector<1x1x8x16xf32>
    %1628 = vector.shape_cast %1627 : vector<1x1x8x16xf32> to vector<8x16xf32>
    %1629 = arith.mulf %1628, %1626 : vector<8x16xf32>
    %cst_885 = arith.constant 1.000000e+00 : f32
    %1630 = vector.broadcast %cst_885 : f32 to vector<8x16xf32>
    %1631 = arith.subf %1630, %1628 : vector<8x16xf32>
    %1632 = arith.mulf %1631, %1605 : vector<8x16xf32>
    %1633 = arith.addf %1629, %1632 : vector<8x16xf32>
    %1634 = arith.mulf %1600, %1598 : vector<8x16xf32>
    %cst_886 = arith.constant 1.000000e+00 : f32
    %1635 = vector.broadcast %cst_886 : f32 to vector<8x16xf32>
    %1636 = arith.subf %1635, %1600 : vector<8x16xf32>
    %1637 = arith.mulf %1636, %1633 : vector<8x16xf32>
    %1638 = arith.addf %1634, %1637 : vector<8x16xf32>
    %1639 = arith.subf %1598, %1605 : vector<8x16xf32>
    %1640 = math.absf %1639 : vector<8x16xf32>
    %1641 = arith.subf %1598, %1616 : vector<8x16xf32>
    %1642 = math.absf %1641 : vector<8x16xf32>
    %1643 = arith.addf %1640, %1642 : vector<8x16xf32>
    %1644 = arith.subf %1598, %1626 : vector<8x16xf32>
    %1645 = math.absf %1644 : vector<8x16xf32>
    %1646 = arith.addf %1643, %1645 : vector<8x16xf32>
    %1647 = arith.subf %1598, %1633 : vector<8x16xf32>
    %1648 = math.absf %1647 : vector<8x16xf32>
    %1649 = arith.addf %1646, %1648 : vector<8x16xf32>
    %1650 = arith.mulf %1649, %1600 : vector<8x16xf32>
    %1651 = vector.shape_cast %1600 : vector<8x16xf32> to vector<1x8x16xf32>
    %cst_887 = arith.constant dense<0.000000e+00> : vector<1xf32>
    %1652 = vector.multi_reduction <add>, %1651, %cst_887 [1, 2] : vector<1x8x16xf32> to vector<1xf32>
    %1653 = vector.shape_cast %1652 : vector<1xf32> to vector<1x1x1xf32>
    %1654 = vector.extract %1653[0, 0, 0] : f32 from vector<1x1x1xf32>
    %1655 = vector.broadcast %1654 : f32 to vector<1x1xf32>
    %cst_888 = arith.constant 9.99999974E-6 : f32
    %1656 = vector.broadcast %cst_888 : f32 to vector<1x1xf32>
    %1657 = arith.addf %1655, %1656 : vector<1x1xf32>
    %1658 = vector.shape_cast %1650 : vector<8x16xf32> to vector<1x8x16xf32>
    %cst_889 = arith.constant dense<0.000000e+00> : vector<1xf32>
    %1659 = vector.multi_reduction <add>, %1658, %cst_889 [1, 2] : vector<1x8x16xf32> to vector<1xf32>
    %1660 = vector.shape_cast %1659 : vector<1xf32> to vector<1x1x1xf32>
    %1661 = vector.extract %1660[0, 0, 0] : f32 from vector<1x1x1xf32>
    %1662 = vector.broadcast %1661 : f32 to vector<1x1xf32>
    %1663 = arith.divf %1662, %1657 : vector<1x1xf32>
    %1664 = arith.addf %1482, %1663 : vector<1x1xf32>
    %c0_890 = arith.constant 0 : index
    %c7_891 = arith.constant 7 : index
    %c0_892 = arith.constant 0 : index
    %c0_893 = arith.constant 0 : index
    %1665 = vector.load %arg12[%c0_890, %c7_891, %c0_892, %c0_893] : memref<2x8x8x16xf32, #tpu.memory_space<vmem>>, vector<1x1x8x16xf32>
    %1666 = vector.shape_cast %1665 : vector<1x1x8x16xf32> to vector<8x16xf32>
    %1667 = vector.shape_cast %1565 : vector<8x16xf32> to vector<1x1x8x16xf32>
    tpu.vector_store %arg12[%c0_890, %c7_891, %c0_892, %c0_893], %1667 {strides = array<i32>} : memref<2x8x8x16xf32, #tpu.memory_space<vmem>>, vector<1x1x8x16xf32>,
    %c0_894 = arith.constant 0 : index
    %c7_895 = arith.constant 7 : index
    %c0_896 = arith.constant 0 : index
    %c0_897 = arith.constant 0 : index
    %1668 = vector.load %arg13[%c0_894, %c7_895, %c0_896, %c0_897] : memref<2x8x8x16xf32, #tpu.memory_space<vmem>>, vector<1x1x8x16xf32>
    %1669 = vector.shape_cast %1668 : vector<1x1x8x16xf32> to vector<8x16xf32>
    %1670 = vector.shape_cast %1570 : vector<8x16xf32> to vector<1x1x8x16xf32>
    tpu.vector_store %arg13[%c0_894, %c7_895, %c0_896, %c0_897], %1670 {strides = array<i32>} : memref<2x8x8x16xf32, #tpu.memory_space<vmem>>, vector<1x1x8x16xf32>,
    %c1_898 = arith.constant 1 : index
    %c0_899 = arith.constant 0 : index
    %c0_900 = arith.constant 0 : index
    %c0_901 = arith.constant 0 : index
    %1671 = vector.load %arg12[%c1_898, %c0_899, %c0_900, %c0_901] : memref<2x8x8x16xf32, #tpu.memory_space<vmem>>, vector<1x1x8x16xf32>
    %1672 = vector.shape_cast %1671 : vector<1x1x8x16xf32> to vector<8x16xf32>
    %1673 = vector.shape_cast %1633 : vector<8x16xf32> to vector<1x1x8x16xf32>
    tpu.vector_store %arg12[%c1_898, %c0_899, %c0_900, %c0_901], %1673 {strides = array<i32>} : memref<2x8x8x16xf32, #tpu.memory_space<vmem>>, vector<1x1x8x16xf32>,
    %c1_902 = arith.constant 1 : index
    %c0_903 = arith.constant 0 : index
    %c0_904 = arith.constant 0 : index
    %c0_905 = arith.constant 0 : index
    %1674 = vector.load %arg13[%c1_902, %c0_903, %c0_904, %c0_905] : memref<2x8x8x16xf32, #tpu.memory_space<vmem>>, vector<1x1x8x16xf32>
    %1675 = vector.shape_cast %1674 : vector<1x1x8x16xf32> to vector<8x16xf32>
    %1676 = vector.shape_cast %1638 : vector<8x16xf32> to vector<1x1x8x16xf32>
    tpu.vector_store %arg13[%c1_902, %c0_903, %c0_904, %c0_905], %1676 {strides = array<i32>} : memref<2x8x8x16xf32, #tpu.memory_space<vmem>>, vector<1x1x8x16xf32>,
    %cst_906 = arith.constant 5.000000e+00 : f32
    %1677 = vector.broadcast %cst_906 : f32 to vector<1x1xf32>
    %1678 = arith.mulf %1596, %1677 : vector<1x1xf32>
    %c0_907 = arith.constant 0 : index
    %c0_908 = arith.constant 0 : index
    %c0_909 = arith.constant 0 : index
    %1679 = vector.load %arg14[%c0_907, %c0_908, %c0_909] : memref<2x1x1xf32, #tpu.memory_space<vmem>>, vector<1x1x1xf32>
    %1680 = vector.shape_cast %1679 : vector<1x1x1xf32> to vector<1x1xf32>
    %1681 = vector.shape_cast %1678 : vector<1x1xf32> to vector<1x1x1xf32>
    tpu.vector_store %arg14[%c0_907, %c0_908, %c0_909], %1681 {strides = array<i32>} : memref<2x1x1xf32, #tpu.memory_space<vmem>>, vector<1x1x1xf32>,
    %cst_910 = arith.constant 5.000000e+00 : f32
    %1682 = vector.broadcast %cst_910 : f32 to vector<1x1xf32>
    %1683 = arith.mulf %1664, %1682 : vector<1x1xf32>
    %c1_911 = arith.constant 1 : index
    %c0_912 = arith.constant 0 : index
    %c0_913 = arith.constant 0 : index
    %1684 = vector.load %arg14[%c1_911, %c0_912, %c0_913] : memref<2x1x1xf32, #tpu.memory_space<vmem>>, vector<1x1x1xf32>
    %1685 = vector.shape_cast %1684 : vector<1x1x1xf32> to vector<1x1xf32>
    %1686 = vector.shape_cast %1683 : vector<1x1xf32> to vector<1x1x1xf32>
    tpu.vector_store %arg14[%c1_911, %c0_912, %c0_913], %1686 {strides = array<i32>} : memref<2x1x1xf32, #tpu.memory_space<vmem>>, vector<1x1x1xf32>,
    return
  }
}

</mosaic_0001>

<llo_original>
// kernel: _bimgru_rbf_forward_impl.1
$region0: #{_bimgru_rbf_forward_impl.1}
  #allocation0 [shape = 'u32[]', space=smem, size = 0x4, offset = 0x4, fixed_abs, tag = 'smem constant byte address 0x4 - core index']
  #allocation1 [shape = 'u32[72,128]{1,0:T(1,128)}', space=vmem, size = 0x9000, scoped, tag = 'internal scratch']
  %s0 = inlined_call_operand.vmem [shape: f32[8,8,16], index: 0, kind: input, shape index: {}]
  %s1 = inlined_call_operand.vmem [shape: f32[8,8,16], index: 1, kind: input, shape index: {}]
  %s2 = inlined_call_operand.vmem [shape: f32[2,8,8,32], index: 2, kind: input, shape index: {}]
  %s3 = inlined_call_operand.vmem [shape: f32[2,8,8,16], index: 3, kind: input, shape index: {}]
  %s4 = inlined_call_operand.vmem [shape: f32[2,8,8,16], index: 4, kind: input, shape index: {}]
  %s5 = inlined_call_operand.vmem [shape: f32[2,8,8,96], index: 5, kind: input, shape index: {}]
  %s6 = inlined_call_operand.vmem [shape: f32[2,32,16], index: 6, kind: input, shape index: {}]
  %s7 = inlined_call_operand.vmem [shape: f32[2,16,16], index: 7, kind: input, shape index: {}]
  %s8 = inlined_call_operand.vmem [shape: f32[2,16,16], index: 8, kind: input, shape index: {}]
  %s9 = inlined_call_operand.vmem [shape: f32[2,16,96], index: 9, kind: input, shape index: {}]
  %s10 = inlined_call_operand.vmem [shape: f32[2,32,96], index: 10, kind: input, shape index: {}]
  %s11 = inlined_call_operand.vmem [shape: f32[2,1,128], index: 11, kind: input, shape index: {}]
  %s12 = inlined_call_operand.vmem [shape: f32[2,8,8,16], index: 12, kind: output, shape index: {0}]
  %s13 = inlined_call_operand.vmem [shape: f32[2,8,8,16], index: 13, kind: output, shape index: {1}]
  %s14 = inlined_call_operand.vmem [shape: f32[2,1,1], index: 14, kind: output, shape index: {2}]
  %15 = xla_tuple %s12, %s13, %s14
  %s16 = sld [smem:[#allocation0]]
  $region74: #{_bimgru_rbf_forward_impl.1} parent=0
    _
  %s18 = ssub.s32 1, %s16
  %s19 = scalar_select 0, %s18, %s16
  // Predicated region
  $region2: #{_bimgru_rbf_forward_impl.1} parent=0 // pred_check
    _
  $region3: #{_bimgru_rbf_forward_impl.1} parent=0 // pred_check_branch
    %21 = sbr.rel (0) target = $region5
  $region4: #{_bimgru_rbf_forward_impl.1} parent=0 // pred_region
    _
  $region5: #{_bimgru_rbf_forward_impl.1} parent=0 // pred_fallthru
    _
  // Predicated region
  $region6: #{_bimgru_rbf_forward_impl.1} parent=0 // pred_check
    _
  $region7: #{_bimgru_rbf_forward_impl.1} parent=0 // pred_check_branch
    %23 = sbr.rel (0) target = $region9
  $region8: #{_bimgru_rbf_forward_impl.1} parent=0 // pred_region
    _
  $region9: #{_bimgru_rbf_forward_impl.1} parent=0 // pred_fallthru
    _
  // Predicated region
  $region10: #{_bimgru_rbf_forward_impl.1} parent=0 // pred_check
    _
  $region11: #{_bimgru_rbf_forward_impl.1} parent=0 // pred_check_branch
    %25 = sbr.rel (0) target = $region13
  $region12: #{_bimgru_rbf_forward_impl.1} parent=0 // pred_region
    _
  $region13: #{_bimgru_rbf_forward_impl.1} parent=0 // pred_fallthru
    _
  // Predicated region
  $region14: #{_bimgru_rbf_forward_impl.1} parent=0 // pred_check
    _
  $region15: #{_bimgru_rbf_forward_impl.1} parent=0 // pred_check_branch
    %27 = sbr.rel (0) target = $region17
  $region16: #{_bimgru_rbf_forward_impl.1} parent=0 // pred_region
    _
  $region17: #{_bimgru_rbf_forward_impl.1} parent=0 // pred_fallthru
    _
  // Predicated region
  $region18: #{_bimgru_rbf_forward_impl.1} parent=0 // pred_check
    _
  $region19: #{_bimgru_rbf_forward_impl.1} parent=0 // pred_check_branch
    %29 = sbr.rel (0) target = $region21
  $region20: #{_bimgru_rbf_forward_impl.1} parent=0 // pred_region
    _
  $region21: #{_bimgru_rbf_forward_impl.1} parent=0 // pred_fallthru
    _
  // Predicated region
  $region22: #{_bimgru_rbf_forward_impl.1} parent=0 // pred_check
    _
  $region23: #{_bimgru_rbf_forward_impl.1} parent=0 // pred_check_branch
    %31 = sbr.rel (0) target = $region25
  $region24: #{_bimgru_rbf_forward_impl.1} parent=0 // pred_region
    _
  $region25: #{_bimgru_rbf_forward_impl.1} parent=0 // pred_fallthru
    _
  // Predicated region
  $region26: #{_bimgru_rbf_forward_impl.1} parent=0 // pred_check
    _
  $region27: #{_bimgru_rbf_forward_impl.1} parent=0 // pred_check_branch
    %33 = sbr.rel (0) target = $region29
  $region28: #{_bimgru_rbf_forward_impl.1} parent=0 // pred_region
    _
  $region29: #{_bimgru_rbf_forward_impl.1} parent=0 // pred_fallthru
    _
  // Predicated region
  $region30: #{_bimgru_rbf_forward_impl.1} parent=0 // pred_check
    _
  $region31: #{_bimgru_rbf_forward_impl.1} parent=0 // pred_check_branch
    %35 = sbr.rel (0) target = $region33
  $region32: #{_bimgru_rbf_forward_impl.1} parent=0 // pred_region
    _
  $region33: #{_bimgru_rbf_forward_impl.1} parent=0 // pred_fallthru
    _
  // Predicated region
  $region34: #{_bimgru_rbf_forward_impl.1} parent=0 // pred_check
    _
  $region35: #{_bimgru_rbf_forward_impl.1} parent=0 // pred_check_branch
    %37 = sbr.rel (0) target = $region37
  $region36: #{_bimgru_rbf_forward_impl.1} parent=0 // pred_region
    _
  $region37: #{_bimgru_rbf_forward_impl.1} parent=0 // pred_fallthru
    _
  // Predicated region
  $region38: #{_bimgru_rbf_forward_impl.1} parent=0 // pred_check
    _
  $region39: #{_bimgru_rbf_forward_impl.1} parent=0 // pred_check_branch
    %39 = sbr.rel (0) target = $region41
  $region40: #{_bimgru_rbf_forward_impl.1} parent=0 // pred_region
    _
  $region41: #{_bimgru_rbf_forward_impl.1} parent=0 // pred_fallthru
    _
  // Predicated region
  $region42: #{_bimgru_rbf_forward_impl.1} parent=0 // pred_check
    _
  $region43: #{_bimgru_rbf_forward_impl.1} parent=0 // pred_check_branch
    %41 = sbr.rel (0) target = $region45
  $region44: #{_bimgru_rbf_forward_impl.1} parent=0 // pred_region
    _
  $region45: #{_bimgru_rbf_forward_impl.1} parent=0 // pred_fallthru
    _
  // Predicated region
  $region46: #{_bimgru_rbf_forward_impl.1} parent=0 // pred_check
    _
  $region47: #{_bimgru_rbf_forward_impl.1} parent=0 // pred_check_branch
    %43 = sbr.rel (0) target = $region49
  $region48: #{_bimgru_rbf_forward_impl.1} parent=0 // pred_region
    _
  $region49: #{_bimgru_rbf_forward_impl.1} parent=0 // pred_fallthru
    _
  %v44 = vld [vmem:[%s11] sm:$0x1]
  %v45 = vld [vmem:[%s11 + $0x1] sm:$0x1]
  %v46 = vld [vmem:[%s0] sm:$0xff]
  %v47 = vld [vmem:[%s1] sm:$0xff]
  %v48 = vld [vmem:[%s6] sm:$0xff]
  %v49 = vld [vmem:[%s6 + $0x8] sm:$0xff]
  %v50 = vld [vmem:[%s6 + $0x10] sm:$0xff]
  %v51 = vld [vmem:[%s6 + $0x18] sm:$0xff]
  %v53 = vperm.slane %v44, 0
  %vm55 = vcmask 261120
  %v57 = vsel %vm55, 0.0, 0
  %59 = vmatpush.msra.mxu0 0.0
  %60 = vmatpush.msra.mxu0 0.0
  %61 = vmatpush.msra.mxu0 0.0
  %62 = vmatpush.msra.mxu0 0.0
  %63 = vmatpush.msra.mxu0 0.0
  %64 = vmatpush.msra.mxu0 0.0
  %65 = vmatpush.msra.mxu0 0.0
  %66 = vmatpush.msra.mxu0 0.0
  %67 = vmatpush.msra.mxu0 0.0
  %68 = vmatpush.msra.mxu0 0.0
  %69 = vmatpush.msra.mxu0 0.0
  %70 = vmatpush.msra.mxu0 0.0
  %71 = vmatpush.msra.mxu0 %v51
  %72 = vmatpush.msra.mxu0 %v50
  %73 = vmatpush.msra.mxu0 %v49
  %74 = vmatpush.msra.mxu0 %v48
  %75 = vmatmul.f32.gmra.mxu0 %v57
  %v76 = vpop.f32.mrf.mxu0
  %v77 = vadd.f32 %v53, %v76
  %78 = vdwg.mxu0
  %v79 = vmul.f32 %v47, %v46
  %v80 = vsub.f32 1.0, %v47
  %v81 = vmul.f32 %v80, %v77
  %v82 = vadd.f32 %v79, %v81
  %v83 = vld [vmem:[%s7] sm:$0xff]
  %v84 = vld [vmem:[%s7 + $0x8] sm:$0xff]
  %v85 = vld [vmem:[%s4] sm:$0xff]
  %vm86 = vcmask 130048
  %v88 = vsel %vm86, %v82, 0
  %90 = vmatpush.msra.mxu0 0.0
  %91 = vmatpush.msra.mxu0 0.0
  %92 = vmatpush.msra.mxu0 0.0
  %93 = vmatpush.msra.mxu0 0.0
  %94 = vmatpush.msra.mxu0 0.0
  %95 = vmatpush.msra.mxu0 0.0
  %96 = vmatpush.msra.mxu0 0.0
  %97 = vmatpush.msra.mxu0 0.0
  %98 = vmatpush.msra.mxu0 0.0
  %99 = vmatpush.msra.mxu0 0.0
  %100 = vmatpush.msra.mxu0 0.0
  %101 = vmatpush.msra.mxu0 0.0
  %102 = vmatpush.msra.mxu0 0.0
  %103 = vmatpush.msra.mxu0 0.0
  %104 = vmatpush.msra.mxu0 %v84
  %105 = vmatpush.msra.mxu0 %v83
  %106 = vmatmul.f32.gmra.mxu0 %v88
  %v107 = vpop.f32.mrf.mxu0
  %v108 = vadd.f32 %v85, %v107
  %109 = vdwg.mxu0
  %v110 = vmul.f32 %v80, %v108
  %v111 = vadd.f32 %v79, %v110
  %v112 = vld [vmem:[%s8] sm:$0xff]
  %v113 = vld [vmem:[%s8 + $0x8] sm:$0xff]
  %114 = vrot.lane.b32.xlu0 %v53, 112
  %v115 = vpop.permute.xlu0 %114
  %v118 = vsel %vm86, %v111, 0
  %120 = vmatpush.msra.mxu0 0.0
  %121 = vmatpush.msra.mxu0 0.0
  %122 = vmatpush.msra.mxu0 0.0
  %123 = vmatpush.msra.mxu0 0.0
  %124 = vmatpush.msra.mxu0 0.0
  %125 = vmatpush.msra.mxu0 0.0
  %126 = vmatpush.msra.mxu0 0.0
  %127 = vmatpush.msra.mxu0 0.0
  %128 = vmatpush.msra.mxu0 0.0
  %129 = vmatpush.msra.mxu0 0.0
  %130 = vmatpush.msra.mxu0 0.0
  %131 = vmatpush.msra.mxu0 0.0
  %132 = vmatpush.msra.mxu0 0.0
  %133 = vmatpush.msra.mxu0 0.0
  %134 = vmatpush.msra.mxu0 %v113
  %135 = vmatpush.msra.mxu0 %v112
  %136 = vmatmul.f32.gmra.mxu0 %v118
  %v137 = vpop.f32.mrf.mxu0
  %v138 = vadd.f32 %v115, %v137
  %139 = vdwg.mxu0
  %v140 = vld [vmem:[%s3] sm:$0xff]
  %v141 = vmul.f32 %v140, %v138
  %v142 = vsub.f32 1.0, %v140
  %v143 = vmul.f32 %v142, %v77
  %v144 = vadd.f32 %v141, %v143
  %v145 = vmul.f32 %v80, %v144
  %v146 = vadd.f32 %v79, %v145
  %v147 = vsub.f32 %v46, %v77
  %v148 = vand.u32 2147483647, %v147
  %v149 = vsub.f32 %v46, %v108
  %v150 = vand.u32 2147483647, %v149
  %v151 = vadd.f32 %v148, %v150
  %v152 = vsub.f32 %v46, %v138
  %v153 = vand.u32 2147483647, %v152
  %v154 = vadd.f32 %v151, %v153
  %v155 = vsub.f32 %v46, %v144
  %v156 = vand.u32 2147483647, %v155
  %v157 = vadd.f32 %v154, %v156
  %v158 = vmul.f32 %v157, %v47
  %v159 = vsel %vm86, %v47, 0.0
  %160 = vadd.xlane.f32.xlu0 %v159
  %v161 = vpop.xlane.xlu0 %160
  %v162 = vrot.slane %v161, 4
  %v163 = vadd.f32 %v161, %v162
  %v164 = vrot.slane %v163, 2
  %v165 = vadd.f32 %v163, %v164
  %v166 = vrot.slane %v165, 1
  %v167 = vadd.f32 %v165, %v166
  %s168 = vtos %v167
  %v169 = vstv %s168
  %v170 = vadd.f32 %v169, 1e-05
  %v171 = vsel %vm86, %v158, 0.0
  %172 = vadd.xlane.f32.xlu0 %v171
  %v173 = vpop.xlane.xlu0 %172
  %v174 = vrot.slane %v173, 4
  %v175 = vadd.f32 %v173, %v174
  %v176 = vrot.slane %v175, 2
  %v177 = vadd.f32 %v175, %v176
  %v178 = vrot.slane %v177, 1
  %v179 = vadd.f32 %v177, %v178
  %s180 = vtos %v179
  %v181 = vstv %s180
  %v182 = vrcp.pop %v170
  %v183 = vmul.f32 %v170, %v182
  %v184 = vsub.f32 1.0, %v183
  %v185 = vmul.f32 %v182, %v184
  %v186 = vadd.f32 %v182, %v185
  %vm187 = vweird.f32 %v170
  %vm188 = vweird.f32 %v182
  %vm189 = vmor %vm187, %vm188
  %v190 = vsel %vm189, %v182, %v186
  %v191 = vand.u32 2147483647, %v170
  %vm192 = vcmp.eq.f32.partialorder %v191, 8.507059e+37
  %v193 = vand.u32 %v170, 2147483648
  %v194 = vor.u32 1.1754944e-38, %v193
  %v195 = vsel %vm192, %v194, %v190
  %v196 = vmul.f32 %v181, %v195
  %v197 = vadd.f32 %v196, 0.0
  %v198 = vld [vmem:[%s2] sm:$0xff]
  %v199 = vmul.f32 %v198, 0.0
  %v200 = vld [vmem:[%s9] sm:$0xff]
  %v201 = vld [vmem:[%s9 + $0x8] sm:$0xff]
  %v202 = vld [vmem:[%s5] sm:$0xff]
  %v204 = vsel %vm86, %v146, 0
  %206 = vmatpush.msra.mxu0 0.0
  %207 = vmatpush.msra.mxu0 0.0
  %208 = vmatpush.msra.mxu0 0.0
  %209 = vmatpush.msra.mxu0 0.0
  %210 = vmatpush.msra.mxu0 0.0
  %211 = vmatpush.msra.mxu0 0.0
  %212 = vmatpush.msra.mxu0 0.0
  %213 = vmatpush.msra.mxu0 0.0
  %214 = vmatpush.msra.mxu0 0.0
  %215 = vmatpush.msra.mxu0 0.0
  %216 = vmatpush.msra.mxu0 0.0
  %217 = vmatpush.msra.mxu0 0.0
  %218 = vmatpush.msra.mxu0 0.0
  %219 = vmatpush.msra.mxu0 0.0
  %220 = vmatpush.msra.mxu0 %v201
  %221 = vmatpush.msra.mxu0 %v200
  %222 = vmatmul.f32.gmra.mxu0 %v204
  %v223 = vpop.f32.mrf.mxu0
  %v224 = vadd.f32 %v202, %v223
  %225 = vdwg.mxu0
  %v226 = vld [vmem:[%s10] sm:$0xff]
  %v227 = vld [vmem:[%s10 + $0x8] sm:$0xff]
  %v228 = vld [vmem:[%s10 + $0x10] sm:$0xff]
  %v229 = vld [vmem:[%s10 + $0x18] sm:$0xff]
  %230 = vrot.lane.b32.xlu0 %v53, 96
  %v231 = vpop.permute.xlu0 %230
  %v234 = vsel %vm55, %v199, 0
  %236 = vmatpush.msra.mxu0 0.0
  %237 = vmatpush.msra.mxu0 0.0
  %238 = vmatpush.msra.mxu0 0.0
  %239 = vmatpush.msra.mxu0 0.0
  %240 = vmatpush.msra.mxu0 0.0
  %241 = vmatpush.msra.mxu0 0.0
  %242 = vmatpush.msra.mxu0 0.0
  %243 = vmatpush.msra.mxu0 0.0
  %244 = vmatpush.msra.mxu0 0.0
  %245 = vmatpush.msra.mxu0 0.0
  %246 = vmatpush.msra.mxu0 0.0
  %247 = vmatpush.msra.mxu0 0.0
  %248 = vmatpush.msra.mxu0 %v229
  %249 = vmatpush.msra.mxu0 %v228
  %250 = vmatpush.msra.mxu0 %v227
  %251 = vmatpush.msra.mxu0 %v226
  %252 = vmatmul.f32.gmra.mxu0 %v234
  %v253 = vpop.f32.mrf.mxu0
  %v254 = vadd.f32 %v231, %v253
  %255 = vdwg.mxu0
  %v256 = vadd.f32 %v224, %v254
  %v257 = vxor.u32 %v256, 2147483648
  %v258 = vmul.f32 %v257, 1.442695
  %v259 = vpow.pop %v258
  %v260 = vadd.f32 %v259, 1.0
  %v261 = vrcp.pop %v260
  %v262 = vmul.f32 %v260, %v261
  %v263 = vsub.f32 1.0, %v262
  %v264 = vmul.f32 %v261, %v263
  %v265 = vadd.f32 %v261, %v264
  %vm266 = vweird.f32 %v260
  %vm267 = vweird.f32 %v261
  %vm268 = vmor %vm266, %vm267
  %v269 = vsel %vm268, %v261, %v265
  %v270 = vand.u32 2147483647, %v260
  %vm271 = vcmp.eq.f32.partialorder %v270, 8.507059e+37
  %v272 = vand.u32 %v260, 2147483648
  %v273 = vor.u32 1.1754944e-38, %v272
  %v274 = vsel %vm271, %v273, %v269
  %v275 = vmul.f32 1.0, %v274
  %277 = vrot.lane.b32.xlu0 %v254, 64
  %v278 = vpop.permute.xlu0 %277
  %v280 = vmul.f32 %v275, %v278
  %282 = vrot.lane.b32.xlu0 %v280, 64
  %v283 = vpop.permute.xlu0 %282
  %v285 = vadd.f32 %v224, %v283
  %v286 = vtanh.pop %v285
  %v287 = vsub.f32 1.0, %v275
  %289 = vrot.lane.b32.xlu0 %v286, 96
  %v290 = vpop.permute.xlu0 %289
  %v292 = vmul.f32 %v287, %v290
  %293 = vrot.lane.b32.xlu0 %v199, 32
  %v294 = vpop.permute.xlu0 %293
  %v296 = vmul.f32 %v275, %v294
  %v297 = vadd.f32 %v292, %v296
  %s298 = scalar_lea.vmem %s0, 56
  %v299 = vld [vmem:[%s298] sm:$0xff]
  %s300 = scalar_lea.vmem %s1, 56
  %v301 = vld [vmem:[%s300] sm:$0xff]
  %s302 = scalar_lea.vmem %s6, 32
  %v303 = vld [vmem:[%s302] sm:$0xff]
  %v304 = vld [vmem:[%s302 + $0x8] sm:$0xff]
  %v305 = vld [vmem:[%s302 + $0x10] sm:$0xff]
  %v306 = vld [vmem:[%s302 + $0x18] sm:$0xff]
  %v308 = vperm.slane %v45, 0
  %310 = vmatpush.msra.mxu0 0.0
  %311 = vmatpush.msra.mxu0 0.0
  %312 = vmatpush.msra.mxu0 0.0
  %313 = vmatpush.msra.mxu0 0.0
  %314 = vmatpush.msra.mxu0 0.0
  %315 = vmatpush.msra.mxu0 0.0
  %316 = vmatpush.msra.mxu0 0.0
  %317 = vmatpush.msra.mxu0 0.0
  %318 = vmatpush.msra.mxu0 0.0
  %319 = vmatpush.msra.mxu0 0.0
  %320 = vmatpush.msra.mxu0 0.0
  %321 = vmatpush.msra.mxu0 0.0
  %322 = vmatpush.msra.mxu0 %v306
  %323 = vmatpush.msra.mxu0 %v305
  %324 = vmatpush.msra.mxu0 %v304
  %325 = vmatpush.msra.mxu0 %v303
  %326 = vmatmul.f32.gmra.mxu0 %v57
  %v327 = vpop.f32.mrf.mxu0
  %v328 = vadd.f32 %v308, %v327
  %329 = vdwg.mxu0
  %v330 = vmul.f32 %v301, %v299
  %v331 = vsub.f32 1.0, %v301
  %v332 = vmul.f32 %v331, %v328
  %v333 = vadd.f32 %v330, %v332
  %s334 = scalar_lea.vmem %s7, 16
  %v335 = vld [vmem:[%s334] sm:$0xff]
  %v336 = vld [vmem:[%s334 + $0x8] sm:$0xff]
  %s337 = scalar_lea.vmem %s4, 120
  %v338 = vld [vmem:[%s337] sm:$0xff]
  %v340 = vsel %vm86, %v333, 0
  %342 = vmatpush.msra.mxu0 0.0
  %343 = vmatpush.msra.mxu0 0.0
  %344 = vmatpush.msra.mxu0 0.0
  %345 = vmatpush.msra.mxu0 0.0
  %346 = vmatpush.msra.mxu0 0.0
  %347 = vmatpush.msra.mxu0 0.0
  %348 = vmatpush.msra.mxu0 0.0
  %349 = vmatpush.msra.mxu0 0.0
  %350 = vmatpush.msra.mxu0 0.0
  %351 = vmatpush.msra.mxu0 0.0
  %352 = vmatpush.msra.mxu0 0.0
  %353 = vmatpush.msra.mxu0 0.0
  %354 = vmatpush.msra.mxu0 0.0
  %355 = vmatpush.msra.mxu0 0.0
  %356 = vmatpush.msra.mxu0 %v336
  %357 = vmatpush.msra.mxu0 %v335
  %358 = vmatmul.f32.gmra.mxu0 %v340
  %v359 = vpop.f32.mrf.mxu0
  %v360 = vadd.f32 %v338, %v359
  %361 = vdwg.mxu0
  %v362 = vmul.f32 %v331, %v360
  %v363 = vadd.f32 %v330, %v362
  %s364 = scalar_lea.vmem %s8, 16
  %v365 = vld [vmem:[%s364] sm:$0xff]
  %v366 = vld [vmem:[%s364 + $0x8] sm:$0xff]
  %367 = vrot.lane.b32.xlu0 %v308, 112
  %v368 = vpop.permute.xlu0 %367
  %v371 = vsel %vm86, %v363, 0
  %373 = vmatpush.msra.mxu0 0.0
  %374 = vmatpush.msra.mxu0 0.0
  %375 = vmatpush.msra.mxu0 0.0
  %376 = vmatpush.msra.mxu0 0.0
  %377 = vmatpush.msra.mxu0 0.0
  %378 = vmatpush.msra.mxu0 0.0
  %379 = vmatpush.msra.mxu0 0.0
  %380 = vmatpush.msra.mxu0 0.0
  %381 = vmatpush.msra.mxu0 0.0
  %382 = vmatpush.msra.mxu0 0.0
  %383 = vmatpush.msra.mxu0 0.0
  %384 = vmatpush.msra.mxu0 0.0
  %385 = vmatpush.msra.mxu0 0.0
  %386 = vmatpush.msra.mxu0 0.0
  %387 = vmatpush.msra.mxu0 %v366
  %388 = vmatpush.msra.mxu0 %v365
  %389 = vmatmul.f32.gmra.mxu0 %v371
  %v390 = vpop.f32.mrf.mxu0
  %v391 = vadd.f32 %v368, %v390
  %392 = vdwg.mxu0
  %s393 = scalar_lea.vmem %s3, 120
  %v394 = vld [vmem:[%s393] sm:$0xff]
  %v395 = vmul.f32 %v394, %v391
  %v396 = vsub.f32 1.0, %v394
  %v397 = vmul.f32 %v396, %v328
  %v398 = vadd.f32 %v395, %v397
  %v399 = vmul.f32 %v331, %v398
  %v400 = vadd.f32 %v330, %v399
  %v401 = vsub.f32 %v299, %v328
  %v402 = vand.u32 2147483647, %v401
  %v403 = vsub.f32 %v299, %v360
  %v404 = vand.u32 2147483647, %v403
  %v405 = vadd.f32 %v402, %v404
  %v406 = vsub.f32 %v299, %v391
  %v407 = vand.u32 2147483647, %v406
  %v408 = vadd.f32 %v405, %v407
  %v409 = vsub.f32 %v299, %v398
  %v410 = vand.u32 2147483647, %v409
  %v411 = vadd.f32 %v408, %v410
  %v412 = vmul.f32 %v411, %v301
  %v413 = vsel %vm86, %v301, 0.0
  %414 = vadd.xlane.f32.xlu0 %v413
  %v415 = vpop.xlane.xlu0 %414
  %v416 = vrot.slane %v415, 4
  %v417 = vadd.f32 %v415, %v416
  %v418 = vrot.slane %v417, 2
  %v419 = vadd.f32 %v417, %v418
  %v420 = vrot.slane %v419, 1
  %v421 = vadd.f32 %v419, %v420
  %s422 = vtos %v421
  %v423 = vstv %s422
  %v424 = vadd.f32 %v423, 1e-05
  %v425 = vsel %vm86, %v412, 0.0
  %426 = vadd.xlane.f32.xlu0 %v425
  %v427 = vpop.xlane.xlu0 %426
  %v428 = vrot.slane %v427, 4
  %v429 = vadd.f32 %v427, %v428
  %v430 = vrot.slane %v429, 2
  %v431 = vadd.f32 %v429, %v430
  %v432 = vrot.slane %v431, 1
  %v433 = vadd.f32 %v431, %v432
  %s434 = vtos %v433
  %v435 = vstv %s434
  %v436 = vrcp.pop %v424
  %v437 = vmul.f32 %v424, %v436
  %v438 = vsub.f32 1.0, %v437
  %v439 = vmul.f32 %v436, %v438
  %v440 = vadd.f32 %v436, %v439
  %vm441 = vweird.f32 %v424
  %vm442 = vweird.f32 %v436
  %vm443 = vmor %vm441, %vm442
  %v444 = vsel %vm443, %v436, %v440
  %v445 = vand.u32 2147483647, %v424
  %vm446 = vcmp.eq.f32.partialorder %v445, 8.507059e+37
  %v447 = vand.u32 %v424, 2147483648
  %v448 = vor.u32 1.1754944e-38, %v447
  %v449 = vsel %vm446, %v448, %v444
  %v450 = vmul.f32 %v435, %v449
  %v451 = vadd.f32 %v450, 0.0
  %s452 = scalar_lea.vmem %s2, 120
  %v453 = vld [vmem:[%s452] sm:$0xff]
  %v454 = vmul.f32 %v453, 0.0
  %s455 = scalar_lea.vmem %s9, 16
  %v456 = vld [vmem:[%s455] sm:$0xff]
  %v457 = vld [vmem:[%s455 + $0x8] sm:$0xff]
  %s458 = scalar_lea.vmem %s5, 120
  %v459 = vld [vmem:[%s458] sm:$0xff]
  %v461 = vsel %vm86, %v400, 0
  %463 = vmatpush.msra.mxu0 0.0
  %464 = vmatpush.msra.mxu0 0.0
  %465 = vmatpush.msra.mxu0 0.0
  %466 = vmatpush.msra.mxu0 0.0
  %467 = vmatpush.msra.mxu0 0.0
  %468 = vmatpush.msra.mxu0 0.0
  %469 = vmatpush.msra.mxu0 0.0
  %470 = vmatpush.msra.mxu0 0.0
  %471 = vmatpush.msra.mxu0 0.0
  %472 = vmatpush.msra.mxu0 0.0
  %473 = vmatpush.msra.mxu0 0.0
  %474 = vmatpush.msra.mxu0 0.0
  %475 = vmatpush.msra.mxu0 0.0
  %476 = vmatpush.msra.mxu0 0.0
  %477 = vmatpush.msra.mxu0 %v457
  %478 = vmatpush.msra.mxu0 %v456
  %479 = vmatmul.f32.gmra.mxu0 %v461
  %v480 = vpop.f32.mrf.mxu0
  %v481 = vadd.f32 %v459, %v480
  %482 = vdwg.mxu0
  %s483 = scalar_lea.vmem %s10, 32
  %v484 = vld [vmem:[%s483] sm:$0xff]
  %v485 = vld [vmem:[%s483 + $0x8] sm:$0xff]
  %v486 = vld [vmem:[%s483 + $0x10] sm:$0xff]
  %v487 = vld [vmem:[%s483 + $0x18] sm:$0xff]
  %488 = vrot.lane.b32.xlu0 %v308, 96
  %v489 = vpop.permute.xlu0 %488
  %v492 = vsel %vm55, %v454, 0
  %494 = vmatpush.msra.mxu0 0.0
  %495 = vmatpush.msra.mxu0 0.0
  %496 = vmatpush.msra.mxu0 0.0
  %497 = vmatpush.msra.mxu0 0.0
  %498 = vmatpush.msra.mxu0 0.0
  %499 = vmatpush.msra.mxu0 0.0
  %500 = vmatpush.msra.mxu0 0.0
  %501 = vmatpush.msra.mxu0 0.0
  %502 = vmatpush.msra.mxu0 0.0
  %503 = vmatpush.msra.mxu0 0.0
  %504 = vmatpush.msra.mxu0 0.0
  %505 = vmatpush.msra.mxu0 0.0
  %506 = vmatpush.msra.mxu0 %v487
  %507 = vmatpush.msra.mxu0 %v486
  %508 = vmatpush.msra.mxu0 %v485
  %509 = vmatpush.msra.mxu0 %v484
  %510 = vmatmul.f32.gmra.mxu0 %v492
  %v511 = vpop.f32.mrf.mxu0
  %v512 = vadd.f32 %v489, %v511
  %513 = vdwg.mxu0
  %v514 = vadd.f32 %v481, %v512
  %v515 = vxor.u32 %v514, 2147483648
  %v516 = vmul.f32 %v515, 1.442695
  %v517 = vpow.pop %v516
  %v518 = vadd.f32 %v517, 1.0
  %v519 = vrcp.pop %v518
  %v520 = vmul.f32 %v518, %v519
  %v521 = vsub.f32 1.0, %v520
  %v522 = vmul.f32 %v519, %v521
  %v523 = vadd.f32 %v519, %v522
  %vm524 = vweird.f32 %v518
  %vm525 = vweird.f32 %v519
  %vm526 = vmor %vm524, %vm525
  %v527 = vsel %vm526, %v519, %v523
  %v528 = vand.u32 2147483647, %v518
  %vm529 = vcmp.eq.f32.partialorder %v528, 8.507059e+37
  %v530 = vand.u32 %v518, 2147483648
  %v531 = vor.u32 1.1754944e-38, %v530
  %v532 = vsel %vm529, %v531, %v527
  %v533 = vmul.f32 1.0, %v532
  %535 = vrot.lane.b32.xlu0 %v512, 64
  %v536 = vpop.permute.xlu0 %535
  %v538 = vmul.f32 %v533, %v536
  %540 = vrot.lane.b32.xlu0 %v538, 64
  %v541 = vpop.permute.xlu0 %540
  %v543 = vadd.f32 %v481, %v541
  %v544 = vtanh.pop %v543
  %v545 = vsub.f32 1.0, %v533
  %547 = vrot.lane.b32.xlu0 %v544, 96
  %v548 = vpop.permute.xlu0 %547
  %v550 = vmul.f32 %v545, %v548
  %551 = vrot.lane.b32.xlu0 %v454, 32
  %v552 = vpop.permute.xlu0 %551
  %v554 = vmul.f32 %v533, %v552
  %v555 = vadd.f32 %v550, %v554
  %556 = vst.msk [vmem:[%s12] sm:$0xff] %vm86, %v144
  %557 = vst.msk [vmem:[%s13] sm:$0xff] %vm86, %v146
  %s558 = scalar_lea.vmem %s12, 120
  %559 = vst.msk [vmem:[%s558] sm:$0xff] %vm86, %v398
  %s560 = scalar_lea.vmem %s13, 120
  %561 = vst.msk [vmem:[%s560] sm:$0xff] %vm86, %v400
  %s562 = scalar_lea.vmem %s0, 8
  %v563 = vld [vmem:[%s562] sm:$0xff]
  %s564 = scalar_lea.vmem %s1, 8
  %v565 = vld [vmem:[%s564] sm:$0xff]
  %v566 = vld [vmem:[%s6] sm:$0xff]
  %v567 = vld [vmem:[%s6 + $0x8] sm:$0xff]
  %v568 = vld [vmem:[%s6 + $0x10] sm:$0xff]
  %v569 = vld [vmem:[%s6 + $0x18] sm:$0xff]
  %571 = vrot.lane.b32.xlu0 %v297, 96
  %v572 = vpop.permute.xlu0 %571
  %v573 = vsel %vm55, %v572, 0
  %575 = vmatpush.msra.mxu0 0.0
  %576 = vmatpush.msra.mxu0 0.0
  %577 = vmatpush.msra.mxu0 0.0
  %578 = vmatpush.msra.mxu0 0.0
  %579 = vmatpush.msra.mxu0 0.0
  %580 = vmatpush.msra.mxu0 0.0
  %581 = vmatpush.msra.mxu0 0.0
  %582 = vmatpush.msra.mxu0 0.0
  %583 = vmatpush.msra.mxu0 0.0
  %584 = vmatpush.msra.mxu0 0.0
  %585 = vmatpush.msra.mxu0 0.0
  %586 = vmatpush.msra.mxu0 0.0
  %587 = vmatpush.msra.mxu0 %v569
  %588 = vmatpush.msra.mxu0 %v568
  %589 = vmatpush.msra.mxu0 %v567
  %590 = vmatpush.msra.mxu0 %v566
  %591 = vmatmul.f32.gmra.mxu0 %v573
  %v592 = vpop.f32.mrf.mxu0
  %v593 = vadd.f32 %v53, %v592
  %594 = vdwg.mxu0
  %v595 = vmul.f32 %v565, %v563
  %v596 = vsub.f32 1.0, %v565
  %v597 = vmul.f32 %v596, %v593
  %v598 = vadd.f32 %v595, %v597
  %v599 = vld [vmem:[%s7] sm:$0xff]
  %v600 = vld [vmem:[%s7 + $0x8] sm:$0xff]
  %s601 = scalar_lea.vmem %s4, 8
  %v602 = vld [vmem:[%s601] sm:$0xff]
  %v604 = vsel %vm86, %v598, 0
  %606 = vmatpush.msra.mxu0 0.0
  %607 = vmatpush.msra.mxu0 0.0
  %608 = vmatpush.msra.mxu0 0.0
  %609 = vmatpush.msra.mxu0 0.0
  %610 = vmatpush.msra.mxu0 0.0
  %611 = vmatpush.msra.mxu0 0.0
  %612 = vmatpush.msra.mxu0 0.0
  %613 = vmatpush.msra.mxu0 0.0
  %614 = vmatpush.msra.mxu0 0.0
  %615 = vmatpush.msra.mxu0 0.0
  %616 = vmatpush.msra.mxu0 0.0
  %617 = vmatpush.msra.mxu0 0.0
  %618 = vmatpush.msra.mxu0 0.0
  %619 = vmatpush.msra.mxu0 0.0
  %620 = vmatpush.msra.mxu0 %v600
  %621 = vmatpush.msra.mxu0 %v599
  %622 = vmatmul.f32.gmra.mxu0 %v604
  %v623 = vpop.f32.mrf.mxu0
  %v624 = vadd.f32 %v602, %v623
  %625 = vdwg.mxu0
  %v626 = vmul.f32 %v596, %v624
  %v627 = vadd.f32 %v595, %v626
  %v628 = vld [vmem:[%s8] sm:$0xff]
  %v629 = vld [vmem:[%s8 + $0x8] sm:$0xff]
  %v631 = vsel %vm86, %v627, 0
  %633 = vmatpush.msra.mxu0 0.0
  %634 = vmatpush.msra.mxu0 0.0
  %635 = vmatpush.msra.mxu0 0.0
  %636 = vmatpush.msra.mxu0 0.0
  %637 = vmatpush.msra.mxu0 0.0
  %638 = vmatpush.msra.mxu0 0.0
  %639 = vmatpush.msra.mxu0 0.0
  %640 = vmatpush.msra.mxu0 0.0
  %641 = vmatpush.msra.mxu0 0.0
  %642 = vmatpush.msra.mxu0 0.0
  %643 = vmatpush.msra.mxu0 0.0
  %644 = vmatpush.msra.mxu0 0.0
  %645 = vmatpush.msra.mxu0 0.0
  %646 = vmatpush.msra.mxu0 0.0
  %647 = vmatpush.msra.mxu0 %v629
  %648 = vmatpush.msra.mxu0 %v628
  %649 = vmatmul.f32.gmra.mxu0 %v631
  %v650 = vpop.f32.mrf.mxu0
  %v651 = vadd.f32 %v115, %v650
  %652 = vdwg.mxu0
  %s653 = scalar_lea.vmem %s3, 8
  %v654 = vld [vmem:[%s653] sm:$0xff]
  %v655 = vmul.f32 %v654, %v651
  %v656 = vsub.f32 1.0, %v654
  %v657 = vmul.f32 %v656, %v593
  %v658 = vadd.f32 %v655, %v657
  %v659 = vmul.f32 %v596, %v658
  %v660 = vadd.f32 %v595, %v659
  %v661 = vsub.f32 %v563, %v593
  %v662 = vand.u32 2147483647, %v661
  %v663 = vsub.f32 %v563, %v624
  %v664 = vand.u32 2147483647, %v663
  %v665 = vadd.f32 %v662, %v664
  %v666 = vsub.f32 %v563, %v651
  %v667 = vand.u32 2147483647, %v666
  %v668 = vadd.f32 %v665, %v667
  %v669 = vsub.f32 %v563, %v658
  %v670 = vand.u32 2147483647, %v669
  %v671 = vadd.f32 %v668, %v670
  %v672 = vmul.f32 %v671, %v565
  %v673 = vsel %vm86, %v565, 0.0
  %674 = vadd.xlane.f32.xlu0 %v673
  %v675 = vpop.xlane.xlu0 %674
  %v676 = vrot.slane %v675, 4
  %v677 = vadd.f32 %v675, %v676
  %v678 = vrot.slane %v677, 2
  %v679 = vadd.f32 %v677, %v678
  %v680 = vrot.slane %v679, 1
  %v681 = vadd.f32 %v679, %v680
  %s682 = vtos %v681
  %v683 = vstv %s682
  %v684 = vadd.f32 %v683, 1e-05
  %v685 = vsel %vm86, %v672, 0.0
  %686 = vadd.xlane.f32.xlu0 %v685
  %v687 = vpop.xlane.xlu0 %686
  %v688 = vrot.slane %v687, 4
  %v689 = vadd.f32 %v687, %v688
  %v690 = vrot.slane %v689, 2
  %v691 = vadd.f32 %v689, %v690
  %v692 = vrot.slane %v691, 1
  %v693 = vadd.f32 %v691, %v692
  %s694 = vtos %v693
  %v695 = vstv %s694
  %v696 = vrcp.pop %v684
  %v697 = vmul.f32 %v684, %v696
  %v698 = vsub.f32 1.0, %v697
  %v699 = vmul.f32 %v696, %v698
  %v700 = vadd.f32 %v696, %v699
  %vm701 = vweird.f32 %v684
  %vm702 = vweird.f32 %v696
  %vm703 = vmor %vm701, %vm702
  %v704 = vsel %vm703, %v696, %v700
  %v705 = vand.u32 2147483647, %v684
  %vm706 = vcmp.eq.f32.partialorder %v705, 8.507059e+37
  %v707 = vand.u32 %v684, 2147483648
  %v708 = vor.u32 1.1754944e-38, %v707
  %v709 = vsel %vm706, %v708, %v704
  %v710 = vmul.f32 %v695, %v709
  %v711 = vadd.f32 %v197, %v710
  %s712 = scalar_lea.vmem %s2, 8
  %v713 = vld [vmem:[%s712] sm:$0xff]
  %715 = vrot.lane.b32.xlu0 %v713, 32
  %v716 = vpop.permute.xlu0 %715
  %v718 = vmul.f32 %v297, %v716
  %v719 = vld [vmem:[%s9] sm:$0xff]
  %v720 = vld [vmem:[%s9 + $0x8] sm:$0xff]
  %s721 = scalar_lea.vmem %s5, 8
  %v722 = vld [vmem:[%s721] sm:$0xff]
  %v724 = vsel %vm86, %v660, 0
  %726 = vmatpush.msra.mxu0 0.0
  %727 = vmatpush.msra.mxu0 0.0
  %728 = vmatpush.msra.mxu0 0.0
  %729 = vmatpush.msra.mxu0 0.0
  %730 = vmatpush.msra.mxu0 0.0
  %731 = vmatpush.msra.mxu0 0.0
  %732 = vmatpush.msra.mxu0 0.0
  %733 = vmatpush.msra.mxu0 0.0
  %734 = vmatpush.msra.mxu0 0.0
  %735 = vmatpush.msra.mxu0 0.0
  %736 = vmatpush.msra.mxu0 0.0
  %737 = vmatpush.msra.mxu0 0.0
  %738 = vmatpush.msra.mxu0 0.0
  %739 = vmatpush.msra.mxu0 0.0
  %740 = vmatpush.msra.mxu0 %v720
  %741 = vmatpush.msra.mxu0 %v719
  %742 = vmatmul.f32.gmra.mxu0 %v724
  %v743 = vpop.f32.mrf.mxu0
  %v744 = vadd.f32 %v722, %v743
  %745 = vdwg.mxu0
  %v746 = vld [vmem:[%s10] sm:$0xff]
  %v747 = vld [vmem:[%s10 + $0x8] sm:$0xff]
  %v748 = vld [vmem:[%s10 + $0x10] sm:$0xff]
  %v749 = vld [vmem:[%s10 + $0x18] sm:$0xff]
  %751 = vrot.lane.b32.xlu0 %v718, 96
  %v752 = vpop.permute.xlu0 %751
  %v753 = vsel %vm55, %v752, 0
  %755 = vmatpush.msra.mxu0 0.0
  %756 = vmatpush.msra.mxu0 0.0
  %757 = vmatpush.msra.mxu0 0.0
  %758 = vmatpush.msra.mxu0 0.0
  %759 = vmatpush.msra.mxu0 0.0
  %760 = vmatpush.msra.mxu0 0.0
  %761 = vmatpush.msra.mxu0 0.0
  %762 = vmatpush.msra.mxu0 0.0
  %763 = vmatpush.msra.mxu0 0.0
  %764 = vmatpush.msra.mxu0 0.0
  %765 = vmatpush.msra.mxu0 0.0
  %766 = vmatpush.msra.mxu0 0.0
  %767 = vmatpush.msra.mxu0 %v749
  %768 = vmatpush.msra.mxu0 %v748
  %769 = vmatpush.msra.mxu0 %v747
  %770 = vmatpush.msra.mxu0 %v746
  %771 = vmatmul.f32.gmra.mxu0 %v753
  %v772 = vpop.f32.mrf.mxu0
  %v773 = vadd.f32 %v231, %v772
  %774 = vdwg.mxu0
  %v775 = vadd.f32 %v744, %v773
  %v776 = vxor.u32 %v775, 2147483648
  %v777 = vmul.f32 %v776, 1.442695
  %v778 = vpow.pop %v777
  %v779 = vadd.f32 %v778, 1.0
  %v780 = vrcp.pop %v779
  %v781 = vmul.f32 %v779, %v780
  %v782 = vsub.f32 1.0, %v781
  %v783 = vmul.f32 %v780, %v782
  %v784 = vadd.f32 %v780, %v783
  %vm785 = vweird.f32 %v779
  %vm786 = vweird.f32 %v780
  %vm787 = vmor %vm785, %vm786
  %v788 = vsel %vm787, %v780, %v784
  %v789 = vand.u32 2147483647, %v779
  %vm790 = vcmp.eq.f32.partialorder %v789, 8.507059e+37
  %v791 = vand.u32 %v779, 2147483648
  %v792 = vor.u32 1.1754944e-38, %v791
  %v793 = vsel %vm790, %v792, %v788
  %v794 = vmul.f32 1.0, %v793
  %796 = vrot.lane.b32.xlu0 %v773, 64
  %v797 = vpop.permute.xlu0 %796
  %v799 = vmul.f32 %v794, %v797
  %801 = vrot.lane.b32.xlu0 %v799, 64
  %v802 = vpop.permute.xlu0 %801
  %v804 = vadd.f32 %v744, %v802
  %v805 = vtanh.pop %v804
  %v806 = vsub.f32 1.0, %v794
  %808 = vrot.lane.b32.xlu0 %v805, 96
  %v809 = vpop.permute.xlu0 %808
  %v811 = vmul.f32 %v806, %v809
  %v812 = vmul.f32 %v794, %v718
  %v813 = vadd.f32 %v811, %v812
  %s814 = scalar_lea.vmem %s0, 48
  %v815 = vld [vmem:[%s814] sm:$0xff]
  %s816 = scalar_lea.vmem %s1, 48
  %v817 = vld [vmem:[%s816] sm:$0xff]
  %v818 = vld [vmem:[%s302] sm:$0xff]
  %v819 = vld [vmem:[%s302 + $0x8] sm:$0xff]
  %v820 = vld [vmem:[%s302 + $0x10] sm:$0xff]
  %v821 = vld [vmem:[%s302 + $0x18] sm:$0xff]
  %823 = vrot.lane.b32.xlu0 %v555, 96
  %v824 = vpop.permute.xlu0 %823
  %v825 = vsel %vm55, %v824, 0
  %827 = vmatpush.msra.mxu0 0.0
  %828 = vmatpush.msra.mxu0 0.0
  %829 = vmatpush.msra.mxu0 0.0
  %830 = vmatpush.msra.mxu0 0.0
  %831 = vmatpush.msra.mxu0 0.0
  %832 = vmatpush.msra.mxu0 0.0
  %833 = vmatpush.msra.mxu0 0.0
  %834 = vmatpush.msra.mxu0 0.0
  %835 = vmatpush.msra.mxu0 0.0
  %836 = vmatpush.msra.mxu0 0.0
  %837 = vmatpush.msra.mxu0 0.0
  %838 = vmatpush.msra.mxu0 0.0
  %839 = vmatpush.msra.mxu0 %v821
  %840 = vmatpush.msra.mxu0 %v820
  %841 = vmatpush.msra.mxu0 %v819
  %842 = vmatpush.msra.mxu0 %v818
  %843 = vmatmul.f32.gmra.mxu0 %v825
  %v844 = vpop.f32.mrf.mxu0
  %v845 = vadd.f32 %v308, %v844
  %846 = vdwg.mxu0
  %v847 = vmul.f32 %v817, %v815
  %v848 = vsub.f32 1.0, %v817
  %v849 = vmul.f32 %v848, %v845
  %v850 = vadd.f32 %v847, %v849
  %v851 = vld [vmem:[%s334] sm:$0xff]
  %v852 = vld [vmem:[%s334 + $0x8] sm:$0xff]
  %s853 = scalar_lea.vmem %s4, 112
  %v854 = vld [vmem:[%s853] sm:$0xff]
  %v856 = vsel %vm86, %v850, 0
  %858 = vmatpush.msra.mxu0 0.0
  %859 = vmatpush.msra.mxu0 0.0
  %860 = vmatpush.msra.mxu0 0.0
  %861 = vmatpush.msra.mxu0 0.0
  %862 = vmatpush.msra.mxu0 0.0
  %863 = vmatpush.msra.mxu0 0.0
  %864 = vmatpush.msra.mxu0 0.0
  %865 = vmatpush.msra.mxu0 0.0
  %866 = vmatpush.msra.mxu0 0.0
  %867 = vmatpush.msra.mxu0 0.0
  %868 = vmatpush.msra.mxu0 0.0
  %869 = vmatpush.msra.mxu0 0.0
  %870 = vmatpush.msra.mxu0 0.0
  %871 = vmatpush.msra.mxu0 0.0
  %872 = vmatpush.msra.mxu0 %v852
  %873 = vmatpush.msra.mxu0 %v851
  %874 = vmatmul.f32.gmra.mxu0 %v856
  %v875 = vpop.f32.mrf.mxu0
  %v876 = vadd.f32 %v854, %v875
  %877 = vdwg.mxu0
  %v878 = vmul.f32 %v848, %v876
  %v879 = vadd.f32 %v847, %v878
  %v880 = vld [vmem:[%s364] sm:$0xff]
  %v881 = vld [vmem:[%s364 + $0x8] sm:$0xff]
  %v883 = vsel %vm86, %v879, 0
  %885 = vmatpush.msra.mxu0 0.0
  %886 = vmatpush.msra.mxu0 0.0
  %887 = vmatpush.msra.mxu0 0.0
  %888 = vmatpush.msra.mxu0 0.0
  %889 = vmatpush.msra.mxu0 0.0
  %890 = vmatpush.msra.mxu0 0.0
  %891 = vmatpush.msra.mxu0 0.0
  %892 = vmatpush.msra.mxu0 0.0
  %893 = vmatpush.msra.mxu0 0.0
  %894 = vmatpush.msra.mxu0 0.0
  %895 = vmatpush.msra.mxu0 0.0
  %896 = vmatpush.msra.mxu0 0.0
  %897 = vmatpush.msra.mxu0 0.0
  %898 = vmatpush.msra.mxu0 0.0
  %899 = vmatpush.msra.mxu0 %v881
  %900 = vmatpush.msra.mxu0 %v880
  %901 = vmatmul.f32.gmra.mxu0 %v883
  %v902 = vpop.f32.mrf.mxu0
  %v903 = vadd.f32 %v368, %v902
  %904 = vdwg.mxu0
  %s905 = scalar_lea.vmem %s3, 112
  %v906 = vld [vmem:[%s905] sm:$0xff]
  %v907 = vmul.f32 %v906, %v903
  %v908 = vsub.f32 1.0, %v906
  %v909 = vmul.f32 %v908, %v845
  %v910 = vadd.f32 %v907, %v909
  %v911 = vmul.f32 %v848, %v910
  %v912 = vadd.f32 %v847, %v911
  %v913 = vsub.f32 %v815, %v845
  %v914 = vand.u32 2147483647, %v913
  %v915 = vsub.f32 %v815, %v876
  %v916 = vand.u32 2147483647, %v915
  %v917 = vadd.f32 %v914, %v916
  %v918 = vsub.f32 %v815, %v903
  %v919 = vand.u32 2147483647, %v918
  %v920 = vadd.f32 %v917, %v919
  %v921 = vsub.f32 %v815, %v910
  %v922 = vand.u32 2147483647, %v921
  %v923 = vadd.f32 %v920, %v922
  %v924 = vmul.f32 %v923, %v817
  %v925 = vsel %vm86, %v817, 0.0
  %926 = vadd.xlane.f32.xlu0 %v925
  %v927 = vpop.xlane.xlu0 %926
  %v928 = vrot.slane %v927, 4
  %v929 = vadd.f32 %v927, %v928
  %v930 = vrot.slane %v929, 2
  %v931 = vadd.f32 %v929, %v930
  %v932 = vrot.slane %v931, 1
  %v933 = vadd.f32 %v931, %v932
  %s934 = vtos %v933
  %v935 = vstv %s934
  %v936 = vadd.f32 %v935, 1e-05
  %v937 = vsel %vm86, %v924, 0.0
  %938 = vadd.xlane.f32.xlu0 %v937
  %v939 = vpop.xlane.xlu0 %938
  %v940 = vrot.slane %v939, 4
  %v941 = vadd.f32 %v939, %v940
  %v942 = vrot.slane %v941, 2
  %v943 = vadd.f32 %v941, %v942
  %v944 = vrot.slane %v943, 1
  %v945 = vadd.f32 %v943, %v944
  %s946 = vtos %v945
  %v947 = vstv %s946
  %v948 = vrcp.pop %v936
  %v949 = vmul.f32 %v936, %v948
  %v950 = vsub.f32 1.0, %v949
  %v951 = vmul.f32 %v948, %v950
  %v952 = vadd.f32 %v948, %v951
  %vm953 = vweird.f32 %v936
  %vm954 = vweird.f32 %v948
  %vm955 = vmor %vm953, %vm954
  %v956 = vsel %vm955, %v948, %v952
  %v957 = vand.u32 2147483647, %v936
  %vm958 = vcmp.eq.f32.partialorder %v957, 8.507059e+37
  %v959 = vand.u32 %v936, 2147483648
  %v960 = vor.u32 1.1754944e-38, %v959
  %v961 = vsel %vm958, %v960, %v956
  %v962 = vmul.f32 %v947, %v961
  %v963 = vadd.f32 %v451, %v962
  %s964 = scalar_lea.vmem %s2, 112
  %v965 = vld [vmem:[%s964] sm:$0xff]
  %967 = vrot.lane.b32.xlu0 %v965, 32
  %v968 = vpop.permute.xlu0 %967
  %v970 = vmul.f32 %v555, %v968
  %v971 = vld [vmem:[%s455] sm:$0xff]
  %v972 = vld [vmem:[%s455 + $0x8] sm:$0xff]
  %s973 = scalar_lea.vmem %s5, 112
  %v974 = vld [vmem:[%s973] sm:$0xff]
  %v976 = vsel %vm86, %v912, 0
  %978 = vmatpush.msra.mxu0 0.0
  %979 = vmatpush.msra.mxu0 0.0
  %980 = vmatpush.msra.mxu0 0.0
  %981 = vmatpush.msra.mxu0 0.0
  %982 = vmatpush.msra.mxu0 0.0
  %983 = vmatpush.msra.mxu0 0.0
  %984 = vmatpush.msra.mxu0 0.0
  %985 = vmatpush.msra.mxu0 0.0
  %986 = vmatpush.msra.mxu0 0.0
  %987 = vmatpush.msra.mxu0 0.0
  %988 = vmatpush.msra.mxu0 0.0
  %989 = vmatpush.msra.mxu0 0.0
  %990 = vmatpush.msra.mxu0 0.0
  %991 = vmatpush.msra.mxu0 0.0
  %992 = vmatpush.msra.mxu0 %v972
  %993 = vmatpush.msra.mxu0 %v971
  %994 = vmatmul.f32.gmra.mxu0 %v976
  %v995 = vpop.f32.mrf.mxu0
  %v996 = vadd.f32 %v974, %v995
  %997 = vdwg.mxu0
  %v998 = vld [vmem:[%s483] sm:$0xff]
  %v999 = vld [vmem:[%s483 + $0x8] sm:$0xff]
  %v1000 = vld [vmem:[%s483 + $0x10] sm:$0xff]
  %v1001 = vld [vmem:[%s483 + $0x18] sm:$0xff]
  %1003 = vrot.lane.b32.xlu0 %v970, 96
  %v1004 = vpop.permute.xlu0 %1003
  %v1005 = vsel %vm55, %v1004, 0
  %1007 = vmatpush.msra.mxu0 0.0
  %1008 = vmatpush.msra.mxu0 0.0
  %1009 = vmatpush.msra.mxu0 0.0
  %1010 = vmatpush.msra.mxu0 0.0
  %1011 = vmatpush.msra.mxu0 0.0
  %1012 = vmatpush.msra.mxu0 0.0
  %1013 = vmatpush.msra.mxu0 0.0
  %1014 = vmatpush.msra.mxu0 0.0
  %1015 = vmatpush.msra.mxu0 0.0
  %1016 = vmatpush.msra.mxu0 0.0
  %1017 = vmatpush.msra.mxu0 0.0
  %1018 = vmatpush.msra.mxu0 0.0
  %1019 = vmatpush.msra.mxu0 %v1001
  %1020 = vmatpush.msra.mxu0 %v1000
  %1021 = vmatpush.msra.mxu0 %v999
  %1022 = vmatpush.msra.mxu0 %v998
  %1023 = vmatmul.f32.gmra.mxu0 %v1005
  %v1024 = vpop.f32.mrf.mxu0
  %v1025 = vadd.f32 %v489, %v1024
  %1026 = vdwg.mxu0
  %v1027 = vadd.f32 %v996, %v1025
  %v1028 = vxor.u32 %v1027, 2147483648
  %v1029 = vmul.f32 %v1028, 1.442695
  %v1030 = vpow.pop %v1029
  %v1031 = vadd.f32 %v1030, 1.0
  %v1032 = vrcp.pop %v1031
  %v1033 = vmul.f32 %v1031, %v1032
  %v1034 = vsub.f32 1.0, %v1033
  %v1035 = vmul.f32 %v1032, %v1034
  %v1036 = vadd.f32 %v1032, %v1035
  %vm1037 = vweird.f32 %v1031
  %vm1038 = vweird.f32 %v1032
  %vm1039 = vmor %vm1037, %vm1038
  %v1040 = vsel %vm1039, %v1032, %v1036
  %v1041 = vand.u32 2147483647, %v1031
  %vm1042 = vcmp.eq.f32.partialorder %v1041, 8.507059e+37
  %v1043 = vand.u32 %v1031, 2147483648
  %v1044 = vor.u32 1.1754944e-38, %v1043
  %v1045 = vsel %vm1042, %v1044, %v1040
  %v1046 = vmul.f32 1.0, %v1045
  %1048 = vrot.lane.b32.xlu0 %v1025, 64
  %v1049 = vpop.permute.xlu0 %1048
  %v1051 = vmul.f32 %v1046, %v1049
  %1053 = vrot.lane.b32.xlu0 %v1051, 64
  %v1054 = vpop.permute.xlu0 %1053
  %v1056 = vadd.f32 %v996, %v1054
  %v1057 = vtanh.pop %v1056
  %v1058 = vsub.f32 1.0, %v1046
  %1060 = vrot.lane.b32.xlu0 %v1057, 96
  %v1061 = vpop.permute.xlu0 %1060
  %v1063 = vmul.f32 %v1058, %v1061
  %v1064 = vmul.f32 %v1046, %v970
  %v1065 = vadd.f32 %v1063, %v1064
  %s1066 = scalar_lea.vmem %s12, 8
  %1067 = vst.msk [vmem:[%s1066] sm:$0xff] %vm86, %v658
  %s1068 = scalar_lea.vmem %s13, 8
  %1069 = vst.msk [vmem:[%s1068] sm:$0xff] %vm86, %v660
  %s1070 = scalar_lea.vmem %s12, 112
  %1071 = vst.msk [vmem:[%s1070] sm:$0xff] %vm86, %v910
  %s1072 = scalar_lea.vmem %s13, 112
  %1073 = vst.msk [vmem:[%s1072] sm:$0xff] %vm86, %v912
  %s1074 = scalar_lea.vmem %s0, 16
  %v1075 = vld [vmem:[%s1074] sm:$0xff]
  %s1076 = scalar_lea.vmem %s1, 16
  %v1077 = vld [vmem:[%s1076] sm:$0xff]
  %v1078 = vld [vmem:[%s6] sm:$0xff]
  %v1079 = vld [vmem:[%s6 + $0x8] sm:$0xff]
  %v1080 = vld [vmem:[%s6 + $0x10] sm:$0xff]
  %v1081 = vld [vmem:[%s6 + $0x18] sm:$0xff]
  %1083 = vrot.lane.b32.xlu0 %v813, 96
  %v1084 = vpop.permute.xlu0 %1083
  %v1085 = vsel %vm55, %v1084, 0
  %1087 = vmatpush.msra.mxu0 0.0
  %1088 = vmatpush.msra.mxu0 0.0
  %1089 = vmatpush.msra.mxu0 0.0
  %1090 = vmatpush.msra.mxu0 0.0
  %1091 = vmatpush.msra.mxu0 0.0
  %1092 = vmatpush.msra.mxu0 0.0
  %1093 = vmatpush.msra.mxu0 0.0
  %1094 = vmatpush.msra.mxu0 0.0
  %1095 = vmatpush.msra.mxu0 0.0
  %1096 = vmatpush.msra.mxu0 0.0
  %1097 = vmatpush.msra.mxu0 0.0
  %1098 = vmatpush.msra.mxu0 0.0
  %1099 = vmatpush.msra.mxu0 %v1081
  %1100 = vmatpush.msra.mxu0 %v1080
  %1101 = vmatpush.msra.mxu0 %v1079
  %1102 = vmatpush.msra.mxu0 %v1078
  %1103 = vmatmul.f32.gmra.mxu0 %v1085
  %v1104 = vpop.f32.mrf.mxu0
  %v1105 = vadd.f32 %v53, %v1104
  %1106 = vdwg.mxu0
  %v1107 = vmul.f32 %v1077, %v1075
  %v1108 = vsub.f32 1.0, %v1077
  %v1109 = vmul.f32 %v1108, %v1105
  %v1110 = vadd.f32 %v1107, %v1109
  %v1111 = vld [vmem:[%s7] sm:$0xff]
  %v1112 = vld [vmem:[%s7 + $0x8] sm:$0xff]
  %s1113 = scalar_lea.vmem %s4, 16
  %v1114 = vld [vmem:[%s1113] sm:$0xff]
  %v1116 = vsel %vm86, %v1110, 0
  %1118 = vmatpush.msra.mxu0 0.0
  %1119 = vmatpush.msra.mxu0 0.0
  %1120 = vmatpush.msra.mxu0 0.0
  %1121 = vmatpush.msra.mxu0 0.0
  %1122 = vmatpush.msra.mxu0 0.0
  %1123 = vmatpush.msra.mxu0 0.0
  %1124 = vmatpush.msra.mxu0 0.0
  %1125 = vmatpush.msra.mxu0 0.0
  %1126 = vmatpush.msra.mxu0 0.0
  %1127 = vmatpush.msra.mxu0 0.0
  %1128 = vmatpush.msra.mxu0 0.0
  %1129 = vmatpush.msra.mxu0 0.0
  %1130 = vmatpush.msra.mxu0 0.0
  %1131 = vmatpush.msra.mxu0 0.0
  %1132 = vmatpush.msra.mxu0 %v1112
  %1133 = vmatpush.msra.mxu0 %v1111
  %1134 = vmatmul.f32.gmra.mxu0 %v1116
  %v1135 = vpop.f32.mrf.mxu0
  %v1136 = vadd.f32 %v1114, %v1135
  %1137 = vdwg.mxu0
  %v1138 = vmul.f32 %v1108, %v1136
  %v1139 = vadd.f32 %v1107, %v1138
  %v1140 = vld [vmem:[%s8] sm:$0xff]
  %v1141 = vld [vmem:[%s8 + $0x8] sm:$0xff]
  %v1143 = vsel %vm86, %v1139, 0
  %1145 = vmatpush.msra.mxu0 0.0
  %1146 = vmatpush.msra.mxu0 0.0
  %1147 = vmatpush.msra.mxu0 0.0
  %1148 = vmatpush.msra.mxu0 0.0
  %1149 = vmatpush.msra.mxu0 0.0
  %1150 = vmatpush.msra.mxu0 0.0
  %1151 = vmatpush.msra.mxu0 0.0
  %1152 = vmatpush.msra.mxu0 0.0
  %1153 = vmatpush.msra.mxu0 0.0
  %1154 = vmatpush.msra.mxu0 0.0
  %1155 = vmatpush.msra.mxu0 0.0
  %1156 = vmatpush.msra.mxu0 0.0
  %1157 = vmatpush.msra.mxu0 0.0
  %1158 = vmatpush.msra.mxu0 0.0
  %1159 = vmatpush.msra.mxu0 %v1141
  %1160 = vmatpush.msra.mxu0 %v1140
  %1161 = vmatmul.f32.gmra.mxu0 %v1143
  %v1162 = vpop.f32.mrf.mxu0
  %v1163 = vadd.f32 %v115, %v1162
  %1164 = vdwg.mxu0
  %s1165 = scalar_lea.vmem %s3, 16
  %v1166 = vld [vmem:[%s1165] sm:$0xff]
  %v1167 = vmul.f32 %v1166, %v1163
  %v1168 = vsub.f32 1.0, %v1166
  %v1169 = vmul.f32 %v1168, %v1105
  %v1170 = vadd.f32 %v1167, %v1169
  %v1171 = vmul.f32 %v1108, %v1170
  %v1172 = vadd.f32 %v1107, %v1171
  %v1173 = vsub.f32 %v1075, %v1105
  %v1174 = vand.u32 2147483647, %v1173
  %v1175 = vsub.f32 %v1075, %v1136
  %v1176 = vand.u32 2147483647, %v1175
  %v1177 = vadd.f32 %v1174, %v1176
  %v1178 = vsub.f32 %v1075, %v1163
  %v1179 = vand.u32 2147483647, %v1178
  %v1180 = vadd.f32 %v1177, %v1179
  %v1181 = vsub.f32 %v1075, %v1170
  %v1182 = vand.u32 2147483647, %v1181
  %v1183 = vadd.f32 %v1180, %v1182
  %v1184 = vmul.f32 %v1183, %v1077
  %v1185 = vsel %vm86, %v1077, 0.0
  %1186 = vadd.xlane.f32.xlu0 %v1185
  %v1187 = vpop.xlane.xlu0 %1186
  %v1188 = vrot.slane %v1187, 4
  %v1189 = vadd.f32 %v1187, %v1188
  %v1190 = vrot.slane %v1189, 2
  %v1191 = vadd.f32 %v1189, %v1190
  %v1192 = vrot.slane %v1191, 1
  %v1193 = vadd.f32 %v1191, %v1192
  %s1194 = vtos %v1193
  %v1195 = vstv %s1194
  %v1196 = vadd.f32 %v1195, 1e-05
  %v1197 = vsel %vm86, %v1184, 0.0
  %1198 = vadd.xlane.f32.xlu0 %v1197
  %v1199 = vpop.xlane.xlu0 %1198
  %v1200 = vrot.slane %v1199, 4
  %v1201 = vadd.f32 %v1199, %v1200
  %v1202 = vrot.slane %v1201, 2
  %v1203 = vadd.f32 %v1201, %v1202
  %v1204 = vrot.slane %v1203, 1
  %v1205 = vadd.f32 %v1203, %v1204
  %s1206 = vtos %v1205
  %v1207 = vstv %s1206
  %v1208 = vrcp.pop %v1196
  %v1209 = vmul.f32 %v1196, %v1208
  %v1210 = vsub.f32 1.0, %v1209
  %v1211 = vmul.f32 %v1208, %v1210
  %v1212 = vadd.f32 %v1208, %v1211
  %vm1213 = vweird.f32 %v1196
  %vm1214 = vweird.f32 %v1208
  %vm1215 = vmor %vm1213, %vm1214
  %v1216 = vsel %vm1215, %v1208, %v1212
  %v1217 = vand.u32 2147483647, %v1196
  %vm1218 = vcmp.eq.f32.partialorder %v1217, 8.507059e+37
  %v1219 = vand.u32 %v1196, 2147483648
  %v1220 = vor.u32 1.1754944e-38, %v1219
  %v1221 = vsel %vm1218, %v1220, %v1216
  %v1222 = vmul.f32 %v1207, %v1221
  %v1223 = vadd.f32 %v711, %v1222
  %s1224 = scalar_lea.vmem %s2, 16
  %v1225 = vld [vmem:[%s1224] sm:$0xff]
  %1227 = vrot.lane.b32.xlu0 %v1225, 32
  %v1228 = vpop.permute.xlu0 %1227
  %v1230 = vmul.f32 %v813, %v1228
  %v1231 = vld [vmem:[%s9] sm:$0xff]
  %v1232 = vld [vmem:[%s9 + $0x8] sm:$0xff]
  %s1233 = scalar_lea.vmem %s5, 16
  %v1234 = vld [vmem:[%s1233] sm:$0xff]
  %v1236 = vsel %vm86, %v1172, 0
  %1238 = vmatpush.msra.mxu0 0.0
  %1239 = vmatpush.msra.mxu0 0.0
  %1240 = vmatpush.msra.mxu0 0.0
  %1241 = vmatpush.msra.mxu0 0.0
  %1242 = vmatpush.msra.mxu0 0.0
  %1243 = vmatpush.msra.mxu0 0.0
  %1244 = vmatpush.msra.mxu0 0.0
  %1245 = vmatpush.msra.mxu0 0.0
  %1246 = vmatpush.msra.mxu0 0.0
  %1247 = vmatpush.msra.mxu0 0.0
  %1248 = vmatpush.msra.mxu0 0.0
  %1249 = vmatpush.msra.mxu0 0.0
  %1250 = vmatpush.msra.mxu0 0.0
  %1251 = vmatpush.msra.mxu0 0.0
  %1252 = vmatpush.msra.mxu0 %v1232
  %1253 = vmatpush.msra.mxu0 %v1231
  %1254 = vmatmul.f32.gmra.mxu0 %v1236
  %v1255 = vpop.f32.mrf.mxu0
  %v1256 = vadd.f32 %v1234, %v1255
  %1257 = vdwg.mxu0
  %v1258 = vld [vmem:[%s10] sm:$0xff]
  %v1259 = vld [vmem:[%s10 + $0x8] sm:$0xff]
  %v1260 = vld [vmem:[%s10 + $0x10] sm:$0xff]
  %v1261 = vld [vmem:[%s10 + $0x18] sm:$0xff]
  %1263 = vrot.lane.b32.xlu0 %v1230, 96
  %v1264 = vpop.permute.xlu0 %1263
  %v1265 = vsel %vm55, %v1264, 0
  %1267 = vmatpush.msra.mxu0 0.0
  %1268 = vmatpush.msra.mxu0 0.0
  %1269 = vmatpush.msra.mxu0 0.0
  %1270 = vmatpush.msra.mxu0 0.0
  %1271 = vmatpush.msra.mxu0 0.0
  %1272 = vmatpush.msra.mxu0 0.0
  %1273 = vmatpush.msra.mxu0 0.0
  %1274 = vmatpush.msra.mxu0 0.0
  %1275 = vmatpush.msra.mxu0 0.0
  %1276 = vmatpush.msra.mxu0 0.0
  %1277 = vmatpush.msra.mxu0 0.0
  %1278 = vmatpush.msra.mxu0 0.0
  %1279 = vmatpush.msra.mxu0 %v1261
  %1280 = vmatpush.msra.mxu0 %v1260
  %1281 = vmatpush.msra.mxu0 %v1259
  %1282 = vmatpush.msra.mxu0 %v1258
  %1283 = vmatmul.f32.gmra.mxu0 %v1265
  %v1284 = vpop.f32.mrf.mxu0
  %v1285 = vadd.f32 %v231, %v1284
  %1286 = vdwg.mxu0
  %v1287 = vadd.f32 %v1256, %v1285
  %v1288 = vxor.u32 %v1287, 2147483648
  %v1289 = vmul.f32 %v1288, 1.442695
  %v1290 = vpow.pop %v1289
  %v1291 = vadd.f32 %v1290, 1.0
  %v1292 = vrcp.pop %v1291
  %v1293 = vmul.f32 %v1291, %v1292
  %v1294 = vsub.f32 1.0, %v1293
  %v1295 = vmul.f32 %v1292, %v1294
  %v1296 = vadd.f32 %v1292, %v1295
  %vm1297 = vweird.f32 %v1291
  %vm1298 = vweird.f32 %v1292
  %vm1299 = vmor %vm1297, %vm1298
  %v1300 = vsel %vm1299, %v1292, %v1296
  %v1301 = vand.u32 2147483647, %v1291
  %vm1302 = vcmp.eq.f32.partialorder %v1301, 8.507059e+37
  %v1303 = vand.u32 %v1291, 2147483648
  %v1304 = vor.u32 1.1754944e-38, %v1303
  %v1305 = vsel %vm1302, %v1304, %v1300
  %v1306 = vmul.f32 1.0, %v1305
  %1308 = vrot.lane.b32.xlu0 %v1285, 64
  %v1309 = vpop.permute.xlu0 %1308
  %v1311 = vmul.f32 %v1306, %v1309
  %1313 = vrot.lane.b32.xlu0 %v1311, 64
  %v1314 = vpop.permute.xlu0 %1313
  %v1316 = vadd.f32 %v1256, %v1314
  %v1317 = vtanh.pop %v1316
  %v1318 = vsub.f32 1.0, %v1306
  %1320 = vrot.lane.b32.xlu0 %v1317, 96
  %v1321 = vpop.permute.xlu0 %1320
  %v1323 = vmul.f32 %v1318, %v1321
  %v1324 = vmul.f32 %v1306, %v1230
  %v1325 = vadd.f32 %v1323, %v1324
  %s1326 = scalar_lea.vmem %s0, 40
  %v1327 = vld [vmem:[%s1326] sm:$0xff]
  %s1328 = scalar_lea.vmem %s1, 40
  %v1329 = vld [vmem:[%s1328] sm:$0xff]
  %v1330 = vld [vmem:[%s302] sm:$0xff]
  %v1331 = vld [vmem:[%s302 + $0x8] sm:$0xff]
  %v1332 = vld [vmem:[%s302 + $0x10] sm:$0xff]
  %v1333 = vld [vmem:[%s302 + $0x18] sm:$0xff]
  %1335 = vrot.lane.b32.xlu0 %v1065, 96
  %v1336 = vpop.permute.xlu0 %1335
  %v1337 = vsel %vm55, %v1336, 0
  %1339 = vmatpush.msra.mxu0 0.0
  %1340 = vmatpush.msra.mxu0 0.0
  %1341 = vmatpush.msra.mxu0 0.0
  %1342 = vmatpush.msra.mxu0 0.0
  %1343 = vmatpush.msra.mxu0 0.0
  %1344 = vmatpush.msra.mxu0 0.0
  %1345 = vmatpush.msra.mxu0 0.0
  %1346 = vmatpush.msra.mxu0 0.0
  %1347 = vmatpush.msra.mxu0 0.0
  %1348 = vmatpush.msra.mxu0 0.0
  %1349 = vmatpush.msra.mxu0 0.0
  %1350 = vmatpush.msra.mxu0 0.0
  %1351 = vmatpush.msra.mxu0 %v1333
  %1352 = vmatpush.msra.mxu0 %v1332
  %1353 = vmatpush.msra.mxu0 %v1331
  %1354 = vmatpush.msra.mxu0 %v1330
  %1355 = vmatmul.f32.gmra.mxu0 %v1337
  %v1356 = vpop.f32.mrf.mxu0
  %v1357 = vadd.f32 %v308, %v1356
  %1358 = vdwg.mxu0
  %v1359 = vmul.f32 %v1329, %v1327
  %v1360 = vsub.f32 1.0, %v1329
  %v1361 = vmul.f32 %v1360, %v1357
  %v1362 = vadd.f32 %v1359, %v1361
  %v1363 = vld [vmem:[%s334] sm:$0xff]
  %v1364 = vld [vmem:[%s334 + $0x8] sm:$0xff]
  %s1365 = scalar_lea.vmem %s4, 104
  %v1366 = vld [vmem:[%s1365] sm:$0xff]
  %v1368 = vsel %vm86, %v1362, 0
  %1370 = vmatpush.msra.mxu0 0.0
  %1371 = vmatpush.msra.mxu0 0.0
  %1372 = vmatpush.msra.mxu0 0.0
  %1373 = vmatpush.msra.mxu0 0.0
  %1374 = vmatpush.msra.mxu0 0.0
  %1375 = vmatpush.msra.mxu0 0.0
  %1376 = vmatpush.msra.mxu0 0.0
  %1377 = vmatpush.msra.mxu0 0.0
  %1378 = vmatpush.msra.mxu0 0.0
  %1379 = vmatpush.msra.mxu0 0.0
  %1380 = vmatpush.msra.mxu0 0.0
  %1381 = vmatpush.msra.mxu0 0.0
  %1382 = vmatpush.msra.mxu0 0.0
  %1383 = vmatpush.msra.mxu0 0.0
  %1384 = vmatpush.msra.mxu0 %v1364
  %1385 = vmatpush.msra.mxu0 %v1363
  %1386 = vmatmul.f32.gmra.mxu0 %v1368
  %v1387 = vpop.f32.mrf.mxu0
  %v1388 = vadd.f32 %v1366, %v1387
  %1389 = vdwg.mxu0
  %v1390 = vmul.f32 %v1360, %v1388
  %v1391 = vadd.f32 %v1359, %v1390
  %v1392 = vld [vmem:[%s364] sm:$0xff]
  %v1393 = vld [vmem:[%s364 + $0x8] sm:$0xff]
  %v1395 = vsel %vm86, %v1391, 0
  %1397 = vmatpush.msra.mxu0 0.0
  %1398 = vmatpush.msra.mxu0 0.0
  %1399 = vmatpush.msra.mxu0 0.0
  %1400 = vmatpush.msra.mxu0 0.0
  %1401 = vmatpush.msra.mxu0 0.0
  %1402 = vmatpush.msra.mxu0 0.0
  %1403 = vmatpush.msra.mxu0 0.0
  %1404 = vmatpush.msra.mxu0 0.0
  %1405 = vmatpush.msra.mxu0 0.0
  %1406 = vmatpush.msra.mxu0 0.0
  %1407 = vmatpush.msra.mxu0 0.0
  %1408 = vmatpush.msra.mxu0 0.0
  %1409 = vmatpush.msra.mxu0 0.0
  %1410 = vmatpush.msra.mxu0 0.0
  %1411 = vmatpush.msra.mxu0 %v1393
  %1412 = vmatpush.msra.mxu0 %v1392
  %1413 = vmatmul.f32.gmra.mxu0 %v1395
  %v1414 = vpop.f32.mrf.mxu0
  %v1415 = vadd.f32 %v368, %v1414
  %1416 = vdwg.mxu0
  %s1417 = scalar_lea.vmem %s3, 104
  %v1418 = vld [vmem:[%s1417] sm:$0xff]
  %v1419 = vmul.f32 %v1418, %v1415
  %v1420 = vsub.f32 1.0, %v1418
  %v1421 = vmul.f32 %v1420, %v1357
  %v1422 = vadd.f32 %v1419, %v1421
  %v1423 = vmul.f32 %v1360, %v1422
  %v1424 = vadd.f32 %v1359, %v1423
  %v1425 = vsub.f32 %v1327, %v1357
  %v1426 = vand.u32 2147483647, %v1425
  %v1427 = vsub.f32 %v1327, %v1388
  %v1428 = vand.u32 2147483647, %v1427
  %v1429 = vadd.f32 %v1426, %v1428
  %v1430 = vsub.f32 %v1327, %v1415
  %v1431 = vand.u32 2147483647, %v1430
  %v1432 = vadd.f32 %v1429, %v1431
  %v1433 = vsub.f32 %v1327, %v1422
  %v1434 = vand.u32 2147483647, %v1433
  %v1435 = vadd.f32 %v1432, %v1434
  %v1436 = vmul.f32 %v1435, %v1329
  %v1437 = vsel %vm86, %v1329, 0.0
  %1438 = vadd.xlane.f32.xlu0 %v1437
  %v1439 = vpop.xlane.xlu0 %1438
  %v1440 = vrot.slane %v1439, 4
  %v1441 = vadd.f32 %v1439, %v1440
  %v1442 = vrot.slane %v1441, 2
  %v1443 = vadd.f32 %v1441, %v1442
  %v1444 = vrot.slane %v1443, 1
  %v1445 = vadd.f32 %v1443, %v1444
  %s1446 = vtos %v1445
  %v1447 = vstv %s1446
  %v1448 = vadd.f32 %v1447, 1e-05
  %v1449 = vsel %vm86, %v1436, 0.0
  %1450 = vadd.xlane.f32.xlu0 %v1449
  %v1451 = vpop.xlane.xlu0 %1450
  %v1452 = vrot.slane %v1451, 4
  %v1453 = vadd.f32 %v1451, %v1452
  %v1454 = vrot.slane %v1453, 2
  %v1455 = vadd.f32 %v1453, %v1454
  %v1456 = vrot.slane %v1455, 1
  %v1457 = vadd.f32 %v1455, %v1456
  %s1458 = vtos %v1457
  %v1459 = vstv %s1458
  %v1460 = vrcp.pop %v1448
  %v1461 = vmul.f32 %v1448, %v1460
  %v1462 = vsub.f32 1.0, %v1461
  %v1463 = vmul.f32 %v1460, %v1462
  %v1464 = vadd.f32 %v1460, %v1463
  %vm1465 = vweird.f32 %v1448
  %vm1466 = vweird.f32 %v1460
  %vm1467 = vmor %vm1465, %vm1466
  %v1468 = vsel %vm1467, %v1460, %v1464
  %v1469 = vand.u32 2147483647, %v1448
  %vm1470 = vcmp.eq.f32.partialorder %v1469, 8.507059e+37
  %v1471 = vand.u32 %v1448, 2147483648
  %v1472 = vor.u32 1.1754944e-38, %v1471
  %v1473 = vsel %vm1470, %v1472, %v1468
  %v1474 = vmul.f32 %v1459, %v1473
  %v1475 = vadd.f32 %v963, %v1474
  %s1476 = scalar_lea.vmem %s2, 104
  %v1477 = vld [vmem:[%s1476] sm:$0xff]
  %1479 = vrot.lane.b32.xlu0 %v1477, 32
  %v1480 = vpop.permute.xlu0 %1479
  %v1482 = vmul.f32 %v1065, %v1480
  %v1483 = vld [vmem:[%s455] sm:$0xff]
  %v1484 = vld [vmem:[%s455 + $0x8] sm:$0xff]
  %s1485 = scalar_lea.vmem %s5, 104
  %v1486 = vld [vmem:[%s1485] sm:$0xff]
  %v1488 = vsel %vm86, %v1424, 0
  %1490 = vmatpush.msra.mxu0 0.0
  %1491 = vmatpush.msra.mxu0 0.0
  %1492 = vmatpush.msra.mxu0 0.0
  %1493 = vmatpush.msra.mxu0 0.0
  %1494 = vmatpush.msra.mxu0 0.0
  %1495 = vmatpush.msra.mxu0 0.0
  %1496 = vmatpush.msra.mxu0 0.0
  %1497 = vmatpush.msra.mxu0 0.0
  %1498 = vmatpush.msra.mxu0 0.0
  %1499 = vmatpush.msra.mxu0 0.0
  %1500 = vmatpush.msra.mxu0 0.0
  %1501 = vmatpush.msra.mxu0 0.0
  %1502 = vmatpush.msra.mxu0 0.0
  %1503 = vmatpush.msra.mxu0 0.0
  %1504 = vmatpush.msra.mxu0 %v1484
  %1505 = vmatpush.msra.mxu0 %v1483
  %1506 = vmatmul.f32.gmra.mxu0 %v1488
  %v1507 = vpop.f32.mrf.mxu0
  %v1508 = vadd.f32 %v1486, %v1507
  %1509 = vdwg.mxu0
  %v1510 = vld [vmem:[%s483] sm:$0xff]
  %v1511 = vld [vmem:[%s483 + $0x8] sm:$0xff]
  %v1512 = vld [vmem:[%s483 + $0x10] sm:$0xff]
  %v1513 = vld [vmem:[%s483 + $0x18] sm:$0xff]
  %1515 = vrot.lane.b32.xlu0 %v1482, 96
  %v1516 = vpop.permute.xlu0 %1515
  %v1517 = vsel %vm55, %v1516, 0
  %1519 = vmatpush.msra.mxu0 0.0
  %1520 = vmatpush.msra.mxu0 0.0
  %1521 = vmatpush.msra.mxu0 0.0
  %1522 = vmatpush.msra.mxu0 0.0
  %1523 = vmatpush.msra.mxu0 0.0
  %1524 = vmatpush.msra.mxu0 0.0
  %1525 = vmatpush.msra.mxu0 0.0
  %1526 = vmatpush.msra.mxu0 0.0
  %1527 = vmatpush.msra.mxu0 0.0
  %1528 = vmatpush.msra.mxu0 0.0
  %1529 = vmatpush.msra.mxu0 0.0
  %1530 = vmatpush.msra.mxu0 0.0
  %1531 = vmatpush.msra.mxu0 %v1513
  %1532 = vmatpush.msra.mxu0 %v1512
  %1533 = vmatpush.msra.mxu0 %v1511
  %1534 = vmatpush.msra.mxu0 %v1510
  %1535 = vmatmul.f32.gmra.mxu0 %v1517
  %v1536 = vpop.f32.mrf.mxu0
  %v1537 = vadd.f32 %v489, %v1536
  %1538 = vdwg.mxu0
  %v1539 = vadd.f32 %v1508, %v1537
  %v1540 = vxor.u32 %v1539, 2147483648
  %v1541 = vmul.f32 %v1540, 1.442695
  %v1542 = vpow.pop %v1541
  %v1543 = vadd.f32 %v1542, 1.0
  %v1544 = vrcp.pop %v1543
  %v1545 = vmul.f32 %v1543, %v1544
  %v1546 = vsub.f32 1.0, %v1545
  %v1547 = vmul.f32 %v1544, %v1546
  %v1548 = vadd.f32 %v1544, %v1547
  %vm1549 = vweird.f32 %v1543
  %vm1550 = vweird.f32 %v1544
  %vm1551 = vmor %vm1549, %vm1550
  %v1552 = vsel %vm1551, %v1544, %v1548
  %v1553 = vand.u32 2147483647, %v1543
  %vm1554 = vcmp.eq.f32.partialorder %v1553, 8.507059e+37
  %v1555 = vand.u32 %v1543, 2147483648
  %v1556 = vor.u32 1.1754944e-38, %v1555
  %v1557 = vsel %vm1554, %v1556, %v1552
  %v1558 = vmul.f32 1.0, %v1557
  %1560 = vrot.lane.b32.xlu0 %v1537, 64
  %v1561 = vpop.permute.xlu0 %1560
  %v1563 = vmul.f32 %v1558, %v1561
  %1565 = vrot.lane.b32.xlu0 %v1563, 64
  %v1566 = vpop.permute.xlu0 %1565
  %v1568 = vadd.f32 %v1508, %v1566
  %v1569 = vtanh.pop %v1568
  %v1570 = vsub.f32 1.0, %v1558
  %1572 = vrot.lane.b32.xlu0 %v1569, 96
  %v1573 = vpop.permute.xlu0 %1572
  %v1575 = vmul.f32 %v1570, %v1573
  %v1576 = vmul.f32 %v1558, %v1482
  %v1577 = vadd.f32 %v1575, %v1576
  %s1578 = scalar_lea.vmem %s12, 16
  %1579 = vst.msk [vmem:[%s1578] sm:$0xff] %vm86, %v1170
  %s1580 = scalar_lea.vmem %s13, 16
  %1581 = vst.msk [vmem:[%s1580] sm:$0xff] %vm86, %v1172
  %s1582 = scalar_lea.vmem %s12, 104
  %1583 = vst.msk [vmem:[%s1582] sm:$0xff] %vm86, %v1422
  %s1584 = scalar_lea.vmem %s13, 104
  %1585 = vst.msk [vmem:[%s1584] sm:$0xff] %vm86, %v1424
  %s1586 = scalar_lea.vmem %s0, 24
  %v1587 = vld [vmem:[%s1586] sm:$0xff]
  %s1588 = scalar_lea.vmem %s1, 24
  %v1589 = vld [vmem:[%s1588] sm:$0xff]
  %v1590 = vld [vmem:[%s6] sm:$0xff]
  %v1591 = vld [vmem:[%s6 + $0x8] sm:$0xff]
  %v1592 = vld [vmem:[%s6 + $0x10] sm:$0xff]
  %v1593 = vld [vmem:[%s6 + $0x18] sm:$0xff]
  %1595 = vrot.lane.b32.xlu0 %v1325, 96
  %v1596 = vpop.permute.xlu0 %1595
  %v1597 = vsel %vm55, %v1596, 0
  %1599 = vmatpush.msra.mxu0 0.0
  %1600 = vmatpush.msra.mxu0 0.0
  %1601 = vmatpush.msra.mxu0 0.0
  %1602 = vmatpush.msra.mxu0 0.0
  %1603 = vmatpush.msra.mxu0 0.0
  %1604 = vmatpush.msra.mxu0 0.0
  %1605 = vmatpush.msra.mxu0 0.0
  %1606 = vmatpush.msra.mxu0 0.0
  %1607 = vmatpush.msra.mxu0 0.0
  %1608 = vmatpush.msra.mxu0 0.0
  %1609 = vmatpush.msra.mxu0 0.0
  %1610 = vmatpush.msra.mxu0 0.0
  %1611 = vmatpush.msra.mxu0 %v1593
  %1612 = vmatpush.msra.mxu0 %v1592
  %1613 = vmatpush.msra.mxu0 %v1591
  %1614 = vmatpush.msra.mxu0 %v1590
  %1615 = vmatmul.f32.gmra.mxu0 %v1597
  %v1616 = vpop.f32.mrf.mxu0
  %v1617 = vadd.f32 %v53, %v1616
  %1618 = vdwg.mxu0
  %v1619 = vmul.f32 %v1589, %v1587
  %v1620 = vsub.f32 1.0, %v1589
  %v1621 = vmul.f32 %v1620, %v1617
  %v1622 = vadd.f32 %v1619, %v1621
  %v1623 = vld [vmem:[%s7] sm:$0xff]
  %v1624 = vld [vmem:[%s7 + $0x8] sm:$0xff]
  %s1625 = scalar_lea.vmem %s4, 24
  %v1626 = vld [vmem:[%s1625] sm:$0xff]
  %v1628 = vsel %vm86, %v1622, 0
  %1630 = vmatpush.msra.mxu0 0.0
  %1631 = vmatpush.msra.mxu0 0.0
  %1632 = vmatpush.msra.mxu0 0.0
  %1633 = vmatpush.msra.mxu0 0.0
  %1634 = vmatpush.msra.mxu0 0.0
  %1635 = vmatpush.msra.mxu0 0.0
  %1636 = vmatpush.msra.mxu0 0.0
  %1637 = vmatpush.msra.mxu0 0.0
  %1638 = vmatpush.msra.mxu0 0.0
  %1639 = vmatpush.msra.mxu0 0.0
  %1640 = vmatpush.msra.mxu0 0.0
  %1641 = vmatpush.msra.mxu0 0.0
  %1642 = vmatpush.msra.mxu0 0.0
  %1643 = vmatpush.msra.mxu0 0.0
  %1644 = vmatpush.msra.mxu0 %v1624
  %1645 = vmatpush.msra.mxu0 %v1623
  %1646 = vmatmul.f32.gmra.mxu0 %v1628
  %v1647 = vpop.f32.mrf.mxu0
  %v1648 = vadd.f32 %v1626, %v1647
  %1649 = vdwg.mxu0
  %v1650 = vmul.f32 %v1620, %v1648
  %v1651 = vadd.f32 %v1619, %v1650
  %v1652 = vld [vmem:[%s8] sm:$0xff]
  %v1653 = vld [vmem:[%s8 + $0x8] sm:$0xff]
  %v1655 = vsel %vm86, %v1651, 0
  %1657 = vmatpush.msra.mxu0 0.0
  %1658 = vmatpush.msra.mxu0 0.0
  %1659 = vmatpush.msra.mxu0 0.0
  %1660 = vmatpush.msra.mxu0 0.0
  %1661 = vmatpush.msra.mxu0 0.0
  %1662 = vmatpush.msra.mxu0 0.0
  %1663 = vmatpush.msra.mxu0 0.0
  %1664 = vmatpush.msra.mxu0 0.0
  %1665 = vmatpush.msra.mxu0 0.0
  %1666 = vmatpush.msra.mxu0 0.0
  %1667 = vmatpush.msra.mxu0 0.0
  %1668 = vmatpush.msra.mxu0 0.0
  %1669 = vmatpush.msra.mxu0 0.0
  %1670 = vmatpush.msra.mxu0 0.0
  %1671 = vmatpush.msra.mxu0 %v1653
  %1672 = vmatpush.msra.mxu0 %v1652
  %1673 = vmatmul.f32.gmra.mxu0 %v1655
  %v1674 = vpop.f32.mrf.mxu0
  %v1675 = vadd.f32 %v115, %v1674
  %1676 = vdwg.mxu0
  %s1677 = scalar_lea.vmem %s3, 24
  %v1678 = vld [vmem:[%s1677] sm:$0xff]
  %v1679 = vmul.f32 %v1678, %v1675
  %v1680 = vsub.f32 1.0, %v1678
  %v1681 = vmul.f32 %v1680, %v1617
  %v1682 = vadd.f32 %v1679, %v1681
  %v1683 = vmul.f32 %v1620, %v1682
  %v1684 = vadd.f32 %v1619, %v1683
  %v1685 = vsub.f32 %v1587, %v1617
  %v1686 = vand.u32 2147483647, %v1685
  %v1687 = vsub.f32 %v1587, %v1648
  %v1688 = vand.u32 2147483647, %v1687
  %v1689 = vadd.f32 %v1686, %v1688
  %v1690 = vsub.f32 %v1587, %v1675
  %v1691 = vand.u32 2147483647, %v1690
  %v1692 = vadd.f32 %v1689, %v1691
  %v1693 = vsub.f32 %v1587, %v1682
  %v1694 = vand.u32 2147483647, %v1693
  %v1695 = vadd.f32 %v1692, %v1694
  %v1696 = vmul.f32 %v1695, %v1589
  %v1697 = vsel %vm86, %v1589, 0.0
  %1698 = vadd.xlane.f32.xlu0 %v1697
  %v1699 = vpop.xlane.xlu0 %1698
  %v1700 = vrot.slane %v1699, 4
  %v1701 = vadd.f32 %v1699, %v1700
  %v1702 = vrot.slane %v1701, 2
  %v1703 = vadd.f32 %v1701, %v1702
  %v1704 = vrot.slane %v1703, 1
  %v1705 = vadd.f32 %v1703, %v1704
  %s1706 = vtos %v1705
  %v1707 = vstv %s1706
  %v1708 = vadd.f32 %v1707, 1e-05
  %v1709 = vsel %vm86, %v1696, 0.0
  %1710 = vadd.xlane.f32.xlu0 %v1709
  %v1711 = vpop.xlane.xlu0 %1710
  %v1712 = vrot.slane %v1711, 4
  %v1713 = vadd.f32 %v1711, %v1712
  %v1714 = vrot.slane %v1713, 2
  %v1715 = vadd.f32 %v1713, %v1714
  %v1716 = vrot.slane %v1715, 1
  %v1717 = vadd.f32 %v1715, %v1716
  %s1718 = vtos %v1717
  %v1719 = vstv %s1718
  %v1720 = vrcp.pop %v1708
  %v1721 = vmul.f32 %v1708, %v1720
  %v1722 = vsub.f32 1.0, %v1721
  %v1723 = vmul.f32 %v1720, %v1722
  %v1724 = vadd.f32 %v1720, %v1723
  %vm1725 = vweird.f32 %v1708
  %vm1726 = vweird.f32 %v1720
  %vm1727 = vmor %vm1725, %vm1726
  %v1728 = vsel %vm1727, %v1720, %v1724
  %v1729 = vand.u32 2147483647, %v1708
  %vm1730 = vcmp.eq.f32.partialorder %v1729, 8.507059e+37
  %v1731 = vand.u32 %v1708, 2147483648
  %v1732 = vor.u32 1.1754944e-38, %v1731
  %v1733 = vsel %vm1730, %v1732, %v1728
  %v1734 = vmul.f32 %v1719, %v1733
  %v1735 = vadd.f32 %v1223, %v1734
  %s1736 = scalar_lea.vmem %s2, 24
  %v1737 = vld [vmem:[%s1736] sm:$0xff]
  %1739 = vrot.lane.b32.xlu0 %v1737, 32
  %v1740 = vpop.permute.xlu0 %1739
  %v1742 = vmul.f32 %v1325, %v1740
  %v1743 = vld [vmem:[%s9] sm:$0xff]
  %v1744 = vld [vmem:[%s9 + $0x8] sm:$0xff]
  %s1745 = scalar_lea.vmem %s5, 24
  %v1746 = vld [vmem:[%s1745] sm:$0xff]
  %v1748 = vsel %vm86, %v1684, 0
  %1750 = vmatpush.msra.mxu0 0.0
  %1751 = vmatpush.msra.mxu0 0.0
  %1752 = vmatpush.msra.mxu0 0.0
  %1753 = vmatpush.msra.mxu0 0.0
  %1754 = vmatpush.msra.mxu0 0.0
  %1755 = vmatpush.msra.mxu0 0.0
  %1756 = vmatpush.msra.mxu0 0.0
  %1757 = vmatpush.msra.mxu0 0.0
  %1758 = vmatpush.msra.mxu0 0.0
  %1759 = vmatpush.msra.mxu0 0.0
  %1760 = vmatpush.msra.mxu0 0.0
  %1761 = vmatpush.msra.mxu0 0.0
  %1762 = vmatpush.msra.mxu0 0.0
  %1763 = vmatpush.msra.mxu0 0.0
  %1764 = vmatpush.msra.mxu0 %v1744
  %1765 = vmatpush.msra.mxu0 %v1743
  %1766 = vmatmul.f32.gmra.mxu0 %v1748
  %v1767 = vpop.f32.mrf.mxu0
  %v1768 = vadd.f32 %v1746, %v1767
  %1769 = vdwg.mxu0
  %v1770 = vld [vmem:[%s10] sm:$0xff]
  %v1771 = vld [vmem:[%s10 + $0x8] sm:$0xff]
  %v1772 = vld [vmem:[%s10 + $0x10] sm:$0xff]
  %v1773 = vld [vmem:[%s10 + $0x18] sm:$0xff]
  %1775 = vrot.lane.b32.xlu0 %v1742, 96
  %v1776 = vpop.permute.xlu0 %1775
  %v1777 = vsel %vm55, %v1776, 0
  %1779 = vmatpush.msra.mxu0 0.0
  %1780 = vmatpush.msra.mxu0 0.0
  %1781 = vmatpush.msra.mxu0 0.0
  %1782 = vmatpush.msra.mxu0 0.0
  %1783 = vmatpush.msra.mxu0 0.0
  %1784 = vmatpush.msra.mxu0 0.0
  %1785 = vmatpush.msra.mxu0 0.0
  %1786 = vmatpush.msra.mxu0 0.0
  %1787 = vmatpush.msra.mxu0 0.0
  %1788 = vmatpush.msra.mxu0 0.0
  %1789 = vmatpush.msra.mxu0 0.0
  %1790 = vmatpush.msra.mxu0 0.0
  %1791 = vmatpush.msra.mxu0 %v1773
  %1792 = vmatpush.msra.mxu0 %v1772
  %1793 = vmatpush.msra.mxu0 %v1771
  %1794 = vmatpush.msra.mxu0 %v1770
  %1795 = vmatmul.f32.gmra.mxu0 %v1777
  %v1796 = vpop.f32.mrf.mxu0
  %v1797 = vadd.f32 %v231, %v1796
  %1798 = vdwg.mxu0
  %v1799 = vadd.f32 %v1768, %v1797
  %v1800 = vxor.u32 %v1799, 2147483648
  %v1801 = vmul.f32 %v1800, 1.442695
  %v1802 = vpow.pop %v1801
  %v1803 = vadd.f32 %v1802, 1.0
  %v1804 = vrcp.pop %v1803
  %v1805 = vmul.f32 %v1803, %v1804
  %v1806 = vsub.f32 1.0, %v1805
  %v1807 = vmul.f32 %v1804, %v1806
  %v1808 = vadd.f32 %v1804, %v1807
  %vm1809 = vweird.f32 %v1803
  %vm1810 = vweird.f32 %v1804
  %vm1811 = vmor %vm1809, %vm1810
  %v1812 = vsel %vm1811, %v1804, %v1808
  %v1813 = vand.u32 2147483647, %v1803
  %vm1814 = vcmp.eq.f32.partialorder %v1813, 8.507059e+37
  %v1815 = vand.u32 %v1803, 2147483648
  %v1816 = vor.u32 1.1754944e-38, %v1815
  %v1817 = vsel %vm1814, %v1816, %v1812
  %v1818 = vmul.f32 1.0, %v1817
  %1820 = vrot.lane.b32.xlu0 %v1797, 64
  %v1821 = vpop.permute.xlu0 %1820
  %v1823 = vmul.f32 %v1818, %v1821
  %1825 = vrot.lane.b32.xlu0 %v1823, 64
  %v1826 = vpop.permute.xlu0 %1825
  %v1828 = vadd.f32 %v1768, %v1826
  %v1829 = vtanh.pop %v1828
  %v1830 = vsub.f32 1.0, %v1818
  %1832 = vrot.lane.b32.xlu0 %v1829, 96
  %v1833 = vpop.permute.xlu0 %1832
  %v1835 = vmul.f32 %v1830, %v1833
  %v1836 = vmul.f32 %v1818, %v1742
  %v1837 = vadd.f32 %v1835, %v1836
  %s1838 = scalar_lea.vmem %s0, 32
  %v1839 = vld [vmem:[%s1838] sm:$0xff]
  %s1840 = scalar_lea.vmem %s1, 32
  %v1841 = vld [vmem:[%s1840] sm:$0xff]
  %v1842 = vld [vmem:[%s302] sm:$0xff]
  %v1843 = vld [vmem:[%s302 + $0x8] sm:$0xff]
  %v1844 = vld [vmem:[%s302 + $0x10] sm:$0xff]
  %v1845 = vld [vmem:[%s302 + $0x18] sm:$0xff]
  %1847 = vrot.lane.b32.xlu0 %v1577, 96
  %v1848 = vpop.permute.xlu0 %1847
  %v1849 = vsel %vm55, %v1848, 0
  %1851 = vmatpush.msra.mxu0 0.0
  %1852 = vmatpush.msra.mxu0 0.0
  %1853 = vmatpush.msra.mxu0 0.0
  %1854 = vmatpush.msra.mxu0 0.0
  %1855 = vmatpush.msra.mxu0 0.0
  %1856 = vmatpush.msra.mxu0 0.0
  %1857 = vmatpush.msra.mxu0 0.0
  %1858 = vmatpush.msra.mxu0 0.0
  %1859 = vmatpush.msra.mxu0 0.0
  %1860 = vmatpush.msra.mxu0 0.0
  %1861 = vmatpush.msra.mxu0 0.0
  %1862 = vmatpush.msra.mxu0 0.0
  %1863 = vmatpush.msra.mxu0 %v1845
  %1864 = vmatpush.msra.mxu0 %v1844
  %1865 = vmatpush.msra.mxu0 %v1843
  %1866 = vmatpush.msra.mxu0 %v1842
  %1867 = vmatmul.f32.gmra.mxu0 %v1849
  %v1868 = vpop.f32.mrf.mxu0
  %v1869 = vadd.f32 %v308, %v1868
  %1870 = vdwg.mxu0
  %v1871 = vmul.f32 %v1841, %v1839
  %v1872 = vsub.f32 1.0, %v1841
  %v1873 = vmul.f32 %v1872, %v1869
  %v1874 = vadd.f32 %v1871, %v1873
  %v1875 = vld [vmem:[%s334] sm:$0xff]
  %v1876 = vld [vmem:[%s334 + $0x8] sm:$0xff]
  %s1877 = scalar_lea.vmem %s4, 96
  %v1878 = vld [vmem:[%s1877] sm:$0xff]
  %v1880 = vsel %vm86, %v1874, 0
  %1882 = vmatpush.msra.mxu0 0.0
  %1883 = vmatpush.msra.mxu0 0.0
  %1884 = vmatpush.msra.mxu0 0.0
  %1885 = vmatpush.msra.mxu0 0.0
  %1886 = vmatpush.msra.mxu0 0.0
  %1887 = vmatpush.msra.mxu0 0.0
  %1888 = vmatpush.msra.mxu0 0.0
  %1889 = vmatpush.msra.mxu0 0.0
  %1890 = vmatpush.msra.mxu0 0.0
  %1891 = vmatpush.msra.mxu0 0.0
  %1892 = vmatpush.msra.mxu0 0.0
  %1893 = vmatpush.msra.mxu0 0.0
  %1894 = vmatpush.msra.mxu0 0.0
  %1895 = vmatpush.msra.mxu0 0.0
  %1896 = vmatpush.msra.mxu0 %v1876
  %1897 = vmatpush.msra.mxu0 %v1875
  %1898 = vmatmul.f32.gmra.mxu0 %v1880
  %v1899 = vpop.f32.mrf.mxu0
  %v1900 = vadd.f32 %v1878, %v1899
  %1901 = vdwg.mxu0
  %v1902 = vmul.f32 %v1872, %v1900
  %v1903 = vadd.f32 %v1871, %v1902
  %v1904 = vld [vmem:[%s364] sm:$0xff]
  %v1905 = vld [vmem:[%s364 + $0x8] sm:$0xff]
  %v1907 = vsel %vm86, %v1903, 0
  %1909 = vmatpush.msra.mxu0 0.0
  %1910 = vmatpush.msra.mxu0 0.0
  %1911 = vmatpush.msra.mxu0 0.0
  %1912 = vmatpush.msra.mxu0 0.0
  %1913 = vmatpush.msra.mxu0 0.0
  %1914 = vmatpush.msra.mxu0 0.0
  %1915 = vmatpush.msra.mxu0 0.0
  %1916 = vmatpush.msra.mxu0 0.0
  %1917 = vmatpush.msra.mxu0 0.0
  %1918 = vmatpush.msra.mxu0 0.0
  %1919 = vmatpush.msra.mxu0 0.0
  %1920 = vmatpush.msra.mxu0 0.0
  %1921 = vmatpush.msra.mxu0 0.0
  %1922 = vmatpush.msra.mxu0 0.0
  %1923 = vmatpush.msra.mxu0 %v1905
  %1924 = vmatpush.msra.mxu0 %v1904
  %1925 = vmatmul.f32.gmra.mxu0 %v1907
  %v1926 = vpop.f32.mrf.mxu0
  %v1927 = vadd.f32 %v368, %v1926
  %1928 = vdwg.mxu0
  %s1929 = scalar_lea.vmem %s3, 96
  %v1930 = vld [vmem:[%s1929] sm:$0xff]
  %v1931 = vmul.f32 %v1930, %v1927
  %v1932 = vsub.f32 1.0, %v1930
  %v1933 = vmul.f32 %v1932, %v1869
  %v1934 = vadd.f32 %v1931, %v1933
  %v1935 = vmul.f32 %v1872, %v1934
  %v1936 = vadd.f32 %v1871, %v1935
  %v1937 = vsub.f32 %v1839, %v1869
  %v1938 = vand.u32 2147483647, %v1937
  %v1939 = vsub.f32 %v1839, %v1900
  %v1940 = vand.u32 2147483647, %v1939
  %v1941 = vadd.f32 %v1938, %v1940
  %v1942 = vsub.f32 %v1839, %v1927
  %v1943 = vand.u32 2147483647, %v1942
  %v1944 = vadd.f32 %v1941, %v1943
  %v1945 = vsub.f32 %v1839, %v1934
  %v1946 = vand.u32 2147483647, %v1945
  %v1947 = vadd.f32 %v1944, %v1946
  %v1948 = vmul.f32 %v1947, %v1841
  %v1949 = vsel %vm86, %v1841, 0.0
  %1950 = vadd.xlane.f32.xlu0 %v1949
  %v1951 = vpop.xlane.xlu0 %1950
  %v1952 = vrot.slane %v1951, 4
  %v1953 = vadd.f32 %v1951, %v1952
  %v1954 = vrot.slane %v1953, 2
  %v1955 = vadd.f32 %v1953, %v1954
  %v1956 = vrot.slane %v1955, 1
  %v1957 = vadd.f32 %v1955, %v1956
  %s1958 = vtos %v1957
  %v1959 = vstv %s1958
  %v1960 = vadd.f32 %v1959, 1e-05
  %v1961 = vsel %vm86, %v1948, 0.0
  %1962 = vadd.xlane.f32.xlu0 %v1961
  %v1963 = vpop.xlane.xlu0 %1962
  %v1964 = vrot.slane %v1963, 4
  %v1965 = vadd.f32 %v1963, %v1964
  %v1966 = vrot.slane %v1965, 2
  %v1967 = vadd.f32 %v1965, %v1966
  %v1968 = vrot.slane %v1967, 1
  %v1969 = vadd.f32 %v1967, %v1968
  %s1970 = vtos %v1969
  %v1971 = vstv %s1970
  %v1972 = vrcp.pop %v1960
  %v1973 = vmul.f32 %v1960, %v1972
  %v1974 = vsub.f32 1.0, %v1973
  %v1975 = vmul.f32 %v1972, %v1974
  %v1976 = vadd.f32 %v1972, %v1975
  %vm1977 = vweird.f32 %v1960
  %vm1978 = vweird.f32 %v1972
  %vm1979 = vmor %vm1977, %vm1978
  %v1980 = vsel %vm1979, %v1972, %v1976
  %v1981 = vand.u32 2147483647, %v1960
  %vm1982 = vcmp.eq.f32.partialorder %v1981, 8.507059e+37
  %v1983 = vand.u32 %v1960, 2147483648
  %v1984 = vor.u32 1.1754944e-38, %v1983
  %v1985 = vsel %vm1982, %v1984, %v1980
  %v1986 = vmul.f32 %v1971, %v1985
  %v1987 = vadd.f32 %v1475, %v1986
  %s1988 = scalar_lea.vmem %s2, 96
  %v1989 = vld [vmem:[%s1988] sm:$0xff]
  %1991 = vrot.lane.b32.xlu0 %v1989, 32
  %v1992 = vpop.permute.xlu0 %1991
  %v1994 = vmul.f32 %v1577, %v1992
  %v1995 = vld [vmem:[%s455] sm:$0xff]
  %v1996 = vld [vmem:[%s455 + $0x8] sm:$0xff]
  %s1997 = scalar_lea.vmem %s5, 96
  %v1998 = vld [vmem:[%s1997] sm:$0xff]
  %v2000 = vsel %vm86, %v1936, 0
  %2002 = vmatpush.msra.mxu0 0.0
  %2003 = vmatpush.msra.mxu0 0.0
  %2004 = vmatpush.msra.mxu0 0.0
  %2005 = vmatpush.msra.mxu0 0.0
  %2006 = vmatpush.msra.mxu0 0.0
  %2007 = vmatpush.msra.mxu0 0.0
  %2008 = vmatpush.msra.mxu0 0.0
  %2009 = vmatpush.msra.mxu0 0.0
  %2010 = vmatpush.msra.mxu0 0.0
  %2011 = vmatpush.msra.mxu0 0.0
  %2012 = vmatpush.msra.mxu0 0.0
  %2013 = vmatpush.msra.mxu0 0.0
  %2014 = vmatpush.msra.mxu0 0.0
  %2015 = vmatpush.msra.mxu0 0.0
  %2016 = vmatpush.msra.mxu0 %v1996
  %2017 = vmatpush.msra.mxu0 %v1995
  %2018 = vmatmul.f32.gmra.mxu0 %v2000
  %v2019 = vpop.f32.mrf.mxu0
  %v2020 = vadd.f32 %v1998, %v2019
  %2021 = vdwg.mxu0
  %v2022 = vld [vmem:[%s483] sm:$0xff]
  %v2023 = vld [vmem:[%s483 + $0x8] sm:$0xff]
  %v2024 = vld [vmem:[%s483 + $0x10] sm:$0xff]
  %v2025 = vld [vmem:[%s483 + $0x18] sm:$0xff]
  %2027 = vrot.lane.b32.xlu0 %v1994, 96
  %v2028 = vpop.permute.xlu0 %2027
  %v2029 = vsel %vm55, %v2028, 0
  %2031 = vmatpush.msra.mxu0 0.0
  %2032 = vmatpush.msra.mxu0 0.0
  %2033 = vmatpush.msra.mxu0 0.0
  %2034 = vmatpush.msra.mxu0 0.0
  %2035 = vmatpush.msra.mxu0 0.0
  %2036 = vmatpush.msra.mxu0 0.0
  %2037 = vmatpush.msra.mxu0 0.0
  %2038 = vmatpush.msra.mxu0 0.0
  %2039 = vmatpush.msra.mxu0 0.0
  %2040 = vmatpush.msra.mxu0 0.0
  %2041 = vmatpush.msra.mxu0 0.0
  %2042 = vmatpush.msra.mxu0 0.0
  %2043 = vmatpush.msra.mxu0 %v2025
  %2044 = vmatpush.msra.mxu0 %v2024
  %2045 = vmatpush.msra.mxu0 %v2023
  %2046 = vmatpush.msra.mxu0 %v2022
  %2047 = vmatmul.f32.gmra.mxu0 %v2029
  %v2048 = vpop.f32.mrf.mxu0
  %v2049 = vadd.f32 %v489, %v2048
  %2050 = vdwg.mxu0
  %v2051 = vadd.f32 %v2020, %v2049
  %v2052 = vxor.u32 %v2051, 2147483648
  %v2053 = vmul.f32 %v2052, 1.442695
  %v2054 = vpow.pop %v2053
  %v2055 = vadd.f32 %v2054, 1.0
  %v2056 = vrcp.pop %v2055
  %v2057 = vmul.f32 %v2055, %v2056
  %v2058 = vsub.f32 1.0, %v2057
  %v2059 = vmul.f32 %v2056, %v2058
  %v2060 = vadd.f32 %v2056, %v2059
  %vm2061 = vweird.f32 %v2055
  %vm2062 = vweird.f32 %v2056
  %vm2063 = vmor %vm2061, %vm2062
  %v2064 = vsel %vm2063, %v2056, %v2060
  %v2065 = vand.u32 2147483647, %v2055
  %vm2066 = vcmp.eq.f32.partialorder %v2065, 8.507059e+37
  %v2067 = vand.u32 %v2055, 2147483648
  %v2068 = vor.u32 1.1754944e-38, %v2067
  %v2069 = vsel %vm2066, %v2068, %v2064
  %v2070 = vmul.f32 1.0, %v2069
  %2072 = vrot.lane.b32.xlu0 %v2049, 64
  %v2073 = vpop.permute.xlu0 %2072
  %v2075 = vmul.f32 %v2070, %v2073
  %2077 = vrot.lane.b32.xlu0 %v2075, 64
  %v2078 = vpop.permute.xlu0 %2077
  %v2080 = vadd.f32 %v2020, %v2078
  %v2081 = vtanh.pop %v2080
  %v2082 = vsub.f32 1.0, %v2070
  %2084 = vrot.lane.b32.xlu0 %v2081, 96
  %v2085 = vpop.permute.xlu0 %2084
  %v2087 = vmul.f32 %v2082, %v2085
  %v2088 = vmul.f32 %v2070, %v1994
  %v2089 = vadd.f32 %v2087, %v2088
  %s2090 = scalar_lea.vmem %s12, 24
  %2091 = vst.msk [vmem:[%s2090] sm:$0xff] %vm86, %v1682
  %s2092 = scalar_lea.vmem %s13, 24
  %2093 = vst.msk [vmem:[%s2092] sm:$0xff] %vm86, %v1684
  %s2094 = scalar_lea.vmem %s12, 96
  %2095 = vst.msk [vmem:[%s2094] sm:$0xff] %vm86, %v1934
  %s2096 = scalar_lea.vmem %s13, 96
  %2097 = vst.msk [vmem:[%s2096] sm:$0xff] %vm86, %v1936
  %v2098 = vld [vmem:[%s1838] sm:$0xff]
  %v2099 = vld [vmem:[%s1840] sm:$0xff]
  %v2100 = vld [vmem:[%s6] sm:$0xff]
  %v2101 = vld [vmem:[%s6 + $0x8] sm:$0xff]
  %v2102 = vld [vmem:[%s6 + $0x10] sm:$0xff]
  %v2103 = vld [vmem:[%s6 + $0x18] sm:$0xff]
  %2105 = vrot.lane.b32.xlu0 %v1837, 96
  %v2106 = vpop.permute.xlu0 %2105
  %v2107 = vsel %vm55, %v2106, 0
  %2109 = vmatpush.msra.mxu0 0.0
  %2110 = vmatpush.msra.mxu0 0.0
  %2111 = vmatpush.msra.mxu0 0.0
  %2112 = vmatpush.msra.mxu0 0.0
  %2113 = vmatpush.msra.mxu0 0.0
  %2114 = vmatpush.msra.mxu0 0.0
  %2115 = vmatpush.msra.mxu0 0.0
  %2116 = vmatpush.msra.mxu0 0.0
  %2117 = vmatpush.msra.mxu0 0.0
  %2118 = vmatpush.msra.mxu0 0.0
  %2119 = vmatpush.msra.mxu0 0.0
  %2120 = vmatpush.msra.mxu0 0.0
  %2121 = vmatpush.msra.mxu0 %v2103
  %2122 = vmatpush.msra.mxu0 %v2102
  %2123 = vmatpush.msra.mxu0 %v2101
  %2124 = vmatpush.msra.mxu0 %v2100
  %2125 = vmatmul.f32.gmra.mxu0 %v2107
  %v2126 = vpop.f32.mrf.mxu0
  %v2127 = vadd.f32 %v53, %v2126
  %2128 = vdwg.mxu0
  %v2129 = vmul.f32 %v2099, %v2098
  %v2130 = vsub.f32 1.0, %v2099
  %v2131 = vmul.f32 %v2130, %v2127
  %v2132 = vadd.f32 %v2129, %v2131
  %v2133 = vld [vmem:[%s7] sm:$0xff]
  %v2134 = vld [vmem:[%s7 + $0x8] sm:$0xff]
  %s2135 = scalar_lea.vmem %s4, 32
  %v2136 = vld [vmem:[%s2135] sm:$0xff]
  %v2138 = vsel %vm86, %v2132, 0
  %2140 = vmatpush.msra.mxu0 0.0
  %2141 = vmatpush.msra.mxu0 0.0
  %2142 = vmatpush.msra.mxu0 0.0
  %2143 = vmatpush.msra.mxu0 0.0
  %2144 = vmatpush.msra.mxu0 0.0
  %2145 = vmatpush.msra.mxu0 0.0
  %2146 = vmatpush.msra.mxu0 0.0
  %2147 = vmatpush.msra.mxu0 0.0
  %2148 = vmatpush.msra.mxu0 0.0
  %2149 = vmatpush.msra.mxu0 0.0
  %2150 = vmatpush.msra.mxu0 0.0
  %2151 = vmatpush.msra.mxu0 0.0
  %2152 = vmatpush.msra.mxu0 0.0
  %2153 = vmatpush.msra.mxu0 0.0
  %2154 = vmatpush.msra.mxu0 %v2134
  %2155 = vmatpush.msra.mxu0 %v2133
  %2156 = vmatmul.f32.gmra.mxu0 %v2138
  %v2157 = vpop.f32.mrf.mxu0
  %v2158 = vadd.f32 %v2136, %v2157
  %2159 = vdwg.mxu0
  %v2160 = vmul.f32 %v2130, %v2158
  %v2161 = vadd.f32 %v2129, %v2160
  %v2162 = vld [vmem:[%s8] sm:$0xff]
  %v2163 = vld [vmem:[%s8 + $0x8] sm:$0xff]
  %v2165 = vsel %vm86, %v2161, 0
  %2167 = vmatpush.msra.mxu0 0.0
  %2168 = vmatpush.msra.mxu0 0.0
  %2169 = vmatpush.msra.mxu0 0.0
  %2170 = vmatpush.msra.mxu0 0.0
  %2171 = vmatpush.msra.mxu0 0.0
  %2172 = vmatpush.msra.mxu0 0.0
  %2173 = vmatpush.msra.mxu0 0.0
  %2174 = vmatpush.msra.mxu0 0.0
  %2175 = vmatpush.msra.mxu0 0.0
  %2176 = vmatpush.msra.mxu0 0.0
  %2177 = vmatpush.msra.mxu0 0.0
  %2178 = vmatpush.msra.mxu0 0.0
  %2179 = vmatpush.msra.mxu0 0.0
  %2180 = vmatpush.msra.mxu0 0.0
  %2181 = vmatpush.msra.mxu0 %v2163
  %2182 = vmatpush.msra.mxu0 %v2162
  %2183 = vmatmul.f32.gmra.mxu0 %v2165
  %v2184 = vpop.f32.mrf.mxu0
  %v2185 = vadd.f32 %v115, %v2184
  %2186 = vdwg.mxu0
  %s2187 = scalar_lea.vmem %s3, 32
  %v2188 = vld [vmem:[%s2187] sm:$0xff]
  %v2189 = vmul.f32 %v2188, %v2185
  %v2190 = vsub.f32 1.0, %v2188
  %v2191 = vmul.f32 %v2190, %v2127
  %v2192 = vadd.f32 %v2189, %v2191
  %v2193 = vmul.f32 %v2130, %v2192
  %v2194 = vadd.f32 %v2129, %v2193
  %v2195 = vsub.f32 %v2098, %v2127
  %v2196 = vand.u32 2147483647, %v2195
  %v2197 = vsub.f32 %v2098, %v2158
  %v2198 = vand.u32 2147483647, %v2197
  %v2199 = vadd.f32 %v2196, %v2198
  %v2200 = vsub.f32 %v2098, %v2185
  %v2201 = vand.u32 2147483647, %v2200
  %v2202 = vadd.f32 %v2199, %v2201
  %v2203 = vsub.f32 %v2098, %v2192
  %v2204 = vand.u32 2147483647, %v2203
  %v2205 = vadd.f32 %v2202, %v2204
  %v2206 = vmul.f32 %v2205, %v2099
  %v2207 = vsel %vm86, %v2099, 0.0
  %2208 = vadd.xlane.f32.xlu0 %v2207
  %v2209 = vpop.xlane.xlu0 %2208
  %v2210 = vrot.slane %v2209, 4
  %v2211 = vadd.f32 %v2209, %v2210
  %v2212 = vrot.slane %v2211, 2
  %v2213 = vadd.f32 %v2211, %v2212
  %v2214 = vrot.slane %v2213, 1
  %v2215 = vadd.f32 %v2213, %v2214
  %s2216 = vtos %v2215
  %v2217 = vstv %s2216
  %v2218 = vadd.f32 %v2217, 1e-05
  %v2219 = vsel %vm86, %v2206, 0.0
  %2220 = vadd.xlane.f32.xlu0 %v2219
  %v2221 = vpop.xlane.xlu0 %2220
  %v2222 = vrot.slane %v2221, 4
  %v2223 = vadd.f32 %v2221, %v2222
  %v2224 = vrot.slane %v2223, 2
  %v2225 = vadd.f32 %v2223, %v2224
  %v2226 = vrot.slane %v2225, 1
  %v2227 = vadd.f32 %v2225, %v2226
  %s2228 = vtos %v2227
  %v2229 = vstv %s2228
  %v2230 = vrcp.pop %v2218
  %v2231 = vmul.f32 %v2218, %v2230
  %v2232 = vsub.f32 1.0, %v2231
  %v2233 = vmul.f32 %v2230, %v2232
  %v2234 = vadd.f32 %v2230, %v2233
  %vm2235 = vweird.f32 %v2218
  %vm2236 = vweird.f32 %v2230
  %vm2237 = vmor %vm2235, %vm2236
  %v2238 = vsel %vm2237, %v2230, %v2234
  %v2239 = vand.u32 2147483647, %v2218
  %vm2240 = vcmp.eq.f32.partialorder %v2239, 8.507059e+37
  %v2241 = vand.u32 %v2218, 2147483648
  %v2242 = vor.u32 1.1754944e-38, %v2241
  %v2243 = vsel %vm2240, %v2242, %v2238
  %v2244 = vmul.f32 %v2229, %v2243
  %v2245 = vadd.f32 %v1735, %v2244
  %s2246 = scalar_lea.vmem %s2, 32
  %v2247 = vld [vmem:[%s2246] sm:$0xff]
  %2249 = vrot.lane.b32.xlu0 %v2247, 32
  %v2250 = vpop.permute.xlu0 %2249
  %v2252 = vmul.f32 %v1837, %v2250
  %v2253 = vld [vmem:[%s9] sm:$0xff]
  %v2254 = vld [vmem:[%s9 + $0x8] sm:$0xff]
  %s2255 = scalar_lea.vmem %s5, 32
  %v2256 = vld [vmem:[%s2255] sm:$0xff]
  %v2258 = vsel %vm86, %v2194, 0
  %2260 = vmatpush.msra.mxu0 0.0
  %2261 = vmatpush.msra.mxu0 0.0
  %2262 = vmatpush.msra.mxu0 0.0
  %2263 = vmatpush.msra.mxu0 0.0
  %2264 = vmatpush.msra.mxu0 0.0
  %2265 = vmatpush.msra.mxu0 0.0
  %2266 = vmatpush.msra.mxu0 0.0
  %2267 = vmatpush.msra.mxu0 0.0
  %2268 = vmatpush.msra.mxu0 0.0
  %2269 = vmatpush.msra.mxu0 0.0
  %2270 = vmatpush.msra.mxu0 0.0
  %2271 = vmatpush.msra.mxu0 0.0
  %2272 = vmatpush.msra.mxu0 0.0
  %2273 = vmatpush.msra.mxu0 0.0
  %2274 = vmatpush.msra.mxu0 %v2254
  %2275 = vmatpush.msra.mxu0 %v2253
  %2276 = vmatmul.f32.gmra.mxu0 %v2258
  %v2277 = vpop.f32.mrf.mxu0
  %v2278 = vadd.f32 %v2256, %v2277
  %2279 = vdwg.mxu0
  %v2280 = vld [vmem:[%s10] sm:$0xff]
  %v2281 = vld [vmem:[%s10 + $0x8] sm:$0xff]
  %v2282 = vld [vmem:[%s10 + $0x10] sm:$0xff]
  %v2283 = vld [vmem:[%s10 + $0x18] sm:$0xff]
  %2285 = vrot.lane.b32.xlu0 %v2252, 96
  %v2286 = vpop.permute.xlu0 %2285
  %v2287 = vsel %vm55, %v2286, 0
  %2289 = vmatpush.msra.mxu0 0.0
  %2290 = vmatpush.msra.mxu0 0.0
  %2291 = vmatpush.msra.mxu0 0.0
  %2292 = vmatpush.msra.mxu0 0.0
  %2293 = vmatpush.msra.mxu0 0.0
  %2294 = vmatpush.msra.mxu0 0.0
  %2295 = vmatpush.msra.mxu0 0.0
  %2296 = vmatpush.msra.mxu0 0.0
  %2297 = vmatpush.msra.mxu0 0.0
  %2298 = vmatpush.msra.mxu0 0.0
  %2299 = vmatpush.msra.mxu0 0.0
  %2300 = vmatpush.msra.mxu0 0.0
  %2301 = vmatpush.msra.mxu0 %v2283
  %2302 = vmatpush.msra.mxu0 %v2282
  %2303 = vmatpush.msra.mxu0 %v2281
  %2304 = vmatpush.msra.mxu0 %v2280
  %2305 = vmatmul.f32.gmra.mxu0 %v2287
  %v2306 = vpop.f32.mrf.mxu0
  %v2307 = vadd.f32 %v231, %v2306
  %2308 = vdwg.mxu0
  %v2309 = vadd.f32 %v2278, %v2307
  %v2310 = vxor.u32 %v2309, 2147483648
  %v2311 = vmul.f32 %v2310, 1.442695
  %v2312 = vpow.pop %v2311
  %v2313 = vadd.f32 %v2312, 1.0
  %v2314 = vrcp.pop %v2313
  %v2315 = vmul.f32 %v2313, %v2314
  %v2316 = vsub.f32 1.0, %v2315
  %v2317 = vmul.f32 %v2314, %v2316
  %v2318 = vadd.f32 %v2314, %v2317
  %vm2319 = vweird.f32 %v2313
  %vm2320 = vweird.f32 %v2314
  %vm2321 = vmor %vm2319, %vm2320
  %v2322 = vsel %vm2321, %v2314, %v2318
  %v2323 = vand.u32 2147483647, %v2313
  %vm2324 = vcmp.eq.f32.partialorder %v2323, 8.507059e+37
  %v2325 = vand.u32 %v2313, 2147483648
  %v2326 = vor.u32 1.1754944e-38, %v2325
  %v2327 = vsel %vm2324, %v2326, %v2322
  %v2328 = vmul.f32 1.0, %v2327
  %2330 = vrot.lane.b32.xlu0 %v2307, 64
  %v2331 = vpop.permute.xlu0 %2330
  %v2333 = vmul.f32 %v2328, %v2331
  %2335 = vrot.lane.b32.xlu0 %v2333, 64
  %v2336 = vpop.permute.xlu0 %2335
  %v2338 = vadd.f32 %v2278, %v2336
  %v2339 = vtanh.pop %v2338
  %v2340 = vsub.f32 1.0, %v2328
  %2342 = vrot.lane.b32.xlu0 %v2339, 96
  %v2343 = vpop.permute.xlu0 %2342
  %v2345 = vmul.f32 %v2340, %v2343
  %v2346 = vmul.f32 %v2328, %v2252
  %v2347 = vadd.f32 %v2345, %v2346
  %v2348 = vld [vmem:[%s1586] sm:$0xff]
  %v2349 = vld [vmem:[%s1588] sm:$0xff]
  %v2350 = vld [vmem:[%s302] sm:$0xff]
  %v2351 = vld [vmem:[%s302 + $0x8] sm:$0xff]
  %v2352 = vld [vmem:[%s302 + $0x10] sm:$0xff]
  %v2353 = vld [vmem:[%s302 + $0x18] sm:$0xff]
  %2355 = vrot.lane.b32.xlu0 %v2089, 96
  %v2356 = vpop.permute.xlu0 %2355
  %v2357 = vsel %vm55, %v2356, 0
  %2359 = vmatpush.msra.mxu0 0.0
  %2360 = vmatpush.msra.mxu0 0.0
  %2361 = vmatpush.msra.mxu0 0.0
  %2362 = vmatpush.msra.mxu0 0.0
  %2363 = vmatpush.msra.mxu0 0.0
  %2364 = vmatpush.msra.mxu0 0.0
  %2365 = vmatpush.msra.mxu0 0.0
  %2366 = vmatpush.msra.mxu0 0.0
  %2367 = vmatpush.msra.mxu0 0.0
  %2368 = vmatpush.msra.mxu0 0.0
  %2369 = vmatpush.msra.mxu0 0.0
  %2370 = vmatpush.msra.mxu0 0.0
  %2371 = vmatpush.msra.mxu0 %v2353
  %2372 = vmatpush.msra.mxu0 %v2352
  %2373 = vmatpush.msra.mxu0 %v2351
  %2374 = vmatpush.msra.mxu0 %v2350
  %2375 = vmatmul.f32.gmra.mxu0 %v2357
  %v2376 = vpop.f32.mrf.mxu0
  %v2377 = vadd.f32 %v308, %v2376
  %2378 = vdwg.mxu0
  %v2379 = vmul.f32 %v2349, %v2348
  %v2380 = vsub.f32 1.0, %v2349
  %v2381 = vmul.f32 %v2380, %v2377
  %v2382 = vadd.f32 %v2379, %v2381
  %v2383 = vld [vmem:[%s334] sm:$0xff]
  %v2384 = vld [vmem:[%s334 + $0x8] sm:$0xff]
  %s2385 = scalar_lea.vmem %s4, 88
  %v2386 = vld [vmem:[%s2385] sm:$0xff]
  %v2388 = vsel %vm86, %v2382, 0
  %2390 = vmatpush.msra.mxu0 0.0
  %2391 = vmatpush.msra.mxu0 0.0
  %2392 = vmatpush.msra.mxu0 0.0
  %2393 = vmatpush.msra.mxu0 0.0
  %2394 = vmatpush.msra.mxu0 0.0
  %2395 = vmatpush.msra.mxu0 0.0
  %2396 = vmatpush.msra.mxu0 0.0
  %2397 = vmatpush.msra.mxu0 0.0
  %2398 = vmatpush.msra.mxu0 0.0
  %2399 = vmatpush.msra.mxu0 0.0
  %2400 = vmatpush.msra.mxu0 0.0
  %2401 = vmatpush.msra.mxu0 0.0
  %2402 = vmatpush.msra.mxu0 0.0
  %2403 = vmatpush.msra.mxu0 0.0
  %2404 = vmatpush.msra.mxu0 %v2384
  %2405 = vmatpush.msra.mxu0 %v2383
  %2406 = vmatmul.f32.gmra.mxu0 %v2388
  %v2407 = vpop.f32.mrf.mxu0
  %v2408 = vadd.f32 %v2386, %v2407
  %2409 = vdwg.mxu0
  %v2410 = vmul.f32 %v2380, %v2408
  %v2411 = vadd.f32 %v2379, %v2410
  %v2412 = vld [vmem:[%s364] sm:$0xff]
  %v2413 = vld [vmem:[%s364 + $0x8] sm:$0xff]
  %v2415 = vsel %vm86, %v2411, 0
  %2417 = vmatpush.msra.mxu0 0.0
  %2418 = vmatpush.msra.mxu0 0.0
  %2419 = vmatpush.msra.mxu0 0.0
  %2420 = vmatpush.msra.mxu0 0.0
  %2421 = vmatpush.msra.mxu0 0.0
  %2422 = vmatpush.msra.mxu0 0.0
  %2423 = vmatpush.msra.mxu0 0.0
  %2424 = vmatpush.msra.mxu0 0.0
  %2425 = vmatpush.msra.mxu0 0.0
  %2426 = vmatpush.msra.mxu0 0.0
  %2427 = vmatpush.msra.mxu0 0.0
  %2428 = vmatpush.msra.mxu0 0.0
  %2429 = vmatpush.msra.mxu0 0.0
  %2430 = vmatpush.msra.mxu0 0.0
  %2431 = vmatpush.msra.mxu0 %v2413
  %2432 = vmatpush.msra.mxu0 %v2412
  %2433 = vmatmul.f32.gmra.mxu0 %v2415
  %v2434 = vpop.f32.mrf.mxu0
  %v2435 = vadd.f32 %v368, %v2434
  %2436 = vdwg.mxu0
  %s2437 = scalar_lea.vmem %s3, 88
  %v2438 = vld [vmem:[%s2437] sm:$0xff]
  %v2439 = vmul.f32 %v2438, %v2435
  %v2440 = vsub.f32 1.0, %v2438
  %v2441 = vmul.f32 %v2440, %v2377
  %v2442 = vadd.f32 %v2439, %v2441
  %v2443 = vmul.f32 %v2380, %v2442
  %v2444 = vadd.f32 %v2379, %v2443
  %v2445 = vsub.f32 %v2348, %v2377
  %v2446 = vand.u32 2147483647, %v2445
  %v2447 = vsub.f32 %v2348, %v2408
  %v2448 = vand.u32 2147483647, %v2447
  %v2449 = vadd.f32 %v2446, %v2448
  %v2450 = vsub.f32 %v2348, %v2435
  %v2451 = vand.u32 2147483647, %v2450
  %v2452 = vadd.f32 %v2449, %v2451
  %v2453 = vsub.f32 %v2348, %v2442
  %v2454 = vand.u32 2147483647, %v2453
  %v2455 = vadd.f32 %v2452, %v2454
  %v2456 = vmul.f32 %v2455, %v2349
  %v2457 = vsel %vm86, %v2349, 0.0
  %2458 = vadd.xlane.f32.xlu0 %v2457
  %v2459 = vpop.xlane.xlu0 %2458
  %v2460 = vrot.slane %v2459, 4
  %v2461 = vadd.f32 %v2459, %v2460
  %v2462 = vrot.slane %v2461, 2
  %v2463 = vadd.f32 %v2461, %v2462
  %v2464 = vrot.slane %v2463, 1
  %v2465 = vadd.f32 %v2463, %v2464
  %s2466 = vtos %v2465
  %v2467 = vstv %s2466
  %v2468 = vadd.f32 %v2467, 1e-05
  %v2469 = vsel %vm86, %v2456, 0.0
  %2470 = vadd.xlane.f32.xlu0 %v2469
  %v2471 = vpop.xlane.xlu0 %2470
  %v2472 = vrot.slane %v2471, 4
  %v2473 = vadd.f32 %v2471, %v2472
  %v2474 = vrot.slane %v2473, 2
  %v2475 = vadd.f32 %v2473, %v2474
  %v2476 = vrot.slane %v2475, 1
  %v2477 = vadd.f32 %v2475, %v2476
  %s2478 = vtos %v2477
  %v2479 = vstv %s2478
  %v2480 = vrcp.pop %v2468
  %v2481 = vmul.f32 %v2468, %v2480
  %v2482 = vsub.f32 1.0, %v2481
  %v2483 = vmul.f32 %v2480, %v2482
  %v2484 = vadd.f32 %v2480, %v2483
  %vm2485 = vweird.f32 %v2468
  %vm2486 = vweird.f32 %v2480
  %vm2487 = vmor %vm2485, %vm2486
  %v2488 = vsel %vm2487, %v2480, %v2484
  %v2489 = vand.u32 2147483647, %v2468
  %vm2490 = vcmp.eq.f32.partialorder %v2489, 8.507059e+37
  %v2491 = vand.u32 %v2468, 2147483648
  %v2492 = vor.u32 1.1754944e-38, %v2491
  %v2493 = vsel %vm2490, %v2492, %v2488
  %v2494 = vmul.f32 %v2479, %v2493
  %v2495 = vadd.f32 %v1987, %v2494
  %s2496 = scalar_lea.vmem %s2, 88
  %v2497 = vld [vmem:[%s2496] sm:$0xff]
  %2499 = vrot.lane.b32.xlu0 %v2497, 32
  %v2500 = vpop.permute.xlu0 %2499
  %v2502 = vmul.f32 %v2089, %v2500
  %v2503 = vld [vmem:[%s455] sm:$0xff]
  %v2504 = vld [vmem:[%s455 + $0x8] sm:$0xff]
  %s2505 = scalar_lea.vmem %s5, 88
  %v2506 = vld [vmem:[%s2505] sm:$0xff]
  %v2508 = vsel %vm86, %v2444, 0
  %2510 = vmatpush.msra.mxu0 0.0
  %2511 = vmatpush.msra.mxu0 0.0
  %2512 = vmatpush.msra.mxu0 0.0
  %2513 = vmatpush.msra.mxu0 0.0
  %2514 = vmatpush.msra.mxu0 0.0
  %2515 = vmatpush.msra.mxu0 0.0
  %2516 = vmatpush.msra.mxu0 0.0
  %2517 = vmatpush.msra.mxu0 0.0
  %2518 = vmatpush.msra.mxu0 0.0
  %2519 = vmatpush.msra.mxu0 0.0
  %2520 = vmatpush.msra.mxu0 0.0
  %2521 = vmatpush.msra.mxu0 0.0
  %2522 = vmatpush.msra.mxu0 0.0
  %2523 = vmatpush.msra.mxu0 0.0
  %2524 = vmatpush.msra.mxu0 %v2504
  %2525 = vmatpush.msra.mxu0 %v2503
  %2526 = vmatmul.f32.gmra.mxu0 %v2508
  %v2527 = vpop.f32.mrf.mxu0
  %v2528 = vadd.f32 %v2506, %v2527
  %2529 = vdwg.mxu0
  %v2530 = vld [vmem:[%s483] sm:$0xff]
  %v2531 = vld [vmem:[%s483 + $0x8] sm:$0xff]
  %v2532 = vld [vmem:[%s483 + $0x10] sm:$0xff]
  %v2533 = vld [vmem:[%s483 + $0x18] sm:$0xff]
  %2535 = vrot.lane.b32.xlu0 %v2502, 96
  %v2536 = vpop.permute.xlu0 %2535
  %v2537 = vsel %vm55, %v2536, 0
  %2539 = vmatpush.msra.mxu0 0.0
  %2540 = vmatpush.msra.mxu0 0.0
  %2541 = vmatpush.msra.mxu0 0.0
  %2542 = vmatpush.msra.mxu0 0.0
  %2543 = vmatpush.msra.mxu0 0.0
  %2544 = vmatpush.msra.mxu0 0.0
  %2545 = vmatpush.msra.mxu0 0.0
  %2546 = vmatpush.msra.mxu0 0.0
  %2547 = vmatpush.msra.mxu0 0.0
  %2548 = vmatpush.msra.mxu0 0.0
  %2549 = vmatpush.msra.mxu0 0.0
  %2550 = vmatpush.msra.mxu0 0.0
  %2551 = vmatpush.msra.mxu0 %v2533
  %2552 = vmatpush.msra.mxu0 %v2532
  %2553 = vmatpush.msra.mxu0 %v2531
  %2554 = vmatpush.msra.mxu0 %v2530
  %2555 = vmatmul.f32.gmra.mxu0 %v2537
  %v2556 = vpop.f32.mrf.mxu0
  %v2557 = vadd.f32 %v489, %v2556
  %2558 = vdwg.mxu0
  %v2559 = vadd.f32 %v2528, %v2557
  %v2560 = vxor.u32 %v2559, 2147483648
  %v2561 = vmul.f32 %v2560, 1.442695
  %v2562 = vpow.pop %v2561
  %v2563 = vadd.f32 %v2562, 1.0
  %v2564 = vrcp.pop %v2563
  %v2565 = vmul.f32 %v2563, %v2564
  %v2566 = vsub.f32 1.0, %v2565
  %v2567 = vmul.f32 %v2564, %v2566
  %v2568 = vadd.f32 %v2564, %v2567
  %vm2569 = vweird.f32 %v2563
  %vm2570 = vweird.f32 %v2564
  %vm2571 = vmor %vm2569, %vm2570
  %v2572 = vsel %vm2571, %v2564, %v2568
  %v2573 = vand.u32 2147483647, %v2563
  %vm2574 = vcmp.eq.f32.partialorder %v2573, 8.507059e+37
  %v2575 = vand.u32 %v2563, 2147483648
  %v2576 = vor.u32 1.1754944e-38, %v2575
  %v2577 = vsel %vm2574, %v2576, %v2572
  %v2578 = vmul.f32 1.0, %v2577
  %2580 = vrot.lane.b32.xlu0 %v2557, 64
  %v2581 = vpop.permute.xlu0 %2580
  %v2583 = vmul.f32 %v2578, %v2581
  %2585 = vrot.lane.b32.xlu0 %v2583, 64
  %v2586 = vpop.permute.xlu0 %2585
  %v2588 = vadd.f32 %v2528, %v2586
  %v2589 = vtanh.pop %v2588
  %v2590 = vsub.f32 1.0, %v2578
  %2592 = vrot.lane.b32.xlu0 %v2589, 96
  %v2593 = vpop.permute.xlu0 %2592
  %v2595 = vmul.f32 %v2590, %v2593
  %v2596 = vmul.f32 %v2578, %v2502
  %v2597 = vadd.f32 %v2595, %v2596
  %s2598 = scalar_lea.vmem %s12, 32
  %2599 = vst.msk [vmem:[%s2598] sm:$0xff] %vm86, %v2192
  %s2600 = scalar_lea.vmem %s13, 32
  %2601 = vst.msk [vmem:[%s2600] sm:$0xff] %vm86, %v2194
  %s2602 = scalar_lea.vmem %s12, 88
  %2603 = vst.msk [vmem:[%s2602] sm:$0xff] %vm86, %v2442
  %s2604 = scalar_lea.vmem %s13, 88
  %2605 = vst.msk [vmem:[%s2604] sm:$0xff] %vm86, %v2444
  %v2606 = vld [vmem:[%s1326] sm:$0xff]
  %v2607 = vld [vmem:[%s1328] sm:$0xff]
  %v2608 = vld [vmem:[%s6] sm:$0xff]
  %v2609 = vld [vmem:[%s6 + $0x8] sm:$0xff]
  %v2610 = vld [vmem:[%s6 + $0x10] sm:$0xff]
  %v2611 = vld [vmem:[%s6 + $0x18] sm:$0xff]
  %2613 = vrot.lane.b32.xlu0 %v2347, 96
  %v2614 = vpop.permute.xlu0 %2613
  %v2615 = vsel %vm55, %v2614, 0
  %2617 = vmatpush.msra.mxu0 0.0
  %2618 = vmatpush.msra.mxu0 0.0
  %2619 = vmatpush.msra.mxu0 0.0
  %2620 = vmatpush.msra.mxu0 0.0
  %2621 = vmatpush.msra.mxu0 0.0
  %2622 = vmatpush.msra.mxu0 0.0
  %2623 = vmatpush.msra.mxu0 0.0
  %2624 = vmatpush.msra.mxu0 0.0
  %2625 = vmatpush.msra.mxu0 0.0
  %2626 = vmatpush.msra.mxu0 0.0
  %2627 = vmatpush.msra.mxu0 0.0
  %2628 = vmatpush.msra.mxu0 0.0
  %2629 = vmatpush.msra.mxu0 %v2611
  %2630 = vmatpush.msra.mxu0 %v2610
  %2631 = vmatpush.msra.mxu0 %v2609
  %2632 = vmatpush.msra.mxu0 %v2608
  %2633 = vmatmul.f32.gmra.mxu0 %v2615
  %v2634 = vpop.f32.mrf.mxu0
  %v2635 = vadd.f32 %v53, %v2634
  %2636 = vdwg.mxu0
  %v2637 = vmul.f32 %v2607, %v2606
  %v2638 = vsub.f32 1.0, %v2607
  %v2639 = vmul.f32 %v2638, %v2635
  %v2640 = vadd.f32 %v2637, %v2639
  %v2641 = vld [vmem:[%s7] sm:$0xff]
  %v2642 = vld [vmem:[%s7 + $0x8] sm:$0xff]
  %s2643 = scalar_lea.vmem %s4, 40
  %v2644 = vld [vmem:[%s2643] sm:$0xff]
  %v2646 = vsel %vm86, %v2640, 0
  %2648 = vmatpush.msra.mxu0 0.0
  %2649 = vmatpush.msra.mxu0 0.0
  %2650 = vmatpush.msra.mxu0 0.0
  %2651 = vmatpush.msra.mxu0 0.0
  %2652 = vmatpush.msra.mxu0 0.0
  %2653 = vmatpush.msra.mxu0 0.0
  %2654 = vmatpush.msra.mxu0 0.0
  %2655 = vmatpush.msra.mxu0 0.0
  %2656 = vmatpush.msra.mxu0 0.0
  %2657 = vmatpush.msra.mxu0 0.0
  %2658 = vmatpush.msra.mxu0 0.0
  %2659 = vmatpush.msra.mxu0 0.0
  %2660 = vmatpush.msra.mxu0 0.0
  %2661 = vmatpush.msra.mxu0 0.0
  %2662 = vmatpush.msra.mxu0 %v2642
  %2663 = vmatpush.msra.mxu0 %v2641
  %2664 = vmatmul.f32.gmra.mxu0 %v2646
  %v2665 = vpop.f32.mrf.mxu0
  %v2666 = vadd.f32 %v2644, %v2665
  %2667 = vdwg.mxu0
  %v2668 = vmul.f32 %v2638, %v2666
  %v2669 = vadd.f32 %v2637, %v2668
  %v2670 = vld [vmem:[%s8] sm:$0xff]
  %v2671 = vld [vmem:[%s8 + $0x8] sm:$0xff]
  %v2673 = vsel %vm86, %v2669, 0
  %2675 = vmatpush.msra.mxu0 0.0
  %2676 = vmatpush.msra.mxu0 0.0
  %2677 = vmatpush.msra.mxu0 0.0
  %2678 = vmatpush.msra.mxu0 0.0
  %2679 = vmatpush.msra.mxu0 0.0
  %2680 = vmatpush.msra.mxu0 0.0
  %2681 = vmatpush.msra.mxu0 0.0
  %2682 = vmatpush.msra.mxu0 0.0
  %2683 = vmatpush.msra.mxu0 0.0
  %2684 = vmatpush.msra.mxu0 0.0
  %2685 = vmatpush.msra.mxu0 0.0
  %2686 = vmatpush.msra.mxu0 0.0
  %2687 = vmatpush.msra.mxu0 0.0
  %2688 = vmatpush.msra.mxu0 0.0
  %2689 = vmatpush.msra.mxu0 %v2671
  %2690 = vmatpush.msra.mxu0 %v2670
  %2691 = vmatmul.f32.gmra.mxu0 %v2673
  %v2692 = vpop.f32.mrf.mxu0
  %v2693 = vadd.f32 %v115, %v2692
  %2694 = vdwg.mxu0
  %s2695 = scalar_lea.vmem %s3, 40
  %v2696 = vld [vmem:[%s2695] sm:$0xff]
  %v2697 = vmul.f32 %v2696, %v2693
  %v2698 = vsub.f32 1.0, %v2696
  %v2699 = vmul.f32 %v2698, %v2635
  %v2700 = vadd.f32 %v2697, %v2699
  %v2701 = vmul.f32 %v2638, %v2700
  %v2702 = vadd.f32 %v2637, %v2701
  %v2703 = vsub.f32 %v2606, %v2635
  %v2704 = vand.u32 2147483647, %v2703
  %v2705 = vsub.f32 %v2606, %v2666
  %v2706 = vand.u32 2147483647, %v2705
  %v2707 = vadd.f32 %v2704, %v2706
  %v2708 = vsub.f32 %v2606, %v2693
  %v2709 = vand.u32 2147483647, %v2708
  %v2710 = vadd.f32 %v2707, %v2709
  %v2711 = vsub.f32 %v2606, %v2700
  %v2712 = vand.u32 2147483647, %v2711
  %v2713 = vadd.f32 %v2710, %v2712
  %v2714 = vmul.f32 %v2713, %v2607
  %v2715 = vsel %vm86, %v2607, 0.0
  %2716 = vadd.xlane.f32.xlu0 %v2715
  %v2717 = vpop.xlane.xlu0 %2716
  %v2718 = vrot.slane %v2717, 4
  %v2719 = vadd.f32 %v2717, %v2718
  %v2720 = vrot.slane %v2719, 2
  %v2721 = vadd.f32 %v2719, %v2720
  %v2722 = vrot.slane %v2721, 1
  %v2723 = vadd.f32 %v2721, %v2722
  %s2724 = vtos %v2723
  %v2725 = vstv %s2724
  %v2726 = vadd.f32 %v2725, 1e-05
  %v2727 = vsel %vm86, %v2714, 0.0
  %2728 = vadd.xlane.f32.xlu0 %v2727
  %v2729 = vpop.xlane.xlu0 %2728
  %v2730 = vrot.slane %v2729, 4
  %v2731 = vadd.f32 %v2729, %v2730
  %v2732 = vrot.slane %v2731, 2
  %v2733 = vadd.f32 %v2731, %v2732
  %v2734 = vrot.slane %v2733, 1
  %v2735 = vadd.f32 %v2733, %v2734
  %s2736 = vtos %v2735
  %v2737 = vstv %s2736
  %v2738 = vrcp.pop %v2726
  %v2739 = vmul.f32 %v2726, %v2738
  %v2740 = vsub.f32 1.0, %v2739
  %v2741 = vmul.f32 %v2738, %v2740
  %v2742 = vadd.f32 %v2738, %v2741
  %vm2743 = vweird.f32 %v2726
  %vm2744 = vweird.f32 %v2738
  %vm2745 = vmor %vm2743, %vm2744
  %v2746 = vsel %vm2745, %v2738, %v2742
  %v2747 = vand.u32 2147483647, %v2726
  %vm2748 = vcmp.eq.f32.partialorder %v2747, 8.507059e+37
  %v2749 = vand.u32 %v2726, 2147483648
  %v2750 = vor.u32 1.1754944e-38, %v2749
  %v2751 = vsel %vm2748, %v2750, %v2746
  %v2752 = vmul.f32 %v2737, %v2751
  %v2753 = vadd.f32 %v2245, %v2752
  %s2754 = scalar_lea.vmem %s2, 40
  %v2755 = vld [vmem:[%s2754] sm:$0xff]
  %2757 = vrot.lane.b32.xlu0 %v2755, 32
  %v2758 = vpop.permute.xlu0 %2757
  %v2760 = vmul.f32 %v2347, %v2758
  %v2761 = vld [vmem:[%s9] sm:$0xff]
  %v2762 = vld [vmem:[%s9 + $0x8] sm:$0xff]
  %s2763 = scalar_lea.vmem %s5, 40
  %v2764 = vld [vmem:[%s2763] sm:$0xff]
  %v2766 = vsel %vm86, %v2702, 0
  %2768 = vmatpush.msra.mxu0 0.0
  %2769 = vmatpush.msra.mxu0 0.0
  %2770 = vmatpush.msra.mxu0 0.0
  %2771 = vmatpush.msra.mxu0 0.0
  %2772 = vmatpush.msra.mxu0 0.0
  %2773 = vmatpush.msra.mxu0 0.0
  %2774 = vmatpush.msra.mxu0 0.0
  %2775 = vmatpush.msra.mxu0 0.0
  %2776 = vmatpush.msra.mxu0 0.0
  %2777 = vmatpush.msra.mxu0 0.0
  %2778 = vmatpush.msra.mxu0 0.0
  %2779 = vmatpush.msra.mxu0 0.0
  %2780 = vmatpush.msra.mxu0 0.0
  %2781 = vmatpush.msra.mxu0 0.0
  %2782 = vmatpush.msra.mxu0 %v2762
  %2783 = vmatpush.msra.mxu0 %v2761
  %2784 = vmatmul.f32.gmra.mxu0 %v2766
  %v2785 = vpop.f32.mrf.mxu0
  %v2786 = vadd.f32 %v2764, %v2785
  %2787 = vdwg.mxu0
  %v2788 = vld [vmem:[%s10] sm:$0xff]
  %v2789 = vld [vmem:[%s10 + $0x8] sm:$0xff]
  %v2790 = vld [vmem:[%s10 + $0x10] sm:$0xff]
  %v2791 = vld [vmem:[%s10 + $0x18] sm:$0xff]
  %2793 = vrot.lane.b32.xlu0 %v2760, 96
  %v2794 = vpop.permute.xlu0 %2793
  %v2795 = vsel %vm55, %v2794, 0
  %2797 = vmatpush.msra.mxu0 0.0
  %2798 = vmatpush.msra.mxu0 0.0
  %2799 = vmatpush.msra.mxu0 0.0
  %2800 = vmatpush.msra.mxu0 0.0
  %2801 = vmatpush.msra.mxu0 0.0
  %2802 = vmatpush.msra.mxu0 0.0
  %2803 = vmatpush.msra.mxu0 0.0
  %2804 = vmatpush.msra.mxu0 0.0
  %2805 = vmatpush.msra.mxu0 0.0
  %2806 = vmatpush.msra.mxu0 0.0
  %2807 = vmatpush.msra.mxu0 0.0
  %2808 = vmatpush.msra.mxu0 0.0
  %2809 = vmatpush.msra.mxu0 %v2791
  %2810 = vmatpush.msra.mxu0 %v2790
  %2811 = vmatpush.msra.mxu0 %v2789
  %2812 = vmatpush.msra.mxu0 %v2788
  %2813 = vmatmul.f32.gmra.mxu0 %v2795
  %v2814 = vpop.f32.mrf.mxu0
  %v2815 = vadd.f32 %v231, %v2814
  %2816 = vdwg.mxu0
  %v2817 = vadd.f32 %v2786, %v2815
  %v2818 = vxor.u32 %v2817, 2147483648
  %v2819 = vmul.f32 %v2818, 1.442695
  %v2820 = vpow.pop %v2819
  %v2821 = vadd.f32 %v2820, 1.0
  %v2822 = vrcp.pop %v2821
  %v2823 = vmul.f32 %v2821, %v2822
  %v2824 = vsub.f32 1.0, %v2823
  %v2825 = vmul.f32 %v2822, %v2824
  %v2826 = vadd.f32 %v2822, %v2825
  %vm2827 = vweird.f32 %v2821
  %vm2828 = vweird.f32 %v2822
  %vm2829 = vmor %vm2827, %vm2828
  %v2830 = vsel %vm2829, %v2822, %v2826
  %v2831 = vand.u32 2147483647, %v2821
  %vm2832 = vcmp.eq.f32.partialorder %v2831, 8.507059e+37
  %v2833 = vand.u32 %v2821, 2147483648
  %v2834 = vor.u32 1.1754944e-38, %v2833
  %v2835 = vsel %vm2832, %v2834, %v2830
  %v2836 = vmul.f32 1.0, %v2835
  %2838 = vrot.lane.b32.xlu0 %v2815, 64
  %v2839 = vpop.permute.xlu0 %2838
  %v2841 = vmul.f32 %v2836, %v2839
  %2843 = vrot.lane.b32.xlu0 %v2841, 64
  %v2844 = vpop.permute.xlu0 %2843
  %v2846 = vadd.f32 %v2786, %v2844
  %v2847 = vtanh.pop %v2846
  %v2848 = vsub.f32 1.0, %v2836
  %2850 = vrot.lane.b32.xlu0 %v2847, 96
  %v2851 = vpop.permute.xlu0 %2850
  %v2853 = vmul.f32 %v2848, %v2851
  %v2854 = vmul.f32 %v2836, %v2760
  %v2855 = vadd.f32 %v2853, %v2854
  %v2856 = vld [vmem:[%s1074] sm:$0xff]
  %v2857 = vld [vmem:[%s1076] sm:$0xff]
  %v2858 = vld [vmem:[%s302] sm:$0xff]
  %v2859 = vld [vmem:[%s302 + $0x8] sm:$0xff]
  %v2860 = vld [vmem:[%s302 + $0x10] sm:$0xff]
  %v2861 = vld [vmem:[%s302 + $0x18] sm:$0xff]
  %2863 = vrot.lane.b32.xlu0 %v2597, 96
  %v2864 = vpop.permute.xlu0 %2863
  %v2865 = vsel %vm55, %v2864, 0
  %2867 = vmatpush.msra.mxu0 0.0
  %2868 = vmatpush.msra.mxu0 0.0
  %2869 = vmatpush.msra.mxu0 0.0
  %2870 = vmatpush.msra.mxu0 0.0
  %2871 = vmatpush.msra.mxu0 0.0
  %2872 = vmatpush.msra.mxu0 0.0
  %2873 = vmatpush.msra.mxu0 0.0
  %2874 = vmatpush.msra.mxu0 0.0
  %2875 = vmatpush.msra.mxu0 0.0
  %2876 = vmatpush.msra.mxu0 0.0
  %2877 = vmatpush.msra.mxu0 0.0
  %2878 = vmatpush.msra.mxu0 0.0
  %2879 = vmatpush.msra.mxu0 %v2861
  %2880 = vmatpush.msra.mxu0 %v2860
  %2881 = vmatpush.msra.mxu0 %v2859
  %2882 = vmatpush.msra.mxu0 %v2858
  %2883 = vmatmul.f32.gmra.mxu0 %v2865
  %v2884 = vpop.f32.mrf.mxu0
  %v2885 = vadd.f32 %v308, %v2884
  %2886 = vdwg.mxu0
  %v2887 = vmul.f32 %v2857, %v2856
  %v2888 = vsub.f32 1.0, %v2857
  %v2889 = vmul.f32 %v2888, %v2885
  %v2890 = vadd.f32 %v2887, %v2889
  %v2891 = vld [vmem:[%s334] sm:$0xff]
  %v2892 = vld [vmem:[%s334 + $0x8] sm:$0xff]
  %s2893 = scalar_lea.vmem %s4, 80
  %v2894 = vld [vmem:[%s2893] sm:$0xff]
  %v2896 = vsel %vm86, %v2890, 0
  %2898 = vmatpush.msra.mxu0 0.0
  %2899 = vmatpush.msra.mxu0 0.0
  %2900 = vmatpush.msra.mxu0 0.0
  %2901 = vmatpush.msra.mxu0 0.0
  %2902 = vmatpush.msra.mxu0 0.0
  %2903 = vmatpush.msra.mxu0 0.0
  %2904 = vmatpush.msra.mxu0 0.0
  %2905 = vmatpush.msra.mxu0 0.0
  %2906 = vmatpush.msra.mxu0 0.0
  %2907 = vmatpush.msra.mxu0 0.0
  %2908 = vmatpush.msra.mxu0 0.0
  %2909 = vmatpush.msra.mxu0 0.0
  %2910 = vmatpush.msra.mxu0 0.0
  %2911 = vmatpush.msra.mxu0 0.0
  %2912 = vmatpush.msra.mxu0 %v2892
  %2913 = vmatpush.msra.mxu0 %v2891
  %2914 = vmatmul.f32.gmra.mxu0 %v2896
  %v2915 = vpop.f32.mrf.mxu0
  %v2916 = vadd.f32 %v2894, %v2915
  %2917 = vdwg.mxu0
  %v2918 = vmul.f32 %v2888, %v2916
  %v2919 = vadd.f32 %v2887, %v2918
  %v2920 = vld [vmem:[%s364] sm:$0xff]
  %v2921 = vld [vmem:[%s364 + $0x8] sm:$0xff]
  %v2923 = vsel %vm86, %v2919, 0
  %2925 = vmatpush.msra.mxu0 0.0
  %2926 = vmatpush.msra.mxu0 0.0
  %2927 = vmatpush.msra.mxu0 0.0
  %2928 = vmatpush.msra.mxu0 0.0
  %2929 = vmatpush.msra.mxu0 0.0
  %2930 = vmatpush.msra.mxu0 0.0
  %2931 = vmatpush.msra.mxu0 0.0
  %2932 = vmatpush.msra.mxu0 0.0
  %2933 = vmatpush.msra.mxu0 0.0
  %2934 = vmatpush.msra.mxu0 0.0
  %2935 = vmatpush.msra.mxu0 0.0
  %2936 = vmatpush.msra.mxu0 0.0
  %2937 = vmatpush.msra.mxu0 0.0
  %2938 = vmatpush.msra.mxu0 0.0
  %2939 = vmatpush.msra.mxu0 %v2921
  %2940 = vmatpush.msra.mxu0 %v2920
  %2941 = vmatmul.f32.gmra.mxu0 %v2923
  %v2942 = vpop.f32.mrf.mxu0
  %v2943 = vadd.f32 %v368, %v2942
  %2944 = vdwg.mxu0
  %s2945 = scalar_lea.vmem %s3, 80
  %v2946 = vld [vmem:[%s2945] sm:$0xff]
  %v2947 = vmul.f32 %v2946, %v2943
  %v2948 = vsub.f32 1.0, %v2946
  %v2949 = vmul.f32 %v2948, %v2885
  %v2950 = vadd.f32 %v2947, %v2949
  %v2951 = vmul.f32 %v2888, %v2950
  %v2952 = vadd.f32 %v2887, %v2951
  %v2953 = vsub.f32 %v2856, %v2885
  %v2954 = vand.u32 2147483647, %v2953
  %v2955 = vsub.f32 %v2856, %v2916
  %v2956 = vand.u32 2147483647, %v2955
  %v2957 = vadd.f32 %v2954, %v2956
  %v2958 = vsub.f32 %v2856, %v2943
  %v2959 = vand.u32 2147483647, %v2958
  %v2960 = vadd.f32 %v2957, %v2959
  %v2961 = vsub.f32 %v2856, %v2950
  %v2962 = vand.u32 2147483647, %v2961
  %v2963 = vadd.f32 %v2960, %v2962
  %v2964 = vmul.f32 %v2963, %v2857
  %v2965 = vsel %vm86, %v2857, 0.0
  %2966 = vadd.xlane.f32.xlu0 %v2965
  %v2967 = vpop.xlane.xlu0 %2966
  %v2968 = vrot.slane %v2967, 4
  %v2969 = vadd.f32 %v2967, %v2968
  %v2970 = vrot.slane %v2969, 2
  %v2971 = vadd.f32 %v2969, %v2970
  %v2972 = vrot.slane %v2971, 1
  %v2973 = vadd.f32 %v2971, %v2972
  %s2974 = vtos %v2973
  %v2975 = vstv %s2974
  %v2976 = vadd.f32 %v2975, 1e-05
  %v2977 = vsel %vm86, %v2964, 0.0
  %2978 = vadd.xlane.f32.xlu0 %v2977
  %v2979 = vpop.xlane.xlu0 %2978
  %v2980 = vrot.slane %v2979, 4
  %v2981 = vadd.f32 %v2979, %v2980
  %v2982 = vrot.slane %v2981, 2
  %v2983 = vadd.f32 %v2981, %v2982
  %v2984 = vrot.slane %v2983, 1
  %v2985 = vadd.f32 %v2983, %v2984
  %s2986 = vtos %v2985
  %v2987 = vstv %s2986
  %v2988 = vrcp.pop %v2976
  %v2989 = vmul.f32 %v2976, %v2988
  %v2990 = vsub.f32 1.0, %v2989
  %v2991 = vmul.f32 %v2988, %v2990
  %v2992 = vadd.f32 %v2988, %v2991
  %vm2993 = vweird.f32 %v2976
  %vm2994 = vweird.f32 %v2988
  %vm2995 = vmor %vm2993, %vm2994
  %v2996 = vsel %vm2995, %v2988, %v2992
  %v2997 = vand.u32 2147483647, %v2976
  %vm2998 = vcmp.eq.f32.partialorder %v2997, 8.507059e+37
  %v2999 = vand.u32 %v2976, 2147483648
  %v3000 = vor.u32 1.1754944e-38, %v2999
  %v3001 = vsel %vm2998, %v3000, %v2996
  %v3002 = vmul.f32 %v2987, %v3001
  %v3003 = vadd.f32 %v2495, %v3002
  %s3004 = scalar_lea.vmem %s2, 80
  %v3005 = vld [vmem:[%s3004] sm:$0xff]
  %3007 = vrot.lane.b32.xlu0 %v3005, 32
  %v3008 = vpop.permute.xlu0 %3007
  %v3010 = vmul.f32 %v2597, %v3008
  %v3011 = vld [vmem:[%s455] sm:$0xff]
  %v3012 = vld [vmem:[%s455 + $0x8] sm:$0xff]
  %s3013 = scalar_lea.vmem %s5, 80
  %v3014 = vld [vmem:[%s3013] sm:$0xff]
  %v3016 = vsel %vm86, %v2952, 0
  %3018 = vmatpush.msra.mxu0 0.0
  %3019 = vmatpush.msra.mxu0 0.0
  %3020 = vmatpush.msra.mxu0 0.0
  %3021 = vmatpush.msra.mxu0 0.0
  %3022 = vmatpush.msra.mxu0 0.0
  %3023 = vmatpush.msra.mxu0 0.0
  %3024 = vmatpush.msra.mxu0 0.0
  %3025 = vmatpush.msra.mxu0 0.0
  %3026 = vmatpush.msra.mxu0 0.0
  %3027 = vmatpush.msra.mxu0 0.0
  %3028 = vmatpush.msra.mxu0 0.0
  %3029 = vmatpush.msra.mxu0 0.0
  %3030 = vmatpush.msra.mxu0 0.0
  %3031 = vmatpush.msra.mxu0 0.0
  %3032 = vmatpush.msra.mxu0 %v3012
  %3033 = vmatpush.msra.mxu0 %v3011
  %3034 = vmatmul.f32.gmra.mxu0 %v3016
  %v3035 = vpop.f32.mrf.mxu0
  %v3036 = vadd.f32 %v3014, %v3035
  %3037 = vdwg.mxu0
  %v3038 = vld [vmem:[%s483] sm:$0xff]
  %v3039 = vld [vmem:[%s483 + $0x8] sm:$0xff]
  %v3040 = vld [vmem:[%s483 + $0x10] sm:$0xff]
  %v3041 = vld [vmem:[%s483 + $0x18] sm:$0xff]
  %3043 = vrot.lane.b32.xlu0 %v3010, 96
  %v3044 = vpop.permute.xlu0 %3043
  %v3045 = vsel %vm55, %v3044, 0
  %3047 = vmatpush.msra.mxu0 0.0
  %3048 = vmatpush.msra.mxu0 0.0
  %3049 = vmatpush.msra.mxu0 0.0
  %3050 = vmatpush.msra.mxu0 0.0
  %3051 = vmatpush.msra.mxu0 0.0
  %3052 = vmatpush.msra.mxu0 0.0
  %3053 = vmatpush.msra.mxu0 0.0
  %3054 = vmatpush.msra.mxu0 0.0
  %3055 = vmatpush.msra.mxu0 0.0
  %3056 = vmatpush.msra.mxu0 0.0
  %3057 = vmatpush.msra.mxu0 0.0
  %3058 = vmatpush.msra.mxu0 0.0
  %3059 = vmatpush.msra.mxu0 %v3041
  %3060 = vmatpush.msra.mxu0 %v3040
  %3061 = vmatpush.msra.mxu0 %v3039
  %3062 = vmatpush.msra.mxu0 %v3038
  %3063 = vmatmul.f32.gmra.mxu0 %v3045
  %v3064 = vpop.f32.mrf.mxu0
  %v3065 = vadd.f32 %v489, %v3064
  %3066 = vdwg.mxu0
  %v3067 = vadd.f32 %v3036, %v3065
  %v3068 = vxor.u32 %v3067, 2147483648
  %v3069 = vmul.f32 %v3068, 1.442695
  %v3070 = vpow.pop %v3069
  %v3071 = vadd.f32 %v3070, 1.0
  %v3072 = vrcp.pop %v3071
  %v3073 = vmul.f32 %v3071, %v3072
  %v3074 = vsub.f32 1.0, %v3073
  %v3075 = vmul.f32 %v3072, %v3074
  %v3076 = vadd.f32 %v3072, %v3075
  %vm3077 = vweird.f32 %v3071
  %vm3078 = vweird.f32 %v3072
  %vm3079 = vmor %vm3077, %vm3078
  %v3080 = vsel %vm3079, %v3072, %v3076
  %v3081 = vand.u32 2147483647, %v3071
  %vm3082 = vcmp.eq.f32.partialorder %v3081, 8.507059e+37
  %v3083 = vand.u32 %v3071, 2147483648
  %v3084 = vor.u32 1.1754944e-38, %v3083
  %v3085 = vsel %vm3082, %v3084, %v3080
  %v3086 = vmul.f32 1.0, %v3085
  %3088 = vrot.lane.b32.xlu0 %v3065, 64
  %v3089 = vpop.permute.xlu0 %3088
  %v3091 = vmul.f32 %v3086, %v3089
  %3093 = vrot.lane.b32.xlu0 %v3091, 64
  %v3094 = vpop.permute.xlu0 %3093
  %v3096 = vadd.f32 %v3036, %v3094
  %v3097 = vtanh.pop %v3096
  %v3098 = vsub.f32 1.0, %v3086
  %3100 = vrot.lane.b32.xlu0 %v3097, 96
  %v3101 = vpop.permute.xlu0 %3100
  %v3103 = vmul.f32 %v3098, %v3101
  %v3104 = vmul.f32 %v3086, %v3010
  %v3105 = vadd.f32 %v3103, %v3104
  %s3106 = scalar_lea.vmem %s12, 40
  %3107 = vst.msk [vmem:[%s3106] sm:$0xff] %vm86, %v2700
  %s3108 = scalar_lea.vmem %s13, 40
  %3109 = vst.msk [vmem:[%s3108] sm:$0xff] %vm86, %v2702
  %s3110 = scalar_lea.vmem %s12, 80
  %3111 = vst.msk [vmem:[%s3110] sm:$0xff] %vm86, %v2950
  %s3112 = scalar_lea.vmem %s13, 80
  %3113 = vst.msk [vmem:[%s3112] sm:$0xff] %vm86, %v2952
  %v3114 = vld [vmem:[%s814] sm:$0xff]
  %v3115 = vld [vmem:[%s816] sm:$0xff]
  %v3116 = vld [vmem:[%s6] sm:$0xff]
  %v3117 = vld [vmem:[%s6 + $0x8] sm:$0xff]
  %v3118 = vld [vmem:[%s6 + $0x10] sm:$0xff]
  %v3119 = vld [vmem:[%s6 + $0x18] sm:$0xff]
  %3121 = vrot.lane.b32.xlu0 %v2855, 96
  %v3122 = vpop.permute.xlu0 %3121
  %v3123 = vsel %vm55, %v3122, 0
  %3125 = vmatpush.msra.mxu0 0.0
  %3126 = vmatpush.msra.mxu0 0.0
  %3127 = vmatpush.msra.mxu0 0.0
  %3128 = vmatpush.msra.mxu0 0.0
  %3129 = vmatpush.msra.mxu0 0.0
  %3130 = vmatpush.msra.mxu0 0.0
  %3131 = vmatpush.msra.mxu0 0.0
  %3132 = vmatpush.msra.mxu0 0.0
  %3133 = vmatpush.msra.mxu0 0.0
  %3134 = vmatpush.msra.mxu0 0.0
  %3135 = vmatpush.msra.mxu0 0.0
  %3136 = vmatpush.msra.mxu0 0.0
  %3137 = vmatpush.msra.mxu0 %v3119
  %3138 = vmatpush.msra.mxu0 %v3118
  %3139 = vmatpush.msra.mxu0 %v3117
  %3140 = vmatpush.msra.mxu0 %v3116
  %3141 = vmatmul.f32.gmra.mxu0 %v3123
  %v3142 = vpop.f32.mrf.mxu0
  %v3143 = vadd.f32 %v53, %v3142
  %3144 = vdwg.mxu0
  %v3145 = vmul.f32 %v3115, %v3114
  %v3146 = vsub.f32 1.0, %v3115
  %v3147 = vmul.f32 %v3146, %v3143
  %v3148 = vadd.f32 %v3145, %v3147
  %v3149 = vld [vmem:[%s7] sm:$0xff]
  %v3150 = vld [vmem:[%s7 + $0x8] sm:$0xff]
  %s3151 = scalar_lea.vmem %s4, 48
  %v3152 = vld [vmem:[%s3151] sm:$0xff]
  %v3154 = vsel %vm86, %v3148, 0
  %3156 = vmatpush.msra.mxu0 0.0
  %3157 = vmatpush.msra.mxu0 0.0
  %3158 = vmatpush.msra.mxu0 0.0
  %3159 = vmatpush.msra.mxu0 0.0
  %3160 = vmatpush.msra.mxu0 0.0
  %3161 = vmatpush.msra.mxu0 0.0
  %3162 = vmatpush.msra.mxu0 0.0
  %3163 = vmatpush.msra.mxu0 0.0
  %3164 = vmatpush.msra.mxu0 0.0
  %3165 = vmatpush.msra.mxu0 0.0
  %3166 = vmatpush.msra.mxu0 0.0
  %3167 = vmatpush.msra.mxu0 0.0
  %3168 = vmatpush.msra.mxu0 0.0
  %3169 = vmatpush.msra.mxu0 0.0
  %3170 = vmatpush.msra.mxu0 %v3150
  %3171 = vmatpush.msra.mxu0 %v3149
  %3172 = vmatmul.f32.gmra.mxu0 %v3154
  %v3173 = vpop.f32.mrf.mxu0
  %v3174 = vadd.f32 %v3152, %v3173
  %3175 = vdwg.mxu0
  %v3176 = vmul.f32 %v3146, %v3174
  %v3177 = vadd.f32 %v3145, %v3176
  %v3178 = vld [vmem:[%s8] sm:$0xff]
  %v3179 = vld [vmem:[%s8 + $0x8] sm:$0xff]
  %v3181 = vsel %vm86, %v3177, 0
  %3183 = vmatpush.msra.mxu0 0.0
  %3184 = vmatpush.msra.mxu0 0.0
  %3185 = vmatpush.msra.mxu0 0.0
  %3186 = vmatpush.msra.mxu0 0.0
  %3187 = vmatpush.msra.mxu0 0.0
  %3188 = vmatpush.msra.mxu0 0.0
  %3189 = vmatpush.msra.mxu0 0.0
  %3190 = vmatpush.msra.mxu0 0.0
  %3191 = vmatpush.msra.mxu0 0.0
  %3192 = vmatpush.msra.mxu0 0.0
  %3193 = vmatpush.msra.mxu0 0.0
  %3194 = vmatpush.msra.mxu0 0.0
  %3195 = vmatpush.msra.mxu0 0.0
  %3196 = vmatpush.msra.mxu0 0.0
  %3197 = vmatpush.msra.mxu0 %v3179
  %3198 = vmatpush.msra.mxu0 %v3178
  %3199 = vmatmul.f32.gmra.mxu0 %v3181
  %v3200 = vpop.f32.mrf.mxu0
  %v3201 = vadd.f32 %v115, %v3200
  %3202 = vdwg.mxu0
  %s3203 = scalar_lea.vmem %s3, 48
  %v3204 = vld [vmem:[%s3203] sm:$0xff]
  %v3205 = vmul.f32 %v3204, %v3201
  %v3206 = vsub.f32 1.0, %v3204
  %v3207 = vmul.f32 %v3206, %v3143
  %v3208 = vadd.f32 %v3205, %v3207
  %v3209 = vmul.f32 %v3146, %v3208
  %v3210 = vadd.f32 %v3145, %v3209
  %v3211 = vsub.f32 %v3114, %v3143
  %v3212 = vand.u32 2147483647, %v3211
  %v3213 = vsub.f32 %v3114, %v3174
  %v3214 = vand.u32 2147483647, %v3213
  %v3215 = vadd.f32 %v3212, %v3214
  %v3216 = vsub.f32 %v3114, %v3201
  %v3217 = vand.u32 2147483647, %v3216
  %v3218 = vadd.f32 %v3215, %v3217
  %v3219 = vsub.f32 %v3114, %v3208
  %v3220 = vand.u32 2147483647, %v3219
  %v3221 = vadd.f32 %v3218, %v3220
  %v3222 = vmul.f32 %v3221, %v3115
  %v3223 = vsel %vm86, %v3115, 0.0
  %3224 = vadd.xlane.f32.xlu0 %v3223
  %v3225 = vpop.xlane.xlu0 %3224
  %v3226 = vrot.slane %v3225, 4
  %v3227 = vadd.f32 %v3225, %v3226
  %v3228 = vrot.slane %v3227, 2
  %v3229 = vadd.f32 %v3227, %v3228
  %v3230 = vrot.slane %v3229, 1
  %v3231 = vadd.f32 %v3229, %v3230
  %s3232 = vtos %v3231
  %v3233 = vstv %s3232
  %v3234 = vadd.f32 %v3233, 1e-05
  %v3235 = vsel %vm86, %v3222, 0.0
  %3236 = vadd.xlane.f32.xlu0 %v3235
  %v3237 = vpop.xlane.xlu0 %3236
  %v3238 = vrot.slane %v3237, 4
  %v3239 = vadd.f32 %v3237, %v3238
  %v3240 = vrot.slane %v3239, 2
  %v3241 = vadd.f32 %v3239, %v3240
  %v3242 = vrot.slane %v3241, 1
  %v3243 = vadd.f32 %v3241, %v3242
  %s3244 = vtos %v3243
  %v3245 = vstv %s3244
  %v3246 = vrcp.pop %v3234
  %v3247 = vmul.f32 %v3234, %v3246
  %v3248 = vsub.f32 1.0, %v3247
  %v3249 = vmul.f32 %v3246, %v3248
  %v3250 = vadd.f32 %v3246, %v3249
  %vm3251 = vweird.f32 %v3234
  %vm3252 = vweird.f32 %v3246
  %vm3253 = vmor %vm3251, %vm3252
  %v3254 = vsel %vm3253, %v3246, %v3250
  %v3255 = vand.u32 2147483647, %v3234
  %vm3256 = vcmp.eq.f32.partialorder %v3255, 8.507059e+37
  %v3257 = vand.u32 %v3234, 2147483648
  %v3258 = vor.u32 1.1754944e-38, %v3257
  %v3259 = vsel %vm3256, %v3258, %v3254
  %v3260 = vmul.f32 %v3245, %v3259
  %v3261 = vadd.f32 %v2753, %v3260
  %s3262 = scalar_lea.vmem %s2, 48
  %v3263 = vld [vmem:[%s3262] sm:$0xff]
  %3265 = vrot.lane.b32.xlu0 %v3263, 32
  %v3266 = vpop.permute.xlu0 %3265
  %v3268 = vmul.f32 %v2855, %v3266
  %v3269 = vld [vmem:[%s9] sm:$0xff]
  %v3270 = vld [vmem:[%s9 + $0x8] sm:$0xff]
  %s3271 = scalar_lea.vmem %s5, 48
  %v3272 = vld [vmem:[%s3271] sm:$0xff]
  %v3274 = vsel %vm86, %v3210, 0
  %3276 = vmatpush.msra.mxu0 0.0
  %3277 = vmatpush.msra.mxu0 0.0
  %3278 = vmatpush.msra.mxu0 0.0
  %3279 = vmatpush.msra.mxu0 0.0
  %3280 = vmatpush.msra.mxu0 0.0
  %3281 = vmatpush.msra.mxu0 0.0
  %3282 = vmatpush.msra.mxu0 0.0
  %3283 = vmatpush.msra.mxu0 0.0
  %3284 = vmatpush.msra.mxu0 0.0
  %3285 = vmatpush.msra.mxu0 0.0
  %3286 = vmatpush.msra.mxu0 0.0
  %3287 = vmatpush.msra.mxu0 0.0
  %3288 = vmatpush.msra.mxu0 0.0
  %3289 = vmatpush.msra.mxu0 0.0
  %3290 = vmatpush.msra.mxu0 %v3270
  %3291 = vmatpush.msra.mxu0 %v3269
  %3292 = vmatmul.f32.gmra.mxu0 %v3274
  %v3293 = vpop.f32.mrf.mxu0
  %v3294 = vadd.f32 %v3272, %v3293
  %3295 = vdwg.mxu0
  %v3296 = vld [vmem:[%s10] sm:$0xff]
  %v3297 = vld [vmem:[%s10 + $0x8] sm:$0xff]
  %v3298 = vld [vmem:[%s10 + $0x10] sm:$0xff]
  %v3299 = vld [vmem:[%s10 + $0x18] sm:$0xff]
  %3301 = vrot.lane.b32.xlu0 %v3268, 96
  %v3302 = vpop.permute.xlu0 %3301
  %v3303 = vsel %vm55, %v3302, 0
  %3305 = vmatpush.msra.mxu0 0.0
  %3306 = vmatpush.msra.mxu0 0.0
  %3307 = vmatpush.msra.mxu0 0.0
  %3308 = vmatpush.msra.mxu0 0.0
  %3309 = vmatpush.msra.mxu0 0.0
  %3310 = vmatpush.msra.mxu0 0.0
  %3311 = vmatpush.msra.mxu0 0.0
  %3312 = vmatpush.msra.mxu0 0.0
  %3313 = vmatpush.msra.mxu0 0.0
  %3314 = vmatpush.msra.mxu0 0.0
  %3315 = vmatpush.msra.mxu0 0.0
  %3316 = vmatpush.msra.mxu0 0.0
  %3317 = vmatpush.msra.mxu0 %v3299
  %3318 = vmatpush.msra.mxu0 %v3298
  %3319 = vmatpush.msra.mxu0 %v3297
  %3320 = vmatpush.msra.mxu0 %v3296
  %3321 = vmatmul.f32.gmra.mxu0 %v3303
  %v3322 = vpop.f32.mrf.mxu0
  %v3323 = vadd.f32 %v231, %v3322
  %3324 = vdwg.mxu0
  %v3325 = vadd.f32 %v3294, %v3323
  %v3326 = vxor.u32 %v3325, 2147483648
  %v3327 = vmul.f32 %v3326, 1.442695
  %v3328 = vpow.pop %v3327
  %v3329 = vadd.f32 %v3328, 1.0
  %v3330 = vrcp.pop %v3329
  %v3331 = vmul.f32 %v3329, %v3330
  %v3332 = vsub.f32 1.0, %v3331
  %v3333 = vmul.f32 %v3330, %v3332
  %v3334 = vadd.f32 %v3330, %v3333
  %vm3335 = vweird.f32 %v3329
  %vm3336 = vweird.f32 %v3330
  %vm3337 = vmor %vm3335, %vm3336
  %v3338 = vsel %vm3337, %v3330, %v3334
  %v3339 = vand.u32 2147483647, %v3329
  %vm3340 = vcmp.eq.f32.partialorder %v3339, 8.507059e+37
  %v3341 = vand.u32 %v3329, 2147483648
  %v3342 = vor.u32 1.1754944e-38, %v3341
  %v3343 = vsel %vm3340, %v3342, %v3338
  %v3344 = vmul.f32 1.0, %v3343
  %3346 = vrot.lane.b32.xlu0 %v3323, 64
  %v3347 = vpop.permute.xlu0 %3346
  %v3349 = vmul.f32 %v3344, %v3347
  %3351 = vrot.lane.b32.xlu0 %v3349, 64
  %v3352 = vpop.permute.xlu0 %3351
  %v3354 = vadd.f32 %v3294, %v3352
  %v3355 = vtanh.pop %v3354
  %v3356 = vsub.f32 1.0, %v3344
  %3358 = vrot.lane.b32.xlu0 %v3355, 96
  %v3359 = vpop.permute.xlu0 %3358
  %v3361 = vmul.f32 %v3356, %v3359
  %v3362 = vmul.f32 %v3344, %v3268
  %v3363 = vadd.f32 %v3361, %v3362
  %v3364 = vld [vmem:[%s562] sm:$0xff]
  %v3365 = vld [vmem:[%s564] sm:$0xff]
  %v3366 = vld [vmem:[%s302] sm:$0xff]
  %v3367 = vld [vmem:[%s302 + $0x8] sm:$0xff]
  %v3368 = vld [vmem:[%s302 + $0x10] sm:$0xff]
  %v3369 = vld [vmem:[%s302 + $0x18] sm:$0xff]
  %3371 = vrot.lane.b32.xlu0 %v3105, 96
  %v3372 = vpop.permute.xlu0 %3371
  %v3373 = vsel %vm55, %v3372, 0
  %3375 = vmatpush.msra.mxu0 0.0
  %3376 = vmatpush.msra.mxu0 0.0
  %3377 = vmatpush.msra.mxu0 0.0
  %3378 = vmatpush.msra.mxu0 0.0
  %3379 = vmatpush.msra.mxu0 0.0
  %3380 = vmatpush.msra.mxu0 0.0
  %3381 = vmatpush.msra.mxu0 0.0
  %3382 = vmatpush.msra.mxu0 0.0
  %3383 = vmatpush.msra.mxu0 0.0
  %3384 = vmatpush.msra.mxu0 0.0
  %3385 = vmatpush.msra.mxu0 0.0
  %3386 = vmatpush.msra.mxu0 0.0
  %3387 = vmatpush.msra.mxu0 %v3369
  %3388 = vmatpush.msra.mxu0 %v3368
  %3389 = vmatpush.msra.mxu0 %v3367
  %3390 = vmatpush.msra.mxu0 %v3366
  %3391 = vmatmul.f32.gmra.mxu0 %v3373
  %v3392 = vpop.f32.mrf.mxu0
  %v3393 = vadd.f32 %v308, %v3392
  %3394 = vdwg.mxu0
  %v3395 = vmul.f32 %v3365, %v3364
  %v3396 = vsub.f32 1.0, %v3365
  %v3397 = vmul.f32 %v3396, %v3393
  %v3398 = vadd.f32 %v3395, %v3397
  %v3399 = vld [vmem:[%s334] sm:$0xff]
  %v3400 = vld [vmem:[%s334 + $0x8] sm:$0xff]
  %s3401 = scalar_lea.vmem %s4, 72
  %v3402 = vld [vmem:[%s3401] sm:$0xff]
  %v3404 = vsel %vm86, %v3398, 0
  %3406 = vmatpush.msra.mxu0 0.0
  %3407 = vmatpush.msra.mxu0 0.0
  %3408 = vmatpush.msra.mxu0 0.0
  %3409 = vmatpush.msra.mxu0 0.0
  %3410 = vmatpush.msra.mxu0 0.0
  %3411 = vmatpush.msra.mxu0 0.0
  %3412 = vmatpush.msra.mxu0 0.0
  %3413 = vmatpush.msra.mxu0 0.0
  %3414 = vmatpush.msra.mxu0 0.0
  %3415 = vmatpush.msra.mxu0 0.0
  %3416 = vmatpush.msra.mxu0 0.0
  %3417 = vmatpush.msra.mxu0 0.0
  %3418 = vmatpush.msra.mxu0 0.0
  %3419 = vmatpush.msra.mxu0 0.0
  %3420 = vmatpush.msra.mxu0 %v3400
  %3421 = vmatpush.msra.mxu0 %v3399
  %3422 = vmatmul.f32.gmra.mxu0 %v3404
  %v3423 = vpop.f32.mrf.mxu0
  %v3424 = vadd.f32 %v3402, %v3423
  %3425 = vdwg.mxu0
  %v3426 = vmul.f32 %v3396, %v3424
  %v3427 = vadd.f32 %v3395, %v3426
  %v3428 = vld [vmem:[%s364] sm:$0xff]
  %v3429 = vld [vmem:[%s364 + $0x8] sm:$0xff]
  %v3431 = vsel %vm86, %v3427, 0
  %3433 = vmatpush.msra.mxu0 0.0
  %3434 = vmatpush.msra.mxu0 0.0
  %3435 = vmatpush.msra.mxu0 0.0
  %3436 = vmatpush.msra.mxu0 0.0
  %3437 = vmatpush.msra.mxu0 0.0
  %3438 = vmatpush.msra.mxu0 0.0
  %3439 = vmatpush.msra.mxu0 0.0
  %3440 = vmatpush.msra.mxu0 0.0
  %3441 = vmatpush.msra.mxu0 0.0
  %3442 = vmatpush.msra.mxu0 0.0
  %3443 = vmatpush.msra.mxu0 0.0
  %3444 = vmatpush.msra.mxu0 0.0
  %3445 = vmatpush.msra.mxu0 0.0
  %3446 = vmatpush.msra.mxu0 0.0
  %3447 = vmatpush.msra.mxu0 %v3429
  %3448 = vmatpush.msra.mxu0 %v3428
  %3449 = vmatmul.f32.gmra.mxu0 %v3431
  %v3450 = vpop.f32.mrf.mxu0
  %v3451 = vadd.f32 %v368, %v3450
  %3452 = vdwg.mxu0
  %s3453 = scalar_lea.vmem %s3, 72
  %v3454 = vld [vmem:[%s3453] sm:$0xff]
  %v3455 = vmul.f32 %v3454, %v3451
  %v3456 = vsub.f32 1.0, %v3454
  %v3457 = vmul.f32 %v3456, %v3393
  %v3458 = vadd.f32 %v3455, %v3457
  %v3459 = vmul.f32 %v3396, %v3458
  %v3460 = vadd.f32 %v3395, %v3459
  %v3461 = vsub.f32 %v3364, %v3393
  %v3462 = vand.u32 2147483647, %v3461
  %v3463 = vsub.f32 %v3364, %v3424
  %v3464 = vand.u32 2147483647, %v3463
  %v3465 = vadd.f32 %v3462, %v3464
  %v3466 = vsub.f32 %v3364, %v3451
  %v3467 = vand.u32 2147483647, %v3466
  %v3468 = vadd.f32 %v3465, %v3467
  %v3469 = vsub.f32 %v3364, %v3458
  %v3470 = vand.u32 2147483647, %v3469
  %v3471 = vadd.f32 %v3468, %v3470
  %v3472 = vmul.f32 %v3471, %v3365
  %v3473 = vsel %vm86, %v3365, 0.0
  %3474 = vadd.xlane.f32.xlu0 %v3473
  %v3475 = vpop.xlane.xlu0 %3474
  %v3476 = vrot.slane %v3475, 4
  %v3477 = vadd.f32 %v3475, %v3476
  %v3478 = vrot.slane %v3477, 2
  %v3479 = vadd.f32 %v3477, %v3478
  %v3480 = vrot.slane %v3479, 1
  %v3481 = vadd.f32 %v3479, %v3480
  %s3482 = vtos %v3481
  %v3483 = vstv %s3482
  %v3484 = vadd.f32 %v3483, 1e-05
  %v3485 = vsel %vm86, %v3472, 0.0
  %3486 = vadd.xlane.f32.xlu0 %v3485
  %v3487 = vpop.xlane.xlu0 %3486
  %v3488 = vrot.slane %v3487, 4
  %v3489 = vadd.f32 %v3487, %v3488
  %v3490 = vrot.slane %v3489, 2
  %v3491 = vadd.f32 %v3489, %v3490
  %v3492 = vrot.slane %v3491, 1
  %v3493 = vadd.f32 %v3491, %v3492
  %s3494 = vtos %v3493
  %v3495 = vstv %s3494
  %v3496 = vrcp.pop %v3484
  %v3497 = vmul.f32 %v3484, %v3496
  %v3498 = vsub.f32 1.0, %v3497
  %v3499 = vmul.f32 %v3496, %v3498
  %v3500 = vadd.f32 %v3496, %v3499
  %vm3501 = vweird.f32 %v3484
  %vm3502 = vweird.f32 %v3496
  %vm3503 = vmor %vm3501, %vm3502
  %v3504 = vsel %vm3503, %v3496, %v3500
  %v3505 = vand.u32 2147483647, %v3484
  %vm3506 = vcmp.eq.f32.partialorder %v3505, 8.507059e+37
  %v3507 = vand.u32 %v3484, 2147483648
  %v3508 = vor.u32 1.1754944e-38, %v3507
  %v3509 = vsel %vm3506, %v3508, %v3504
  %v3510 = vmul.f32 %v3495, %v3509
  %v3511 = vadd.f32 %v3003, %v3510
  %s3512 = scalar_lea.vmem %s2, 72
  %v3513 = vld [vmem:[%s3512] sm:$0xff]
  %3515 = vrot.lane.b32.xlu0 %v3513, 32
  %v3516 = vpop.permute.xlu0 %3515
  %v3518 = vmul.f32 %v3105, %v3516
  %v3519 = vld [vmem:[%s455] sm:$0xff]
  %v3520 = vld [vmem:[%s455 + $0x8] sm:$0xff]
  %s3521 = scalar_lea.vmem %s5, 72
  %v3522 = vld [vmem:[%s3521] sm:$0xff]
  %v3524 = vsel %vm86, %v3460, 0
  %3526 = vmatpush.msra.mxu0 0.0
  %3527 = vmatpush.msra.mxu0 0.0
  %3528 = vmatpush.msra.mxu0 0.0
  %3529 = vmatpush.msra.mxu0 0.0
  %3530 = vmatpush.msra.mxu0 0.0
  %3531 = vmatpush.msra.mxu0 0.0
  %3532 = vmatpush.msra.mxu0 0.0
  %3533 = vmatpush.msra.mxu0 0.0
  %3534 = vmatpush.msra.mxu0 0.0
  %3535 = vmatpush.msra.mxu0 0.0
  %3536 = vmatpush.msra.mxu0 0.0
  %3537 = vmatpush.msra.mxu0 0.0
  %3538 = vmatpush.msra.mxu0 0.0
  %3539 = vmatpush.msra.mxu0 0.0
  %3540 = vmatpush.msra.mxu0 %v3520
  %3541 = vmatpush.msra.mxu0 %v3519
  %3542 = vmatmul.f32.gmra.mxu0 %v3524
  %v3543 = vpop.f32.mrf.mxu0
  %v3544 = vadd.f32 %v3522, %v3543
  %3545 = vdwg.mxu0
  %v3546 = vld [vmem:[%s483] sm:$0xff]
  %v3547 = vld [vmem:[%s483 + $0x8] sm:$0xff]
  %v3548 = vld [vmem:[%s483 + $0x10] sm:$0xff]
  %v3549 = vld [vmem:[%s483 + $0x18] sm:$0xff]
  %3551 = vrot.lane.b32.xlu0 %v3518, 96
  %v3552 = vpop.permute.xlu0 %3551
  %v3553 = vsel %vm55, %v3552, 0
  %3555 = vmatpush.msra.mxu0 0.0
  %3556 = vmatpush.msra.mxu0 0.0
  %3557 = vmatpush.msra.mxu0 0.0
  %3558 = vmatpush.msra.mxu0 0.0
  %3559 = vmatpush.msra.mxu0 0.0
  %3560 = vmatpush.msra.mxu0 0.0
  %3561 = vmatpush.msra.mxu0 0.0
  %3562 = vmatpush.msra.mxu0 0.0
  %3563 = vmatpush.msra.mxu0 0.0
  %3564 = vmatpush.msra.mxu0 0.0
  %3565 = vmatpush.msra.mxu0 0.0
  %3566 = vmatpush.msra.mxu0 0.0
  %3567 = vmatpush.msra.mxu0 %v3549
  %3568 = vmatpush.msra.mxu0 %v3548
  %3569 = vmatpush.msra.mxu0 %v3547
  %3570 = vmatpush.msra.mxu0 %v3546
  %3571 = vmatmul.f32.gmra.mxu0 %v3553
  %v3572 = vpop.f32.mrf.mxu0
  %v3573 = vadd.f32 %v489, %v3572
  %3574 = vdwg.mxu0
  %v3575 = vadd.f32 %v3544, %v3573
  %v3576 = vxor.u32 %v3575, 2147483648
  %v3577 = vmul.f32 %v3576, 1.442695
  %v3578 = vpow.pop %v3577
  %v3579 = vadd.f32 %v3578, 1.0
  %v3580 = vrcp.pop %v3579
  %v3581 = vmul.f32 %v3579, %v3580
  %v3582 = vsub.f32 1.0, %v3581
  %v3583 = vmul.f32 %v3580, %v3582
  %v3584 = vadd.f32 %v3580, %v3583
  %vm3585 = vweird.f32 %v3579
  %vm3586 = vweird.f32 %v3580
  %vm3587 = vmor %vm3585, %vm3586
  %v3588 = vsel %vm3587, %v3580, %v3584
  %v3589 = vand.u32 2147483647, %v3579
  %vm3590 = vcmp.eq.f32.partialorder %v3589, 8.507059e+37
  %v3591 = vand.u32 %v3579, 2147483648
  %v3592 = vor.u32 1.1754944e-38, %v3591
  %v3593 = vsel %vm3590, %v3592, %v3588
  %v3594 = vmul.f32 1.0, %v3593
  %3596 = vrot.lane.b32.xlu0 %v3573, 64
  %v3597 = vpop.permute.xlu0 %3596
  %v3599 = vmul.f32 %v3594, %v3597
  %3601 = vrot.lane.b32.xlu0 %v3599, 64
  %v3602 = vpop.permute.xlu0 %3601
  %v3604 = vadd.f32 %v3544, %v3602
  %v3605 = vtanh.pop %v3604
  %v3606 = vsub.f32 1.0, %v3594
  %3608 = vrot.lane.b32.xlu0 %v3605, 96
  %v3609 = vpop.permute.xlu0 %3608
  %v3611 = vmul.f32 %v3606, %v3609
  %v3612 = vmul.f32 %v3594, %v3518
  %v3613 = vadd.f32 %v3611, %v3612
  %s3614 = scalar_lea.vmem %s12, 48
  %3615 = vst.msk [vmem:[%s3614] sm:$0xff] %vm86, %v3208
  %s3616 = scalar_lea.vmem %s13, 48
  %3617 = vst.msk [vmem:[%s3616] sm:$0xff] %vm86, %v3210
  %s3618 = scalar_lea.vmem %s12, 72
  %3619 = vst.msk [vmem:[%s3618] sm:$0xff] %vm86, %v3458
  %s3620 = scalar_lea.vmem %s13, 72
  %3621 = vst.msk [vmem:[%s3620] sm:$0xff] %vm86, %v3460
  %v3622 = vld [vmem:[%s298] sm:$0xff]
  %v3623 = vld [vmem:[%s300] sm:$0xff]
  %v3624 = vld [vmem:[%s6] sm:$0xff]
  %v3625 = vld [vmem:[%s6 + $0x8] sm:$0xff]
  %v3626 = vld [vmem:[%s6 + $0x10] sm:$0xff]
  %v3627 = vld [vmem:[%s6 + $0x18] sm:$0xff]
  %3629 = vrot.lane.b32.xlu0 %v3363, 96
  %v3630 = vpop.permute.xlu0 %3629
  %v3631 = vsel %vm55, %v3630, 0
  %3633 = vmatpush.msra.mxu0 0.0
  %3634 = vmatpush.msra.mxu0 0.0
  %3635 = vmatpush.msra.mxu0 0.0
  %3636 = vmatpush.msra.mxu0 0.0
  %3637 = vmatpush.msra.mxu0 0.0
  %3638 = vmatpush.msra.mxu0 0.0
  %3639 = vmatpush.msra.mxu0 0.0
  %3640 = vmatpush.msra.mxu0 0.0
  %3641 = vmatpush.msra.mxu0 0.0
  %3642 = vmatpush.msra.mxu0 0.0
  %3643 = vmatpush.msra.mxu0 0.0
  %3644 = vmatpush.msra.mxu0 0.0
  %3645 = vmatpush.msra.mxu0 %v3627
  %3646 = vmatpush.msra.mxu0 %v3626
  %3647 = vmatpush.msra.mxu0 %v3625
  %3648 = vmatpush.msra.mxu0 %v3624
  %3649 = vmatmul.f32.gmra.mxu0 %v3631
  %v3650 = vpop.f32.mrf.mxu0
  %v3651 = vadd.f32 %v53, %v3650
  %3652 = vdwg.mxu0
  %v3653 = vmul.f32 %v3623, %v3622
  %v3654 = vsub.f32 1.0, %v3623
  %v3655 = vmul.f32 %v3654, %v3651
  %v3656 = vadd.f32 %v3653, %v3655
  %v3657 = vld [vmem:[%s7] sm:$0xff]
  %v3658 = vld [vmem:[%s7 + $0x8] sm:$0xff]
  %s3659 = scalar_lea.vmem %s4, 56
  %v3660 = vld [vmem:[%s3659] sm:$0xff]
  %v3662 = vsel %vm86, %v3656, 0
  %3664 = vmatpush.msra.mxu0 0.0
  %3665 = vmatpush.msra.mxu0 0.0
  %3666 = vmatpush.msra.mxu0 0.0
  %3667 = vmatpush.msra.mxu0 0.0
  %3668 = vmatpush.msra.mxu0 0.0
  %3669 = vmatpush.msra.mxu0 0.0
  %3670 = vmatpush.msra.mxu0 0.0
  %3671 = vmatpush.msra.mxu0 0.0
  %3672 = vmatpush.msra.mxu0 0.0
  %3673 = vmatpush.msra.mxu0 0.0
  %3674 = vmatpush.msra.mxu0 0.0
  %3675 = vmatpush.msra.mxu0 0.0
  %3676 = vmatpush.msra.mxu0 0.0
  %3677 = vmatpush.msra.mxu0 0.0
  %3678 = vmatpush.msra.mxu0 %v3658
  %3679 = vmatpush.msra.mxu0 %v3657
  %3680 = vmatmul.f32.gmra.mxu0 %v3662
  %v3681 = vpop.f32.mrf.mxu0
  %v3682 = vadd.f32 %v3660, %v3681
  %3683 = vdwg.mxu0
  %v3684 = vmul.f32 %v3654, %v3682
  %v3685 = vadd.f32 %v3653, %v3684
  %v3686 = vld [vmem:[%s8] sm:$0xff]
  %v3687 = vld [vmem:[%s8 + $0x8] sm:$0xff]
  %v3689 = vsel %vm86, %v3685, 0
  %3691 = vmatpush.msra.mxu0 0.0
  %3692 = vmatpush.msra.mxu0 0.0
  %3693 = vmatpush.msra.mxu0 0.0
  %3694 = vmatpush.msra.mxu0 0.0
  %3695 = vmatpush.msra.mxu0 0.0
  %3696 = vmatpush.msra.mxu0 0.0
  %3697 = vmatpush.msra.mxu0 0.0
  %3698 = vmatpush.msra.mxu0 0.0
  %3699 = vmatpush.msra.mxu0 0.0
  %3700 = vmatpush.msra.mxu0 0.0
  %3701 = vmatpush.msra.mxu0 0.0
  %3702 = vmatpush.msra.mxu0 0.0
  %3703 = vmatpush.msra.mxu0 0.0
  %3704 = vmatpush.msra.mxu0 0.0
  %3705 = vmatpush.msra.mxu0 %v3687
  %3706 = vmatpush.msra.mxu0 %v3686
  %3707 = vmatmul.f32.gmra.mxu0 %v3689
  %v3708 = vpop.f32.mrf.mxu0
  %v3709 = vadd.f32 %v115, %v3708
  %3710 = vdwg.mxu0
  %s3711 = scalar_lea.vmem %s3, 56
  %v3712 = vld [vmem:[%s3711] sm:$0xff]
  %v3713 = vmul.f32 %v3712, %v3709
  %v3714 = vsub.f32 1.0, %v3712
  %v3715 = vmul.f32 %v3714, %v3651
  %v3716 = vadd.f32 %v3713, %v3715
  %v3717 = vmul.f32 %v3654, %v3716
  %v3718 = vadd.f32 %v3653, %v3717
  %v3719 = vsub.f32 %v3622, %v3651
  %v3720 = vand.u32 2147483647, %v3719
  %v3721 = vsub.f32 %v3622, %v3682
  %v3722 = vand.u32 2147483647, %v3721
  %v3723 = vadd.f32 %v3720, %v3722
  %v3724 = vsub.f32 %v3622, %v3709
  %v3725 = vand.u32 2147483647, %v3724
  %v3726 = vadd.f32 %v3723, %v3725
  %v3727 = vsub.f32 %v3622, %v3716
  %v3728 = vand.u32 2147483647, %v3727
  %v3729 = vadd.f32 %v3726, %v3728
  %v3730 = vmul.f32 %v3729, %v3623
  %v3731 = vsel %vm86, %v3623, 0.0
  %3732 = vadd.xlane.f32.xlu0 %v3731
  %v3733 = vpop.xlane.xlu0 %3732
  %v3734 = vrot.slane %v3733, 4
  %v3735 = vadd.f32 %v3733, %v3734
  %v3736 = vrot.slane %v3735, 2
  %v3737 = vadd.f32 %v3735, %v3736
  %v3738 = vrot.slane %v3737, 1
  %v3739 = vadd.f32 %v3737, %v3738
  %s3740 = vtos %v3739
  %v3741 = vstv %s3740
  %v3742 = vadd.f32 %v3741, 1e-05
  %v3743 = vsel %vm86, %v3730, 0.0
  %3744 = vadd.xlane.f32.xlu0 %v3743
  %v3745 = vpop.xlane.xlu0 %3744
  %v3746 = vrot.slane %v3745, 4
  %v3747 = vadd.f32 %v3745, %v3746
  %v3748 = vrot.slane %v3747, 2
  %v3749 = vadd.f32 %v3747, %v3748
  %v3750 = vrot.slane %v3749, 1
  %v3751 = vadd.f32 %v3749, %v3750
  %s3752 = vtos %v3751
  %v3753 = vstv %s3752
  %v3754 = vrcp.pop %v3742
  %v3755 = vmul.f32 %v3742, %v3754
  %v3756 = vsub.f32 1.0, %v3755
  %v3757 = vmul.f32 %v3754, %v3756
  %v3758 = vadd.f32 %v3754, %v3757
  %vm3759 = vweird.f32 %v3742
  %vm3760 = vweird.f32 %v3754
  %vm3761 = vmor %vm3759, %vm3760
  %v3762 = vsel %vm3761, %v3754, %v3758
  %v3763 = vand.u32 2147483647, %v3742
  %vm3764 = vcmp.eq.f32.partialorder %v3763, 8.507059e+37
  %v3765 = vand.u32 %v3742, 2147483648
  %v3766 = vor.u32 1.1754944e-38, %v3765
  %v3767 = vsel %vm3764, %v3766, %v3762
  %v3768 = vmul.f32 %v3753, %v3767
  %v3769 = vadd.f32 %v3261, %v3768
  %v3770 = vld [vmem:[%s0] sm:$0xff]
  %v3771 = vld [vmem:[%s1] sm:$0xff]
  %v3772 = vld [vmem:[%s302] sm:$0xff]
  %v3773 = vld [vmem:[%s302 + $0x8] sm:$0xff]
  %v3774 = vld [vmem:[%s302 + $0x10] sm:$0xff]
  %v3775 = vld [vmem:[%s302 + $0x18] sm:$0xff]
  %3777 = vrot.lane.b32.xlu0 %v3613, 96
  %v3778 = vpop.permute.xlu0 %3777
  %v3779 = vsel %vm55, %v3778, 0
  %3781 = vmatpush.msra.mxu0 0.0
  %3782 = vmatpush.msra.mxu0 0.0
  %3783 = vmatpush.msra.mxu0 0.0
  %3784 = vmatpush.msra.mxu0 0.0
  %3785 = vmatpush.msra.mxu0 0.0
  %3786 = vmatpush.msra.mxu0 0.0
  %3787 = vmatpush.msra.mxu0 0.0
  %3788 = vmatpush.msra.mxu0 0.0
  %3789 = vmatpush.msra.mxu0 0.0
  %3790 = vmatpush.msra.mxu0 0.0
  %3791 = vmatpush.msra.mxu0 0.0
  %3792 = vmatpush.msra.mxu0 0.0
  %3793 = vmatpush.msra.mxu0 %v3775
  %3794 = vmatpush.msra.mxu0 %v3774
  %3795 = vmatpush.msra.mxu0 %v3773
  %3796 = vmatpush.msra.mxu0 %v3772
  %3797 = vmatmul.f32.gmra.mxu0 %v3779
  %v3798 = vpop.f32.mrf.mxu0
  %v3799 = vadd.f32 %v308, %v3798
  %3800 = vdwg.mxu0
  %v3801 = vmul.f32 %v3771, %v3770
  %v3802 = vsub.f32 1.0, %v3771
  %v3803 = vmul.f32 %v3802, %v3799
  %v3804 = vadd.f32 %v3801, %v3803
  %v3805 = vld [vmem:[%s334] sm:$0xff]
  %v3806 = vld [vmem:[%s334 + $0x8] sm:$0xff]
  %s3807 = scalar_lea.vmem %s4, 64
  %v3808 = vld [vmem:[%s3807] sm:$0xff]
  %v3810 = vsel %vm86, %v3804, 0
  %3812 = vmatpush.msra.mxu0 0.0
  %3813 = vmatpush.msra.mxu0 0.0
  %3814 = vmatpush.msra.mxu0 0.0
  %3815 = vmatpush.msra.mxu0 0.0
  %3816 = vmatpush.msra.mxu0 0.0
  %3817 = vmatpush.msra.mxu0 0.0
  %3818 = vmatpush.msra.mxu0 0.0
  %3819 = vmatpush.msra.mxu0 0.0
  %3820 = vmatpush.msra.mxu0 0.0
  %3821 = vmatpush.msra.mxu0 0.0
  %3822 = vmatpush.msra.mxu0 0.0
  %3823 = vmatpush.msra.mxu0 0.0
  %3824 = vmatpush.msra.mxu0 0.0
  %3825 = vmatpush.msra.mxu0 0.0
  %3826 = vmatpush.msra.mxu0 %v3806
  %3827 = vmatpush.msra.mxu0 %v3805
  %3828 = vmatmul.f32.gmra.mxu0 %v3810
  %v3829 = vpop.f32.mrf.mxu0
  %v3830 = vadd.f32 %v3808, %v3829
  %3831 = vdwg.mxu0
  %v3832 = vmul.f32 %v3802, %v3830
  %v3833 = vadd.f32 %v3801, %v3832
  %v3834 = vld [vmem:[%s364] sm:$0xff]
  %v3835 = vld [vmem:[%s364 + $0x8] sm:$0xff]
  %v3837 = vsel %vm86, %v3833, 0
  %3839 = vmatpush.msra.mxu0 0.0
  %3840 = vmatpush.msra.mxu0 0.0
  %3841 = vmatpush.msra.mxu0 0.0
  %3842 = vmatpush.msra.mxu0 0.0
  %3843 = vmatpush.msra.mxu0 0.0
  %3844 = vmatpush.msra.mxu0 0.0
  %3845 = vmatpush.msra.mxu0 0.0
  %3846 = vmatpush.msra.mxu0 0.0
  %3847 = vmatpush.msra.mxu0 0.0
  %3848 = vmatpush.msra.mxu0 0.0
  %3849 = vmatpush.msra.mxu0 0.0
  %3850 = vmatpush.msra.mxu0 0.0
  %3851 = vmatpush.msra.mxu0 0.0
  %3852 = vmatpush.msra.mxu0 0.0
  %3853 = vmatpush.msra.mxu0 %v3835
  %3854 = vmatpush.msra.mxu0 %v3834
  %3855 = vmatmul.f32.gmra.mxu0 %v3837
  %v3856 = vpop.f32.mrf.mxu0
  %v3857 = vadd.f32 %v368, %v3856
  %3858 = vdwg.mxu0
  %s3859 = scalar_lea.vmem %s3, 64
  %v3860 = vld [vmem:[%s3859] sm:$0xff]
  %v3861 = vmul.f32 %v3860, %v3857
  %v3862 = vsub.f32 1.0, %v3860
  %v3863 = vmul.f32 %v3862, %v3799
  %v3864 = vadd.f32 %v3861, %v3863
  %v3865 = vmul.f32 %v3802, %v3864
  %v3866 = vadd.f32 %v3801, %v3865
  %v3867 = vsub.f32 %v3770, %v3799
  %v3868 = vand.u32 2147483647, %v3867
  %v3869 = vsub.f32 %v3770, %v3830
  %v3870 = vand.u32 2147483647, %v3869
  %v3871 = vadd.f32 %v3868, %v3870
  %v3872 = vsub.f32 %v3770, %v3857
  %v3873 = vand.u32 2147483647, %v3872
  %v3874 = vadd.f32 %v3871, %v3873
  %v3875 = vsub.f32 %v3770, %v3864
  %v3876 = vand.u32 2147483647, %v3875
  %v3877 = vadd.f32 %v3874, %v3876
  %v3878 = vmul.f32 %v3877, %v3771
  %v3879 = vsel %vm86, %v3771, 0.0
  %3880 = vadd.xlane.f32.xlu0 %v3879
  %v3881 = vpop.xlane.xlu0 %3880
  %v3882 = vrot.slane %v3881, 4
  %v3883 = vadd.f32 %v3881, %v3882
  %v3884 = vrot.slane %v3883, 2
  %v3885 = vadd.f32 %v3883, %v3884
  %v3886 = vrot.slane %v3885, 1
  %v3887 = vadd.f32 %v3885, %v3886
  %s3888 = vtos %v3887
  %v3889 = vstv %s3888
  %v3890 = vadd.f32 %v3889, 1e-05
  %v3891 = vsel %vm86, %v3878, 0.0
  %3892 = vadd.xlane.f32.xlu0 %v3891
  %v3893 = vpop.xlane.xlu0 %3892
  %v3894 = vrot.slane %v3893, 4
  %v3895 = vadd.f32 %v3893, %v3894
  %v3896 = vrot.slane %v3895, 2
  %v3897 = vadd.f32 %v3895, %v3896
  %v3898 = vrot.slane %v3897, 1
  %v3899 = vadd.f32 %v3897, %v3898
  %s3900 = vtos %v3899
  %v3901 = vstv %s3900
  %v3902 = vrcp.pop %v3890
  %v3903 = vmul.f32 %v3890, %v3902
  %v3904 = vsub.f32 1.0, %v3903
  %v3905 = vmul.f32 %v3902, %v3904
  %v3906 = vadd.f32 %v3902, %v3905
  %vm3907 = vweird.f32 %v3890
  %vm3908 = vweird.f32 %v3902
  %vm3909 = vmor %vm3907, %vm3908
  %v3910 = vsel %vm3909, %v3902, %v3906
  %v3911 = vand.u32 2147483647, %v3890
  %vm3912 = vcmp.eq.f32.partialorder %v3911, 8.507059e+37
  %v3913 = vand.u32 %v3890, 2147483648
  %v3914 = vor.u32 1.1754944e-38, %v3913
  %v3915 = vsel %vm3912, %v3914, %v3910
  %v3916 = vmul.f32 %v3901, %v3915
  %v3917 = vadd.f32 %v3511, %v3916
  %s3918 = scalar_lea.vmem %s12, 56
  %3919 = vst.msk [vmem:[%s3918] sm:$0xff] %vm86, %v3716
  %s3920 = scalar_lea.vmem %s13, 56
  %3921 = vst.msk [vmem:[%s3920] sm:$0xff] %vm86, %v3718
  %s3922 = scalar_lea.vmem %s12, 64
  %3923 = vst.msk [vmem:[%s3922] sm:$0xff] %vm86, %v3864
  %s3924 = scalar_lea.vmem %s13, 64
  %3925 = vst.msk [vmem:[%s3924] sm:$0xff] %vm86, %v3866
  %v3926 = vmul.f32 %v3769, 5.0
  %vm3927 = vcmask 0
  %3928 = vst.msk [vmem:[%s14] sm:$0x1] %vm3927, %v3926
  %v3929 = vmul.f32 %v3917, 5.0
  %s3930 = scalar_lea.vmem %s14, 1
  %3931 = vst.msk [vmem:[%s3930] sm:$0x1] %vm3927, %v3929
  // Predicated region
  $region50: #{_bimgru_rbf_forward_impl.1} parent=0 // pred_check
    _
  $region51: #{_bimgru_rbf_forward_impl.1} parent=0 // pred_check_branch
    %3933 = sbr.rel (0) target = $region53
  $region52: #{_bimgru_rbf_forward_impl.1} parent=0 // pred_region
    _
  $region53: #{_bimgru_rbf_forward_impl.1} parent=0 // pred_fallthru
    _
  // Predicated region
  $region54: #{_bimgru_rbf_forward_impl.1} parent=0 // pred_check
    _
  $region55: #{_bimgru_rbf_forward_impl.1} parent=0 // pred_check_branch
    %3935 = sbr.rel (0) target = $region57
  $region56: #{_bimgru_rbf_forward_impl.1} parent=0 // pred_region
    _
  $region57: #{_bimgru_rbf_forward_impl.1} parent=0 // pred_fallthru
    _
  // Predicated region
  $region58: #{_bimgru_rbf_forward_impl.1} parent=0 // pred_check
    _
  $region59: #{_bimgru_rbf_forward_impl.1} parent=0 // pred_check_branch
    %3937 = sbr.rel (0) target = $region61
  $region60: #{_bimgru_rbf_forward_impl.1} parent=0 // pred_region
    _
  $region61: #{_bimgru_rbf_forward_impl.1} parent=0 // pred_fallthru
    _
  // Predicated region
  $region62: #{_bimgru_rbf_forward_impl.1} parent=0 // pred_check
    _
  $region63: #{_bimgru_rbf_forward_impl.1} parent=0 // pred_check_branch
    %3939 = sbr.rel (0) target = $region65
  $region64: #{_bimgru_rbf_forward_impl.1} parent=0 // pred_region
    _
  $region65: #{_bimgru_rbf_forward_impl.1} parent=0 // pred_fallthru
    _
  // Predicated region
  $region66: #{_bimgru_rbf_forward_impl.1} parent=0 // pred_check
    _
  $region67: #{_bimgru_rbf_forward_impl.1} parent=0 // pred_check_branch
    %3941 = sbr.rel (0) target = $region69
  $region68: #{_bimgru_rbf_forward_impl.1} parent=0 // pred_region
    _
  $region69: #{_bimgru_rbf_forward_impl.1} parent=0 // pred_fallthru
    _
  // Predicated region
  $region70: #{_bimgru_rbf_forward_impl.1} parent=0 // pred_check
    _
  $region71: #{_bimgru_rbf_forward_impl.1} parent=0 // pred_check_branch
    %3943 = sbr.rel (0) target = $region73
  $region72: #{_bimgru_rbf_forward_impl.1} parent=0 // pred_region
    _
  $region73: #{_bimgru_rbf_forward_impl.1} parent=0 // pred_fallthru
    _

</llo_original>
